<compile_context>
chip_gen: v7x
topology: tpu7x:2x2x1
jax: 0.10.0
libtpu: 0.0.40
codegen_flags: <defaults>
</compile_context>

<pallas_src>
import jax
import jax.numpy as jnp
from jax.experimental import pallas as pl
from jax.experimental.pallas import tpu as pltpu


def _round_up(n, m):
    return ((n + m - 1) // m) * m


def _vmem_limit_bytes():
    """3/4 of physical VMEM (48 MiB v7x, 96 MiB v5e/v6e); safe fallback 48 MiB."""
    try:
        cap = int(pltpu.get_tpu_info().vmem_capacity_bytes)
    except Exception:
        cap = 64 << 20  # conservative: v7x physical VMEM per TC
    return cap * 3 // 4


def _quantize_int8_per_channel(w):
    """Symmetric per-output-channel int8 quantization of an (in, out) weight."""
    amax = jnp.max(jnp.abs(w), axis=0, keepdims=True)               # (1, out)
    scale = jnp.where(amax > 0.0, amax / 127.0, 1.0).astype(jnp.float32)
    w_q = jnp.clip(jnp.round(w / scale), -127.0, 127.0).astype(jnp.int8)
    return w_q, scale


def _prepare_params(params, *, weights_dtype, lane=128):
    """Zero-pad output widths to lane multiples; cast / quantize weights.

    Zero padding is semantics-preserving: padded hidden units have
    pre-activation 0 -> ReLU 0 and feed all-zero weight rows downstream;
    padded output columns are sliced off in the wrapper.

    Returns a list of per-layer tuples:
      (w, b)        for weights_dtype in {"bf16", "float32"}
      (w_q, s, b)   for weights_dtype == "int8"   (s = per-channel f32 scale)
    """
    layers = []
    prev_pad = 0  # extra (zero) input rows carried from the previous layer
    for i in range(1, 5):
        w = params[f"w{i}"]
        b = params[f"b{i}"]
        d_in, d_out = w.shape
        d_out_p = _round_up(d_out, lane)
        w_p = jnp.pad(w, ((0, prev_pad), (0, d_out_p - d_out)))
        b_p = jnp.pad(b, ((0, 0), (0, d_out_p - d_out))).astype(jnp.float32)
        if weights_dtype == "int8":
            w_q, s = _quantize_int8_per_channel(w_p)
            layers.append((w_q, s, b_p))
        else:
            dt = jnp.float32 if weights_dtype == "float32" else jnp.bfloat16
            layers.append((w_p.astype(dt), b_p))
        prev_pad = d_out_p - d_out
    return layers


def _make_mlp_kernel(use_scale, compute_dtype):
    """Build the fused 4-layer MLP kernel.

    refs = (x, [w, (s,), b] * 4, out).  MXU matmuls accumulate in f32; the
    per-channel scale (int8 mode), bias add and ReLU run as an f32 epilogue
    (v5e-friendly: no bf16 VPU required).
    """
    step = 3 if use_scale else 2

    def kernel(*refs):
        x_ref, o_ref = refs[0], refs[-1]
        layer_refs = refs[1:-1]
        n_layers = len(layer_refs) // step

        h = x_ref[...]  # already compute_dtype (cast in the wrapper)
        for l in range(n_layers):
            w = layer_refs[step * l][...]
            if jnp.issubdtype(w.dtype, jnp.integer):
                w = w.astype(jnp.float32)          # int8 storage -> dequant
            w = w.astype(compute_dtype)
            acc = jnp.dot(h, w, preferred_element_type=jnp.float32)
            if use_scale:
                acc = acc * layer_refs[step * l + 1][...]   # per-channel descale
            acc = acc + layer_refs[step * l + (2 if use_scale else 1)][...]
            if l + 1 < n_layers:
                h = jnp.maximum(acc, 0.0).astype(compute_dtype)
            else:
                o_ref[...] = acc.astype(o_ref.dtype)

    return kernel


def choice_net_forward(x, params, *, batch_tile=None, weights_dtype="bf16"):
    """Forward pass of choice_Net.

    x: (B, n_states) float32.
    params: w1..w4 stored (in, out) float32, b1..b4 stored (1, out) float32.
    weights_dtype: "bf16" (default), "int8" (per-channel quantized weight
      stream; biggest win on HBM-bound v5e/v6e batches, also valid on v7x
      since the MXU operands stay bf16), or "float32" (exact escape hatch for
      bit-comparable Q-values).
    """
    assert weights_dtype in ("bf16", "int8", "float32")
    B, n_states = x.shape
    n_actions = params["w4"].shape[1]

    compute_dtype = jnp.float32 if weights_dtype == "float32" else jnp.bfloat16
    use_scale = weights_dtype == "int8"

    layers = _prepare_params(params, weights_dtype=weights_dtype)
    n_out_p = layers[-1][0].shape[1]

    # ---- batch tiling --------------------------------------------------
    align = 16 if compute_dtype == jnp.bfloat16 else 8
    if batch_tile is None:
        bt = min(512, _round_up(B, 256))          # feed the 256-wide MXU
    else:
        bt = batch_tile
    bt = max(align, min(_round_up(bt, align), _round_up(B, align)))
    b_pad = _round_up(B, bt)
    if B >= 512 and b_pad // bt < 2:
        # Force >= 2 grid steps so the "parallel" batch axis shards across
        # both TensorCores on v7x (negligible overhead on single-TC chips).
        bt = max(align, _round_up(pl.cdiv(b_pad, 2), align))
        b_pad = _round_up(B, bt)
    grid = (b_pad // bt,)

    # Cast x to the compute dtype in the wrapper (halves the x DMA), then pad.
    x_c = x.astype(compute_dtype)
    x_p = jnp.pad(x_c, ((0, b_pad - B), (0, 0))) if b_pad != B else x_c

    flat_params = [a for layer in layers for a in layer]
    # Constant index_map: each weight/scale/bias block is DMA'd once and
    # reused across batch-grid steps.
    param_specs = [pl.BlockSpec(a.shape, lambda i: (0, 0)) for a in flat_params]

    out = pl.pallas_call(
        _make_mlp_kernel(use_scale, compute_dtype),
        out_shape=jax.ShapeDtypeStruct((b_pad, n_out_p), jnp.float32),
        grid_spec=pltpu.PrefetchScalarGridSpec(
            num_scalar_prefetch=0,
            grid=grid,
            in_specs=[pl.BlockSpec((bt, n_states), lambda i: (i, 0))]
                     + param_specs,
            out_specs=pl.BlockSpec((bt, n_out_p), lambda i: (i, 0)),
        ),
        compiler_params=pltpu.CompilerParams(
            dimension_semantics=("parallel",),
            vmem_limit_bytes=_vmem_limit_bytes(),
        ),
    )(x_p, *flat_params)

    return out[:B, :n_actions]


def init_params(key, n_states, n_actions):
    """Mirror the PyTorch init: weights ~ N(0, 0.1), biases = 0.1; stored (in, out)."""
    dims = [(n_states, 720), (720, 1024), (1024, 1440), (1440, n_actions)]
    params = {}
    for idx, ((d_in, d_out), k) in enumerate(zip(dims, jax.random.split(key, 4)), 1):
        params[f"w{idx}"] = (0.1 * jax.random.normal(k, (d_in, d_out))).astype(jnp.float32)
        params[f"b{idx}"] = jnp.full((1, d_out), 0.1, dtype=jnp.float32)
    return params


def reference_forward(x, params, *, operand_dtype=jnp.float32):
    """Pure-JAX reference matching the PyTorch module (optionally bf16 operands)."""
    def dense(h, w, b):
        return jnp.dot(h.astype(operand_dtype), w.astype(operand_dtype),
                       preferred_element_type=jnp.float32) + b
    h = jnp.maximum(dense(x, params["w1"], params["b1"]), 0.0)
    h = jnp.maximum(dense(h, params["w2"], params["b2"]), 0.0)
    h = jnp.maximum(dense(h, params["w3"], params["b3"]), 0.0)
    return dense(h, params["w4"], params["b4"])


def reference_forward_int8(x, params):
    """Pure-JAX mirror of the int8-weight kernel math (apples-to-apples check)."""
    h = x.astype(jnp.bfloat16)
    out = None
    for i in range(1, 5):
        w_q, s = _quantize_int8_per_channel(params[f"w{i}"])
        acc = jnp.dot(h, w_q.astype(jnp.float32).astype(jnp.bfloat16),
                      preferred_element_type=jnp.float32)
        acc = acc * s + params[f"b{i}"]
        if i < 4:
            h = jnp.maximum(acc, 0.0).astype(jnp.bfloat16)
        else:
            out = acc
    return out


if __name__ == "__main__":
    key = jax.random.PRNGKey(0)
    k_param, k_x = jax.random.split(key)

    n_states, n_actions, batch = 32, 16, 8

    params = init_params(k_param, n_states, n_actions)
    x = jax.random.normal(k_x, (batch, n_states), dtype=jnp.float32)

    # Default path: bf16 weight stream, f32 MXU accumulation.
    out = jax.block_until_ready(choice_net_forward(x, params))
    assert out.shape == (batch, n_actions)

    # Apples-to-apples check vs. a reference with the same bf16 matmul operands.
    ref_bf16 = reference_forward(x, params, operand_dtype=jnp.bfloat16)
    assert jnp.allclose(out, ref_bf16, atol=2e-2, rtol=2e-2)

    # Semantics sanity vs. the exact f32 module (difference = bf16 quantization).
    ref_f32 = reference_forward(x, params)
    assert float(jnp.max(jnp.abs(out - ref_f32))) < 1.0

    # int8 weight-stream path (halves HBM weight traffic on v5e/v6e; safe on
    # v7x since the MXU operands remain bf16).
    out_q = jax.block_until_ready(
        choice_net_forward(x, params, weights_dtype="int8"))
    assert out_q.shape == (batch, n_actions)
    ref_q = reference_forward_int8(x, params)
    assert jnp.allclose(out_q, ref_q, atol=3e-2, rtol=3e-2)

    print("KERNEL_OK")
</pallas_src>

<mosaic_0001>
module attributes {stable_mosaic.version = 11 : i64} {
  func.func @kernel(%arg0: i32, %arg1: memref<16x32xbf16, #tpu.memory_space<vmem>>, %arg2: memref<32x768xbf16, #tpu.memory_space<vmem>>, %arg3: memref<1x768xf32, #tpu.memory_space<vmem>>, %arg4: memref<768x1024xbf16, #tpu.memory_space<vmem>>, %arg5: memref<1x1024xf32, #tpu.memory_space<vmem>>, %arg6: memref<1024x1536xbf16, #tpu.memory_space<vmem>>, %arg7: memref<1x1536xf32, #tpu.memory_space<vmem>>, %arg8: memref<1536x128xbf16, #tpu.memory_space<vmem>>, %arg9: memref<1x128xf32, #tpu.memory_space<vmem>>, %arg10: memref<16x128xf32, #tpu.memory_space<vmem>>) attributes {dimension_semantics = [#tpu.dimension_semantics<parallel>], iteration_bounds = array<i64: 1>, scalar_prefetch = 0 : i64, scratch_operands = 0 : i64, tpu.core_type = #tpu.core_type<tc>, window_params = [{transform_indices = @transform_0, window_bounds = array<i64: 16, 32>}, {pipeline_mode = #tpu.pipeline_mode<synchronous>, transform_indices = @transform_1, window_bounds = array<i64: 32, 768>}, {pipeline_mode = #tpu.pipeline_mode<synchronous>, transform_indices = @transform_2, window_bounds = array<i64: 1, 768>}, {pipeline_mode = #tpu.pipeline_mode<synchronous>, transform_indices = @transform_3, window_bounds = array<i64: 768, 1024>}, {pipeline_mode = #tpu.pipeline_mode<synchronous>, transform_indices = @transform_4, window_bounds = array<i64: 1, 1024>}, {pipeline_mode = #tpu.pipeline_mode<synchronous>, transform_indices = @transform_5, window_bounds = array<i64: 1024, 1536>}, {pipeline_mode = #tpu.pipeline_mode<synchronous>, transform_indices = @transform_6, window_bounds = array<i64: 1, 1536>}, {pipeline_mode = #tpu.pipeline_mode<synchronous>, transform_indices = @transform_7, window_bounds = array<i64: 1536, 128>}, {pipeline_mode = #tpu.pipeline_mode<synchronous>, transform_indices = @transform_8, window_bounds = array<i64: 1, 128>}, {transform_indices = @transform_9, window_bounds = array<i64: 16, 128>}]} {
    %c0 = arith.constant 0 : index
    %c0_0 = arith.constant 0 : index
    %0 = vector.load %arg1[%c0, %c0_0] : memref<16x32xbf16, #tpu.memory_space<vmem>>, vector<16x32xbf16>
    %c0_1 = arith.constant 0 : index
    %c0_2 = arith.constant 0 : index
    %1 = vector.load %arg2[%c0_1, %c0_2] : memref<32x768xbf16, #tpu.memory_space<vmem>>, vector<32x768xbf16>
    %cst = arith.constant dense<0.000000e+00> : vector<16x768xf32>
    %2 = tpu.matmul %0, %1, %cst {dimension_numbers = #tpu.dot_dimension_numbers<[1], [0], [0], [1], [0, 0, 1, 1], [], []>} : vector<16x32xbf16>, vector<32x768xbf16>, vector<16x768xf32> -> vector<16x768xf32>
    %c0_3 = arith.constant 0 : index
    %c0_4 = arith.constant 0 : index
    %3 = vector.load %arg3[%c0_3, %c0_4] : memref<1x768xf32, #tpu.memory_space<vmem>>, vector<1x768xf32>
    %4 = vector.broadcast %3 : vector<1x768xf32> to vector<16x768xf32>
    %5 = arith.addf %2, %4 : vector<16x768xf32>
    %cst_5 = arith.constant 0.000000e+00 : f32
    %6 = vector.broadcast %cst_5 : f32 to vector<16x768xf32>
    %7 = arith.maximumf %5, %6 : vector<16x768xf32>
    %8 = arith.truncf %7 : vector<16x768xf32> to vector<16x768xbf16>
    %c0_6 = arith.constant 0 : index
    %c0_7 = arith.constant 0 : index
    %9 = vector.load %arg4[%c0_6, %c0_7] : memref<768x1024xbf16, #tpu.memory_space<vmem>>, vector<768x1024xbf16>
    %cst_8 = arith.constant dense<0.000000e+00> : vector<16x1024xf32>
    %10 = tpu.matmul %8, %9, %cst_8 {dimension_numbers = #tpu.dot_dimension_numbers<[1], [0], [0], [1], [0, 0, 1, 1], [], []>} : vector<16x768xbf16>, vector<768x1024xbf16>, vector<16x1024xf32> -> vector<16x1024xf32>
    %c0_9 = arith.constant 0 : index
    %c0_10 = arith.constant 0 : index
    %11 = vector.load %arg5[%c0_9, %c0_10] : memref<1x1024xf32, #tpu.memory_space<vmem>>, vector<1x1024xf32>
    %12 = vector.broadcast %11 : vector<1x1024xf32> to vector<16x1024xf32>
    %13 = arith.addf %10, %12 : vector<16x1024xf32>
    %cst_11 = arith.constant 0.000000e+00 : f32
    %14 = vector.broadcast %cst_11 : f32 to vector<16x1024xf32>
    %15 = arith.maximumf %13, %14 : vector<16x1024xf32>
    %16 = arith.truncf %15 : vector<16x1024xf32> to vector<16x1024xbf16>
    %c0_12 = arith.constant 0 : index
    %c0_13 = arith.constant 0 : index
    %17 = vector.load %arg6[%c0_12, %c0_13] : memref<1024x1536xbf16, #tpu.memory_space<vmem>>, vector<1024x1536xbf16>
    %cst_14 = arith.constant dense<0.000000e+00> : vector<16x1536xf32>
    %18 = tpu.matmul %16, %17, %cst_14 {dimension_numbers = #tpu.dot_dimension_numbers<[1], [0], [0], [1], [0, 0, 1, 1], [], []>} : vector<16x1024xbf16>, vector<1024x1536xbf16>, vector<16x1536xf32> -> vector<16x1536xf32>
    %c0_15 = arith.constant 0 : index
    %c0_16 = arith.constant 0 : index
    %19 = vector.load %arg7[%c0_15, %c0_16] : memref<1x1536xf32, #tpu.memory_space<vmem>>, vector<1x1536xf32>
    %20 = vector.broadcast %19 : vector<1x1536xf32> to vector<16x1536xf32>
    %21 = arith.addf %18, %20 : vector<16x1536xf32>
    %cst_17 = arith.constant 0.000000e+00 : f32
    %22 = vector.broadcast %cst_17 : f32 to vector<16x1536xf32>
    %23 = arith.maximumf %21, %22 : vector<16x1536xf32>
    %24 = arith.truncf %23 : vector<16x1536xf32> to vector<16x1536xbf16>
    %c0_18 = arith.constant 0 : index
    %c0_19 = arith.constant 0 : index
    %25 = vector.load %arg8[%c0_18, %c0_19] : memref<1536x128xbf16, #tpu.memory_space<vmem>>, vector<1536x128xbf16>
    %cst_20 = arith.constant dense<0.000000e+00> : vector<16x128xf32>
    %26 = tpu.matmul %24, %25, %cst_20 {dimension_numbers = #tpu.dot_dimension_numbers<[1], [0], [0], [1], [0, 0, 1, 1], [], []>} : vector<16x1536xbf16>, vector<1536x128xbf16>, vector<16x128xf32> -> vector<16x128xf32>
    %c0_21 = arith.constant 0 : index
    %c0_22 = arith.constant 0 : index
    %27 = vector.load %arg9[%c0_21, %c0_22] : memref<1x128xf32, #tpu.memory_space<vmem>>, vector<1x128xf32>
    %28 = vector.broadcast %27 : vector<1x128xf32> to vector<16x128xf32>
    %29 = arith.addf %26, %28 : vector<16x128xf32>
    %c0_23 = arith.constant 0 : index
    %c0_24 = arith.constant 0 : index
    %30 = vector.load %arg10[%c0_23, %c0_24] : memref<16x128xf32, #tpu.memory_space<vmem>>, vector<16x128xf32>
    tpu.vector_store %arg10[%c0_23, %c0_24], %29 {strides = array<i32>} : memref<16x128xf32, #tpu.memory_space<vmem>>, vector<16x128xf32>,
    return
  }
  func.func @transform_0(%arg0: i32) -> (i32, i32) {
    %c0_i32 = arith.constant 0 : i32
    %c0_i32_0 = arith.constant 0 : i32
    return %arg0, %c0_i32 : i32, i32
  }
  func.func @transform_1(%arg0: i32) -> (i32, i32) {
    %c0_i32 = arith.constant 0 : i32
    %c0_i32_0 = arith.constant 0 : i32
    %c0_i32_1 = arith.constant 0 : i32
    return %c0_i32, %c0_i32_0 : i32, i32
  }
  func.func @transform_2(%arg0: i32) -> (i32, i32) {
    %c0_i32 = arith.constant 0 : i32
    %c0_i32_0 = arith.constant 0 : i32
    %c0_i32_1 = arith.constant 0 : i32
    return %c0_i32, %c0_i32_0 : i32, i32
  }
  func.func @transform_3(%arg0: i32) -> (i32, i32) {
    %c0_i32 = arith.constant 0 : i32
    %c0_i32_0 = arith.constant 0 : i32
    %c0_i32_1 = arith.constant 0 : i32
    return %c0_i32, %c0_i32_0 : i32, i32
  }
  func.func @transform_4(%arg0: i32) -> (i32, i32) {
    %c0_i32 = arith.constant 0 : i32
    %c0_i32_0 = arith.constant 0 : i32
    %c0_i32_1 = arith.constant 0 : i32
    return %c0_i32, %c0_i32_0 : i32, i32
  }
  func.func @transform_5(%arg0: i32) -> (i32, i32) {
    %c0_i32 = arith.constant 0 : i32
    %c0_i32_0 = arith.constant 0 : i32
    %c0_i32_1 = arith.constant 0 : i32
    return %c0_i32, %c0_i32_0 : i32, i32
  }
  func.func @transform_6(%arg0: i32) -> (i32, i32) {
    %c0_i32 = arith.constant 0 : i32
    %c0_i32_0 = arith.constant 0 : i32
    %c0_i32_1 = arith.constant 0 : i32
    return %c0_i32, %c0_i32_0 : i32, i32
  }
  func.func @transform_7(%arg0: i32) -> (i32, i32) {
    %c0_i32 = arith.constant 0 : i32
    %c0_i32_0 = arith.constant 0 : i32
    %c0_i32_1 = arith.constant 0 : i32
    return %c0_i32, %c0_i32_0 : i32, i32
  }
  func.func @transform_8(%arg0: i32) -> (i32, i32) {
    %c0_i32 = arith.constant 0 : i32
    %c0_i32_0 = arith.constant 0 : i32
    %c0_i32_1 = arith.constant 0 : i32
    return %c0_i32, %c0_i32_0 : i32, i32
  }
  func.func @transform_9(%arg0: i32) -> (i32, i32) {
    %c0_i32 = arith.constant 0 : i32
    %c0_i32_0 = arith.constant 0 : i32
    return %arg0, %c0_i32 : i32, i32
  }
}

</mosaic_0001>

<llo_original>
// kernel: tpu_custom_call.1
$region0: #{tpu_custom_call.1}
  #allocation0 [shape = 'u32[]', space=smem, size = 0x4, offset = 0x4, fixed_abs, tag = 'smem constant byte address 0x4 - core index']
  #allocation1 [shape = 'u32[144,128]{1,0:T(1,128)}', space=vmem, size = 0x12000, scoped, tag = 'internal scratch']
  %s0 = inlined_call_operand.hbm [shape: bf16[16,32], index: 0, kind: input, shape index: {}]
  %s1 = inlined_call_operand.hbm [shape: bf16[32,768], index: 1, kind: input, shape index: {}]
  %s2 = inlined_call_operand.hbm [shape: f32[1,768], index: 2, kind: input, shape index: {}]
  %s3 = inlined_call_operand.hbm [shape: bf16[768,1024], index: 3, kind: input, shape index: {}]
  %s4 = inlined_call_operand.hbm [shape: f32[1,1024], index: 4, kind: input, shape index: {}]
  %s5 = inlined_call_operand.hbm [shape: bf16[1024,1536], index: 5, kind: input, shape index: {}]
  %s6 = inlined_call_operand.hbm [shape: f32[1,1536], index: 6, kind: input, shape index: {}]
  %s7 = inlined_call_operand.hbm [shape: bf16[1536,128], index: 7, kind: input, shape index: {}]
  %s8 = inlined_call_operand.hbm [shape: f32[1,128], index: 8, kind: input, shape index: {}]
  %s9 = inlined_call_operand.hbm [shape: f32[16,128], index: 9, kind: output, shape index: {}]
  %s10 = sld [smem:[#allocation0]]
  $region82: #{tpu_custom_call.1} parent=0
    _
  %s12 = ssub.s32 1, %s10
  %s13 = scalar_select 0, %s12, %s10
  $region1: #{tpu_custom_call.1} parent=0
    #allocation2 [shape = 'u8[4096]{0}', space=vmem, size = 0x1000, scoped, tag = 'input window, operand 0, single buffered']
    #allocation3 [shape = 's32[1]{0}', space=sflag, size = 0x4, scoped, tag = 'scoped memory for tpu_custom_call.1']
    #allocation4 [shape = 's32[1]{0}', space=sflag, size = 0x4, scoped, tag = 'scoped memory for tpu_custom_call.1']
    #allocation5 [shape = 'u8[49152]{0}', space=vmem, size = 0xc000, scoped, tag = 'input window, operand 1, single buffered']
    #allocation6 [shape = 's32[1]{0}', space=sflag, size = 0x4, scoped, tag = 'scoped memory for tpu_custom_call.1']
    #allocation7 [shape = 'u8[3072]{0}', space=vmem, size = 0xc00, scoped, tag = 'input window, operand 2, single buffered']
    #allocation8 [shape = 'u8[1572864]{0}', space=vmem, size = 0x180000, scoped, tag = 'input window, operand 3, single buffered']
    #allocation9 [shape = 's32[1]{0}', space=sflag, size = 0x4, scoped, tag = 'scoped memory for tpu_custom_call.1']
    #allocation10 [shape = 'u8[4096]{0}', space=vmem, size = 0x1000, scoped, tag = 'input window, operand 4, single buffered']
    #allocation11 [shape = 'u8[3145728]{0}', space=vmem, size = 0x300000, scoped, tag = 'input window, operand 5, single buffered']
    #allocation12 [shape = 's32[1]{0}', space=sflag, size = 0x4, scoped, tag = 'scoped memory for tpu_custom_call.1']
    #allocation13 [shape = 'u8[6144]{0}', space=vmem, size = 0x1800, scoped, tag = 'input window, operand 6, single buffered']
    #allocation14 [shape = 'u8[393216]{0}', space=vmem, size = 0x60000, scoped, tag = 'input window, operand 7, single buffered']
    #allocation15 [shape = 's32[1]{0}', space=sflag, size = 0x4, scoped, tag = 'scoped memory for tpu_custom_call.1']
    #allocation16 [shape = 'u8[512]{0}', space=vmem, size = 0x400, scoped, tag = 'input window, operand 8, single buffered']
    #allocation17 [shape = 'u8[8192]{0}', space=vmem, size = 0x2000, scoped, tag = 'output window, operand 0, single buffered']
    %14 = vsyncpa [#allocation3], 0
    %15 = vsyncpa [#allocation6], 0
    %16 = vsyncpa [#allocation9], 0
    %17 = vsyncpa [#allocation12], 0
    %18 = vsyncpa [#allocation15], 0
    %19 = vsyncpa [#allocation4], 0
    // Predicated region
    $region2: #{tpu_custom_call.1} parent=1 // pred_check
      _
    $region3: #{tpu_custom_call.1} parent=1 // pred_check_branch
      %21 = sbr.rel (0) target = $region5
    $region4: #{tpu_custom_call.1} parent=1 // pred_region
      %s23 = ssub.s32 128, 128
      %24 = vsyncadd [#allocation3], %s23
      %s25 = sshll.u32 [#allocation2], 4
      %s26 = int_to_ptr.vmem [resolvable:$true] %s25
      %31 = dma.hbm_to_vmem [thread:$0]  %s0, 128, %s26, [#allocation3], 64, 64, 4
    $region5: #{tpu_custom_call.1} parent=1 // pred_fallthru
      _
    // Predicated region
    $region6: #{tpu_custom_call.1} parent=1 // pred_check
      _
    $region7: #{tpu_custom_call.1} parent=1 // pred_check_branch
      %33 = sbr.rel (0) target = $region9
    $region8: #{tpu_custom_call.1} parent=1 // pred_region
      %s35 = ssub.s32 1536, 1536
      %36 = vsyncadd [#allocation6], %s35
      %s37 = sshll.u32 [#allocation5], 4
      %s38 = int_to_ptr.vmem [resolvable:$true] %s37
      %43 = dma.hbm_to_vmem [thread:$0]  %s1, 1536, %s38, [#allocation6], 384, 384, 24
    $region9: #{tpu_custom_call.1} parent=1 // pred_fallthru
      _
    // Predicated region
    $region10: #{tpu_custom_call.1} parent=1 // pred_check
      _
    $region11: #{tpu_custom_call.1} parent=1 // pred_check_branch
      %45 = sbr.rel (0) target = $region13
    $region12: #{tpu_custom_call.1} parent=1 // pred_region
      %s47 = ssub.s32 96, 96
      %48 = vsyncadd [#allocation6], %s47
      %s50 = sshll.u32 [#allocation7], 4
      %s51 = int_to_ptr.vmem [resolvable:$true] %s50
      %53 = dma.hbm_to_vmem [thread:$0]  %s2, 96, %s51, [#allocation6]
    $region13: #{tpu_custom_call.1} parent=1 // pred_fallthru
      _
    // Predicated region
    $region14: #{tpu_custom_call.1} parent=1 // pred_check
      _
    $region15: #{tpu_custom_call.1} parent=1 // pred_check_branch
      %55 = sbr.rel (0) target = $region17
    $region16: #{tpu_custom_call.1} parent=1 // pred_region
      %s57 = ssub.s32 49152, 49152
      %58 = vsyncadd [#allocation9], %s57
      %s59 = sshll.u32 [#allocation8], 4
      %s60 = int_to_ptr.vmem [resolvable:$true] %s59
      %65 = dma.hbm_to_vmem [thread:$0]  %s3, 49152, %s60, [#allocation9], 512, 512, 32
    $region17: #{tpu_custom_call.1} parent=1 // pred_fallthru
      _
    // Predicated region
    $region18: #{tpu_custom_call.1} parent=1 // pred_check
      _
    $region19: #{tpu_custom_call.1} parent=1 // pred_check_branch
      %67 = sbr.rel (0) target = $region21
    $region20: #{tpu_custom_call.1} parent=1 // pred_region
      %s69 = ssub.s32 128, 128
      %70 = vsyncadd [#allocation9], %s69
      %s72 = sshll.u32 [#allocation10], 4
      %s73 = int_to_ptr.vmem [resolvable:$true] %s72
      %75 = dma.hbm_to_vmem [thread:$0]  %s4, 128, %s73, [#allocation9]
    $region21: #{tpu_custom_call.1} parent=1 // pred_fallthru
      _
    // Predicated region
    $region22: #{tpu_custom_call.1} parent=1 // pred_check
      _
    $region23: #{tpu_custom_call.1} parent=1 // pred_check_branch
      %77 = sbr.rel (0) target = $region25
    $region24: #{tpu_custom_call.1} parent=1 // pred_region
      %s79 = ssub.s32 98304, 98304
      %80 = vsyncadd [#allocation12], %s79
      %s81 = sshll.u32 [#allocation11], 4
      %s82 = int_to_ptr.vmem [resolvable:$true] %s81
      %87 = dma.hbm_to_vmem [thread:$0]  %s5, 98304, %s82, [#allocation12], 768, 768, 48
    $region25: #{tpu_custom_call.1} parent=1 // pred_fallthru
      _
    // Predicated region
    $region26: #{tpu_custom_call.1} parent=1 // pred_check
      _
    $region27: #{tpu_custom_call.1} parent=1 // pred_check_branch
      %89 = sbr.rel (0) target = $region29
    $region28: #{tpu_custom_call.1} parent=1 // pred_region
      %s91 = ssub.s32 192, 192
      %92 = vsyncadd [#allocation12], %s91
      %s94 = sshll.u32 [#allocation13], 4
      %s95 = int_to_ptr.vmem [resolvable:$true] %s94
      %97 = dma.hbm_to_vmem [thread:$0]  %s6, 192, %s95, [#allocation12]
    $region29: #{tpu_custom_call.1} parent=1 // pred_fallthru
      _
    // Predicated region
    $region30: #{tpu_custom_call.1} parent=1 // pred_check
      _
    $region31: #{tpu_custom_call.1} parent=1 // pred_check_branch
      %99 = sbr.rel (0) target = $region33
    $region32: #{tpu_custom_call.1} parent=1 // pred_region
      %s101 = ssub.s32 12288, 12288
      %102 = vsyncadd [#allocation15], %s101
      %s103 = sshll.u32 [#allocation14], 4
      %s104 = int_to_ptr.vmem [resolvable:$true] %s103
      %109 = dma.hbm_to_vmem [thread:$0]  %s7, 12288, %s104, [#allocation15], 64, 64, 4
    $region33: #{tpu_custom_call.1} parent=1 // pred_fallthru
      _
    // Predicated region
    $region34: #{tpu_custom_call.1} parent=1 // pred_check
      _
    $region35: #{tpu_custom_call.1} parent=1 // pred_check_branch
      %111 = sbr.rel (0) target = $region37
    $region36: #{tpu_custom_call.1} parent=1 // pred_region
      %s113 = ssub.s32 16, 16
      %114 = vsyncadd [#allocation15], %s113
      %s116 = sshll.u32 [#allocation16], 4
      %s117 = int_to_ptr.vmem [resolvable:$true] %s116
      %119 = dma.hbm_to_vmem [thread:$0]  %s8, 16, %s117, [#allocation15]
    $region37: #{tpu_custom_call.1} parent=1 // pred_fallthru
      _
    // Predicated region
    $region38: #{tpu_custom_call.1} parent=1 // pred_check
      _
    $region39: #{tpu_custom_call.1} parent=1 // pred_check_branch
      %121 = sbr.rel (0) target = $region41
    $region40: #{tpu_custom_call.1} parent=1 // pred_region
      %122 = dma.done [#allocation3], 128
    $region41: #{tpu_custom_call.1} parent=1 // pred_fallthru
      _
    // Predicated region
    $region42: #{tpu_custom_call.1} parent=1 // pred_check
      _
    $region43: #{tpu_custom_call.1} parent=1 // pred_check_branch
      %124 = sbr.rel (0) target = $region45
    $region44: #{tpu_custom_call.1} parent=1 // pred_region
      %125 = dma.done [#allocation6], 1536
    $region45: #{tpu_custom_call.1} parent=1 // pred_fallthru
      _
    // Predicated region
    $region46: #{tpu_custom_call.1} parent=1 // pred_check
      _
    $region47: #{tpu_custom_call.1} parent=1 // pred_check_branch
      %127 = sbr.rel (0) target = $region49
    $region48: #{tpu_custom_call.1} parent=1 // pred_region
      %128 = dma.done [#allocation6], 96
    $region49: #{tpu_custom_call.1} parent=1 // pred_fallthru
      _
    // Predicated region
    $region50: #{tpu_custom_call.1} parent=1 // pred_check
      _
    $region51: #{tpu_custom_call.1} parent=1 // pred_check_branch
      %130 = sbr.rel (0) target = $region53
    $region52: #{tpu_custom_call.1} parent=1 // pred_region
      %131 = dma.done [#allocation9], 49152
    $region53: #{tpu_custom_call.1} parent=1 // pred_fallthru
      _
    // Predicated region
    $region54: #{tpu_custom_call.1} parent=1 // pred_check
      _
    $region55: #{tpu_custom_call.1} parent=1 // pred_check_branch
      %133 = sbr.rel (0) target = $region57
    $region56: #{tpu_custom_call.1} parent=1 // pred_region
      %134 = dma.done [#allocation9], 128
    $region57: #{tpu_custom_call.1} parent=1 // pred_fallthru
      _
    // Predicated region
    $region58: #{tpu_custom_call.1} parent=1 // pred_check
      _
    $region59: #{tpu_custom_call.1} parent=1 // pred_check_branch
      %136 = sbr.rel (0) target = $region61
    $region60: #{tpu_custom_call.1} parent=1 // pred_region
      %137 = dma.done [#allocation12], 98304
    $region61: #{tpu_custom_call.1} parent=1 // pred_fallthru
      _
    // Predicated region
    $region62: #{tpu_custom_call.1} parent=1 // pred_check
      _
    $region63: #{tpu_custom_call.1} parent=1 // pred_check_branch
      %139 = sbr.rel (0) target = $region65
    $region64: #{tpu_custom_call.1} parent=1 // pred_region
      %140 = dma.done [#allocation12], 192
    $region65: #{tpu_custom_call.1} parent=1 // pred_fallthru
      _
    // Predicated region
    $region66: #{tpu_custom_call.1} parent=1 // pred_check
      _
    $region67: #{tpu_custom_call.1} parent=1 // pred_check_branch
      %142 = sbr.rel (0) target = $region69
    $region68: #{tpu_custom_call.1} parent=1 // pred_region
      %143 = dma.done [#allocation15], 12288
    $region69: #{tpu_custom_call.1} parent=1 // pred_fallthru
      _
    // Predicated region
    $region70: #{tpu_custom_call.1} parent=1 // pred_check
      _
    $region71: #{tpu_custom_call.1} parent=1 // pred_check_branch
      %145 = sbr.rel (0) target = $region73
    $region72: #{tpu_custom_call.1} parent=1 // pred_region
      %146 = dma.done [#allocation15], 16
    $region73: #{tpu_custom_call.1} parent=1 // pred_fallthru
      _
    %v148 = vld [vmem:[#allocation2] sm:$0xf]
    %v149 = vld [vmem:[#allocation2 + $0x4] sm:$0xf]
    %v150 = vld [vmem:[#allocation5] sm:$0xff]
    %v151 = vld [vmem:[#allocation5 + $0x8] sm:$0xff]
    %v152 = vld [vmem:[#allocation5 + $0x10] sm:$0xff]
    %v153 = vld [vmem:[#allocation5 + $0x18] sm:$0xff]
    %v154 = vld [vmem:[#allocation5 + $0x20] sm:$0xff]
    %v155 = vld [vmem:[#allocation5 + $0x28] sm:$0xff]
    %v156 = vld [vmem:[#allocation5 + $0x30] sm:$0xff]
    %v157 = vld [vmem:[#allocation5 + $0x38] sm:$0xff]
    %v158 = vld [vmem:[#allocation5 + $0x40] sm:$0xff]
    %v159 = vld [vmem:[#allocation5 + $0x48] sm:$0xff]
    %v160 = vld [vmem:[#allocation5 + $0x50] sm:$0xff]
    %v161 = vld [vmem:[#allocation5 + $0x58] sm:$0xff]
    %v162 = vld [vmem:[#allocation7] sm:$0x3f]
    %v164 = vlaneseq
    %v165 = vshrl.u32 %v164, 7
    %v166 = vsub.s32 0, %v165
    %v167 = vrot.slane %v162, %v166
    %v168 = vlaneseq
    %v169 = vshrl.u32 %v168, 7
    %v170 = vsub.s32 1, %v169
    %v171 = vrot.slane %v162, %v170
    %v172 = vlaneseq
    %v173 = vshrl.u32 %v172, 7
    %v174 = vsub.s32 2, %v173
    %v175 = vrot.slane %v162, %v174
    %v176 = vlaneseq
    %v177 = vshrl.u32 %v176, 7
    %v178 = vsub.s32 3, %v177
    %v179 = vrot.slane %v162, %v178
    %v180 = vlaneseq
    %v181 = vshrl.u32 %v180, 7
    %v182 = vsub.s32 4, %v181
    %v183 = vrot.slane %v162, %v182
    %v184 = vlaneseq
    %v185 = vshrl.u32 %v184, 7
    %v186 = vsub.s32 5, %v185
    %v187 = vrot.slane %v162, %v186
    %v196 = vunpack.c.l.b16 %v148
    %v197 = vunpack.c.l.b16 %v149
    %v198 = vpack.c.b16 %v197, %v196
    %v211 = vunpack.c.l.b16 %v150
    %v212 = vunpack.c.h.b16 %v150
    %v213 = vunpack.c.l.b16 %v151
    %v214 = vunpack.c.h.b16 %v151
    %v215 = vunpack.c.l.b16 %v152
    %v216 = vunpack.c.h.b16 %v152
    %v217 = vunpack.c.l.b16 %v153
    %v218 = vunpack.c.h.b16 %v153
    %v219 = vunpack.c.l.b16 %v154
    %v220 = vunpack.c.h.b16 %v154
    %v221 = vunpack.c.l.b16 %v155
    %v222 = vunpack.c.h.b16 %v155
    %v223 = vunpack.c.l.b16 %v156
    %v224 = vunpack.c.h.b16 %v156
    %v225 = vunpack.c.l.b16 %v157
    %v226 = vunpack.c.h.b16 %v157
    %v227 = vunpack.c.l.b16 %v158
    %v228 = vunpack.c.h.b16 %v158
    %v229 = vunpack.c.l.b16 %v159
    %v230 = vunpack.c.h.b16 %v159
    %v231 = vunpack.c.l.b16 %v160
    %v232 = vunpack.c.h.b16 %v160
    %v233 = vunpack.c.l.b16 %v161
    %v234 = vunpack.c.h.b16 %v161
    %v235 = vpack.c.b16 %v217, %v211
    %v236 = vpack.c.b16 %v218, %v212
    %v237 = vpack.c.b16 %v219, %v213
    %v238 = vpack.c.b16 %v220, %v214
    %v239 = vpack.c.b16 %v221, %v215
    %v240 = vpack.c.b16 %v222, %v216
    %v241 = vpack.c.b16 %v229, %v223
    %v242 = vpack.c.b16 %v230, %v224
    %v243 = vpack.c.b16 %v231, %v225
    %v244 = vpack.c.b16 %v232, %v226
    %v245 = vpack.c.b16 %v233, %v227
    %v246 = vpack.c.b16 %v234, %v228
    %vm259 = vcmask 261120
    %v261 = vsel %vm259, %v198, 0
    %263 = vmatprep.subr.bf16.mxu0 %v236
    %264 = vmatpush1.bf16.msra.mxu0 %v235
    %265 = vmatprep.subr.bf16.mxu0 %v242
    %266 = vmatpush1.bf16.msra.mxu0 %v241
    %267 = vmatprep.subr.bf16.mxu0 0
    %268 = vmatpush1.bf16.msra.mxu0 0
    %269 = vmatprep.subr.bf16.mxu0 0
    %270 = vmatpush1.bf16.msra.mxu0 0
    %271 = vmatprep.subr.bf16.mxu0 0
    %272 = vmatpush1.bf16.msra.mxu0 0
    %273 = vmatprep.subr.bf16.mxu0 0
    %274 = vmatpush1.bf16.msra.mxu0 0
    %275 = vmatprep.subr.bf16.mxu0 0
    %276 = vmatpush1.bf16.msra.mxu0 0
    %277 = vmatprep.subr.bf16.mxu0 0
    %278 = vmatpush1.bf16.msra.mxu0 0
    %279 = vmatprep.subr.bf16.mxu0 0
    %280 = vmatpush1.bf16.msra.mxu0 0
    %281 = vmatprep.subr.bf16.mxu0 0
    %282 = vmatpush1.bf16.msra.mxu0 0
    %283 = vmatprep.subr.bf16.mxu0 0
    %284 = vmatpush1.bf16.msra.mxu0 0
    %285 = vmatprep.subr.bf16.mxu0 0
    %286 = vmatpush1.bf16.msra.mxu0 0
    %287 = vmatprep.subr.bf16.mxu0 0
    %288 = vmatpush1.bf16.msra.mxu0 0
    %289 = vmatprep.subr.bf16.mxu0 0
    %290 = vmatpush1.bf16.msra.mxu0 0
    %291 = vmatprep.subr.bf16.mxu0 0
    %292 = vmatpush1.bf16.msra.mxu0 0
    %293 = vmatprep.subr.bf16.mxu0 0
    %294 = vmatpush1.bf16.msra.mxu0 0
    %295 = vmatprep.mubr.bf16.mxu0 0
    %296 = vmatmul.mubr.bf16.gmra.mrb[0].mxu0 %v261
    %v297 = vpop.f32.mrb[0].mxu0
    %v298 = vadd.f32 %v167, %v297
    %v299 = vpop.f32.mrb[0].mxu0
    %v300 = vadd.f32 %v171, %v299
    %v301 = vpop.f32.mrb[0].mxu0
    %v302 = vadd.f32 %v167, %v301
    %v303 = vpop.f32.mrb[0].mxu0
    %v304 = vadd.f32 %v171, %v303
    %305 = vdwg.mxu0
    %306 = vmatprep.subr.bf16.mxu0 %v238
    %307 = vmatpush1.bf16.msra.mxu0 %v237
    %308 = vmatprep.subr.bf16.mxu0 %v244
    %309 = vmatpush1.bf16.msra.mxu0 %v243
    %310 = vmatprep.subr.bf16.mxu0 0
    %311 = vmatpush1.bf16.msra.mxu0 0
    %312 = vmatprep.subr.bf16.mxu0 0
    %313 = vmatpush1.bf16.msra.mxu0 0
    %314 = vmatprep.subr.bf16.mxu0 0
    %315 = vmatpush1.bf16.msra.mxu0 0
    %316 = vmatprep.subr.bf16.mxu0 0
    %317 = vmatpush1.bf16.msra.mxu0 0
    %318 = vmatprep.subr.bf16.mxu0 0
    %319 = vmatpush1.bf16.msra.mxu0 0
    %320 = vmatprep.subr.bf16.mxu0 0
    %321 = vmatpush1.bf16.msra.mxu0 0
    %322 = vmatprep.subr.bf16.mxu0 0
    %323 = vmatpush1.bf16.msra.mxu0 0
    %324 = vmatprep.subr.bf16.mxu0 0
    %325 = vmatpush1.bf16.msra.mxu0 0
    %326 = vmatprep.subr.bf16.mxu0 0
    %327 = vmatpush1.bf16.msra.mxu0 0
    %328 = vmatprep.subr.bf16.mxu0 0
    %329 = vmatpush1.bf16.msra.mxu0 0
    %330 = vmatprep.subr.bf16.mxu0 0
    %331 = vmatpush1.bf16.msra.mxu0 0
    %332 = vmatprep.subr.bf16.mxu0 0
    %333 = vmatpush1.bf16.msra.mxu0 0
    %334 = vmatprep.subr.bf16.mxu0 0
    %335 = vmatpush1.bf16.msra.mxu0 0
    %336 = vmatprep.subr.bf16.mxu0 0
    %337 = vmatpush1.bf16.msra.mxu0 0
    %338 = vmatprep.mubr.bf16.mxu0 0
    %339 = vmatmul.mubr.bf16.gmra.mrb[0].mxu0 %v261
    %v340 = vpop.f32.mrb[0].mxu0
    %v341 = vadd.f32 %v175, %v340
    %v342 = vpop.f32.mrb[0].mxu0
    %v343 = vadd.f32 %v179, %v342
    %v344 = vpop.f32.mrb[0].mxu0
    %v345 = vadd.f32 %v175, %v344
    %v346 = vpop.f32.mrb[0].mxu0
    %v347 = vadd.f32 %v179, %v346
    %348 = vdwg.mxu0
    %349 = vmatprep.subr.bf16.mxu0 %v240
    %350 = vmatpush1.bf16.msra.mxu0 %v239
    %351 = vmatprep.subr.bf16.mxu0 %v246
    %352 = vmatpush1.bf16.msra.mxu0 %v245
    %353 = vmatprep.subr.bf16.mxu0 0
    %354 = vmatpush1.bf16.msra.mxu0 0
    %355 = vmatprep.subr.bf16.mxu0 0
    %356 = vmatpush1.bf16.msra.mxu0 0
    %357 = vmatprep.subr.bf16.mxu0 0
    %358 = vmatpush1.bf16.msra.mxu0 0
    %359 = vmatprep.subr.bf16.mxu0 0
    %360 = vmatpush1.bf16.msra.mxu0 0
    %361 = vmatprep.subr.bf16.mxu0 0
    %362 = vmatpush1.bf16.msra.mxu0 0
    %363 = vmatprep.subr.bf16.mxu0 0
    %364 = vmatpush1.bf16.msra.mxu0 0
    %365 = vmatprep.subr.bf16.mxu0 0
    %366 = vmatpush1.bf16.msra.mxu0 0
    %367 = vmatprep.subr.bf16.mxu0 0
    %368 = vmatpush1.bf16.msra.mxu0 0
    %369 = vmatprep.subr.bf16.mxu0 0
    %370 = vmatpush1.bf16.msra.mxu0 0
    %371 = vmatprep.subr.bf16.mxu0 0
    %372 = vmatpush1.bf16.msra.mxu0 0
    %373 = vmatprep.subr.bf16.mxu0 0
    %374 = vmatpush1.bf16.msra.mxu0 0
    %375 = vmatprep.subr.bf16.mxu0 0
    %376 = vmatpush1.bf16.msra.mxu0 0
    %377 = vmatprep.subr.bf16.mxu0 0
    %378 = vmatpush1.bf16.msra.mxu0 0
    %379 = vmatprep.subr.bf16.mxu0 0
    %380 = vmatpush1.bf16.msra.mxu0 0
    %381 = vmatprep.mubr.bf16.mxu0 0
    %382 = vmatmul.mubr.bf16.gmra.mrb[0].mxu0 %v261
    %v383 = vpop.f32.mrb[0].mxu0
    %v384 = vadd.f32 %v183, %v383
    %v385 = vpop.f32.mrb[0].mxu0
    %v386 = vadd.f32 %v187, %v385
    %v387 = vpop.f32.mrb[0].mxu0
    %v388 = vadd.f32 %v183, %v387
    %v389 = vpop.f32.mrb[0].mxu0
    %v390 = vadd.f32 %v187, %v389
    %391 = vdwg.mxu0
    %v392 = vmax.f32 %v298, 0.0
    %v393 = vmax.f32 %v300, 0.0
    %v394 = vmax.f32 %v341, 0.0
    %v395 = vmax.f32 %v343, 0.0
    %v396 = vmax.f32 %v384, 0.0
    %v397 = vmax.f32 %v386, 0.0
    %v398 = vmax.f32 %v302, 0.0
    %v399 = vmax.f32 %v304, 0.0
    %v400 = vmax.f32 %v345, 0.0
    %v401 = vmax.f32 %v347, 0.0
    %v402 = vmax.f32 %v388, 0.0
    %v403 = vmax.f32 %v390, 0.0
    %v404 = vpack.c.bf16 %v398, %v392
    %v405 = vpack.c.bf16 %v399, %v393
    %v406 = vpack.c.bf16 %v400, %v394
    %v407 = vpack.c.bf16 %v401, %v395
    %v408 = vpack.c.bf16 %v402, %v396
    %v409 = vpack.c.bf16 %v403, %v397
    %v410 = vld [vmem:[#allocation8] sm:$0xff]
    %v411 = vld [vmem:[#allocation8 + $0x8] sm:$0xff]
    %v412 = vld [vmem:[#allocation8 + $0x10] sm:$0xff]
    %v413 = vld [vmem:[#allocation8 + $0x18] sm:$0xff]
    %v414 = vld [vmem:[#allocation8 + $0x20] sm:$0xff]
    %v415 = vld [vmem:[#allocation8 + $0x28] sm:$0xff]
    %v416 = vld [vmem:[#allocation8 + $0x30] sm:$0xff]
    %v417 = vld [vmem:[#allocation8 + $0x38] sm:$0xff]
    %v418 = vld [vmem:[#allocation8 + $0x40] sm:$0xff]
    %v419 = vld [vmem:[#allocation8 + $0x48] sm:$0xff]
    %v420 = vld [vmem:[#allocation8 + $0x50] sm:$0xff]
    %v421 = vld [vmem:[#allocation8 + $0x58] sm:$0xff]
    %v422 = vld [vmem:[#allocation8 + $0x60] sm:$0xff]
    %v423 = vld [vmem:[#allocation8 + $0x68] sm:$0xff]
    %v424 = vld [vmem:[#allocation8 + $0x70] sm:$0xff]
    %v425 = vld [vmem:[#allocation8 + $0x78] sm:$0xff]
    %v426 = vld [vmem:[#allocation8 + $0x80] sm:$0xff]
    %v427 = vld [vmem:[#allocation8 + $0x88] sm:$0xff]
    %v428 = vld [vmem:[#allocation8 + $0x90] sm:$0xff]
    %v429 = vld [vmem:[#allocation8 + $0x98] sm:$0xff]
    %v430 = vld [vmem:[#allocation8 + $0xa0] sm:$0xff]
    %v431 = vld [vmem:[#allocation8 + $0xa8] sm:$0xff]
    %v432 = vld [vmem:[#allocation8 + $0xb0] sm:$0xff]
    %v433 = vld [vmem:[#allocation8 + $0xb8] sm:$0xff]
    %v434 = vld [vmem:[#allocation8 + $0xc0] sm:$0xff]
    %v435 = vld [vmem:[#allocation8 + $0xc8] sm:$0xff]
    %v436 = vld [vmem:[#allocation8 + $0xd0] sm:$0xff]
    %v437 = vld [vmem:[#allocation8 + $0xd8] sm:$0xff]
    %v438 = vld [vmem:[#allocation8 + $0xe0] sm:$0xff]
    %v439 = vld [vmem:[#allocation8 + $0xe8] sm:$0xff]
    %v440 = vld [vmem:[#allocation8 + $0xf0] sm:$0xff]
    %v441 = vld [vmem:[#allocation8 + $0xf8] sm:$0xff]
    %v442 = vld [vmem:[#allocation8 + $0x100] sm:$0xff]
    %v443 = vld [vmem:[#allocation8 + $0x108] sm:$0xff]
    %v444 = vld [vmem:[#allocation8 + $0x110] sm:$0xff]
    %v445 = vld [vmem:[#allocation8 + $0x118] sm:$0xff]
    %v446 = vld [vmem:[#allocation8 + $0x120] sm:$0xff]
    %v447 = vld [vmem:[#allocation8 + $0x128] sm:$0xff]
    %v448 = vld [vmem:[#allocation8 + $0x130] sm:$0xff]
    %v449 = vld [vmem:[#allocation8 + $0x138] sm:$0xff]
    %v450 = vld [vmem:[#allocation8 + $0x140] sm:$0xff]
    %v451 = vld [vmem:[#allocation8 + $0x148] sm:$0xff]
    %v452 = vld [vmem:[#allocation8 + $0x150] sm:$0xff]
    %v453 = vld [vmem:[#allocation8 + $0x158] sm:$0xff]
    %v454 = vld [vmem:[#allocation8 + $0x160] sm:$0xff]
    %v455 = vld [vmem:[#allocation8 + $0x168] sm:$0xff]
    %v456 = vld [vmem:[#allocation8 + $0x170] sm:$0xff]
    %v457 = vld [vmem:[#allocation8 + $0x178] sm:$0xff]
    %v458 = vld [vmem:[#allocation8 + $0x180] sm:$0xff]
    %v459 = vld [vmem:[#allocation8 + $0x188] sm:$0xff]
    %v460 = vld [vmem:[#allocation8 + $0x190] sm:$0xff]
    %v461 = vld [vmem:[#allocation8 + $0x198] sm:$0xff]
    %v462 = vld [vmem:[#allocation8 + $0x1a0] sm:$0xff]
    %v463 = vld [vmem:[#allocation8 + $0x1a8] sm:$0xff]
    %v464 = vld [vmem:[#allocation8 + $0x1b0] sm:$0xff]
    %v465 = vld [vmem:[#allocation8 + $0x1b8] sm:$0xff]
    %v466 = vld [vmem:[#allocation8 + $0x1c0] sm:$0xff]
    %v467 = vld [vmem:[#allocation8 + $0x1c8] sm:$0xff]
    %v468 = vld [vmem:[#allocation8 + $0x1d0] sm:$0xff]
    %v469 = vld [vmem:[#allocation8 + $0x1d8] sm:$0xff]
    %v470 = vld [vmem:[#allocation8 + $0x1e0] sm:$0xff]
    %v471 = vld [vmem:[#allocation8 + $0x1e8] sm:$0xff]
    %v472 = vld [vmem:[#allocation8 + $0x1f0] sm:$0xff]
    %v473 = vld [vmem:[#allocation8 + $0x1f8] sm:$0xff]
    %v474 = vld [vmem:[#allocation8 + $0x200] sm:$0xff]
    %v475 = vld [vmem:[#allocation8 + $0x208] sm:$0xff]
    %v476 = vld [vmem:[#allocation8 + $0x210] sm:$0xff]
    %v477 = vld [vmem:[#allocation8 + $0x218] sm:$0xff]
    %v478 = vld [vmem:[#allocation8 + $0x220] sm:$0xff]
    %v479 = vld [vmem:[#allocation8 + $0x228] sm:$0xff]
    %v480 = vld [vmem:[#allocation8 + $0x230] sm:$0xff]
    %v481 = vld [vmem:[#allocation8 + $0x238] sm:$0xff]
    %v482 = vld [vmem:[#allocation8 + $0x240] sm:$0xff]
    %v483 = vld [vmem:[#allocation8 + $0x248] sm:$0xff]
    %v484 = vld [vmem:[#allocation8 + $0x250] sm:$0xff]
    %v485 = vld [vmem:[#allocation8 + $0x258] sm:$0xff]
    %v486 = vld [vmem:[#allocation8 + $0x260] sm:$0xff]
    %v487 = vld [vmem:[#allocation8 + $0x268] sm:$0xff]
    %v488 = vld [vmem:[#allocation8 + $0x270] sm:$0xff]
    %v489 = vld [vmem:[#allocation8 + $0x278] sm:$0xff]
    %v490 = vld [vmem:[#allocation8 + $0x280] sm:$0xff]
    %v491 = vld [vmem:[#allocation8 + $0x288] sm:$0xff]
    %v492 = vld [vmem:[#allocation8 + $0x290] sm:$0xff]
    %v493 = vld [vmem:[#allocation8 + $0x298] sm:$0xff]
    %v494 = vld [vmem:[#allocation8 + $0x2a0] sm:$0xff]
    %v495 = vld [vmem:[#allocation8 + $0x2a8] sm:$0xff]
    %v496 = vld [vmem:[#allocation8 + $0x2b0] sm:$0xff]
    %v497 = vld [vmem:[#allocation8 + $0x2b8] sm:$0xff]
    %v498 = vld [vmem:[#allocation8 + $0x2c0] sm:$0xff]
    %v499 = vld [vmem:[#allocation8 + $0x2c8] sm:$0xff]
    %v500 = vld [vmem:[#allocation8 + $0x2d0] sm:$0xff]
    %v501 = vld [vmem:[#allocation8 + $0x2d8] sm:$0xff]
    %v502 = vld [vmem:[#allocation8 + $0x2e0] sm:$0xff]
    %v503 = vld [vmem:[#allocation8 + $0x2e8] sm:$0xff]
    %v504 = vld [vmem:[#allocation8 + $0x2f0] sm:$0xff]
    %v505 = vld [vmem:[#allocation8 + $0x2f8] sm:$0xff]
    %v506 = vld [vmem:[#allocation8 + $0x300] sm:$0xff]
    %v507 = vld [vmem:[#allocation8 + $0x308] sm:$0xff]
    %v508 = vld [vmem:[#allocation8 + $0x310] sm:$0xff]
    %v509 = vld [vmem:[#allocation8 + $0x318] sm:$0xff]
    %v510 = vld [vmem:[#allocation8 + $0x320] sm:$0xff]
    %v511 = vld [vmem:[#allocation8 + $0x328] sm:$0xff]
    %v512 = vld [vmem:[#allocation8 + $0x330] sm:$0xff]
    %v513 = vld [vmem:[#allocation8 + $0x338] sm:$0xff]
    %v514 = vld [vmem:[#allocation8 + $0x340] sm:$0xff]
    %v515 = vld [vmem:[#allocation8 + $0x348] sm:$0xff]
    %v516 = vld [vmem:[#allocation8 + $0x350] sm:$0xff]
    %v517 = vld [vmem:[#allocation8 + $0x358] sm:$0xff]
    %v518 = vld [vmem:[#allocation8 + $0x360] sm:$0xff]
    %v519 = vld [vmem:[#allocation8 + $0x368] sm:$0xff]
    %v520 = vld [vmem:[#allocation8 + $0x370] sm:$0xff]
    %v521 = vld [vmem:[#allocation8 + $0x378] sm:$0xff]
    %v522 = vld [vmem:[#allocation8 + $0x380] sm:$0xff]
    %v523 = vld [vmem:[#allocation8 + $0x388] sm:$0xff]
    %v524 = vld [vmem:[#allocation8 + $0x390] sm:$0xff]
    %v525 = vld [vmem:[#allocation8 + $0x398] sm:$0xff]
    %v526 = vld [vmem:[#allocation8 + $0x3a0] sm:$0xff]
    %v527 = vld [vmem:[#allocation8 + $0x3a8] sm:$0xff]
    %v528 = vld [vmem:[#allocation8 + $0x3b0] sm:$0xff]
    %v529 = vld [vmem:[#allocation8 + $0x3b8] sm:$0xff]
    %v530 = vld [vmem:[#allocation8 + $0x3c0] sm:$0xff]
    %v531 = vld [vmem:[#allocation8 + $0x3c8] sm:$0xff]
    %v532 = vld [vmem:[#allocation8 + $0x3d0] sm:$0xff]
    %v533 = vld [vmem:[#allocation8 + $0x3d8] sm:$0xff]
    %v534 = vld [vmem:[#allocation8 + $0x3e0] sm:$0xff]
    %v535 = vld [vmem:[#allocation8 + $0x3e8] sm:$0xff]
    %v536 = vld [vmem:[#allocation8 + $0x3f0] sm:$0xff]
    %v537 = vld [vmem:[#allocation8 + $0x3f8] sm:$0xff]
    %v538 = vld [vmem:[#allocation8 + $0x400] sm:$0xff]
    %v539 = vld [vmem:[#allocation8 + $0x408] sm:$0xff]
    %v540 = vld [vmem:[#allocation8 + $0x410] sm:$0xff]
    %v541 = vld [vmem:[#allocation8 + $0x418] sm:$0xff]
    %v542 = vld [vmem:[#allocation8 + $0x420] sm:$0xff]
    %v543 = vld [vmem:[#allocation8 + $0x428] sm:$0xff]
    %v544 = vld [vmem:[#allocation8 + $0x430] sm:$0xff]
    %v545 = vld [vmem:[#allocation8 + $0x438] sm:$0xff]
    %v546 = vld [vmem:[#allocation8 + $0x440] sm:$0xff]
    %v547 = vld [vmem:[#allocation8 + $0x448] sm:$0xff]
    %v548 = vld [vmem:[#allocation8 + $0x450] sm:$0xff]
    %v549 = vld [vmem:[#allocation8 + $0x458] sm:$0xff]
    %v550 = vld [vmem:[#allocation8 + $0x460] sm:$0xff]
    %v551 = vld [vmem:[#allocation8 + $0x468] sm:$0xff]
    %v552 = vld [vmem:[#allocation8 + $0x470] sm:$0xff]
    %v553 = vld [vmem:[#allocation8 + $0x478] sm:$0xff]
    %v554 = vld [vmem:[#allocation8 + $0x480] sm:$0xff]
    %v555 = vld [vmem:[#allocation8 + $0x488] sm:$0xff]
    %v556 = vld [vmem:[#allocation8 + $0x490] sm:$0xff]
    %v557 = vld [vmem:[#allocation8 + $0x498] sm:$0xff]
    %v558 = vld [vmem:[#allocation8 + $0x4a0] sm:$0xff]
    %v559 = vld [vmem:[#allocation8 + $0x4a8] sm:$0xff]
    %v560 = vld [vmem:[#allocation8 + $0x4b0] sm:$0xff]
    %v561 = vld [vmem:[#allocation8 + $0x4b8] sm:$0xff]
    %v562 = vld [vmem:[#allocation8 + $0x4c0] sm:$0xff]
    %v563 = vld [vmem:[#allocation8 + $0x4c8] sm:$0xff]
    %v564 = vld [vmem:[#allocation8 + $0x4d0] sm:$0xff]
    %v565 = vld [vmem:[#allocation8 + $0x4d8] sm:$0xff]
    %v566 = vld [vmem:[#allocation8 + $0x4e0] sm:$0xff]
    %v567 = vld [vmem:[#allocation8 + $0x4e8] sm:$0xff]
    %v568 = vld [vmem:[#allocation8 + $0x4f0] sm:$0xff]
    %v569 = vld [vmem:[#allocation8 + $0x4f8] sm:$0xff]
    %v570 = vld [vmem:[#allocation8 + $0x500] sm:$0xff]
    %v571 = vld [vmem:[#allocation8 + $0x508] sm:$0xff]
    %v572 = vld [vmem:[#allocation8 + $0x510] sm:$0xff]
    %v573 = vld [vmem:[#allocation8 + $0x518] sm:$0xff]
    %v574 = vld [vmem:[#allocation8 + $0x520] sm:$0xff]
    %v575 = vld [vmem:[#allocation8 + $0x528] sm:$0xff]
    %v576 = vld [vmem:[#allocation8 + $0x530] sm:$0xff]
    %v577 = vld [vmem:[#allocation8 + $0x538] sm:$0xff]
    %v578 = vld [vmem:[#allocation8 + $0x540] sm:$0xff]
    %v579 = vld [vmem:[#allocation8 + $0x548] sm:$0xff]
    %v580 = vld [vmem:[#allocation8 + $0x550] sm:$0xff]
    %v581 = vld [vmem:[#allocation8 + $0x558] sm:$0xff]
    %v582 = vld [vmem:[#allocation8 + $0x560] sm:$0xff]
    %v583 = vld [vmem:[#allocation8 + $0x568] sm:$0xff]
    %v584 = vld [vmem:[#allocation8 + $0x570] sm:$0xff]
    %v585 = vld [vmem:[#allocation8 + $0x578] sm:$0xff]
    %v586 = vld [vmem:[#allocation8 + $0x580] sm:$0xff]
    %v587 = vld [vmem:[#allocation8 + $0x588] sm:$0xff]
    %v588 = vld [vmem:[#allocation8 + $0x590] sm:$0xff]
    %v589 = vld [vmem:[#allocation8 + $0x598] sm:$0xff]
    %v590 = vld [vmem:[#allocation8 + $0x5a0] sm:$0xff]
    %v591 = vld [vmem:[#allocation8 + $0x5a8] sm:$0xff]
    %v592 = vld [vmem:[#allocation8 + $0x5b0] sm:$0xff]
    %v593 = vld [vmem:[#allocation8 + $0x5b8] sm:$0xff]
    %v594 = vld [vmem:[#allocation8 + $0x5c0] sm:$0xff]
    %v595 = vld [vmem:[#allocation8 + $0x5c8] sm:$0xff]
    %v596 = vld [vmem:[#allocation8 + $0x5d0] sm:$0xff]
    %v597 = vld [vmem:[#allocation8 + $0x5d8] sm:$0xff]
    %v598 = vld [vmem:[#allocation8 + $0x5e0] sm:$0xff]
    %v599 = vld [vmem:[#allocation8 + $0x5e8] sm:$0xff]
    %v600 = vld [vmem:[#allocation8 + $0x5f0] sm:$0xff]
    %v601 = vld [vmem:[#allocation8 + $0x5f8] sm:$0xff]
    %v602 = vld [vmem:[#allocation8 + $0x600] sm:$0xff]
    %v603 = vld [vmem:[#allocation8 + $0x608] sm:$0xff]
    %v604 = vld [vmem:[#allocation8 + $0x610] sm:$0xff]
    %v605 = vld [vmem:[#allocation8 + $0x618] sm:$0xff]
    %v606 = vld [vmem:[#allocation8 + $0x620] sm:$0xff]
    %v607 = vld [vmem:[#allocation8 + $0x628] sm:$0xff]
    %v608 = vld [vmem:[#allocation8 + $0x630] sm:$0xff]
    %v609 = vld [vmem:[#allocation8 + $0x638] sm:$0xff]
    %v610 = vld [vmem:[#allocation8 + $0x640] sm:$0xff]
    %v611 = vld [vmem:[#allocation8 + $0x648] sm:$0xff]
    %v612 = vld [vmem:[#allocation8 + $0x650] sm:$0xff]
    %v613 = vld [vmem:[#allocation8 + $0x658] sm:$0xff]
    %v614 = vld [vmem:[#allocation8 + $0x660] sm:$0xff]
    %v615 = vld [vmem:[#allocation8 + $0x668] sm:$0xff]
    %v616 = vld [vmem:[#allocation8 + $0x670] sm:$0xff]
    %v617 = vld [vmem:[#allocation8 + $0x678] sm:$0xff]
    %v618 = vld [vmem:[#allocation8 + $0x680] sm:$0xff]
    %v619 = vld [vmem:[#allocation8 + $0x688] sm:$0xff]
    %v620 = vld [vmem:[#allocation8 + $0x690] sm:$0xff]
    %v621 = vld [vmem:[#allocation8 + $0x698] sm:$0xff]
    %v622 = vld [vmem:[#allocation8 + $0x6a0] sm:$0xff]
    %v623 = vld [vmem:[#allocation8 + $0x6a8] sm:$0xff]
    %v624 = vld [vmem:[#allocation8 + $0x6b0] sm:$0xff]
    %v625 = vld [vmem:[#allocation8 + $0x6b8] sm:$0xff]
    %v626 = vld [vmem:[#allocation8 + $0x6c0] sm:$0xff]
    %v627 = vld [vmem:[#allocation8 + $0x6c8] sm:$0xff]
    %v628 = vld [vmem:[#allocation8 + $0x6d0] sm:$0xff]
    %v629 = vld [vmem:[#allocation8 + $0x6d8] sm:$0xff]
    %v630 = vld [vmem:[#allocation8 + $0x6e0] sm:$0xff]
    %v631 = vld [vmem:[#allocation8 + $0x6e8] sm:$0xff]
    %v632 = vld [vmem:[#allocation8 + $0x6f0] sm:$0xff]
    %v633 = vld [vmem:[#allocation8 + $0x6f8] sm:$0xff]
    %v634 = vld [vmem:[#allocation8 + $0x700] sm:$0xff]
    %v635 = vld [vmem:[#allocation8 + $0x708] sm:$0xff]
    %v636 = vld [vmem:[#allocation8 + $0x710] sm:$0xff]
    %v637 = vld [vmem:[#allocation8 + $0x718] sm:$0xff]
    %v638 = vld [vmem:[#allocation8 + $0x720] sm:$0xff]
    %v639 = vld [vmem:[#allocation8 + $0x728] sm:$0xff]
    %v640 = vld [vmem:[#allocation8 + $0x730] sm:$0xff]
    %v641 = vld [vmem:[#allocation8 + $0x738] sm:$0xff]
    %v642 = vld [vmem:[#allocation8 + $0x740] sm:$0xff]
    %v643 = vld [vmem:[#allocation8 + $0x748] sm:$0xff]
    %v644 = vld [vmem:[#allocation8 + $0x750] sm:$0xff]
    %v645 = vld [vmem:[#allocation8 + $0x758] sm:$0xff]
    %v646 = vld [vmem:[#allocation8 + $0x760] sm:$0xff]
    %v647 = vld [vmem:[#allocation8 + $0x768] sm:$0xff]
    %v648 = vld [vmem:[#allocation8 + $0x770] sm:$0xff]
    %v649 = vld [vmem:[#allocation8 + $0x778] sm:$0xff]
    %v650 = vld [vmem:[#allocation8 + $0x780] sm:$0xff]
    %v651 = vld [vmem:[#allocation8 + $0x788] sm:$0xff]
    %v652 = vld [vmem:[#allocation8 + $0x790] sm:$0xff]
    %v653 = vld [vmem:[#allocation8 + $0x798] sm:$0xff]
    %v654 = vld [vmem:[#allocation8 + $0x7a0] sm:$0xff]
    %v655 = vld [vmem:[#allocation8 + $0x7a8] sm:$0xff]
    %v656 = vld [vmem:[#allocation8 + $0x7b0] sm:$0xff]
    %v657 = vld [vmem:[#allocation8 + $0x7b8] sm:$0xff]
    %v658 = vld [vmem:[#allocation8 + $0x7c0] sm:$0xff]
    %v659 = vld [vmem:[#allocation8 + $0x7c8] sm:$0xff]
    %v660 = vld [vmem:[#allocation8 + $0x7d0] sm:$0xff]
    %v661 = vld [vmem:[#allocation8 + $0x7d8] sm:$0xff]
    %v662 = vld [vmem:[#allocation8 + $0x7e0] sm:$0xff]
    %v663 = vld [vmem:[#allocation8 + $0x7e8] sm:$0xff]
    %v664 = vld [vmem:[#allocation8 + $0x7f0] sm:$0xff]
    %v665 = vld [vmem:[#allocation8 + $0x7f8] sm:$0xff]
    %v666 = vld [vmem:[#allocation8 + $0x800] sm:$0xff]
    %v667 = vld [vmem:[#allocation8 + $0x808] sm:$0xff]
    %v668 = vld [vmem:[#allocation8 + $0x810] sm:$0xff]
    %v669 = vld [vmem:[#allocation8 + $0x818] sm:$0xff]
    %v670 = vld [vmem:[#allocation8 + $0x820] sm:$0xff]
    %v671 = vld [vmem:[#allocation8 + $0x828] sm:$0xff]
    %v672 = vld [vmem:[#allocation8 + $0x830] sm:$0xff]
    %v673 = vld [vmem:[#allocation8 + $0x838] sm:$0xff]
    %v674 = vld [vmem:[#allocation8 + $0x840] sm:$0xff]
    %v675 = vld [vmem:[#allocation8 + $0x848] sm:$0xff]
    %v676 = vld [vmem:[#allocation8 + $0x850] sm:$0xff]
    %v677 = vld [vmem:[#allocation8 + $0x858] sm:$0xff]
    %v678 = vld [vmem:[#allocation8 + $0x860] sm:$0xff]
    %v679 = vld [vmem:[#allocation8 + $0x868] sm:$0xff]
    %v680 = vld [vmem:[#allocation8 + $0x870] sm:$0xff]
    %v681 = vld [vmem:[#allocation8 + $0x878] sm:$0xff]
    %v682 = vld [vmem:[#allocation8 + $0x880] sm:$0xff]
    %v683 = vld [vmem:[#allocation8 + $0x888] sm:$0xff]
    %v684 = vld [vmem:[#allocation8 + $0x890] sm:$0xff]
    %v685 = vld [vmem:[#allocation8 + $0x898] sm:$0xff]
    %v686 = vld [vmem:[#allocation8 + $0x8a0] sm:$0xff]
    %v687 = vld [vmem:[#allocation8 + $0x8a8] sm:$0xff]
    %v688 = vld [vmem:[#allocation8 + $0x8b0] sm:$0xff]
    %v689 = vld [vmem:[#allocation8 + $0x8b8] sm:$0xff]
    %v690 = vld [vmem:[#allocation8 + $0x8c0] sm:$0xff]
    %v691 = vld [vmem:[#allocation8 + $0x8c8] sm:$0xff]
    %v692 = vld [vmem:[#allocation8 + $0x8d0] sm:$0xff]
    %v693 = vld [vmem:[#allocation8 + $0x8d8] sm:$0xff]
    %v694 = vld [vmem:[#allocation8 + $0x8e0] sm:$0xff]
    %v695 = vld [vmem:[#allocation8 + $0x8e8] sm:$0xff]
    %v696 = vld [vmem:[#allocation8 + $0x8f0] sm:$0xff]
    %v697 = vld [vmem:[#allocation8 + $0x8f8] sm:$0xff]
    %v698 = vld [vmem:[#allocation8 + $0x900] sm:$0xff]
    %v699 = vld [vmem:[#allocation8 + $0x908] sm:$0xff]
    %v700 = vld [vmem:[#allocation8 + $0x910] sm:$0xff]
    %v701 = vld [vmem:[#allocation8 + $0x918] sm:$0xff]
    %v702 = vld [vmem:[#allocation8 + $0x920] sm:$0xff]
    %v703 = vld [vmem:[#allocation8 + $0x928] sm:$0xff]
    %v704 = vld [vmem:[#allocation8 + $0x930] sm:$0xff]
    %v705 = vld [vmem:[#allocation8 + $0x938] sm:$0xff]
    %v706 = vld [vmem:[#allocation8 + $0x940] sm:$0xff]
    %v707 = vld [vmem:[#allocation8 + $0x948] sm:$0xff]
    %v708 = vld [vmem:[#allocation8 + $0x950] sm:$0xff]
    %v709 = vld [vmem:[#allocation8 + $0x958] sm:$0xff]
    %v710 = vld [vmem:[#allocation8 + $0x960] sm:$0xff]
    %v711 = vld [vmem:[#allocation8 + $0x968] sm:$0xff]
    %v712 = vld [vmem:[#allocation8 + $0x970] sm:$0xff]
    %v713 = vld [vmem:[#allocation8 + $0x978] sm:$0xff]
    %v714 = vld [vmem:[#allocation8 + $0x980] sm:$0xff]
    %v715 = vld [vmem:[#allocation8 + $0x988] sm:$0xff]
    %v716 = vld [vmem:[#allocation8 + $0x990] sm:$0xff]
    %v717 = vld [vmem:[#allocation8 + $0x998] sm:$0xff]
    %v718 = vld [vmem:[#allocation8 + $0x9a0] sm:$0xff]
    %v719 = vld [vmem:[#allocation8 + $0x9a8] sm:$0xff]
    %v720 = vld [vmem:[#allocation8 + $0x9b0] sm:$0xff]
    %v721 = vld [vmem:[#allocation8 + $0x9b8] sm:$0xff]
    %v722 = vld [vmem:[#allocation8 + $0x9c0] sm:$0xff]
    %v723 = vld [vmem:[#allocation8 + $0x9c8] sm:$0xff]
    %v724 = vld [vmem:[#allocation8 + $0x9d0] sm:$0xff]
    %v725 = vld [vmem:[#allocation8 + $0x9d8] sm:$0xff]
    %v726 = vld [vmem:[#allocation8 + $0x9e0] sm:$0xff]
    %v727 = vld [vmem:[#allocation8 + $0x9e8] sm:$0xff]
    %v728 = vld [vmem:[#allocation8 + $0x9f0] sm:$0xff]
    %v729 = vld [vmem:[#allocation8 + $0x9f8] sm:$0xff]
    %v730 = vld [vmem:[#allocation8 + $0xa00] sm:$0xff]
    %v731 = vld [vmem:[#allocation8 + $0xa08] sm:$0xff]
    %v732 = vld [vmem:[#allocation8 + $0xa10] sm:$0xff]
    %v733 = vld [vmem:[#allocation8 + $0xa18] sm:$0xff]
    %v734 = vld [vmem:[#allocation8 + $0xa20] sm:$0xff]
    %v735 = vld [vmem:[#allocation8 + $0xa28] sm:$0xff]
    %v736 = vld [vmem:[#allocation8 + $0xa30] sm:$0xff]
    %v737 = vld [vmem:[#allocation8 + $0xa38] sm:$0xff]
    %v738 = vld [vmem:[#allocation8 + $0xa40] sm:$0xff]
    %v739 = vld [vmem:[#allocation8 + $0xa48] sm:$0xff]
    %v740 = vld [vmem:[#allocation8 + $0xa50] sm:$0xff]
    %v741 = vld [vmem:[#allocation8 + $0xa58] sm:$0xff]
    %v742 = vld [vmem:[#allocation8 + $0xa60] sm:$0xff]
    %v743 = vld [vmem:[#allocation8 + $0xa68] sm:$0xff]
    %v744 = vld [vmem:[#allocation8 + $0xa70] sm:$0xff]
    %v745 = vld [vmem:[#allocation8 + $0xa78] sm:$0xff]
    %v746 = vld [vmem:[#allocation8 + $0xa80] sm:$0xff]
    %v747 = vld [vmem:[#allocation8 + $0xa88] sm:$0xff]
    %v748 = vld [vmem:[#allocation8 + $0xa90] sm:$0xff]
    %v749 = vld [vmem:[#allocation8 + $0xa98] sm:$0xff]
    %v750 = vld [vmem:[#allocation8 + $0xaa0] sm:$0xff]
    %v751 = vld [vmem:[#allocation8 + $0xaa8] sm:$0xff]
    %v752 = vld [vmem:[#allocation8 + $0xab0] sm:$0xff]
    %v753 = vld [vmem:[#allocation8 + $0xab8] sm:$0xff]
    %v754 = vld [vmem:[#allocation8 + $0xac0] sm:$0xff]
    %v755 = vld [vmem:[#allocation8 + $0xac8] sm:$0xff]
    %v756 = vld [vmem:[#allocation8 + $0xad0] sm:$0xff]
    %v757 = vld [vmem:[#allocation8 + $0xad8] sm:$0xff]
    %v758 = vld [vmem:[#allocation8 + $0xae0] sm:$0xff]
    %v759 = vld [vmem:[#allocation8 + $0xae8] sm:$0xff]
    %v760 = vld [vmem:[#allocation8 + $0xaf0] sm:$0xff]
    %v761 = vld [vmem:[#allocation8 + $0xaf8] sm:$0xff]
    %v762 = vld [vmem:[#allocation8 + $0xb00] sm:$0xff]
    %v763 = vld [vmem:[#allocation8 + $0xb08] sm:$0xff]
    %v764 = vld [vmem:[#allocation8 + $0xb10] sm:$0xff]
    %v765 = vld [vmem:[#allocation8 + $0xb18] sm:$0xff]
    %v766 = vld [vmem:[#allocation8 + $0xb20] sm:$0xff]
    %v767 = vld [vmem:[#allocation8 + $0xb28] sm:$0xff]
    %v768 = vld [vmem:[#allocation8 + $0xb30] sm:$0xff]
    %v769 = vld [vmem:[#allocation8 + $0xb38] sm:$0xff]
    %v770 = vld [vmem:[#allocation8 + $0xb40] sm:$0xff]
    %v771 = vld [vmem:[#allocation8 + $0xb48] sm:$0xff]
    %v772 = vld [vmem:[#allocation8 + $0xb50] sm:$0xff]
    %v773 = vld [vmem:[#allocation8 + $0xb58] sm:$0xff]
    %v774 = vld [vmem:[#allocation8 + $0xb60] sm:$0xff]
    %v775 = vld [vmem:[#allocation8 + $0xb68] sm:$0xff]
    %v776 = vld [vmem:[#allocation8 + $0xb70] sm:$0xff]
    %v777 = vld [vmem:[#allocation8 + $0xb78] sm:$0xff]
    %v778 = vld [vmem:[#allocation8 + $0xb80] sm:$0xff]
    %v779 = vld [vmem:[#allocation8 + $0xb88] sm:$0xff]
    %v780 = vld [vmem:[#allocation8 + $0xb90] sm:$0xff]
    %v781 = vld [vmem:[#allocation8 + $0xb98] sm:$0xff]
    %v782 = vld [vmem:[#allocation8 + $0xba0] sm:$0xff]
    %v783 = vld [vmem:[#allocation8 + $0xba8] sm:$0xff]
    %v784 = vld [vmem:[#allocation8 + $0xbb0] sm:$0xff]
    %v785 = vld [vmem:[#allocation8 + $0xbb8] sm:$0xff]
    %v786 = vld [vmem:[#allocation8 + $0xbc0] sm:$0xff]
    %v787 = vld [vmem:[#allocation8 + $0xbc8] sm:$0xff]
    %v788 = vld [vmem:[#allocation8 + $0xbd0] sm:$0xff]
    %v789 = vld [vmem:[#allocation8 + $0xbd8] sm:$0xff]
    %v790 = vld [vmem:[#allocation8 + $0xbe0] sm:$0xff]
    %v791 = vld [vmem:[#allocation8 + $0xbe8] sm:$0xff]
    %v792 = vld [vmem:[#allocation8 + $0xbf0] sm:$0xff]
    %v793 = vld [vmem:[#allocation8 + $0xbf8] sm:$0xff]
    %v794 = vld [vmem:[#allocation10] sm:$0xff]
    %v796 = vlaneseq
    %v797 = vshrl.u32 %v796, 7
    %v798 = vsub.s32 0, %v797
    %v799 = vrot.slane %v794, %v798
    %v800 = vlaneseq
    %v801 = vshrl.u32 %v800, 7
    %v802 = vsub.s32 1, %v801
    %v803 = vrot.slane %v794, %v802
    %v804 = vlaneseq
    %v805 = vshrl.u32 %v804, 7
    %v806 = vsub.s32 2, %v805
    %v807 = vrot.slane %v794, %v806
    %v808 = vlaneseq
    %v809 = vshrl.u32 %v808, 7
    %v810 = vsub.s32 3, %v809
    %v811 = vrot.slane %v794, %v810
    %v812 = vlaneseq
    %v813 = vshrl.u32 %v812, 7
    %v814 = vsub.s32 4, %v813
    %v815 = vrot.slane %v794, %v814
    %v816 = vlaneseq
    %v817 = vshrl.u32 %v816, 7
    %v818 = vsub.s32 5, %v817
    %v819 = vrot.slane %v794, %v818
    %v820 = vlaneseq
    %v821 = vshrl.u32 %v820, 7
    %v822 = vsub.s32 6, %v821
    %v823 = vrot.slane %v794, %v822
    %v824 = vlaneseq
    %v825 = vshrl.u32 %v824, 7
    %v826 = vsub.s32 7, %v825
    %v827 = vrot.slane %v794, %v826
    %v1220 = vunpack.c.l.b16 %v410
    %v1221 = vunpack.c.h.b16 %v410
    %v1222 = vunpack.c.l.b16 %v411
    %v1223 = vunpack.c.h.b16 %v411
    %v1224 = vunpack.c.l.b16 %v412
    %v1225 = vunpack.c.h.b16 %v412
    %v1226 = vunpack.c.l.b16 %v413
    %v1227 = vunpack.c.h.b16 %v413
    %v1228 = vunpack.c.l.b16 %v414
    %v1229 = vunpack.c.h.b16 %v414
    %v1230 = vunpack.c.l.b16 %v415
    %v1231 = vunpack.c.h.b16 %v415
    %v1232 = vunpack.c.l.b16 %v416
    %v1233 = vunpack.c.h.b16 %v416
    %v1234 = vunpack.c.l.b16 %v417
    %v1235 = vunpack.c.h.b16 %v417
    %v1236 = vunpack.c.l.b16 %v418
    %v1237 = vunpack.c.h.b16 %v418
    %v1238 = vunpack.c.l.b16 %v419
    %v1239 = vunpack.c.h.b16 %v419
    %v1240 = vunpack.c.l.b16 %v420
    %v1241 = vunpack.c.h.b16 %v420
    %v1242 = vunpack.c.l.b16 %v421
    %v1243 = vunpack.c.h.b16 %v421
    %v1244 = vunpack.c.l.b16 %v422
    %v1245 = vunpack.c.h.b16 %v422
    %v1246 = vunpack.c.l.b16 %v423
    %v1247 = vunpack.c.h.b16 %v423
    %v1248 = vunpack.c.l.b16 %v424
    %v1249 = vunpack.c.h.b16 %v424
    %v1250 = vunpack.c.l.b16 %v425
    %v1251 = vunpack.c.h.b16 %v425
    %v1252 = vunpack.c.l.b16 %v426
    %v1253 = vunpack.c.h.b16 %v426
    %v1254 = vunpack.c.l.b16 %v427
    %v1255 = vunpack.c.h.b16 %v427
    %v1256 = vunpack.c.l.b16 %v428
    %v1257 = vunpack.c.h.b16 %v428
    %v1258 = vunpack.c.l.b16 %v429
    %v1259 = vunpack.c.h.b16 %v429
    %v1260 = vunpack.c.l.b16 %v430
    %v1261 = vunpack.c.h.b16 %v430
    %v1262 = vunpack.c.l.b16 %v431
    %v1263 = vunpack.c.h.b16 %v431
    %v1264 = vunpack.c.l.b16 %v432
    %v1265 = vunpack.c.h.b16 %v432
    %v1266 = vunpack.c.l.b16 %v433
    %v1267 = vunpack.c.h.b16 %v433
    %v1268 = vunpack.c.l.b16 %v434
    %v1269 = vunpack.c.h.b16 %v434
    %v1270 = vunpack.c.l.b16 %v435
    %v1271 = vunpack.c.h.b16 %v435
    %v1272 = vunpack.c.l.b16 %v436
    %v1273 = vunpack.c.h.b16 %v436
    %v1274 = vunpack.c.l.b16 %v437
    %v1275 = vunpack.c.h.b16 %v437
    %v1276 = vunpack.c.l.b16 %v438
    %v1277 = vunpack.c.h.b16 %v438
    %v1278 = vunpack.c.l.b16 %v439
    %v1279 = vunpack.c.h.b16 %v439
    %v1280 = vunpack.c.l.b16 %v440
    %v1281 = vunpack.c.h.b16 %v440
    %v1282 = vunpack.c.l.b16 %v441
    %v1283 = vunpack.c.h.b16 %v441
    %v1284 = vunpack.c.l.b16 %v442
    %v1285 = vunpack.c.h.b16 %v442
    %v1286 = vunpack.c.l.b16 %v443
    %v1287 = vunpack.c.h.b16 %v443
    %v1288 = vunpack.c.l.b16 %v444
    %v1289 = vunpack.c.h.b16 %v444
    %v1290 = vunpack.c.l.b16 %v445
    %v1291 = vunpack.c.h.b16 %v445
    %v1292 = vunpack.c.l.b16 %v446
    %v1293 = vunpack.c.h.b16 %v446
    %v1294 = vunpack.c.l.b16 %v447
    %v1295 = vunpack.c.h.b16 %v447
    %v1296 = vunpack.c.l.b16 %v448
    %v1297 = vunpack.c.h.b16 %v448
    %v1298 = vunpack.c.l.b16 %v449
    %v1299 = vunpack.c.h.b16 %v449
    %v1300 = vunpack.c.l.b16 %v450
    %v1301 = vunpack.c.h.b16 %v450
    %v1302 = vunpack.c.l.b16 %v451
    %v1303 = vunpack.c.h.b16 %v451
    %v1304 = vunpack.c.l.b16 %v452
    %v1305 = vunpack.c.h.b16 %v452
    %v1306 = vunpack.c.l.b16 %v453
    %v1307 = vunpack.c.h.b16 %v453
    %v1308 = vunpack.c.l.b16 %v454
    %v1309 = vunpack.c.h.b16 %v454
    %v1310 = vunpack.c.l.b16 %v455
    %v1311 = vunpack.c.h.b16 %v455
    %v1312 = vunpack.c.l.b16 %v456
    %v1313 = vunpack.c.h.b16 %v456
    %v1314 = vunpack.c.l.b16 %v457
    %v1315 = vunpack.c.h.b16 %v457
    %v1316 = vunpack.c.l.b16 %v458
    %v1317 = vunpack.c.h.b16 %v458
    %v1318 = vunpack.c.l.b16 %v459
    %v1319 = vunpack.c.h.b16 %v459
    %v1320 = vunpack.c.l.b16 %v460
    %v1321 = vunpack.c.h.b16 %v460
    %v1322 = vunpack.c.l.b16 %v461
    %v1323 = vunpack.c.h.b16 %v461
    %v1324 = vunpack.c.l.b16 %v462
    %v1325 = vunpack.c.h.b16 %v462
    %v1326 = vunpack.c.l.b16 %v463
    %v1327 = vunpack.c.h.b16 %v463
    %v1328 = vunpack.c.l.b16 %v464
    %v1329 = vunpack.c.h.b16 %v464
    %v1330 = vunpack.c.l.b16 %v465
    %v1331 = vunpack.c.h.b16 %v465
    %v1332 = vunpack.c.l.b16 %v466
    %v1333 = vunpack.c.h.b16 %v466
    %v1334 = vunpack.c.l.b16 %v467
    %v1335 = vunpack.c.h.b16 %v467
    %v1336 = vunpack.c.l.b16 %v468
    %v1337 = vunpack.c.h.b16 %v468
    %v1338 = vunpack.c.l.b16 %v469
    %v1339 = vunpack.c.h.b16 %v469
    %v1340 = vunpack.c.l.b16 %v470
    %v1341 = vunpack.c.h.b16 %v470
    %v1342 = vunpack.c.l.b16 %v471
    %v1343 = vunpack.c.h.b16 %v471
    %v1344 = vunpack.c.l.b16 %v472
    %v1345 = vunpack.c.h.b16 %v472
    %v1346 = vunpack.c.l.b16 %v473
    %v1347 = vunpack.c.h.b16 %v473
    %v1348 = vunpack.c.l.b16 %v474
    %v1349 = vunpack.c.h.b16 %v474
    %v1350 = vunpack.c.l.b16 %v475
    %v1351 = vunpack.c.h.b16 %v475
    %v1352 = vunpack.c.l.b16 %v476
    %v1353 = vunpack.c.h.b16 %v476
    %v1354 = vunpack.c.l.b16 %v477
    %v1355 = vunpack.c.h.b16 %v477
    %v1356 = vunpack.c.l.b16 %v478
    %v1357 = vunpack.c.h.b16 %v478
    %v1358 = vunpack.c.l.b16 %v479
    %v1359 = vunpack.c.h.b16 %v479
    %v1360 = vunpack.c.l.b16 %v480
    %v1361 = vunpack.c.h.b16 %v480
    %v1362 = vunpack.c.l.b16 %v481
    %v1363 = vunpack.c.h.b16 %v481
    %v1364 = vunpack.c.l.b16 %v482
    %v1365 = vunpack.c.h.b16 %v482
    %v1366 = vunpack.c.l.b16 %v483
    %v1367 = vunpack.c.h.b16 %v483
    %v1368 = vunpack.c.l.b16 %v484
    %v1369 = vunpack.c.h.b16 %v484
    %v1370 = vunpack.c.l.b16 %v485
    %v1371 = vunpack.c.h.b16 %v485
    %v1372 = vunpack.c.l.b16 %v486
    %v1373 = vunpack.c.h.b16 %v486
    %v1374 = vunpack.c.l.b16 %v487
    %v1375 = vunpack.c.h.b16 %v487
    %v1376 = vunpack.c.l.b16 %v488
    %v1377 = vunpack.c.h.b16 %v488
    %v1378 = vunpack.c.l.b16 %v489
    %v1379 = vunpack.c.h.b16 %v489
    %v1380 = vunpack.c.l.b16 %v490
    %v1381 = vunpack.c.h.b16 %v490
    %v1382 = vunpack.c.l.b16 %v491
    %v1383 = vunpack.c.h.b16 %v491
    %v1384 = vunpack.c.l.b16 %v492
    %v1385 = vunpack.c.h.b16 %v492
    %v1386 = vunpack.c.l.b16 %v493
    %v1387 = vunpack.c.h.b16 %v493
    %v1388 = vunpack.c.l.b16 %v494
    %v1389 = vunpack.c.h.b16 %v494
    %v1390 = vunpack.c.l.b16 %v495
    %v1391 = vunpack.c.h.b16 %v495
    %v1392 = vunpack.c.l.b16 %v496
    %v1393 = vunpack.c.h.b16 %v496
    %v1394 = vunpack.c.l.b16 %v497
    %v1395 = vunpack.c.h.b16 %v497
    %v1396 = vunpack.c.l.b16 %v498
    %v1397 = vunpack.c.h.b16 %v498
    %v1398 = vunpack.c.l.b16 %v499
    %v1399 = vunpack.c.h.b16 %v499
    %v1400 = vunpack.c.l.b16 %v500
    %v1401 = vunpack.c.h.b16 %v500
    %v1402 = vunpack.c.l.b16 %v501
    %v1403 = vunpack.c.h.b16 %v501
    %v1404 = vunpack.c.l.b16 %v502
    %v1405 = vunpack.c.h.b16 %v502
    %v1406 = vunpack.c.l.b16 %v503
    %v1407 = vunpack.c.h.b16 %v503
    %v1408 = vunpack.c.l.b16 %v504
    %v1409 = vunpack.c.h.b16 %v504
    %v1410 = vunpack.c.l.b16 %v505
    %v1411 = vunpack.c.h.b16 %v505
    %v1412 = vunpack.c.l.b16 %v506
    %v1413 = vunpack.c.h.b16 %v506
    %v1414 = vunpack.c.l.b16 %v507
    %v1415 = vunpack.c.h.b16 %v507
    %v1416 = vunpack.c.l.b16 %v508
    %v1417 = vunpack.c.h.b16 %v508
    %v1418 = vunpack.c.l.b16 %v509
    %v1419 = vunpack.c.h.b16 %v509
    %v1420 = vunpack.c.l.b16 %v510
    %v1421 = vunpack.c.h.b16 %v510
    %v1422 = vunpack.c.l.b16 %v511
    %v1423 = vunpack.c.h.b16 %v511
    %v1424 = vunpack.c.l.b16 %v512
    %v1425 = vunpack.c.h.b16 %v512
    %v1426 = vunpack.c.l.b16 %v513
    %v1427 = vunpack.c.h.b16 %v513
    %v1428 = vunpack.c.l.b16 %v514
    %v1429 = vunpack.c.h.b16 %v514
    %v1430 = vunpack.c.l.b16 %v515
    %v1431 = vunpack.c.h.b16 %v515
    %v1432 = vunpack.c.l.b16 %v516
    %v1433 = vunpack.c.h.b16 %v516
    %v1434 = vunpack.c.l.b16 %v517
    %v1435 = vunpack.c.h.b16 %v517
    %v1436 = vunpack.c.l.b16 %v518
    %v1437 = vunpack.c.h.b16 %v518
    %v1438 = vunpack.c.l.b16 %v519
    %v1439 = vunpack.c.h.b16 %v519
    %v1440 = vunpack.c.l.b16 %v520
    %v1441 = vunpack.c.h.b16 %v520
    %v1442 = vunpack.c.l.b16 %v521
    %v1443 = vunpack.c.h.b16 %v521
    %v1444 = vunpack.c.l.b16 %v522
    %v1445 = vunpack.c.h.b16 %v522
    %v1446 = vunpack.c.l.b16 %v523
    %v1447 = vunpack.c.h.b16 %v523
    %v1448 = vunpack.c.l.b16 %v524
    %v1449 = vunpack.c.h.b16 %v524
    %v1450 = vunpack.c.l.b16 %v525
    %v1451 = vunpack.c.h.b16 %v525
    %v1452 = vunpack.c.l.b16 %v526
    %v1453 = vunpack.c.h.b16 %v526
    %v1454 = vunpack.c.l.b16 %v527
    %v1455 = vunpack.c.h.b16 %v527
    %v1456 = vunpack.c.l.b16 %v528
    %v1457 = vunpack.c.h.b16 %v528
    %v1458 = vunpack.c.l.b16 %v529
    %v1459 = vunpack.c.h.b16 %v529
    %v1460 = vunpack.c.l.b16 %v530
    %v1461 = vunpack.c.h.b16 %v530
    %v1462 = vunpack.c.l.b16 %v531
    %v1463 = vunpack.c.h.b16 %v531
    %v1464 = vunpack.c.l.b16 %v532
    %v1465 = vunpack.c.h.b16 %v532
    %v1466 = vunpack.c.l.b16 %v533
    %v1467 = vunpack.c.h.b16 %v533
    %v1468 = vunpack.c.l.b16 %v534
    %v1469 = vunpack.c.h.b16 %v534
    %v1470 = vunpack.c.l.b16 %v535
    %v1471 = vunpack.c.h.b16 %v535
    %v1472 = vunpack.c.l.b16 %v536
    %v1473 = vunpack.c.h.b16 %v536
    %v1474 = vunpack.c.l.b16 %v537
    %v1475 = vunpack.c.h.b16 %v537
    %v1476 = vunpack.c.l.b16 %v538
    %v1477 = vunpack.c.h.b16 %v538
    %v1478 = vunpack.c.l.b16 %v539
    %v1479 = vunpack.c.h.b16 %v539
    %v1480 = vunpack.c.l.b16 %v540
    %v1481 = vunpack.c.h.b16 %v540
    %v1482 = vunpack.c.l.b16 %v541
    %v1483 = vunpack.c.h.b16 %v541
    %v1484 = vunpack.c.l.b16 %v542
    %v1485 = vunpack.c.h.b16 %v542
    %v1486 = vunpack.c.l.b16 %v543
    %v1487 = vunpack.c.h.b16 %v543
    %v1488 = vunpack.c.l.b16 %v544
    %v1489 = vunpack.c.h.b16 %v544
    %v1490 = vunpack.c.l.b16 %v545
    %v1491 = vunpack.c.h.b16 %v545
    %v1492 = vunpack.c.l.b16 %v546
    %v1493 = vunpack.c.h.b16 %v546
    %v1494 = vunpack.c.l.b16 %v547
    %v1495 = vunpack.c.h.b16 %v547
    %v1496 = vunpack.c.l.b16 %v548
    %v1497 = vunpack.c.h.b16 %v548
    %v1498 = vunpack.c.l.b16 %v549
    %v1499 = vunpack.c.h.b16 %v549
    %v1500 = vunpack.c.l.b16 %v550
    %v1501 = vunpack.c.h.b16 %v550
    %v1502 = vunpack.c.l.b16 %v551
    %v1503 = vunpack.c.h.b16 %v551
    %v1504 = vunpack.c.l.b16 %v552
    %v1505 = vunpack.c.h.b16 %v552
    %v1506 = vunpack.c.l.b16 %v553
    %v1507 = vunpack.c.h.b16 %v553
    %v1508 = vunpack.c.l.b16 %v554
    %v1509 = vunpack.c.h.b16 %v554
    %v1510 = vunpack.c.l.b16 %v555
    %v1511 = vunpack.c.h.b16 %v555
    %v1512 = vunpack.c.l.b16 %v556
    %v1513 = vunpack.c.h.b16 %v556
    %v1514 = vunpack.c.l.b16 %v557
    %v1515 = vunpack.c.h.b16 %v557
    %v1516 = vunpack.c.l.b16 %v558
    %v1517 = vunpack.c.h.b16 %v558
    %v1518 = vunpack.c.l.b16 %v559
    %v1519 = vunpack.c.h.b16 %v559
    %v1520 = vunpack.c.l.b16 %v560
    %v1521 = vunpack.c.h.b16 %v560
    %v1522 = vunpack.c.l.b16 %v561
    %v1523 = vunpack.c.h.b16 %v561
    %v1524 = vunpack.c.l.b16 %v562
    %v1525 = vunpack.c.h.b16 %v562
    %v1526 = vunpack.c.l.b16 %v563
    %v1527 = vunpack.c.h.b16 %v563
    %v1528 = vunpack.c.l.b16 %v564
    %v1529 = vunpack.c.h.b16 %v564
    %v1530 = vunpack.c.l.b16 %v565
    %v1531 = vunpack.c.h.b16 %v565
    %v1532 = vunpack.c.l.b16 %v566
    %v1533 = vunpack.c.h.b16 %v566
    %v1534 = vunpack.c.l.b16 %v567
    %v1535 = vunpack.c.h.b16 %v567
    %v1536 = vunpack.c.l.b16 %v568
    %v1537 = vunpack.c.h.b16 %v568
    %v1538 = vunpack.c.l.b16 %v569
    %v1539 = vunpack.c.h.b16 %v569
    %v1540 = vunpack.c.l.b16 %v570
    %v1541 = vunpack.c.h.b16 %v570
    %v1542 = vunpack.c.l.b16 %v571
    %v1543 = vunpack.c.h.b16 %v571
    %v1544 = vunpack.c.l.b16 %v572
    %v1545 = vunpack.c.h.b16 %v572
    %v1546 = vunpack.c.l.b16 %v573
    %v1547 = vunpack.c.h.b16 %v573
    %v1548 = vunpack.c.l.b16 %v574
    %v1549 = vunpack.c.h.b16 %v574
    %v1550 = vunpack.c.l.b16 %v575
    %v1551 = vunpack.c.h.b16 %v575
    %v1552 = vunpack.c.l.b16 %v576
    %v1553 = vunpack.c.h.b16 %v576
    %v1554 = vunpack.c.l.b16 %v577
    %v1555 = vunpack.c.h.b16 %v577
    %v1556 = vunpack.c.l.b16 %v578
    %v1557 = vunpack.c.h.b16 %v578
    %v1558 = vunpack.c.l.b16 %v579
    %v1559 = vunpack.c.h.b16 %v579
    %v1560 = vunpack.c.l.b16 %v580
    %v1561 = vunpack.c.h.b16 %v580
    %v1562 = vunpack.c.l.b16 %v581
    %v1563 = vunpack.c.h.b16 %v581
    %v1564 = vunpack.c.l.b16 %v582
    %v1565 = vunpack.c.h.b16 %v582
    %v1566 = vunpack.c.l.b16 %v583
    %v1567 = vunpack.c.h.b16 %v583
    %v1568 = vunpack.c.l.b16 %v584
    %v1569 = vunpack.c.h.b16 %v584
    %v1570 = vunpack.c.l.b16 %v585
    %v1571 = vunpack.c.h.b16 %v585
    %v1572 = vunpack.c.l.b16 %v586
    %v1573 = vunpack.c.h.b16 %v586
    %v1574 = vunpack.c.l.b16 %v587
    %v1575 = vunpack.c.h.b16 %v587
    %v1576 = vunpack.c.l.b16 %v588
    %v1577 = vunpack.c.h.b16 %v588
    %v1578 = vunpack.c.l.b16 %v589
    %v1579 = vunpack.c.h.b16 %v589
    %v1580 = vunpack.c.l.b16 %v590
    %v1581 = vunpack.c.h.b16 %v590
    %v1582 = vunpack.c.l.b16 %v591
    %v1583 = vunpack.c.h.b16 %v591
    %v1584 = vunpack.c.l.b16 %v592
    %v1585 = vunpack.c.h.b16 %v592
    %v1586 = vunpack.c.l.b16 %v593
    %v1587 = vunpack.c.h.b16 %v593
    %v1588 = vunpack.c.l.b16 %v594
    %v1589 = vunpack.c.h.b16 %v594
    %v1590 = vunpack.c.l.b16 %v595
    %v1591 = vunpack.c.h.b16 %v595
    %v1592 = vunpack.c.l.b16 %v596
    %v1593 = vunpack.c.h.b16 %v596
    %v1594 = vunpack.c.l.b16 %v597
    %v1595 = vunpack.c.h.b16 %v597
    %v1596 = vunpack.c.l.b16 %v598
    %v1597 = vunpack.c.h.b16 %v598
    %v1598 = vunpack.c.l.b16 %v599
    %v1599 = vunpack.c.h.b16 %v599
    %v1600 = vunpack.c.l.b16 %v600
    %v1601 = vunpack.c.h.b16 %v600
    %v1602 = vunpack.c.l.b16 %v601
    %v1603 = vunpack.c.h.b16 %v601
    %v1604 = vunpack.c.l.b16 %v602
    %v1605 = vunpack.c.h.b16 %v602
    %v1606 = vunpack.c.l.b16 %v603
    %v1607 = vunpack.c.h.b16 %v603
    %v1608 = vunpack.c.l.b16 %v604
    %v1609 = vunpack.c.h.b16 %v604
    %v1610 = vunpack.c.l.b16 %v605
    %v1611 = vunpack.c.h.b16 %v605
    %v1612 = vunpack.c.l.b16 %v606
    %v1613 = vunpack.c.h.b16 %v606
    %v1614 = vunpack.c.l.b16 %v607
    %v1615 = vunpack.c.h.b16 %v607
    %v1616 = vunpack.c.l.b16 %v608
    %v1617 = vunpack.c.h.b16 %v608
    %v1618 = vunpack.c.l.b16 %v609
    %v1619 = vunpack.c.h.b16 %v609
    %v1620 = vunpack.c.l.b16 %v610
    %v1621 = vunpack.c.h.b16 %v610
    %v1622 = vunpack.c.l.b16 %v611
    %v1623 = vunpack.c.h.b16 %v611
    %v1624 = vunpack.c.l.b16 %v612
    %v1625 = vunpack.c.h.b16 %v612
    %v1626 = vunpack.c.l.b16 %v613
    %v1627 = vunpack.c.h.b16 %v613
    %v1628 = vunpack.c.l.b16 %v614
    %v1629 = vunpack.c.h.b16 %v614
    %v1630 = vunpack.c.l.b16 %v615
    %v1631 = vunpack.c.h.b16 %v615
    %v1632 = vunpack.c.l.b16 %v616
    %v1633 = vunpack.c.h.b16 %v616
    %v1634 = vunpack.c.l.b16 %v617
    %v1635 = vunpack.c.h.b16 %v617
    %v1636 = vunpack.c.l.b16 %v618
    %v1637 = vunpack.c.h.b16 %v618
    %v1638 = vunpack.c.l.b16 %v619
    %v1639 = vunpack.c.h.b16 %v619
    %v1640 = vunpack.c.l.b16 %v620
    %v1641 = vunpack.c.h.b16 %v620
    %v1642 = vunpack.c.l.b16 %v621
    %v1643 = vunpack.c.h.b16 %v621
    %v1644 = vunpack.c.l.b16 %v622
    %v1645 = vunpack.c.h.b16 %v622
    %v1646 = vunpack.c.l.b16 %v623
    %v1647 = vunpack.c.h.b16 %v623
    %v1648 = vunpack.c.l.b16 %v624
    %v1649 = vunpack.c.h.b16 %v624
    %v1650 = vunpack.c.l.b16 %v625
    %v1651 = vunpack.c.h.b16 %v625
    %v1652 = vunpack.c.l.b16 %v626
    %v1653 = vunpack.c.h.b16 %v626
    %v1654 = vunpack.c.l.b16 %v627
    %v1655 = vunpack.c.h.b16 %v627
    %v1656 = vunpack.c.l.b16 %v628
    %v1657 = vunpack.c.h.b16 %v628
    %v1658 = vunpack.c.l.b16 %v629
    %v1659 = vunpack.c.h.b16 %v629
    %v1660 = vunpack.c.l.b16 %v630
    %v1661 = vunpack.c.h.b16 %v630
    %v1662 = vunpack.c.l.b16 %v631
    %v1663 = vunpack.c.h.b16 %v631
    %v1664 = vunpack.c.l.b16 %v632
    %v1665 = vunpack.c.h.b16 %v632
    %v1666 = vunpack.c.l.b16 %v633
    %v1667 = vunpack.c.h.b16 %v633
    %v1668 = vunpack.c.l.b16 %v634
    %v1669 = vunpack.c.h.b16 %v634
    %v1670 = vunpack.c.l.b16 %v635
    %v1671 = vunpack.c.h.b16 %v635
    %v1672 = vunpack.c.l.b16 %v636
    %v1673 = vunpack.c.h.b16 %v636
    %v1674 = vunpack.c.l.b16 %v637
    %v1675 = vunpack.c.h.b16 %v637
    %v1676 = vunpack.c.l.b16 %v638
    %v1677 = vunpack.c.h.b16 %v638
    %v1678 = vunpack.c.l.b16 %v639
    %v1679 = vunpack.c.h.b16 %v639
    %v1680 = vunpack.c.l.b16 %v640
    %v1681 = vunpack.c.h.b16 %v640
    %v1682 = vunpack.c.l.b16 %v641
    %v1683 = vunpack.c.h.b16 %v641
    %v1684 = vunpack.c.l.b16 %v642
    %v1685 = vunpack.c.h.b16 %v642
    %v1686 = vunpack.c.l.b16 %v643
    %v1687 = vunpack.c.h.b16 %v643
    %v1688 = vunpack.c.l.b16 %v644
    %v1689 = vunpack.c.h.b16 %v644
    %v1690 = vunpack.c.l.b16 %v645
    %v1691 = vunpack.c.h.b16 %v645
    %v1692 = vunpack.c.l.b16 %v646
    %v1693 = vunpack.c.h.b16 %v646
    %v1694 = vunpack.c.l.b16 %v647
    %v1695 = vunpack.c.h.b16 %v647
    %v1696 = vunpack.c.l.b16 %v648
    %v1697 = vunpack.c.h.b16 %v648
    %v1698 = vunpack.c.l.b16 %v649
    %v1699 = vunpack.c.h.b16 %v649
    %v1700 = vunpack.c.l.b16 %v650
    %v1701 = vunpack.c.h.b16 %v650
    %v1702 = vunpack.c.l.b16 %v651
    %v1703 = vunpack.c.h.b16 %v651
    %v1704 = vunpack.c.l.b16 %v652
    %v1705 = vunpack.c.h.b16 %v652
    %v1706 = vunpack.c.l.b16 %v653
    %v1707 = vunpack.c.h.b16 %v653
    %v1708 = vunpack.c.l.b16 %v654
    %v1709 = vunpack.c.h.b16 %v654
    %v1710 = vunpack.c.l.b16 %v655
    %v1711 = vunpack.c.h.b16 %v655
    %v1712 = vunpack.c.l.b16 %v656
    %v1713 = vunpack.c.h.b16 %v656
    %v1714 = vunpack.c.l.b16 %v657
    %v1715 = vunpack.c.h.b16 %v657
    %v1716 = vunpack.c.l.b16 %v658
    %v1717 = vunpack.c.h.b16 %v658
    %v1718 = vunpack.c.l.b16 %v659
    %v1719 = vunpack.c.h.b16 %v659
    %v1720 = vunpack.c.l.b16 %v660
    %v1721 = vunpack.c.h.b16 %v660
    %v1722 = vunpack.c.l.b16 %v661
    %v1723 = vunpack.c.h.b16 %v661
    %v1724 = vunpack.c.l.b16 %v662
    %v1725 = vunpack.c.h.b16 %v662
    %v1726 = vunpack.c.l.b16 %v663
    %v1727 = vunpack.c.h.b16 %v663
    %v1728 = vunpack.c.l.b16 %v664
    %v1729 = vunpack.c.h.b16 %v664
    %v1730 = vunpack.c.l.b16 %v665
    %v1731 = vunpack.c.h.b16 %v665
    %v1732 = vunpack.c.l.b16 %v666
    %v1733 = vunpack.c.h.b16 %v666
    %v1734 = vunpack.c.l.b16 %v667
    %v1735 = vunpack.c.h.b16 %v667
    %v1736 = vunpack.c.l.b16 %v668
    %v1737 = vunpack.c.h.b16 %v668
    %v1738 = vunpack.c.l.b16 %v669
    %v1739 = vunpack.c.h.b16 %v669
    %v1740 = vunpack.c.l.b16 %v670
    %v1741 = vunpack.c.h.b16 %v670
    %v1742 = vunpack.c.l.b16 %v671
    %v1743 = vunpack.c.h.b16 %v671
    %v1744 = vunpack.c.l.b16 %v672
    %v1745 = vunpack.c.h.b16 %v672
    %v1746 = vunpack.c.l.b16 %v673
    %v1747 = vunpack.c.h.b16 %v673
    %v1748 = vunpack.c.l.b16 %v674
    %v1749 = vunpack.c.h.b16 %v674
    %v1750 = vunpack.c.l.b16 %v675
    %v1751 = vunpack.c.h.b16 %v675
    %v1752 = vunpack.c.l.b16 %v676
    %v1753 = vunpack.c.h.b16 %v676
    %v1754 = vunpack.c.l.b16 %v677
    %v1755 = vunpack.c.h.b16 %v677
    %v1756 = vunpack.c.l.b16 %v678
    %v1757 = vunpack.c.h.b16 %v678
    %v1758 = vunpack.c.l.b16 %v679
    %v1759 = vunpack.c.h.b16 %v679
    %v1760 = vunpack.c.l.b16 %v680
    %v1761 = vunpack.c.h.b16 %v680
    %v1762 = vunpack.c.l.b16 %v681
    %v1763 = vunpack.c.h.b16 %v681
    %v1764 = vunpack.c.l.b16 %v682
    %v1765 = vunpack.c.h.b16 %v682
    %v1766 = vunpack.c.l.b16 %v683
    %v1767 = vunpack.c.h.b16 %v683
    %v1768 = vunpack.c.l.b16 %v684
    %v1769 = vunpack.c.h.b16 %v684
    %v1770 = vunpack.c.l.b16 %v685
    %v1771 = vunpack.c.h.b16 %v685
    %v1772 = vunpack.c.l.b16 %v686
    %v1773 = vunpack.c.h.b16 %v686
    %v1774 = vunpack.c.l.b16 %v687
    %v1775 = vunpack.c.h.b16 %v687
    %v1776 = vunpack.c.l.b16 %v688
    %v1777 = vunpack.c.h.b16 %v688
    %v1778 = vunpack.c.l.b16 %v689
    %v1779 = vunpack.c.h.b16 %v689
    %v1780 = vunpack.c.l.b16 %v690
    %v1781 = vunpack.c.h.b16 %v690
    %v1782 = vunpack.c.l.b16 %v691
    %v1783 = vunpack.c.h.b16 %v691
    %v1784 = vunpack.c.l.b16 %v692
    %v1785 = vunpack.c.h.b16 %v692
    %v1786 = vunpack.c.l.b16 %v693
    %v1787 = vunpack.c.h.b16 %v693
    %v1788 = vunpack.c.l.b16 %v694
    %v1789 = vunpack.c.h.b16 %v694
    %v1790 = vunpack.c.l.b16 %v695
    %v1791 = vunpack.c.h.b16 %v695
    %v1792 = vunpack.c.l.b16 %v696
    %v1793 = vunpack.c.h.b16 %v696
    %v1794 = vunpack.c.l.b16 %v697
    %v1795 = vunpack.c.h.b16 %v697
    %v1796 = vunpack.c.l.b16 %v698
    %v1797 = vunpack.c.h.b16 %v698
    %v1798 = vunpack.c.l.b16 %v699
    %v1799 = vunpack.c.h.b16 %v699
    %v1800 = vunpack.c.l.b16 %v700
    %v1801 = vunpack.c.h.b16 %v700
    %v1802 = vunpack.c.l.b16 %v701
    %v1803 = vunpack.c.h.b16 %v701
    %v1804 = vunpack.c.l.b16 %v702
    %v1805 = vunpack.c.h.b16 %v702
    %v1806 = vunpack.c.l.b16 %v703
    %v1807 = vunpack.c.h.b16 %v703
    %v1808 = vunpack.c.l.b16 %v704
    %v1809 = vunpack.c.h.b16 %v704
    %v1810 = vunpack.c.l.b16 %v705
    %v1811 = vunpack.c.h.b16 %v705
    %v1812 = vunpack.c.l.b16 %v706
    %v1813 = vunpack.c.h.b16 %v706
    %v1814 = vunpack.c.l.b16 %v707
    %v1815 = vunpack.c.h.b16 %v707
    %v1816 = vunpack.c.l.b16 %v708
    %v1817 = vunpack.c.h.b16 %v708
    %v1818 = vunpack.c.l.b16 %v709
    %v1819 = vunpack.c.h.b16 %v709
    %v1820 = vunpack.c.l.b16 %v710
    %v1821 = vunpack.c.h.b16 %v710
    %v1822 = vunpack.c.l.b16 %v711
    %v1823 = vunpack.c.h.b16 %v711
    %v1824 = vunpack.c.l.b16 %v712
    %v1825 = vunpack.c.h.b16 %v712
    %v1826 = vunpack.c.l.b16 %v713
    %v1827 = vunpack.c.h.b16 %v713
    %v1828 = vunpack.c.l.b16 %v714
    %v1829 = vunpack.c.h.b16 %v714
    %v1830 = vunpack.c.l.b16 %v715
    %v1831 = vunpack.c.h.b16 %v715
    %v1832 = vunpack.c.l.b16 %v716
    %v1833 = vunpack.c.h.b16 %v716
    %v1834 = vunpack.c.l.b16 %v717
    %v1835 = vunpack.c.h.b16 %v717
    %v1836 = vunpack.c.l.b16 %v718
    %v1837 = vunpack.c.h.b16 %v718
    %v1838 = vunpack.c.l.b16 %v719
    %v1839 = vunpack.c.h.b16 %v719
    %v1840 = vunpack.c.l.b16 %v720
    %v1841 = vunpack.c.h.b16 %v720
    %v1842 = vunpack.c.l.b16 %v721
    %v1843 = vunpack.c.h.b16 %v721
    %v1844 = vunpack.c.l.b16 %v722
    %v1845 = vunpack.c.h.b16 %v722
    %v1846 = vunpack.c.l.b16 %v723
    %v1847 = vunpack.c.h.b16 %v723
    %v1848 = vunpack.c.l.b16 %v724
    %v1849 = vunpack.c.h.b16 %v724
    %v1850 = vunpack.c.l.b16 %v725
    %v1851 = vunpack.c.h.b16 %v725
    %v1852 = vunpack.c.l.b16 %v726
    %v1853 = vunpack.c.h.b16 %v726
    %v1854 = vunpack.c.l.b16 %v727
    %v1855 = vunpack.c.h.b16 %v727
    %v1856 = vunpack.c.l.b16 %v728
    %v1857 = vunpack.c.h.b16 %v728
    %v1858 = vunpack.c.l.b16 %v729
    %v1859 = vunpack.c.h.b16 %v729
    %v1860 = vunpack.c.l.b16 %v730
    %v1861 = vunpack.c.h.b16 %v730
    %v1862 = vunpack.c.l.b16 %v731
    %v1863 = vunpack.c.h.b16 %v731
    %v1864 = vunpack.c.l.b16 %v732
    %v1865 = vunpack.c.h.b16 %v732
    %v1866 = vunpack.c.l.b16 %v733
    %v1867 = vunpack.c.h.b16 %v733
    %v1868 = vunpack.c.l.b16 %v734
    %v1869 = vunpack.c.h.b16 %v734
    %v1870 = vunpack.c.l.b16 %v735
    %v1871 = vunpack.c.h.b16 %v735
    %v1872 = vunpack.c.l.b16 %v736
    %v1873 = vunpack.c.h.b16 %v736
    %v1874 = vunpack.c.l.b16 %v737
    %v1875 = vunpack.c.h.b16 %v737
    %v1876 = vunpack.c.l.b16 %v738
    %v1877 = vunpack.c.h.b16 %v738
    %v1878 = vunpack.c.l.b16 %v739
    %v1879 = vunpack.c.h.b16 %v739
    %v1880 = vunpack.c.l.b16 %v740
    %v1881 = vunpack.c.h.b16 %v740
    %v1882 = vunpack.c.l.b16 %v741
    %v1883 = vunpack.c.h.b16 %v741
    %v1884 = vunpack.c.l.b16 %v742
    %v1885 = vunpack.c.h.b16 %v742
    %v1886 = vunpack.c.l.b16 %v743
    %v1887 = vunpack.c.h.b16 %v743
    %v1888 = vunpack.c.l.b16 %v744
    %v1889 = vunpack.c.h.b16 %v744
    %v1890 = vunpack.c.l.b16 %v745
    %v1891 = vunpack.c.h.b16 %v745
    %v1892 = vunpack.c.l.b16 %v746
    %v1893 = vunpack.c.h.b16 %v746
    %v1894 = vunpack.c.l.b16 %v747
    %v1895 = vunpack.c.h.b16 %v747
    %v1896 = vunpack.c.l.b16 %v748
    %v1897 = vunpack.c.h.b16 %v748
    %v1898 = vunpack.c.l.b16 %v749
    %v1899 = vunpack.c.h.b16 %v749
    %v1900 = vunpack.c.l.b16 %v750
    %v1901 = vunpack.c.h.b16 %v750
    %v1902 = vunpack.c.l.b16 %v751
    %v1903 = vunpack.c.h.b16 %v751
    %v1904 = vunpack.c.l.b16 %v752
    %v1905 = vunpack.c.h.b16 %v752
    %v1906 = vunpack.c.l.b16 %v753
    %v1907 = vunpack.c.h.b16 %v753
    %v1908 = vunpack.c.l.b16 %v754
    %v1909 = vunpack.c.h.b16 %v754
    %v1910 = vunpack.c.l.b16 %v755
    %v1911 = vunpack.c.h.b16 %v755
    %v1912 = vunpack.c.l.b16 %v756
    %v1913 = vunpack.c.h.b16 %v756
    %v1914 = vunpack.c.l.b16 %v757
    %v1915 = vunpack.c.h.b16 %v757
    %v1916 = vunpack.c.l.b16 %v758
    %v1917 = vunpack.c.h.b16 %v758
    %v1918 = vunpack.c.l.b16 %v759
    %v1919 = vunpack.c.h.b16 %v759
    %v1920 = vunpack.c.l.b16 %v760
    %v1921 = vunpack.c.h.b16 %v760
    %v1922 = vunpack.c.l.b16 %v761
    %v1923 = vunpack.c.h.b16 %v761
    %v1924 = vunpack.c.l.b16 %v762
    %v1925 = vunpack.c.h.b16 %v762
    %v1926 = vunpack.c.l.b16 %v763
    %v1927 = vunpack.c.h.b16 %v763
    %v1928 = vunpack.c.l.b16 %v764
    %v1929 = vunpack.c.h.b16 %v764
    %v1930 = vunpack.c.l.b16 %v765
    %v1931 = vunpack.c.h.b16 %v765
    %v1932 = vunpack.c.l.b16 %v766
    %v1933 = vunpack.c.h.b16 %v766
    %v1934 = vunpack.c.l.b16 %v767
    %v1935 = vunpack.c.h.b16 %v767
    %v1936 = vunpack.c.l.b16 %v768
    %v1937 = vunpack.c.h.b16 %v768
    %v1938 = vunpack.c.l.b16 %v769
    %v1939 = vunpack.c.h.b16 %v769
    %v1940 = vunpack.c.l.b16 %v770
    %v1941 = vunpack.c.h.b16 %v770
    %v1942 = vunpack.c.l.b16 %v771
    %v1943 = vunpack.c.h.b16 %v771
    %v1944 = vunpack.c.l.b16 %v772
    %v1945 = vunpack.c.h.b16 %v772
    %v1946 = vunpack.c.l.b16 %v773
    %v1947 = vunpack.c.h.b16 %v773
    %v1948 = vunpack.c.l.b16 %v774
    %v1949 = vunpack.c.h.b16 %v774
    %v1950 = vunpack.c.l.b16 %v775
    %v1951 = vunpack.c.h.b16 %v775
    %v1952 = vunpack.c.l.b16 %v776
    %v1953 = vunpack.c.h.b16 %v776
    %v1954 = vunpack.c.l.b16 %v777
    %v1955 = vunpack.c.h.b16 %v777
    %v1956 = vunpack.c.l.b16 %v778
    %v1957 = vunpack.c.h.b16 %v778
    %v1958 = vunpack.c.l.b16 %v779
    %v1959 = vunpack.c.h.b16 %v779
    %v1960 = vunpack.c.l.b16 %v780
    %v1961 = vunpack.c.h.b16 %v780
    %v1962 = vunpack.c.l.b16 %v781
    %v1963 = vunpack.c.h.b16 %v781
    %v1964 = vunpack.c.l.b16 %v782
    %v1965 = vunpack.c.h.b16 %v782
    %v1966 = vunpack.c.l.b16 %v783
    %v1967 = vunpack.c.h.b16 %v783
    %v1968 = vunpack.c.l.b16 %v784
    %v1969 = vunpack.c.h.b16 %v784
    %v1970 = vunpack.c.l.b16 %v785
    %v1971 = vunpack.c.h.b16 %v785
    %v1972 = vunpack.c.l.b16 %v786
    %v1973 = vunpack.c.h.b16 %v786
    %v1974 = vunpack.c.l.b16 %v787
    %v1975 = vunpack.c.h.b16 %v787
    %v1976 = vunpack.c.l.b16 %v788
    %v1977 = vunpack.c.h.b16 %v788
    %v1978 = vunpack.c.l.b16 %v789
    %v1979 = vunpack.c.h.b16 %v789
    %v1980 = vunpack.c.l.b16 %v790
    %v1981 = vunpack.c.h.b16 %v790
    %v1982 = vunpack.c.l.b16 %v791
    %v1983 = vunpack.c.h.b16 %v791
    %v1984 = vunpack.c.l.b16 %v792
    %v1985 = vunpack.c.h.b16 %v792
    %v1986 = vunpack.c.l.b16 %v793
    %v1987 = vunpack.c.h.b16 %v793
    %v1988 = vpack.c.b16 %v1228, %v1220
    %v1989 = vpack.c.b16 %v1229, %v1221
    %v1990 = vpack.c.b16 %v1230, %v1222
    %v1991 = vpack.c.b16 %v1231, %v1223
    %v1992 = vpack.c.b16 %v1232, %v1224
    %v1993 = vpack.c.b16 %v1233, %v1225
    %v1994 = vpack.c.b16 %v1234, %v1226
    %v1995 = vpack.c.b16 %v1235, %v1227
    %v1996 = vpack.c.b16 %v1244, %v1236
    %v1997 = vpack.c.b16 %v1245, %v1237
    %v1998 = vpack.c.b16 %v1246, %v1238
    %v1999 = vpack.c.b16 %v1247, %v1239
    %v2000 = vpack.c.b16 %v1248, %v1240
    %v2001 = vpack.c.b16 %v1249, %v1241
    %v2002 = vpack.c.b16 %v1250, %v1242
    %v2003 = vpack.c.b16 %v1251, %v1243
    %v2004 = vpack.c.b16 %v1260, %v1252
    %v2005 = vpack.c.b16 %v1261, %v1253
    %v2006 = vpack.c.b16 %v1262, %v1254
    %v2007 = vpack.c.b16 %v1263, %v1255
    %v2008 = vpack.c.b16 %v1264, %v1256
    %v2009 = vpack.c.b16 %v1265, %v1257
    %v2010 = vpack.c.b16 %v1266, %v1258
    %v2011 = vpack.c.b16 %v1267, %v1259
    %v2012 = vpack.c.b16 %v1276, %v1268
    %v2013 = vpack.c.b16 %v1277, %v1269
    %v2014 = vpack.c.b16 %v1278, %v1270
    %v2015 = vpack.c.b16 %v1279, %v1271
    %v2016 = vpack.c.b16 %v1280, %v1272
    %v2017 = vpack.c.b16 %v1281, %v1273
    %v2018 = vpack.c.b16 %v1282, %v1274
    %v2019 = vpack.c.b16 %v1283, %v1275
    %v2020 = vpack.c.b16 %v1292, %v1284
    %v2021 = vpack.c.b16 %v1293, %v1285
    %v2022 = vpack.c.b16 %v1294, %v1286
    %v2023 = vpack.c.b16 %v1295, %v1287
    %v2024 = vpack.c.b16 %v1296, %v1288
    %v2025 = vpack.c.b16 %v1297, %v1289
    %v2026 = vpack.c.b16 %v1298, %v1290
    %v2027 = vpack.c.b16 %v1299, %v1291
    %v2028 = vpack.c.b16 %v1308, %v1300
    %v2029 = vpack.c.b16 %v1309, %v1301
    %v2030 = vpack.c.b16 %v1310, %v1302
    %v2031 = vpack.c.b16 %v1311, %v1303
    %v2032 = vpack.c.b16 %v1312, %v1304
    %v2033 = vpack.c.b16 %v1313, %v1305
    %v2034 = vpack.c.b16 %v1314, %v1306
    %v2035 = vpack.c.b16 %v1315, %v1307
    %v2036 = vpack.c.b16 %v1324, %v1316
    %v2037 = vpack.c.b16 %v1325, %v1317
    %v2038 = vpack.c.b16 %v1326, %v1318
    %v2039 = vpack.c.b16 %v1327, %v1319
    %v2040 = vpack.c.b16 %v1328, %v1320
    %v2041 = vpack.c.b16 %v1329, %v1321
    %v2042 = vpack.c.b16 %v1330, %v1322
    %v2043 = vpack.c.b16 %v1331, %v1323
    %v2044 = vpack.c.b16 %v1340, %v1332
    %v2045 = vpack.c.b16 %v1341, %v1333
    %v2046 = vpack.c.b16 %v1342, %v1334
    %v2047 = vpack.c.b16 %v1343, %v1335
    %v2048 = vpack.c.b16 %v1344, %v1336
    %v2049 = vpack.c.b16 %v1345, %v1337
    %v2050 = vpack.c.b16 %v1346, %v1338
    %v2051 = vpack.c.b16 %v1347, %v1339
    %v2052 = vpack.c.b16 %v1356, %v1348
    %v2053 = vpack.c.b16 %v1357, %v1349
    %v2054 = vpack.c.b16 %v1358, %v1350
    %v2055 = vpack.c.b16 %v1359, %v1351
    %v2056 = vpack.c.b16 %v1360, %v1352
    %v2057 = vpack.c.b16 %v1361, %v1353
    %v2058 = vpack.c.b16 %v1362, %v1354
    %v2059 = vpack.c.b16 %v1363, %v1355
    %v2060 = vpack.c.b16 %v1372, %v1364
    %v2061 = vpack.c.b16 %v1373, %v1365
    %v2062 = vpack.c.b16 %v1374, %v1366
    %v2063 = vpack.c.b16 %v1375, %v1367
    %v2064 = vpack.c.b16 %v1376, %v1368
    %v2065 = vpack.c.b16 %v1377, %v1369
    %v2066 = vpack.c.b16 %v1378, %v1370
    %v2067 = vpack.c.b16 %v1379, %v1371
    %v2068 = vpack.c.b16 %v1388, %v1380
    %v2069 = vpack.c.b16 %v1389, %v1381
    %v2070 = vpack.c.b16 %v1390, %v1382
    %v2071 = vpack.c.b16 %v1391, %v1383
    %v2072 = vpack.c.b16 %v1392, %v1384
    %v2073 = vpack.c.b16 %v1393, %v1385
    %v2074 = vpack.c.b16 %v1394, %v1386
    %v2075 = vpack.c.b16 %v1395, %v1387
    %v2076 = vpack.c.b16 %v1404, %v1396
    %v2077 = vpack.c.b16 %v1405, %v1397
    %v2078 = vpack.c.b16 %v1406, %v1398
    %v2079 = vpack.c.b16 %v1407, %v1399
    %v2080 = vpack.c.b16 %v1408, %v1400
    %v2081 = vpack.c.b16 %v1409, %v1401
    %v2082 = vpack.c.b16 %v1410, %v1402
    %v2083 = vpack.c.b16 %v1411, %v1403
    %v2084 = vpack.c.b16 %v1420, %v1412
    %v2085 = vpack.c.b16 %v1421, %v1413
    %v2086 = vpack.c.b16 %v1422, %v1414
    %v2087 = vpack.c.b16 %v1423, %v1415
    %v2088 = vpack.c.b16 %v1424, %v1416
    %v2089 = vpack.c.b16 %v1425, %v1417
    %v2090 = vpack.c.b16 %v1426, %v1418
    %v2091 = vpack.c.b16 %v1427, %v1419
    %v2092 = vpack.c.b16 %v1436, %v1428
    %v2093 = vpack.c.b16 %v1437, %v1429
    %v2094 = vpack.c.b16 %v1438, %v1430
    %v2095 = vpack.c.b16 %v1439, %v1431
    %v2096 = vpack.c.b16 %v1440, %v1432
    %v2097 = vpack.c.b16 %v1441, %v1433
    %v2098 = vpack.c.b16 %v1442, %v1434
    %v2099 = vpack.c.b16 %v1443, %v1435
    %v2100 = vpack.c.b16 %v1452, %v1444
    %v2101 = vpack.c.b16 %v1453, %v1445
    %v2102 = vpack.c.b16 %v1454, %v1446
    %v2103 = vpack.c.b16 %v1455, %v1447
    %v2104 = vpack.c.b16 %v1456, %v1448
    %v2105 = vpack.c.b16 %v1457, %v1449
    %v2106 = vpack.c.b16 %v1458, %v1450
    %v2107 = vpack.c.b16 %v1459, %v1451
    %v2108 = vpack.c.b16 %v1468, %v1460
    %v2109 = vpack.c.b16 %v1469, %v1461
    %v2110 = vpack.c.b16 %v1470, %v1462
    %v2111 = vpack.c.b16 %v1471, %v1463
    %v2112 = vpack.c.b16 %v1472, %v1464
    %v2113 = vpack.c.b16 %v1473, %v1465
    %v2114 = vpack.c.b16 %v1474, %v1466
    %v2115 = vpack.c.b16 %v1475, %v1467
    %v2116 = vpack.c.b16 %v1484, %v1476
    %v2117 = vpack.c.b16 %v1485, %v1477
    %v2118 = vpack.c.b16 %v1486, %v1478
    %v2119 = vpack.c.b16 %v1487, %v1479
    %v2120 = vpack.c.b16 %v1488, %v1480
    %v2121 = vpack.c.b16 %v1489, %v1481
    %v2122 = vpack.c.b16 %v1490, %v1482
    %v2123 = vpack.c.b16 %v1491, %v1483
    %v2124 = vpack.c.b16 %v1500, %v1492
    %v2125 = vpack.c.b16 %v1501, %v1493
    %v2126 = vpack.c.b16 %v1502, %v1494
    %v2127 = vpack.c.b16 %v1503, %v1495
    %v2128 = vpack.c.b16 %v1504, %v1496
    %v2129 = vpack.c.b16 %v1505, %v1497
    %v2130 = vpack.c.b16 %v1506, %v1498
    %v2131 = vpack.c.b16 %v1507, %v1499
    %v2132 = vpack.c.b16 %v1516, %v1508
    %v2133 = vpack.c.b16 %v1517, %v1509
    %v2134 = vpack.c.b16 %v1518, %v1510
    %v2135 = vpack.c.b16 %v1519, %v1511
    %v2136 = vpack.c.b16 %v1520, %v1512
    %v2137 = vpack.c.b16 %v1521, %v1513
    %v2138 = vpack.c.b16 %v1522, %v1514
    %v2139 = vpack.c.b16 %v1523, %v1515
    %v2140 = vpack.c.b16 %v1532, %v1524
    %v2141 = vpack.c.b16 %v1533, %v1525
    %v2142 = vpack.c.b16 %v1534, %v1526
    %v2143 = vpack.c.b16 %v1535, %v1527
    %v2144 = vpack.c.b16 %v1536, %v1528
    %v2145 = vpack.c.b16 %v1537, %v1529
    %v2146 = vpack.c.b16 %v1538, %v1530
    %v2147 = vpack.c.b16 %v1539, %v1531
    %v2148 = vpack.c.b16 %v1548, %v1540
    %v2149 = vpack.c.b16 %v1549, %v1541
    %v2150 = vpack.c.b16 %v1550, %v1542
    %v2151 = vpack.c.b16 %v1551, %v1543
    %v2152 = vpack.c.b16 %v1552, %v1544
    %v2153 = vpack.c.b16 %v1553, %v1545
    %v2154 = vpack.c.b16 %v1554, %v1546
    %v2155 = vpack.c.b16 %v1555, %v1547
    %v2156 = vpack.c.b16 %v1564, %v1556
    %v2157 = vpack.c.b16 %v1565, %v1557
    %v2158 = vpack.c.b16 %v1566, %v1558
    %v2159 = vpack.c.b16 %v1567, %v1559
    %v2160 = vpack.c.b16 %v1568, %v1560
    %v2161 = vpack.c.b16 %v1569, %v1561
    %v2162 = vpack.c.b16 %v1570, %v1562
    %v2163 = vpack.c.b16 %v1571, %v1563
    %v2164 = vpack.c.b16 %v1580, %v1572
    %v2165 = vpack.c.b16 %v1581, %v1573
    %v2166 = vpack.c.b16 %v1582, %v1574
    %v2167 = vpack.c.b16 %v1583, %v1575
    %v2168 = vpack.c.b16 %v1584, %v1576
    %v2169 = vpack.c.b16 %v1585, %v1577
    %v2170 = vpack.c.b16 %v1586, %v1578
    %v2171 = vpack.c.b16 %v1587, %v1579
    %v2172 = vpack.c.b16 %v1596, %v1588
    %v2173 = vpack.c.b16 %v1597, %v1589
    %v2174 = vpack.c.b16 %v1598, %v1590
    %v2175 = vpack.c.b16 %v1599, %v1591
    %v2176 = vpack.c.b16 %v1600, %v1592
    %v2177 = vpack.c.b16 %v1601, %v1593
    %v2178 = vpack.c.b16 %v1602, %v1594
    %v2179 = vpack.c.b16 %v1603, %v1595
    %v2180 = vpack.c.b16 %v1612, %v1604
    %v2181 = vpack.c.b16 %v1613, %v1605
    %v2182 = vpack.c.b16 %v1614, %v1606
    %v2183 = vpack.c.b16 %v1615, %v1607
    %v2184 = vpack.c.b16 %v1616, %v1608
    %v2185 = vpack.c.b16 %v1617, %v1609
    %v2186 = vpack.c.b16 %v1618, %v1610
    %v2187 = vpack.c.b16 %v1619, %v1611
    %v2188 = vpack.c.b16 %v1628, %v1620
    %v2189 = vpack.c.b16 %v1629, %v1621
    %v2190 = vpack.c.b16 %v1630, %v1622
    %v2191 = vpack.c.b16 %v1631, %v1623
    %v2192 = vpack.c.b16 %v1632, %v1624
    %v2193 = vpack.c.b16 %v1633, %v1625
    %v2194 = vpack.c.b16 %v1634, %v1626
    %v2195 = vpack.c.b16 %v1635, %v1627
    %v2196 = vpack.c.b16 %v1644, %v1636
    %v2197 = vpack.c.b16 %v1645, %v1637
    %v2198 = vpack.c.b16 %v1646, %v1638
    %v2199 = vpack.c.b16 %v1647, %v1639
    %v2200 = vpack.c.b16 %v1648, %v1640
    %v2201 = vpack.c.b16 %v1649, %v1641
    %v2202 = vpack.c.b16 %v1650, %v1642
    %v2203 = vpack.c.b16 %v1651, %v1643
    %v2204 = vpack.c.b16 %v1660, %v1652
    %v2205 = vpack.c.b16 %v1661, %v1653
    %v2206 = vpack.c.b16 %v1662, %v1654
    %v2207 = vpack.c.b16 %v1663, %v1655
    %v2208 = vpack.c.b16 %v1664, %v1656
    %v2209 = vpack.c.b16 %v1665, %v1657
    %v2210 = vpack.c.b16 %v1666, %v1658
    %v2211 = vpack.c.b16 %v1667, %v1659
    %v2212 = vpack.c.b16 %v1676, %v1668
    %v2213 = vpack.c.b16 %v1677, %v1669
    %v2214 = vpack.c.b16 %v1678, %v1670
    %v2215 = vpack.c.b16 %v1679, %v1671
    %v2216 = vpack.c.b16 %v1680, %v1672
    %v2217 = vpack.c.b16 %v1681, %v1673
    %v2218 = vpack.c.b16 %v1682, %v1674
    %v2219 = vpack.c.b16 %v1683, %v1675
    %v2220 = vpack.c.b16 %v1692, %v1684
    %v2221 = vpack.c.b16 %v1693, %v1685
    %v2222 = vpack.c.b16 %v1694, %v1686
    %v2223 = vpack.c.b16 %v1695, %v1687
    %v2224 = vpack.c.b16 %v1696, %v1688
    %v2225 = vpack.c.b16 %v1697, %v1689
    %v2226 = vpack.c.b16 %v1698, %v1690
    %v2227 = vpack.c.b16 %v1699, %v1691
    %v2228 = vpack.c.b16 %v1708, %v1700
    %v2229 = vpack.c.b16 %v1709, %v1701
    %v2230 = vpack.c.b16 %v1710, %v1702
    %v2231 = vpack.c.b16 %v1711, %v1703
    %v2232 = vpack.c.b16 %v1712, %v1704
    %v2233 = vpack.c.b16 %v1713, %v1705
    %v2234 = vpack.c.b16 %v1714, %v1706
    %v2235 = vpack.c.b16 %v1715, %v1707
    %v2236 = vpack.c.b16 %v1724, %v1716
    %v2237 = vpack.c.b16 %v1725, %v1717
    %v2238 = vpack.c.b16 %v1726, %v1718
    %v2239 = vpack.c.b16 %v1727, %v1719
    %v2240 = vpack.c.b16 %v1728, %v1720
    %v2241 = vpack.c.b16 %v1729, %v1721
    %v2242 = vpack.c.b16 %v1730, %v1722
    %v2243 = vpack.c.b16 %v1731, %v1723
    %v2244 = vpack.c.b16 %v1740, %v1732
    %v2245 = vpack.c.b16 %v1741, %v1733
    %v2246 = vpack.c.b16 %v1742, %v1734
    %v2247 = vpack.c.b16 %v1743, %v1735
    %v2248 = vpack.c.b16 %v1744, %v1736
    %v2249 = vpack.c.b16 %v1745, %v1737
    %v2250 = vpack.c.b16 %v1746, %v1738
    %v2251 = vpack.c.b16 %v1747, %v1739
    %v2252 = vpack.c.b16 %v1756, %v1748
    %v2253 = vpack.c.b16 %v1757, %v1749
    %v2254 = vpack.c.b16 %v1758, %v1750
    %v2255 = vpack.c.b16 %v1759, %v1751
    %v2256 = vpack.c.b16 %v1760, %v1752
    %v2257 = vpack.c.b16 %v1761, %v1753
    %v2258 = vpack.c.b16 %v1762, %v1754
    %v2259 = vpack.c.b16 %v1763, %v1755
    %v2260 = vpack.c.b16 %v1772, %v1764
    %v2261 = vpack.c.b16 %v1773, %v1765
    %v2262 = vpack.c.b16 %v1774, %v1766
    %v2263 = vpack.c.b16 %v1775, %v1767
    %v2264 = vpack.c.b16 %v1776, %v1768
    %v2265 = vpack.c.b16 %v1777, %v1769
    %v2266 = vpack.c.b16 %v1778, %v1770
    %v2267 = vpack.c.b16 %v1779, %v1771
    %v2268 = vpack.c.b16 %v1788, %v1780
    %v2269 = vpack.c.b16 %v1789, %v1781
    %v2270 = vpack.c.b16 %v1790, %v1782
    %v2271 = vpack.c.b16 %v1791, %v1783
    %v2272 = vpack.c.b16 %v1792, %v1784
    %v2273 = vpack.c.b16 %v1793, %v1785
    %v2274 = vpack.c.b16 %v1794, %v1786
    %v2275 = vpack.c.b16 %v1795, %v1787
    %v2276 = vpack.c.b16 %v1804, %v1796
    %v2277 = vpack.c.b16 %v1805, %v1797
    %v2278 = vpack.c.b16 %v1806, %v1798
    %v2279 = vpack.c.b16 %v1807, %v1799
    %v2280 = vpack.c.b16 %v1808, %v1800
    %v2281 = vpack.c.b16 %v1809, %v1801
    %v2282 = vpack.c.b16 %v1810, %v1802
    %v2283 = vpack.c.b16 %v1811, %v1803
    %v2284 = vpack.c.b16 %v1820, %v1812
    %v2285 = vpack.c.b16 %v1821, %v1813
    %v2286 = vpack.c.b16 %v1822, %v1814
    %v2287 = vpack.c.b16 %v1823, %v1815
    %v2288 = vpack.c.b16 %v1824, %v1816
    %v2289 = vpack.c.b16 %v1825, %v1817
    %v2290 = vpack.c.b16 %v1826, %v1818
    %v2291 = vpack.c.b16 %v1827, %v1819
    %v2292 = vpack.c.b16 %v1836, %v1828
    %v2293 = vpack.c.b16 %v1837, %v1829
    %v2294 = vpack.c.b16 %v1838, %v1830
    %v2295 = vpack.c.b16 %v1839, %v1831
    %v2296 = vpack.c.b16 %v1840, %v1832
    %v2297 = vpack.c.b16 %v1841, %v1833
    %v2298 = vpack.c.b16 %v1842, %v1834
    %v2299 = vpack.c.b16 %v1843, %v1835
    %v2300 = vpack.c.b16 %v1852, %v1844
    %v2301 = vpack.c.b16 %v1853, %v1845
    %v2302 = vpack.c.b16 %v1854, %v1846
    %v2303 = vpack.c.b16 %v1855, %v1847
    %v2304 = vpack.c.b16 %v1856, %v1848
    %v2305 = vpack.c.b16 %v1857, %v1849
    %v2306 = vpack.c.b16 %v1858, %v1850
    %v2307 = vpack.c.b16 %v1859, %v1851
    %v2308 = vpack.c.b16 %v1868, %v1860
    %v2309 = vpack.c.b16 %v1869, %v1861
    %v2310 = vpack.c.b16 %v1870, %v1862
    %v2311 = vpack.c.b16 %v1871, %v1863
    %v2312 = vpack.c.b16 %v1872, %v1864
    %v2313 = vpack.c.b16 %v1873, %v1865
    %v2314 = vpack.c.b16 %v1874, %v1866
    %v2315 = vpack.c.b16 %v1875, %v1867
    %v2316 = vpack.c.b16 %v1884, %v1876
    %v2317 = vpack.c.b16 %v1885, %v1877
    %v2318 = vpack.c.b16 %v1886, %v1878
    %v2319 = vpack.c.b16 %v1887, %v1879
    %v2320 = vpack.c.b16 %v1888, %v1880
    %v2321 = vpack.c.b16 %v1889, %v1881
    %v2322 = vpack.c.b16 %v1890, %v1882
    %v2323 = vpack.c.b16 %v1891, %v1883
    %v2324 = vpack.c.b16 %v1900, %v1892
    %v2325 = vpack.c.b16 %v1901, %v1893
    %v2326 = vpack.c.b16 %v1902, %v1894
    %v2327 = vpack.c.b16 %v1903, %v1895
    %v2328 = vpack.c.b16 %v1904, %v1896
    %v2329 = vpack.c.b16 %v1905, %v1897
    %v2330 = vpack.c.b16 %v1906, %v1898
    %v2331 = vpack.c.b16 %v1907, %v1899
    %v2332 = vpack.c.b16 %v1916, %v1908
    %v2333 = vpack.c.b16 %v1917, %v1909
    %v2334 = vpack.c.b16 %v1918, %v1910
    %v2335 = vpack.c.b16 %v1919, %v1911
    %v2336 = vpack.c.b16 %v1920, %v1912
    %v2337 = vpack.c.b16 %v1921, %v1913
    %v2338 = vpack.c.b16 %v1922, %v1914
    %v2339 = vpack.c.b16 %v1923, %v1915
    %v2340 = vpack.c.b16 %v1932, %v1924
    %v2341 = vpack.c.b16 %v1933, %v1925
    %v2342 = vpack.c.b16 %v1934, %v1926
    %v2343 = vpack.c.b16 %v1935, %v1927
    %v2344 = vpack.c.b16 %v1936, %v1928
    %v2345 = vpack.c.b16 %v1937, %v1929
    %v2346 = vpack.c.b16 %v1938, %v1930
    %v2347 = vpack.c.b16 %v1939, %v1931
    %v2348 = vpack.c.b16 %v1948, %v1940
    %v2349 = vpack.c.b16 %v1949, %v1941
    %v2350 = vpack.c.b16 %v1950, %v1942
    %v2351 = vpack.c.b16 %v1951, %v1943
    %v2352 = vpack.c.b16 %v1952, %v1944
    %v2353 = vpack.c.b16 %v1953, %v1945
    %v2354 = vpack.c.b16 %v1954, %v1946
    %v2355 = vpack.c.b16 %v1955, %v1947
    %v2356 = vpack.c.b16 %v1964, %v1956
    %v2357 = vpack.c.b16 %v1965, %v1957
    %v2358 = vpack.c.b16 %v1966, %v1958
    %v2359 = vpack.c.b16 %v1967, %v1959
    %v2360 = vpack.c.b16 %v1968, %v1960
    %v2361 = vpack.c.b16 %v1969, %v1961
    %v2362 = vpack.c.b16 %v1970, %v1962
    %v2363 = vpack.c.b16 %v1971, %v1963
    %v2364 = vpack.c.b16 %v1980, %v1972
    %v2365 = vpack.c.b16 %v1981, %v1973
    %v2366 = vpack.c.b16 %v1982, %v1974
    %v2367 = vpack.c.b16 %v1983, %v1975
    %v2368 = vpack.c.b16 %v1984, %v1976
    %v2369 = vpack.c.b16 %v1985, %v1977
    %v2370 = vpack.c.b16 %v1986, %v1978
    %v2371 = vpack.c.b16 %v1987, %v1979
    %2756 = vmatprep.subr.bf16.mxu0 %v1989
    %2757 = vmatpush1.bf16.msra.mxu0 %v1988
    %2758 = vmatprep.subr.bf16.mxu0 %v1997
    %2759 = vmatpush1.bf16.msra.mxu0 %v1996
    %2760 = vmatprep.subr.bf16.mxu0 %v2005
    %2761 = vmatpush1.bf16.msra.mxu0 %v2004
    %2762 = vmatprep.subr.bf16.mxu0 %v2013
    %2763 = vmatpush1.bf16.msra.mxu0 %v2012
    %2764 = vmatprep.subr.bf16.mxu0 %v2021
    %2765 = vmatpush1.bf16.msra.mxu0 %v2020
    %2766 = vmatprep.subr.bf16.mxu0 %v2029
    %2767 = vmatpush1.bf16.msra.mxu0 %v2028
    %2768 = vmatprep.subr.bf16.mxu0 %v2037
    %2769 = vmatpush1.bf16.msra.mxu0 %v2036
    %2770 = vmatprep.subr.bf16.mxu0 %v2045
    %2771 = vmatpush1.bf16.msra.mxu0 %v2044
    %2772 = vmatprep.subr.bf16.mxu0 %v2053
    %2773 = vmatpush1.bf16.msra.mxu0 %v2052
    %2774 = vmatprep.subr.bf16.mxu0 %v2061
    %2775 = vmatpush1.bf16.msra.mxu0 %v2060
    %2776 = vmatprep.subr.bf16.mxu0 %v2069
    %2777 = vmatpush1.bf16.msra.mxu0 %v2068
    %2778 = vmatprep.subr.bf16.mxu0 %v2077
    %2779 = vmatpush1.bf16.msra.mxu0 %v2076
    %2780 = vmatprep.subr.bf16.mxu0 %v2085
    %2781 = vmatpush1.bf16.msra.mxu0 %v2084
    %2782 = vmatprep.subr.bf16.mxu0 %v2093
    %2783 = vmatpush1.bf16.msra.mxu0 %v2092
    %2784 = vmatprep.subr.bf16.mxu0 %v2101
    %2785 = vmatpush1.bf16.msra.mxu0 %v2100
    %2786 = vmatprep.subr.bf16.mxu0 %v2109
    %2787 = vmatpush1.bf16.msra.mxu0 %v2108
    %2788 = vmatprep.mubr.bf16.mxu0 %v405
    %2789 = vmatmul.mubr.bf16.gmra.mrb[0].mxu0 %v404
    %v2790 = vpop.f32.mrb[0].mxu0
    %v2791 = vadd.f32 %v799, %v2790
    %v2792 = vpop.f32.mrb[0].mxu0
    %v2793 = vadd.f32 %v803, %v2792
    %v2794 = vpop.f32.mrb[0].mxu0
    %v2795 = vadd.f32 %v799, %v2794
    %v2796 = vpop.f32.mrb[0].mxu0
    %v2797 = vadd.f32 %v803, %v2796
    %2798 = vdwg.mxu0
    %2799 = vmatprep.subr.bf16.mxu0 %v2117
    %2800 = vmatpush1.bf16.msra.mxu0 %v2116
    %2801 = vmatprep.subr.bf16.mxu0 %v2125
    %2802 = vmatpush1.bf16.msra.mxu0 %v2124
    %2803 = vmatprep.subr.bf16.mxu0 %v2133
    %2804 = vmatpush1.bf16.msra.mxu0 %v2132
    %2805 = vmatprep.subr.bf16.mxu0 %v2141
    %2806 = vmatpush1.bf16.msra.mxu0 %v2140
    %2807 = vmatprep.subr.bf16.mxu0 %v2149
    %2808 = vmatpush1.bf16.msra.mxu0 %v2148
    %2809 = vmatprep.subr.bf16.mxu0 %v2157
    %2810 = vmatpush1.bf16.msra.mxu0 %v2156
    %2811 = vmatprep.subr.bf16.mxu0 %v2165
    %2812 = vmatpush1.bf16.msra.mxu0 %v2164
    %2813 = vmatprep.subr.bf16.mxu0 %v2173
    %2814 = vmatpush1.bf16.msra.mxu0 %v2172
    %2815 = vmatprep.subr.bf16.mxu0 %v2181
    %2816 = vmatpush1.bf16.msra.mxu0 %v2180
    %2817 = vmatprep.subr.bf16.mxu0 %v2189
    %2818 = vmatpush1.bf16.msra.mxu0 %v2188
    %2819 = vmatprep.subr.bf16.mxu0 %v2197
    %2820 = vmatpush1.bf16.msra.mxu0 %v2196
    %2821 = vmatprep.subr.bf16.mxu0 %v2205
    %2822 = vmatpush1.bf16.msra.mxu0 %v2204
    %2823 = vmatprep.subr.bf16.mxu0 %v2213
    %2824 = vmatpush1.bf16.msra.mxu0 %v2212
    %2825 = vmatprep.subr.bf16.mxu0 %v2221
    %2826 = vmatpush1.bf16.msra.mxu0 %v2220
    %2827 = vmatprep.subr.bf16.mxu0 %v2229
    %2828 = vmatpush1.bf16.msra.mxu0 %v2228
    %2829 = vmatprep.subr.bf16.mxu0 %v2237
    %2830 = vmatpush1.bf16.msra.mxu0 %v2236
    %2831 = vmatprep.mubr.bf16.mxu0 %v407
    %2832 = vmatmul.mubr.bf16.gmra.mrb[0].mxu0 %v406
    %v2833 = vpop.f32.mrb[0].mxu0
    %v2834 = vadd.f32 %v2791, %v2833
    %v2835 = vpop.f32.mrb[0].mxu0
    %v2836 = vadd.f32 %v2793, %v2835
    %v2837 = vpop.f32.mrb[0].mxu0
    %v2838 = vadd.f32 %v2795, %v2837
    %v2839 = vpop.f32.mrb[0].mxu0
    %v2840 = vadd.f32 %v2797, %v2839
    %2841 = vdwg.mxu0
    %2842 = vmatprep.subr.bf16.mxu0 %v2245
    %2843 = vmatpush1.bf16.msra.mxu0 %v2244
    %2844 = vmatprep.subr.bf16.mxu0 %v2253
    %2845 = vmatpush1.bf16.msra.mxu0 %v2252
    %2846 = vmatprep.subr.bf16.mxu0 %v2261
    %2847 = vmatpush1.bf16.msra.mxu0 %v2260
    %2848 = vmatprep.subr.bf16.mxu0 %v2269
    %2849 = vmatpush1.bf16.msra.mxu0 %v2268
    %2850 = vmatprep.subr.bf16.mxu0 %v2277
    %2851 = vmatpush1.bf16.msra.mxu0 %v2276
    %2852 = vmatprep.subr.bf16.mxu0 %v2285
    %2853 = vmatpush1.bf16.msra.mxu0 %v2284
    %2854 = vmatprep.subr.bf16.mxu0 %v2293
    %2855 = vmatpush1.bf16.msra.mxu0 %v2292
    %2856 = vmatprep.subr.bf16.mxu0 %v2301
    %2857 = vmatpush1.bf16.msra.mxu0 %v2300
    %2858 = vmatprep.subr.bf16.mxu0 %v2309
    %2859 = vmatpush1.bf16.msra.mxu0 %v2308
    %2860 = vmatprep.subr.bf16.mxu0 %v2317
    %2861 = vmatpush1.bf16.msra.mxu0 %v2316
    %2862 = vmatprep.subr.bf16.mxu0 %v2325
    %2863 = vmatpush1.bf16.msra.mxu0 %v2324
    %2864 = vmatprep.subr.bf16.mxu0 %v2333
    %2865 = vmatpush1.bf16.msra.mxu0 %v2332
    %2866 = vmatprep.subr.bf16.mxu0 %v2341
    %2867 = vmatpush1.bf16.msra.mxu0 %v2340
    %2868 = vmatprep.subr.bf16.mxu0 %v2349
    %2869 = vmatpush1.bf16.msra.mxu0 %v2348
    %2870 = vmatprep.subr.bf16.mxu0 %v2357
    %2871 = vmatpush1.bf16.msra.mxu0 %v2356
    %2872 = vmatprep.subr.bf16.mxu0 %v2365
    %2873 = vmatpush1.bf16.msra.mxu0 %v2364
    %2874 = vmatprep.mubr.bf16.mxu0 %v409
    %2875 = vmatmul.mubr.bf16.gmra.mrb[0].mxu0 %v408
    %v2876 = vpop.f32.mrb[0].mxu0
    %v2877 = vadd.f32 %v2834, %v2876
    %v2878 = vpop.f32.mrb[0].mxu0
    %v2879 = vadd.f32 %v2836, %v2878
    %v2880 = vpop.f32.mrb[0].mxu0
    %v2881 = vadd.f32 %v2838, %v2880
    %v2882 = vpop.f32.mrb[0].mxu0
    %v2883 = vadd.f32 %v2840, %v2882
    %2884 = vdwg.mxu0
    %2885 = vmatprep.subr.bf16.mxu0 %v1991
    %2886 = vmatpush1.bf16.msra.mxu0 %v1990
    %2887 = vmatprep.subr.bf16.mxu0 %v1999
    %2888 = vmatpush1.bf16.msra.mxu0 %v1998
    %2889 = vmatprep.subr.bf16.mxu0 %v2007
    %2890 = vmatpush1.bf16.msra.mxu0 %v2006
    %2891 = vmatprep.subr.bf16.mxu0 %v2015
    %2892 = vmatpush1.bf16.msra.mxu0 %v2014
    %2893 = vmatprep.subr.bf16.mxu0 %v2023
    %2894 = vmatpush1.bf16.msra.mxu0 %v2022
    %2895 = vmatprep.subr.bf16.mxu0 %v2031
    %2896 = vmatpush1.bf16.msra.mxu0 %v2030
    %2897 = vmatprep.subr.bf16.mxu0 %v2039
    %2898 = vmatpush1.bf16.msra.mxu0 %v2038
    %2899 = vmatprep.subr.bf16.mxu0 %v2047
    %2900 = vmatpush1.bf16.msra.mxu0 %v2046
    %2901 = vmatprep.subr.bf16.mxu0 %v2055
    %2902 = vmatpush1.bf16.msra.mxu0 %v2054
    %2903 = vmatprep.subr.bf16.mxu0 %v2063
    %2904 = vmatpush1.bf16.msra.mxu0 %v2062
    %2905 = vmatprep.subr.bf16.mxu0 %v2071
    %2906 = vmatpush1.bf16.msra.mxu0 %v2070
    %2907 = vmatprep.subr.bf16.mxu0 %v2079
    %2908 = vmatpush1.bf16.msra.mxu0 %v2078
    %2909 = vmatprep.subr.bf16.mxu0 %v2087
    %2910 = vmatpush1.bf16.msra.mxu0 %v2086
    %2911 = vmatprep.subr.bf16.mxu0 %v2095
    %2912 = vmatpush1.bf16.msra.mxu0 %v2094
    %2913 = vmatprep.subr.bf16.mxu0 %v2103
    %2914 = vmatpush1.bf16.msra.mxu0 %v2102
    %2915 = vmatprep.subr.bf16.mxu0 %v2111
    %2916 = vmatpush1.bf16.msra.mxu0 %v2110
    %2917 = vmatprep.mubr.bf16.mxu0 %v405
    %2918 = vmatmul.mubr.bf16.gmra.mrb[0].mxu0 %v404
    %v2919 = vpop.f32.mrb[0].mxu0
    %v2920 = vadd.f32 %v807, %v2919
    %v2921 = vpop.f32.mrb[0].mxu0
    %v2922 = vadd.f32 %v811, %v2921
    %v2923 = vpop.f32.mrb[0].mxu0
    %v2924 = vadd.f32 %v807, %v2923
    %v2925 = vpop.f32.mrb[0].mxu0
    %v2926 = vadd.f32 %v811, %v2925
    %2927 = vdwg.mxu0
    %2928 = vmatprep.subr.bf16.mxu0 %v2119
    %2929 = vmatpush1.bf16.msra.mxu0 %v2118
    %2930 = vmatprep.subr.bf16.mxu0 %v2127
    %2931 = vmatpush1.bf16.msra.mxu0 %v2126
    %2932 = vmatprep.subr.bf16.mxu0 %v2135
    %2933 = vmatpush1.bf16.msra.mxu0 %v2134
    %2934 = vmatprep.subr.bf16.mxu0 %v2143
    %2935 = vmatpush1.bf16.msra.mxu0 %v2142
    %2936 = vmatprep.subr.bf16.mxu0 %v2151
    %2937 = vmatpush1.bf16.msra.mxu0 %v2150
    %2938 = vmatprep.subr.bf16.mxu0 %v2159
    %2939 = vmatpush1.bf16.msra.mxu0 %v2158
    %2940 = vmatprep.subr.bf16.mxu0 %v2167
    %2941 = vmatpush1.bf16.msra.mxu0 %v2166
    %2942 = vmatprep.subr.bf16.mxu0 %v2175
    %2943 = vmatpush1.bf16.msra.mxu0 %v2174
    %2944 = vmatprep.subr.bf16.mxu0 %v2183
    %2945 = vmatpush1.bf16.msra.mxu0 %v2182
    %2946 = vmatprep.subr.bf16.mxu0 %v2191
    %2947 = vmatpush1.bf16.msra.mxu0 %v2190
    %2948 = vmatprep.subr.bf16.mxu0 %v2199
    %2949 = vmatpush1.bf16.msra.mxu0 %v2198
    %2950 = vmatprep.subr.bf16.mxu0 %v2207
    %2951 = vmatpush1.bf16.msra.mxu0 %v2206
    %2952 = vmatprep.subr.bf16.mxu0 %v2215
    %2953 = vmatpush1.bf16.msra.mxu0 %v2214
    %2954 = vmatprep.subr.bf16.mxu0 %v2223
    %2955 = vmatpush1.bf16.msra.mxu0 %v2222
    %2956 = vmatprep.subr.bf16.mxu0 %v2231
    %2957 = vmatpush1.bf16.msra.mxu0 %v2230
    %2958 = vmatprep.subr.bf16.mxu0 %v2239
    %2959 = vmatpush1.bf16.msra.mxu0 %v2238
    %2960 = vmatprep.mubr.bf16.mxu0 %v407
    %2961 = vmatmul.mubr.bf16.gmra.mrb[0].mxu0 %v406
    %v2962 = vpop.f32.mrb[0].mxu0
    %v2963 = vadd.f32 %v2920, %v2962
    %v2964 = vpop.f32.mrb[0].mxu0
    %v2965 = vadd.f32 %v2922, %v2964
    %v2966 = vpop.f32.mrb[0].mxu0
    %v2967 = vadd.f32 %v2924, %v2966
    %v2968 = vpop.f32.mrb[0].mxu0
    %v2969 = vadd.f32 %v2926, %v2968
    %2970 = vdwg.mxu0
    %2971 = vmatprep.subr.bf16.mxu0 %v2247
    %2972 = vmatpush1.bf16.msra.mxu0 %v2246
    %2973 = vmatprep.subr.bf16.mxu0 %v2255
    %2974 = vmatpush1.bf16.msra.mxu0 %v2254
    %2975 = vmatprep.subr.bf16.mxu0 %v2263
    %2976 = vmatpush1.bf16.msra.mxu0 %v2262
    %2977 = vmatprep.subr.bf16.mxu0 %v2271
    %2978 = vmatpush1.bf16.msra.mxu0 %v2270
    %2979 = vmatprep.subr.bf16.mxu0 %v2279
    %2980 = vmatpush1.bf16.msra.mxu0 %v2278
    %2981 = vmatprep.subr.bf16.mxu0 %v2287
    %2982 = vmatpush1.bf16.msra.mxu0 %v2286
    %2983 = vmatprep.subr.bf16.mxu0 %v2295
    %2984 = vmatpush1.bf16.msra.mxu0 %v2294
    %2985 = vmatprep.subr.bf16.mxu0 %v2303
    %2986 = vmatpush1.bf16.msra.mxu0 %v2302
    %2987 = vmatprep.subr.bf16.mxu0 %v2311
    %2988 = vmatpush1.bf16.msra.mxu0 %v2310
    %2989 = vmatprep.subr.bf16.mxu0 %v2319
    %2990 = vmatpush1.bf16.msra.mxu0 %v2318
    %2991 = vmatprep.subr.bf16.mxu0 %v2327
    %2992 = vmatpush1.bf16.msra.mxu0 %v2326
    %2993 = vmatprep.subr.bf16.mxu0 %v2335
    %2994 = vmatpush1.bf16.msra.mxu0 %v2334
    %2995 = vmatprep.subr.bf16.mxu0 %v2343
    %2996 = vmatpush1.bf16.msra.mxu0 %v2342
    %2997 = vmatprep.subr.bf16.mxu0 %v2351
    %2998 = vmatpush1.bf16.msra.mxu0 %v2350
    %2999 = vmatprep.subr.bf16.mxu0 %v2359
    %3000 = vmatpush1.bf16.msra.mxu0 %v2358
    %3001 = vmatprep.subr.bf16.mxu0 %v2367
    %3002 = vmatpush1.bf16.msra.mxu0 %v2366
    %3003 = vmatprep.mubr.bf16.mxu0 %v409
    %3004 = vmatmul.mubr.bf16.gmra.mrb[0].mxu0 %v408
    %v3005 = vpop.f32.mrb[0].mxu0
    %v3006 = vadd.f32 %v2963, %v3005
    %v3007 = vpop.f32.mrb[0].mxu0
    %v3008 = vadd.f32 %v2965, %v3007
    %v3009 = vpop.f32.mrb[0].mxu0
    %v3010 = vadd.f32 %v2967, %v3009
    %v3011 = vpop.f32.mrb[0].mxu0
    %v3012 = vadd.f32 %v2969, %v3011
    %3013 = vdwg.mxu0
    %3014 = vmatprep.subr.bf16.mxu0 %v1993
    %3015 = vmatpush1.bf16.msra.mxu0 %v1992
    %3016 = vmatprep.subr.bf16.mxu0 %v2001
    %3017 = vmatpush1.bf16.msra.mxu0 %v2000
    %3018 = vmatprep.subr.bf16.mxu0 %v2009
    %3019 = vmatpush1.bf16.msra.mxu0 %v2008
    %3020 = vmatprep.subr.bf16.mxu0 %v2017
    %3021 = vmatpush1.bf16.msra.mxu0 %v2016
    %3022 = vmatprep.subr.bf16.mxu0 %v2025
    %3023 = vmatpush1.bf16.msra.mxu0 %v2024
    %3024 = vmatprep.subr.bf16.mxu0 %v2033
    %3025 = vmatpush1.bf16.msra.mxu0 %v2032
    %3026 = vmatprep.subr.bf16.mxu0 %v2041
    %3027 = vmatpush1.bf16.msra.mxu0 %v2040
    %3028 = vmatprep.subr.bf16.mxu0 %v2049
    %3029 = vmatpush1.bf16.msra.mxu0 %v2048
    %3030 = vmatprep.subr.bf16.mxu0 %v2057
    %3031 = vmatpush1.bf16.msra.mxu0 %v2056
    %3032 = vmatprep.subr.bf16.mxu0 %v2065
    %3033 = vmatpush1.bf16.msra.mxu0 %v2064
    %3034 = vmatprep.subr.bf16.mxu0 %v2073
    %3035 = vmatpush1.bf16.msra.mxu0 %v2072
    %3036 = vmatprep.subr.bf16.mxu0 %v2081
    %3037 = vmatpush1.bf16.msra.mxu0 %v2080
    %3038 = vmatprep.subr.bf16.mxu0 %v2089
    %3039 = vmatpush1.bf16.msra.mxu0 %v2088
    %3040 = vmatprep.subr.bf16.mxu0 %v2097
    %3041 = vmatpush1.bf16.msra.mxu0 %v2096
    %3042 = vmatprep.subr.bf16.mxu0 %v2105
    %3043 = vmatpush1.bf16.msra.mxu0 %v2104
    %3044 = vmatprep.subr.bf16.mxu0 %v2113
    %3045 = vmatpush1.bf16.msra.mxu0 %v2112
    %3046 = vmatprep.mubr.bf16.mxu0 %v405
    %3047 = vmatmul.mubr.bf16.gmra.mrb[0].mxu0 %v404
    %v3048 = vpop.f32.mrb[0].mxu0
    %v3049 = vadd.f32 %v815, %v3048
    %v3050 = vpop.f32.mrb[0].mxu0
    %v3051 = vadd.f32 %v819, %v3050
    %v3052 = vpop.f32.mrb[0].mxu0
    %v3053 = vadd.f32 %v815, %v3052
    %v3054 = vpop.f32.mrb[0].mxu0
    %v3055 = vadd.f32 %v819, %v3054
    %3056 = vdwg.mxu0
    %3057 = vmatprep.subr.bf16.mxu0 %v2121
    %3058 = vmatpush1.bf16.msra.mxu0 %v2120
    %3059 = vmatprep.subr.bf16.mxu0 %v2129
    %3060 = vmatpush1.bf16.msra.mxu0 %v2128
    %3061 = vmatprep.subr.bf16.mxu0 %v2137
    %3062 = vmatpush1.bf16.msra.mxu0 %v2136
    %3063 = vmatprep.subr.bf16.mxu0 %v2145
    %3064 = vmatpush1.bf16.msra.mxu0 %v2144
    %3065 = vmatprep.subr.bf16.mxu0 %v2153
    %3066 = vmatpush1.bf16.msra.mxu0 %v2152
    %3067 = vmatprep.subr.bf16.mxu0 %v2161
    %3068 = vmatpush1.bf16.msra.mxu0 %v2160
    %3069 = vmatprep.subr.bf16.mxu0 %v2169
    %3070 = vmatpush1.bf16.msra.mxu0 %v2168
    %3071 = vmatprep.subr.bf16.mxu0 %v2177
    %3072 = vmatpush1.bf16.msra.mxu0 %v2176
    %3073 = vmatprep.subr.bf16.mxu0 %v2185
    %3074 = vmatpush1.bf16.msra.mxu0 %v2184
    %3075 = vmatprep.subr.bf16.mxu0 %v2193
    %3076 = vmatpush1.bf16.msra.mxu0 %v2192
    %3077 = vmatprep.subr.bf16.mxu0 %v2201
    %3078 = vmatpush1.bf16.msra.mxu0 %v2200
    %3079 = vmatprep.subr.bf16.mxu0 %v2209
    %3080 = vmatpush1.bf16.msra.mxu0 %v2208
    %3081 = vmatprep.subr.bf16.mxu0 %v2217
    %3082 = vmatpush1.bf16.msra.mxu0 %v2216
    %3083 = vmatprep.subr.bf16.mxu0 %v2225
    %3084 = vmatpush1.bf16.msra.mxu0 %v2224
    %3085 = vmatprep.subr.bf16.mxu0 %v2233
    %3086 = vmatpush1.bf16.msra.mxu0 %v2232
    %3087 = vmatprep.subr.bf16.mxu0 %v2241
    %3088 = vmatpush1.bf16.msra.mxu0 %v2240
    %3089 = vmatprep.mubr.bf16.mxu0 %v407
    %3090 = vmatmul.mubr.bf16.gmra.mrb[0].mxu0 %v406
    %v3091 = vpop.f32.mrb[0].mxu0
    %v3092 = vadd.f32 %v3049, %v3091
    %v3093 = vpop.f32.mrb[0].mxu0
    %v3094 = vadd.f32 %v3051, %v3093
    %v3095 = vpop.f32.mrb[0].mxu0
    %v3096 = vadd.f32 %v3053, %v3095
    %v3097 = vpop.f32.mrb[0].mxu0
    %v3098 = vadd.f32 %v3055, %v3097
    %3099 = vdwg.mxu0
    %3100 = vmatprep.subr.bf16.mxu0 %v2249
    %3101 = vmatpush1.bf16.msra.mxu0 %v2248
    %3102 = vmatprep.subr.bf16.mxu0 %v2257
    %3103 = vmatpush1.bf16.msra.mxu0 %v2256
    %3104 = vmatprep.subr.bf16.mxu0 %v2265
    %3105 = vmatpush1.bf16.msra.mxu0 %v2264
    %3106 = vmatprep.subr.bf16.mxu0 %v2273
    %3107 = vmatpush1.bf16.msra.mxu0 %v2272
    %3108 = vmatprep.subr.bf16.mxu0 %v2281
    %3109 = vmatpush1.bf16.msra.mxu0 %v2280
    %3110 = vmatprep.subr.bf16.mxu0 %v2289
    %3111 = vmatpush1.bf16.msra.mxu0 %v2288
    %3112 = vmatprep.subr.bf16.mxu0 %v2297
    %3113 = vmatpush1.bf16.msra.mxu0 %v2296
    %3114 = vmatprep.subr.bf16.mxu0 %v2305
    %3115 = vmatpush1.bf16.msra.mxu0 %v2304
    %3116 = vmatprep.subr.bf16.mxu0 %v2313
    %3117 = vmatpush1.bf16.msra.mxu0 %v2312
    %3118 = vmatprep.subr.bf16.mxu0 %v2321
    %3119 = vmatpush1.bf16.msra.mxu0 %v2320
    %3120 = vmatprep.subr.bf16.mxu0 %v2329
    %3121 = vmatpush1.bf16.msra.mxu0 %v2328
    %3122 = vmatprep.subr.bf16.mxu0 %v2337
    %3123 = vmatpush1.bf16.msra.mxu0 %v2336
    %3124 = vmatprep.subr.bf16.mxu0 %v2345
    %3125 = vmatpush1.bf16.msra.mxu0 %v2344
    %3126 = vmatprep.subr.bf16.mxu0 %v2353
    %3127 = vmatpush1.bf16.msra.mxu0 %v2352
    %3128 = vmatprep.subr.bf16.mxu0 %v2361
    %3129 = vmatpush1.bf16.msra.mxu0 %v2360
    %3130 = vmatprep.subr.bf16.mxu0 %v2369
    %3131 = vmatpush1.bf16.msra.mxu0 %v2368
    %3132 = vmatprep.mubr.bf16.mxu0 %v409
    %3133 = vmatmul.mubr.bf16.gmra.mrb[0].mxu0 %v408
    %v3134 = vpop.f32.mrb[0].mxu0
    %v3135 = vadd.f32 %v3092, %v3134
    %v3136 = vpop.f32.mrb[0].mxu0
    %v3137 = vadd.f32 %v3094, %v3136
    %v3138 = vpop.f32.mrb[0].mxu0
    %v3139 = vadd.f32 %v3096, %v3138
    %v3140 = vpop.f32.mrb[0].mxu0
    %v3141 = vadd.f32 %v3098, %v3140
    %3142 = vdwg.mxu0
    %3143 = vmatprep.subr.bf16.mxu0 %v1995
    %3144 = vmatpush1.bf16.msra.mxu0 %v1994
    %3145 = vmatprep.subr.bf16.mxu0 %v2003
    %3146 = vmatpush1.bf16.msra.mxu0 %v2002
    %3147 = vmatprep.subr.bf16.mxu0 %v2011
    %3148 = vmatpush1.bf16.msra.mxu0 %v2010
    %3149 = vmatprep.subr.bf16.mxu0 %v2019
    %3150 = vmatpush1.bf16.msra.mxu0 %v2018
    %3151 = vmatprep.subr.bf16.mxu0 %v2027
    %3152 = vmatpush1.bf16.msra.mxu0 %v2026
    %3153 = vmatprep.subr.bf16.mxu0 %v2035
    %3154 = vmatpush1.bf16.msra.mxu0 %v2034
    %3155 = vmatprep.subr.bf16.mxu0 %v2043
    %3156 = vmatpush1.bf16.msra.mxu0 %v2042
    %3157 = vmatprep.subr.bf16.mxu0 %v2051
    %3158 = vmatpush1.bf16.msra.mxu0 %v2050
    %3159 = vmatprep.subr.bf16.mxu0 %v2059
    %3160 = vmatpush1.bf16.msra.mxu0 %v2058
    %3161 = vmatprep.subr.bf16.mxu0 %v2067
    %3162 = vmatpush1.bf16.msra.mxu0 %v2066
    %3163 = vmatprep.subr.bf16.mxu0 %v2075
    %3164 = vmatpush1.bf16.msra.mxu0 %v2074
    %3165 = vmatprep.subr.bf16.mxu0 %v2083
    %3166 = vmatpush1.bf16.msra.mxu0 %v2082
    %3167 = vmatprep.subr.bf16.mxu0 %v2091
    %3168 = vmatpush1.bf16.msra.mxu0 %v2090
    %3169 = vmatprep.subr.bf16.mxu0 %v2099
    %3170 = vmatpush1.bf16.msra.mxu0 %v2098
    %3171 = vmatprep.subr.bf16.mxu0 %v2107
    %3172 = vmatpush1.bf16.msra.mxu0 %v2106
    %3173 = vmatprep.subr.bf16.mxu0 %v2115
    %3174 = vmatpush1.bf16.msra.mxu0 %v2114
    %3175 = vmatprep.mubr.bf16.mxu0 %v405
    %3176 = vmatmul.mubr.bf16.gmra.mrb[0].mxu0 %v404
    %v3177 = vpop.f32.mrb[0].mxu0
    %v3178 = vadd.f32 %v823, %v3177
    %v3179 = vpop.f32.mrb[0].mxu0
    %v3180 = vadd.f32 %v827, %v3179
    %v3181 = vpop.f32.mrb[0].mxu0
    %v3182 = vadd.f32 %v823, %v3181
    %v3183 = vpop.f32.mrb[0].mxu0
    %v3184 = vadd.f32 %v827, %v3183
    %3185 = vdwg.mxu0
    %3186 = vmatprep.subr.bf16.mxu0 %v2123
    %3187 = vmatpush1.bf16.msra.mxu0 %v2122
    %3188 = vmatprep.subr.bf16.mxu0 %v2131
    %3189 = vmatpush1.bf16.msra.mxu0 %v2130
    %3190 = vmatprep.subr.bf16.mxu0 %v2139
    %3191 = vmatpush1.bf16.msra.mxu0 %v2138
    %3192 = vmatprep.subr.bf16.mxu0 %v2147
    %3193 = vmatpush1.bf16.msra.mxu0 %v2146
    %3194 = vmatprep.subr.bf16.mxu0 %v2155
    %3195 = vmatpush1.bf16.msra.mxu0 %v2154
    %3196 = vmatprep.subr.bf16.mxu0 %v2163
    %3197 = vmatpush1.bf16.msra.mxu0 %v2162
    %3198 = vmatprep.subr.bf16.mxu0 %v2171
    %3199 = vmatpush1.bf16.msra.mxu0 %v2170
    %3200 = vmatprep.subr.bf16.mxu0 %v2179
    %3201 = vmatpush1.bf16.msra.mxu0 %v2178
    %3202 = vmatprep.subr.bf16.mxu0 %v2187
    %3203 = vmatpush1.bf16.msra.mxu0 %v2186
    %3204 = vmatprep.subr.bf16.mxu0 %v2195
    %3205 = vmatpush1.bf16.msra.mxu0 %v2194
    %3206 = vmatprep.subr.bf16.mxu0 %v2203
    %3207 = vmatpush1.bf16.msra.mxu0 %v2202
    %3208 = vmatprep.subr.bf16.mxu0 %v2211
    %3209 = vmatpush1.bf16.msra.mxu0 %v2210
    %3210 = vmatprep.subr.bf16.mxu0 %v2219
    %3211 = vmatpush1.bf16.msra.mxu0 %v2218
    %3212 = vmatprep.subr.bf16.mxu0 %v2227
    %3213 = vmatpush1.bf16.msra.mxu0 %v2226
    %3214 = vmatprep.subr.bf16.mxu0 %v2235
    %3215 = vmatpush1.bf16.msra.mxu0 %v2234
    %3216 = vmatprep.subr.bf16.mxu0 %v2243
    %3217 = vmatpush1.bf16.msra.mxu0 %v2242
    %3218 = vmatprep.mubr.bf16.mxu0 %v407
    %3219 = vmatmul.mubr.bf16.gmra.mrb[0].mxu0 %v406
    %v3220 = vpop.f32.mrb[0].mxu0
    %v3221 = vadd.f32 %v3178, %v3220
    %v3222 = vpop.f32.mrb[0].mxu0
    %v3223 = vadd.f32 %v3180, %v3222
    %v3224 = vpop.f32.mrb[0].mxu0
    %v3225 = vadd.f32 %v3182, %v3224
    %v3226 = vpop.f32.mrb[0].mxu0
    %v3227 = vadd.f32 %v3184, %v3226
    %3228 = vdwg.mxu0
    %3229 = vmatprep.subr.bf16.mxu0 %v2251
    %3230 = vmatpush1.bf16.msra.mxu0 %v2250
    %3231 = vmatprep.subr.bf16.mxu0 %v2259
    %3232 = vmatpush1.bf16.msra.mxu0 %v2258
    %3233 = vmatprep.subr.bf16.mxu0 %v2267
    %3234 = vmatpush1.bf16.msra.mxu0 %v2266
    %3235 = vmatprep.subr.bf16.mxu0 %v2275
    %3236 = vmatpush1.bf16.msra.mxu0 %v2274
    %3237 = vmatprep.subr.bf16.mxu0 %v2283
    %3238 = vmatpush1.bf16.msra.mxu0 %v2282
    %3239 = vmatprep.subr.bf16.mxu0 %v2291
    %3240 = vmatpush1.bf16.msra.mxu0 %v2290
    %3241 = vmatprep.subr.bf16.mxu0 %v2299
    %3242 = vmatpush1.bf16.msra.mxu0 %v2298
    %3243 = vmatprep.subr.bf16.mxu0 %v2307
    %3244 = vmatpush1.bf16.msra.mxu0 %v2306
    %3245 = vmatprep.subr.bf16.mxu0 %v2315
    %3246 = vmatpush1.bf16.msra.mxu0 %v2314
    %3247 = vmatprep.subr.bf16.mxu0 %v2323
    %3248 = vmatpush1.bf16.msra.mxu0 %v2322
    %3249 = vmatprep.subr.bf16.mxu0 %v2331
    %3250 = vmatpush1.bf16.msra.mxu0 %v2330
    %3251 = vmatprep.subr.bf16.mxu0 %v2339
    %3252 = vmatpush1.bf16.msra.mxu0 %v2338
    %3253 = vmatprep.subr.bf16.mxu0 %v2347
    %3254 = vmatpush1.bf16.msra.mxu0 %v2346
    %3255 = vmatprep.subr.bf16.mxu0 %v2355
    %3256 = vmatpush1.bf16.msra.mxu0 %v2354
    %3257 = vmatprep.subr.bf16.mxu0 %v2363
    %3258 = vmatpush1.bf16.msra.mxu0 %v2362
    %3259 = vmatprep.subr.bf16.mxu0 %v2371
    %3260 = vmatpush1.bf16.msra.mxu0 %v2370
    %3261 = vmatprep.mubr.bf16.mxu0 %v409
    %3262 = vmatmul.mubr.bf16.gmra.mrb[0].mxu0 %v408
    %v3263 = vpop.f32.mrb[0].mxu0
    %v3264 = vadd.f32 %v3221, %v3263
    %v3265 = vpop.f32.mrb[0].mxu0
    %v3266 = vadd.f32 %v3223, %v3265
    %v3267 = vpop.f32.mrb[0].mxu0
    %v3268 = vadd.f32 %v3225, %v3267
    %v3269 = vpop.f32.mrb[0].mxu0
    %v3270 = vadd.f32 %v3227, %v3269
    %3271 = vdwg.mxu0
    %v3272 = vmax.f32 %v2877, 0.0
    %v3273 = vmax.f32 %v2879, 0.0
    %v3274 = vmax.f32 %v3006, 0.0
    %v3275 = vmax.f32 %v3008, 0.0
    %v3276 = vmax.f32 %v3135, 0.0
    %v3277 = vmax.f32 %v3137, 0.0
    %v3278 = vmax.f32 %v3264, 0.0
    %v3279 = vmax.f32 %v3266, 0.0
    %v3280 = vmax.f32 %v2881, 0.0
    %v3281 = vmax.f32 %v2883, 0.0
    %v3282 = vmax.f32 %v3010, 0.0
    %v3283 = vmax.f32 %v3012, 0.0
    %v3284 = vmax.f32 %v3139, 0.0
    %v3285 = vmax.f32 %v3141, 0.0
    %v3286 = vmax.f32 %v3268, 0.0
    %v3287 = vmax.f32 %v3270, 0.0
    %v3288 = vpack.c.bf16 %v3280, %v3272
    %v3289 = vpack.c.bf16 %v3281, %v3273
    %v3290 = vpack.c.bf16 %v3282, %v3274
    %v3291 = vpack.c.bf16 %v3283, %v3275
    %v3292 = vpack.c.bf16 %v3284, %v3276
    %v3293 = vpack.c.bf16 %v3285, %v3277
    %v3294 = vpack.c.bf16 %v3286, %v3278
    %v3295 = vpack.c.bf16 %v3287, %v3279
    %v3296 = vld [vmem:[#allocation11] sm:$0xff]
    %v3297 = vld [vmem:[#allocation11 + $0x8] sm:$0xff]
    %v3298 = vld [vmem:[#allocation11 + $0x10] sm:$0xff]
    %v3299 = vld [vmem:[#allocation11 + $0x18] sm:$0xff]
    %v3300 = vld [vmem:[#allocation11 + $0x20] sm:$0xff]
    %v3301 = vld [vmem:[#allocation11 + $0x28] sm:$0xff]
    %v3302 = vld [vmem:[#allocation11 + $0x30] sm:$0xff]
    %v3303 = vld [vmem:[#allocation11 + $0x38] sm:$0xff]
    %v3304 = vld [vmem:[#allocation11 + $0x40] sm:$0xff]
    %v3305 = vld [vmem:[#allocation11 + $0x48] sm:$0xff]
    %v3306 = vld [vmem:[#allocation11 + $0x50] sm:$0xff]
    %v3307 = vld [vmem:[#allocation11 + $0x58] sm:$0xff]
    %v3308 = vld [vmem:[#allocation11 + $0x60] sm:$0xff]
    %v3309 = vld [vmem:[#allocation11 + $0x68] sm:$0xff]
    %v3310 = vld [vmem:[#allocation11 + $0x70] sm:$0xff]
    %v3311 = vld [vmem:[#allocation11 + $0x78] sm:$0xff]
    %v3312 = vld [vmem:[#allocation11 + $0x80] sm:$0xff]
    %v3313 = vld [vmem:[#allocation11 + $0x88] sm:$0xff]
    %v3314 = vld [vmem:[#allocation11 + $0x90] sm:$0xff]
    %v3315 = vld [vmem:[#allocation11 + $0x98] sm:$0xff]
    %v3316 = vld [vmem:[#allocation11 + $0xa0] sm:$0xff]
    %v3317 = vld [vmem:[#allocation11 + $0xa8] sm:$0xff]
    %v3318 = vld [vmem:[#allocation11 + $0xb0] sm:$0xff]
    %v3319 = vld [vmem:[#allocation11 + $0xb8] sm:$0xff]
    %v3320 = vld [vmem:[#allocation11 + $0xc0] sm:$0xff]
    %v3321 = vld [vmem:[#allocation11 + $0xc8] sm:$0xff]
    %v3322 = vld [vmem:[#allocation11 + $0xd0] sm:$0xff]
    %v3323 = vld [vmem:[#allocation11 + $0xd8] sm:$0xff]
    %v3324 = vld [vmem:[#allocation11 + $0xe0] sm:$0xff]
    %v3325 = vld [vmem:[#allocation11 + $0xe8] sm:$0xff]
    %v3326 = vld [vmem:[#allocation11 + $0xf0] sm:$0xff]
    %v3327 = vld [vmem:[#allocation11 + $0xf8] sm:$0xff]
    %v3328 = vld [vmem:[#allocation11 + $0x100] sm:$0xff]
    %v3329 = vld [vmem:[#allocation11 + $0x108] sm:$0xff]
    %v3330 = vld [vmem:[#allocation11 + $0x110] sm:$0xff]
    %v3331 = vld [vmem:[#allocation11 + $0x118] sm:$0xff]
    %v3332 = vld [vmem:[#allocation11 + $0x120] sm:$0xff]
    %v3333 = vld [vmem:[#allocation11 + $0x128] sm:$0xff]
    %v3334 = vld [vmem:[#allocation11 + $0x130] sm:$0xff]
    %v3335 = vld [vmem:[#allocation11 + $0x138] sm:$0xff]
    %v3336 = vld [vmem:[#allocation11 + $0x140] sm:$0xff]
    %v3337 = vld [vmem:[#allocation11 + $0x148] sm:$0xff]
    %v3338 = vld [vmem:[#allocation11 + $0x150] sm:$0xff]
    %v3339 = vld [vmem:[#allocation11 + $0x158] sm:$0xff]
    %v3340 = vld [vmem:[#allocation11 + $0x160] sm:$0xff]
    %v3341 = vld [vmem:[#allocation11 + $0x168] sm:$0xff]
    %v3342 = vld [vmem:[#allocation11 + $0x170] sm:$0xff]
    %v3343 = vld [vmem:[#allocation11 + $0x178] sm:$0xff]
    %v3344 = vld [vmem:[#allocation11 + $0x180] sm:$0xff]
    %v3345 = vld [vmem:[#allocation11 + $0x188] sm:$0xff]
    %v3346 = vld [vmem:[#allocation11 + $0x190] sm:$0xff]
    %v3347 = vld [vmem:[#allocation11 + $0x198] sm:$0xff]
    %v3348 = vld [vmem:[#allocation11 + $0x1a0] sm:$0xff]
    %v3349 = vld [vmem:[#allocation11 + $0x1a8] sm:$0xff]
    %v3350 = vld [vmem:[#allocation11 + $0x1b0] sm:$0xff]
    %v3351 = vld [vmem:[#allocation11 + $0x1b8] sm:$0xff]
    %v3352 = vld [vmem:[#allocation11 + $0x1c0] sm:$0xff]
    %v3353 = vld [vmem:[#allocation11 + $0x1c8] sm:$0xff]
    %v3354 = vld [vmem:[#allocation11 + $0x1d0] sm:$0xff]
    %v3355 = vld [vmem:[#allocation11 + $0x1d8] sm:$0xff]
    %v3356 = vld [vmem:[#allocation11 + $0x1e0] sm:$0xff]
    %v3357 = vld [vmem:[#allocation11 + $0x1e8] sm:$0xff]
    %v3358 = vld [vmem:[#allocation11 + $0x1f0] sm:$0xff]
    %v3359 = vld [vmem:[#allocation11 + $0x1f8] sm:$0xff]
    %v3360 = vld [vmem:[#allocation11 + $0x200] sm:$0xff]
    %v3361 = vld [vmem:[#allocation11 + $0x208] sm:$0xff]
    %v3362 = vld [vmem:[#allocation11 + $0x210] sm:$0xff]
    %v3363 = vld [vmem:[#allocation11 + $0x218] sm:$0xff]
    %v3364 = vld [vmem:[#allocation11 + $0x220] sm:$0xff]
    %v3365 = vld [vmem:[#allocation11 + $0x228] sm:$0xff]
    %v3366 = vld [vmem:[#allocation11 + $0x230] sm:$0xff]
    %v3367 = vld [vmem:[#allocation11 + $0x238] sm:$0xff]
    %v3368 = vld [vmem:[#allocation11 + $0x240] sm:$0xff]
    %v3369 = vld [vmem:[#allocation11 + $0x248] sm:$0xff]
    %v3370 = vld [vmem:[#allocation11 + $0x250] sm:$0xff]
    %v3371 = vld [vmem:[#allocation11 + $0x258] sm:$0xff]
    %v3372 = vld [vmem:[#allocation11 + $0x260] sm:$0xff]
    %v3373 = vld [vmem:[#allocation11 + $0x268] sm:$0xff]
    %v3374 = vld [vmem:[#allocation11 + $0x270] sm:$0xff]
    %v3375 = vld [vmem:[#allocation11 + $0x278] sm:$0xff]
    %v3376 = vld [vmem:[#allocation11 + $0x280] sm:$0xff]
    %v3377 = vld [vmem:[#allocation11 + $0x288] sm:$0xff]
    %v3378 = vld [vmem:[#allocation11 + $0x290] sm:$0xff]
    %v3379 = vld [vmem:[#allocation11 + $0x298] sm:$0xff]
    %v3380 = vld [vmem:[#allocation11 + $0x2a0] sm:$0xff]
    %v3381 = vld [vmem:[#allocation11 + $0x2a8] sm:$0xff]
    %v3382 = vld [vmem:[#allocation11 + $0x2b0] sm:$0xff]
    %v3383 = vld [vmem:[#allocation11 + $0x2b8] sm:$0xff]
    %v3384 = vld [vmem:[#allocation11 + $0x2c0] sm:$0xff]
    %v3385 = vld [vmem:[#allocation11 + $0x2c8] sm:$0xff]
    %v3386 = vld [vmem:[#allocation11 + $0x2d0] sm:$0xff]
    %v3387 = vld [vmem:[#allocation11 + $0x2d8] sm:$0xff]
    %v3388 = vld [vmem:[#allocation11 + $0x2e0] sm:$0xff]
    %v3389 = vld [vmem:[#allocation11 + $0x2e8] sm:$0xff]
    %v3390 = vld [vmem:[#allocation11 + $0x2f0] sm:$0xff]
    %v3391 = vld [vmem:[#allocation11 + $0x2f8] sm:$0xff]
    %v3392 = vld [vmem:[#allocation11 + $0x300] sm:$0xff]
    %v3393 = vld [vmem:[#allocation11 + $0x308] sm:$0xff]
    %v3394 = vld [vmem:[#allocation11 + $0x310] sm:$0xff]
    %v3395 = vld [vmem:[#allocation11 + $0x318] sm:$0xff]
    %v3396 = vld [vmem:[#allocation11 + $0x320] sm:$0xff]
    %v3397 = vld [vmem:[#allocation11 + $0x328] sm:$0xff]
    %v3398 = vld [vmem:[#allocation11 + $0x330] sm:$0xff]
    %v3399 = vld [vmem:[#allocation11 + $0x338] sm:$0xff]
    %v3400 = vld [vmem:[#allocation11 + $0x340] sm:$0xff]
    %v3401 = vld [vmem:[#allocation11 + $0x348] sm:$0xff]
    %v3402 = vld [vmem:[#allocation11 + $0x350] sm:$0xff]
    %v3403 = vld [vmem:[#allocation11 + $0x358] sm:$0xff]
    %v3404 = vld [vmem:[#allocation11 + $0x360] sm:$0xff]
    %v3405 = vld [vmem:[#allocation11 + $0x368] sm:$0xff]
    %v3406 = vld [vmem:[#allocation11 + $0x370] sm:$0xff]
    %v3407 = vld [vmem:[#allocation11 + $0x378] sm:$0xff]
    %v3408 = vld [vmem:[#allocation11 + $0x380] sm:$0xff]
    %v3409 = vld [vmem:[#allocation11 + $0x388] sm:$0xff]
    %v3410 = vld [vmem:[#allocation11 + $0x390] sm:$0xff]
    %v3411 = vld [vmem:[#allocation11 + $0x398] sm:$0xff]
    %v3412 = vld [vmem:[#allocation11 + $0x3a0] sm:$0xff]
    %v3413 = vld [vmem:[#allocation11 + $0x3a8] sm:$0xff]
    %v3414 = vld [vmem:[#allocation11 + $0x3b0] sm:$0xff]
    %v3415 = vld [vmem:[#allocation11 + $0x3b8] sm:$0xff]
    %v3416 = vld [vmem:[#allocation11 + $0x3c0] sm:$0xff]
    %v3417 = vld [vmem:[#allocation11 + $0x3c8] sm:$0xff]
    %v3418 = vld [vmem:[#allocation11 + $0x3d0] sm:$0xff]
    %v3419 = vld [vmem:[#allocation11 + $0x3d8] sm:$0xff]
    %v3420 = vld [vmem:[#allocation11 + $0x3e0] sm:$0xff]
    %v3421 = vld [vmem:[#allocation11 + $0x3e8] sm:$0xff]
    %v3422 = vld [vmem:[#allocation11 + $0x3f0] sm:$0xff]
    %v3423 = vld [vmem:[#allocation11 + $0x3f8] sm:$0xff]
    %v3424 = vld [vmem:[#allocation11 + $0x400] sm:$0xff]
    %v3425 = vld [vmem:[#allocation11 + $0x408] sm:$0xff]
    %v3426 = vld [vmem:[#allocation11 + $0x410] sm:$0xff]
    %v3427 = vld [vmem:[#allocation11 + $0x418] sm:$0xff]
    %v3428 = vld [vmem:[#allocation11 + $0x420] sm:$0xff]
    %v3429 = vld [vmem:[#allocation11 + $0x428] sm:$0xff]
    %v3430 = vld [vmem:[#allocation11 + $0x430] sm:$0xff]
    %v3431 = vld [vmem:[#allocation11 + $0x438] sm:$0xff]
    %v3432 = vld [vmem:[#allocation11 + $0x440] sm:$0xff]
    %v3433 = vld [vmem:[#allocation11 + $0x448] sm:$0xff]
    %v3434 = vld [vmem:[#allocation11 + $0x450] sm:$0xff]
    %v3435 = vld [vmem:[#allocation11 + $0x458] sm:$0xff]
    %v3436 = vld [vmem:[#allocation11 + $0x460] sm:$0xff]
    %v3437 = vld [vmem:[#allocation11 + $0x468] sm:$0xff]
    %v3438 = vld [vmem:[#allocation11 + $0x470] sm:$0xff]
    %v3439 = vld [vmem:[#allocation11 + $0x478] sm:$0xff]
    %v3440 = vld [vmem:[#allocation11 + $0x480] sm:$0xff]
    %v3441 = vld [vmem:[#allocation11 + $0x488] sm:$0xff]
    %v3442 = vld [vmem:[#allocation11 + $0x490] sm:$0xff]
    %v3443 = vld [vmem:[#allocation11 + $0x498] sm:$0xff]
    %v3444 = vld [vmem:[#allocation11 + $0x4a0] sm:$0xff]
    %v3445 = vld [vmem:[#allocation11 + $0x4a8] sm:$0xff]
    %v3446 = vld [vmem:[#allocation11 + $0x4b0] sm:$0xff]
    %v3447 = vld [vmem:[#allocation11 + $0x4b8] sm:$0xff]
    %v3448 = vld [vmem:[#allocation11 + $0x4c0] sm:$0xff]
    %v3449 = vld [vmem:[#allocation11 + $0x4c8] sm:$0xff]
    %v3450 = vld [vmem:[#allocation11 + $0x4d0] sm:$0xff]
    %v3451 = vld [vmem:[#allocation11 + $0x4d8] sm:$0xff]
    %v3452 = vld [vmem:[#allocation11 + $0x4e0] sm:$0xff]
    %v3453 = vld [vmem:[#allocation11 + $0x4e8] sm:$0xff]
    %v3454 = vld [vmem:[#allocation11 + $0x4f0] sm:$0xff]
    %v3455 = vld [vmem:[#allocation11 + $0x4f8] sm:$0xff]
    %v3456 = vld [vmem:[#allocation11 + $0x500] sm:$0xff]
    %v3457 = vld [vmem:[#allocation11 + $0x508] sm:$0xff]
    %v3458 = vld [vmem:[#allocation11 + $0x510] sm:$0xff]
    %v3459 = vld [vmem:[#allocation11 + $0x518] sm:$0xff]
    %v3460 = vld [vmem:[#allocation11 + $0x520] sm:$0xff]
    %v3461 = vld [vmem:[#allocation11 + $0x528] sm:$0xff]
    %v3462 = vld [vmem:[#allocation11 + $0x530] sm:$0xff]
    %v3463 = vld [vmem:[#allocation11 + $0x538] sm:$0xff]
    %v3464 = vld [vmem:[#allocation11 + $0x540] sm:$0xff]
    %v3465 = vld [vmem:[#allocation11 + $0x548] sm:$0xff]
    %v3466 = vld [vmem:[#allocation11 + $0x550] sm:$0xff]
    %v3467 = vld [vmem:[#allocation11 + $0x558] sm:$0xff]
    %v3468 = vld [vmem:[#allocation11 + $0x560] sm:$0xff]
    %v3469 = vld [vmem:[#allocation11 + $0x568] sm:$0xff]
    %v3470 = vld [vmem:[#allocation11 + $0x570] sm:$0xff]
    %v3471 = vld [vmem:[#allocation11 + $0x578] sm:$0xff]
    %v3472 = vld [vmem:[#allocation11 + $0x580] sm:$0xff]
    %v3473 = vld [vmem:[#allocation11 + $0x588] sm:$0xff]
    %v3474 = vld [vmem:[#allocation11 + $0x590] sm:$0xff]
    %v3475 = vld [vmem:[#allocation11 + $0x598] sm:$0xff]
    %v3476 = vld [vmem:[#allocation11 + $0x5a0] sm:$0xff]
    %v3477 = vld [vmem:[#allocation11 + $0x5a8] sm:$0xff]
    %v3478 = vld [vmem:[#allocation11 + $0x5b0] sm:$0xff]
    %v3479 = vld [vmem:[#allocation11 + $0x5b8] sm:$0xff]
    %v3480 = vld [vmem:[#allocation11 + $0x5c0] sm:$0xff]
    %v3481 = vld [vmem:[#allocation11 + $0x5c8] sm:$0xff]
    %v3482 = vld [vmem:[#allocation11 + $0x5d0] sm:$0xff]
    %v3483 = vld [vmem:[#allocation11 + $0x5d8] sm:$0xff]
    %v3484 = vld [vmem:[#allocation11 + $0x5e0] sm:$0xff]
    %v3485 = vld [vmem:[#allocation11 + $0x5e8] sm:$0xff]
    %v3486 = vld [vmem:[#allocation11 + $0x5f0] sm:$0xff]
    %v3487 = vld [vmem:[#allocation11 + $0x5f8] sm:$0xff]
    %v3488 = vld [vmem:[#allocation11 + $0x600] sm:$0xff]
    %v3489 = vld [vmem:[#allocation11 + $0x608] sm:$0xff]
    %v3490 = vld [vmem:[#allocation11 + $0x610] sm:$0xff]
    %v3491 = vld [vmem:[#allocation11 + $0x618] sm:$0xff]
    %v3492 = vld [vmem:[#allocation11 + $0x620] sm:$0xff]
    %v3493 = vld [vmem:[#allocation11 + $0x628] sm:$0xff]
    %v3494 = vld [vmem:[#allocation11 + $0x630] sm:$0xff]
    %v3495 = vld [vmem:[#allocation11 + $0x638] sm:$0xff]
    %v3496 = vld [vmem:[#allocation11 + $0x640] sm:$0xff]
    %v3497 = vld [vmem:[#allocation11 + $0x648] sm:$0xff]
    %v3498 = vld [vmem:[#allocation11 + $0x650] sm:$0xff]
    %v3499 = vld [vmem:[#allocation11 + $0x658] sm:$0xff]
    %v3500 = vld [vmem:[#allocation11 + $0x660] sm:$0xff]
    %v3501 = vld [vmem:[#allocation11 + $0x668] sm:$0xff]
    %v3502 = vld [vmem:[#allocation11 + $0x670] sm:$0xff]
    %v3503 = vld [vmem:[#allocation11 + $0x678] sm:$0xff]
    %v3504 = vld [vmem:[#allocation11 + $0x680] sm:$0xff]
    %v3505 = vld [vmem:[#allocation11 + $0x688] sm:$0xff]
    %v3506 = vld [vmem:[#allocation11 + $0x690] sm:$0xff]
    %v3507 = vld [vmem:[#allocation11 + $0x698] sm:$0xff]
    %v3508 = vld [vmem:[#allocation11 + $0x6a0] sm:$0xff]
    %v3509 = vld [vmem:[#allocation11 + $0x6a8] sm:$0xff]
    %v3510 = vld [vmem:[#allocation11 + $0x6b0] sm:$0xff]
    %v3511 = vld [vmem:[#allocation11 + $0x6b8] sm:$0xff]
    %v3512 = vld [vmem:[#allocation11 + $0x6c0] sm:$0xff]
    %v3513 = vld [vmem:[#allocation11 + $0x6c8] sm:$0xff]
    %v3514 = vld [vmem:[#allocation11 + $0x6d0] sm:$0xff]
    %v3515 = vld [vmem:[#allocation11 + $0x6d8] sm:$0xff]
    %v3516 = vld [vmem:[#allocation11 + $0x6e0] sm:$0xff]
    %v3517 = vld [vmem:[#allocation11 + $0x6e8] sm:$0xff]
    %v3518 = vld [vmem:[#allocation11 + $0x6f0] sm:$0xff]
    %v3519 = vld [vmem:[#allocation11 + $0x6f8] sm:$0xff]
    %v3520 = vld [vmem:[#allocation11 + $0x700] sm:$0xff]
    %v3521 = vld [vmem:[#allocation11 + $0x708] sm:$0xff]
    %v3522 = vld [vmem:[#allocation11 + $0x710] sm:$0xff]
    %v3523 = vld [vmem:[#allocation11 + $0x718] sm:$0xff]
    %v3524 = vld [vmem:[#allocation11 + $0x720] sm:$0xff]
    %v3525 = vld [vmem:[#allocation11 + $0x728] sm:$0xff]
    %v3526 = vld [vmem:[#allocation11 + $0x730] sm:$0xff]
    %v3527 = vld [vmem:[#allocation11 + $0x738] sm:$0xff]
    %v3528 = vld [vmem:[#allocation11 + $0x740] sm:$0xff]
    %v3529 = vld [vmem:[#allocation11 + $0x748] sm:$0xff]
    %v3530 = vld [vmem:[#allocation11 + $0x750] sm:$0xff]
    %v3531 = vld [vmem:[#allocation11 + $0x758] sm:$0xff]
    %v3532 = vld [vmem:[#allocation11 + $0x760] sm:$0xff]
    %v3533 = vld [vmem:[#allocation11 + $0x768] sm:$0xff]
    %v3534 = vld [vmem:[#allocation11 + $0x770] sm:$0xff]
    %v3535 = vld [vmem:[#allocation11 + $0x778] sm:$0xff]
    %v3536 = vld [vmem:[#allocation11 + $0x780] sm:$0xff]
    %v3537 = vld [vmem:[#allocation11 + $0x788] sm:$0xff]
    %v3538 = vld [vmem:[#allocation11 + $0x790] sm:$0xff]
    %v3539 = vld [vmem:[#allocation11 + $0x798] sm:$0xff]
    %v3540 = vld [vmem:[#allocation11 + $0x7a0] sm:$0xff]
    %v3541 = vld [vmem:[#allocation11 + $0x7a8] sm:$0xff]
    %v3542 = vld [vmem:[#allocation11 + $0x7b0] sm:$0xff]
    %v3543 = vld [vmem:[#allocation11 + $0x7b8] sm:$0xff]
    %v3544 = vld [vmem:[#allocation11 + $0x7c0] sm:$0xff]
    %v3545 = vld [vmem:[#allocation11 + $0x7c8] sm:$0xff]
    %v3546 = vld [vmem:[#allocation11 + $0x7d0] sm:$0xff]
    %v3547 = vld [vmem:[#allocation11 + $0x7d8] sm:$0xff]
    %v3548 = vld [vmem:[#allocation11 + $0x7e0] sm:$0xff]
    %v3549 = vld [vmem:[#allocation11 + $0x7e8] sm:$0xff]
    %v3550 = vld [vmem:[#allocation11 + $0x7f0] sm:$0xff]
    %v3551 = vld [vmem:[#allocation11 + $0x7f8] sm:$0xff]
    %v3552 = vld [vmem:[#allocation11 + $0x800] sm:$0xff]
    %v3553 = vld [vmem:[#allocation11 + $0x808] sm:$0xff]
    %v3554 = vld [vmem:[#allocation11 + $0x810] sm:$0xff]
    %v3555 = vld [vmem:[#allocation11 + $0x818] sm:$0xff]
    %v3556 = vld [vmem:[#allocation11 + $0x820] sm:$0xff]
    %v3557 = vld [vmem:[#allocation11 + $0x828] sm:$0xff]
    %v3558 = vld [vmem:[#allocation11 + $0x830] sm:$0xff]
    %v3559 = vld [vmem:[#allocation11 + $0x838] sm:$0xff]
    %v3560 = vld [vmem:[#allocation11 + $0x840] sm:$0xff]
    %v3561 = vld [vmem:[#allocation11 + $0x848] sm:$0xff]
    %v3562 = vld [vmem:[#allocation11 + $0x850] sm:$0xff]
    %v3563 = vld [vmem:[#allocation11 + $0x858] sm:$0xff]
    %v3564 = vld [vmem:[#allocation11 + $0x860] sm:$0xff]
    %v3565 = vld [vmem:[#allocation11 + $0x868] sm:$0xff]
    %v3566 = vld [vmem:[#allocation11 + $0x870] sm:$0xff]
    %v3567 = vld [vmem:[#allocation11 + $0x878] sm:$0xff]
    %v3568 = vld [vmem:[#allocation11 + $0x880] sm:$0xff]
    %v3569 = vld [vmem:[#allocation11 + $0x888] sm:$0xff]
    %v3570 = vld [vmem:[#allocation11 + $0x890] sm:$0xff]
    %v3571 = vld [vmem:[#allocation11 + $0x898] sm:$0xff]
    %v3572 = vld [vmem:[#allocation11 + $0x8a0] sm:$0xff]
    %v3573 = vld [vmem:[#allocation11 + $0x8a8] sm:$0xff]
    %v3574 = vld [vmem:[#allocation11 + $0x8b0] sm:$0xff]
    %v3575 = vld [vmem:[#allocation11 + $0x8b8] sm:$0xff]
    %v3576 = vld [vmem:[#allocation11 + $0x8c0] sm:$0xff]
    %v3577 = vld [vmem:[#allocation11 + $0x8c8] sm:$0xff]
    %v3578 = vld [vmem:[#allocation11 + $0x8d0] sm:$0xff]
    %v3579 = vld [vmem:[#allocation11 + $0x8d8] sm:$0xff]
    %v3580 = vld [vmem:[#allocation11 + $0x8e0] sm:$0xff]
    %v3581 = vld [vmem:[#allocation11 + $0x8e8] sm:$0xff]
    %v3582 = vld [vmem:[#allocation11 + $0x8f0] sm:$0xff]
    %v3583 = vld [vmem:[#allocation11 + $0x8f8] sm:$0xff]
    %v3584 = vld [vmem:[#allocation11 + $0x900] sm:$0xff]
    %v3585 = vld [vmem:[#allocation11 + $0x908] sm:$0xff]
    %v3586 = vld [vmem:[#allocation11 + $0x910] sm:$0xff]
    %v3587 = vld [vmem:[#allocation11 + $0x918] sm:$0xff]
    %v3588 = vld [vmem:[#allocation11 + $0x920] sm:$0xff]
    %v3589 = vld [vmem:[#allocation11 + $0x928] sm:$0xff]
    %v3590 = vld [vmem:[#allocation11 + $0x930] sm:$0xff]
    %v3591 = vld [vmem:[#allocation11 + $0x938] sm:$0xff]
    %v3592 = vld [vmem:[#allocation11 + $0x940] sm:$0xff]
    %v3593 = vld [vmem:[#allocation11 + $0x948] sm:$0xff]
    %v3594 = vld [vmem:[#allocation11 + $0x950] sm:$0xff]
    %v3595 = vld [vmem:[#allocation11 + $0x958] sm:$0xff]
    %v3596 = vld [vmem:[#allocation11 + $0x960] sm:$0xff]
    %v3597 = vld [vmem:[#allocation11 + $0x968] sm:$0xff]
    %v3598 = vld [vmem:[#allocation11 + $0x970] sm:$0xff]
    %v3599 = vld [vmem:[#allocation11 + $0x978] sm:$0xff]
    %v3600 = vld [vmem:[#allocation11 + $0x980] sm:$0xff]
    %v3601 = vld [vmem:[#allocation11 + $0x988] sm:$0xff]
    %v3602 = vld [vmem:[#allocation11 + $0x990] sm:$0xff]
    %v3603 = vld [vmem:[#allocation11 + $0x998] sm:$0xff]
    %v3604 = vld [vmem:[#allocation11 + $0x9a0] sm:$0xff]
    %v3605 = vld [vmem:[#allocation11 + $0x9a8] sm:$0xff]
    %v3606 = vld [vmem:[#allocation11 + $0x9b0] sm:$0xff]
    %v3607 = vld [vmem:[#allocation11 + $0x9b8] sm:$0xff]
    %v3608 = vld [vmem:[#allocation11 + $0x9c0] sm:$0xff]
    %v3609 = vld [vmem:[#allocation11 + $0x9c8] sm:$0xff]
    %v3610 = vld [vmem:[#allocation11 + $0x9d0] sm:$0xff]
    %v3611 = vld [vmem:[#allocation11 + $0x9d8] sm:$0xff]
    %v3612 = vld [vmem:[#allocation11 + $0x9e0] sm:$0xff]
    %v3613 = vld [vmem:[#allocation11 + $0x9e8] sm:$0xff]
    %v3614 = vld [vmem:[#allocation11 + $0x9f0] sm:$0xff]
    %v3615 = vld [vmem:[#allocation11 + $0x9f8] sm:$0xff]
    %v3616 = vld [vmem:[#allocation11 + $0xa00] sm:$0xff]
    %v3617 = vld [vmem:[#allocation11 + $0xa08] sm:$0xff]
    %v3618 = vld [vmem:[#allocation11 + $0xa10] sm:$0xff]
    %v3619 = vld [vmem:[#allocation11 + $0xa18] sm:$0xff]
    %v3620 = vld [vmem:[#allocation11 + $0xa20] sm:$0xff]
    %v3621 = vld [vmem:[#allocation11 + $0xa28] sm:$0xff]
    %v3622 = vld [vmem:[#allocation11 + $0xa30] sm:$0xff]
    %v3623 = vld [vmem:[#allocation11 + $0xa38] sm:$0xff]
    %v3624 = vld [vmem:[#allocation11 + $0xa40] sm:$0xff]
    %v3625 = vld [vmem:[#allocation11 + $0xa48] sm:$0xff]
    %v3626 = vld [vmem:[#allocation11 + $0xa50] sm:$0xff]
    %v3627 = vld [vmem:[#allocation11 + $0xa58] sm:$0xff]
    %v3628 = vld [vmem:[#allocation11 + $0xa60] sm:$0xff]
    %v3629 = vld [vmem:[#allocation11 + $0xa68] sm:$0xff]
    %v3630 = vld [vmem:[#allocation11 + $0xa70] sm:$0xff]
    %v3631 = vld [vmem:[#allocation11 + $0xa78] sm:$0xff]
    %v3632 = vld [vmem:[#allocation11 + $0xa80] sm:$0xff]
    %v3633 = vld [vmem:[#allocation11 + $0xa88] sm:$0xff]
    %v3634 = vld [vmem:[#allocation11 + $0xa90] sm:$0xff]
    %v3635 = vld [vmem:[#allocation11 + $0xa98] sm:$0xff]
    %v3636 = vld [vmem:[#allocation11 + $0xaa0] sm:$0xff]
    %v3637 = vld [vmem:[#allocation11 + $0xaa8] sm:$0xff]
    %v3638 = vld [vmem:[#allocation11 + $0xab0] sm:$0xff]
    %v3639 = vld [vmem:[#allocation11 + $0xab8] sm:$0xff]
    %v3640 = vld [vmem:[#allocation11 + $0xac0] sm:$0xff]
    %v3641 = vld [vmem:[#allocation11 + $0xac8] sm:$0xff]
    %v3642 = vld [vmem:[#allocation11 + $0xad0] sm:$0xff]
    %v3643 = vld [vmem:[#allocation11 + $0xad8] sm:$0xff]
    %v3644 = vld [vmem:[#allocation11 + $0xae0] sm:$0xff]
    %v3645 = vld [vmem:[#allocation11 + $0xae8] sm:$0xff]
    %v3646 = vld [vmem:[#allocation11 + $0xaf0] sm:$0xff]
    %v3647 = vld [vmem:[#allocation11 + $0xaf8] sm:$0xff]
    %v3648 = vld [vmem:[#allocation11 + $0xb00] sm:$0xff]
    %v3649 = vld [vmem:[#allocation11 + $0xb08] sm:$0xff]
    %v3650 = vld [vmem:[#allocation11 + $0xb10] sm:$0xff]
    %v3651 = vld [vmem:[#allocation11 + $0xb18] sm:$0xff]
    %v3652 = vld [vmem:[#allocation11 + $0xb20] sm:$0xff]
    %v3653 = vld [vmem:[#allocation11 + $0xb28] sm:$0xff]
    %v3654 = vld [vmem:[#allocation11 + $0xb30] sm:$0xff]
    %v3655 = vld [vmem:[#allocation11 + $0xb38] sm:$0xff]
    %v3656 = vld [vmem:[#allocation11 + $0xb40] sm:$0xff]
    %v3657 = vld [vmem:[#allocation11 + $0xb48] sm:$0xff]
    %v3658 = vld [vmem:[#allocation11 + $0xb50] sm:$0xff]
    %v3659 = vld [vmem:[#allocation11 + $0xb58] sm:$0xff]
    %v3660 = vld [vmem:[#allocation11 + $0xb60] sm:$0xff]
    %v3661 = vld [vmem:[#allocation11 + $0xb68] sm:$0xff]
    %v3662 = vld [vmem:[#allocation11 + $0xb70] sm:$0xff]
    %v3663 = vld [vmem:[#allocation11 + $0xb78] sm:$0xff]
    %v3664 = vld [vmem:[#allocation11 + $0xb80] sm:$0xff]
    %v3665 = vld [vmem:[#allocation11 + $0xb88] sm:$0xff]
    %v3666 = vld [vmem:[#allocation11 + $0xb90] sm:$0xff]
    %v3667 = vld [vmem:[#allocation11 + $0xb98] sm:$0xff]
    %v3668 = vld [vmem:[#allocation11 + $0xba0] sm:$0xff]
    %v3669 = vld [vmem:[#allocation11 + $0xba8] sm:$0xff]
    %v3670 = vld [vmem:[#allocation11 + $0xbb0] sm:$0xff]
    %v3671 = vld [vmem:[#allocation11 + $0xbb8] sm:$0xff]
    %v3672 = vld [vmem:[#allocation11 + $0xbc0] sm:$0xff]
    %v3673 = vld [vmem:[#allocation11 + $0xbc8] sm:$0xff]
    %v3674 = vld [vmem:[#allocation11 + $0xbd0] sm:$0xff]
    %v3675 = vld [vmem:[#allocation11 + $0xbd8] sm:$0xff]
    %v3676 = vld [vmem:[#allocation11 + $0xbe0] sm:$0xff]
    %v3677 = vld [vmem:[#allocation11 + $0xbe8] sm:$0xff]
    %v3678 = vld [vmem:[#allocation11 + $0xbf0] sm:$0xff]
    %v3679 = vld [vmem:[#allocation11 + $0xbf8] sm:$0xff]
    %v3680 = vld [vmem:[#allocation11 + $0xc00] sm:$0xff]
    %v3681 = vld [vmem:[#allocation11 + $0xc08] sm:$0xff]
    %v3682 = vld [vmem:[#allocation11 + $0xc10] sm:$0xff]
    %v3683 = vld [vmem:[#allocation11 + $0xc18] sm:$0xff]
    %v3684 = vld [vmem:[#allocation11 + $0xc20] sm:$0xff]
    %v3685 = vld [vmem:[#allocation11 + $0xc28] sm:$0xff]
    %v3686 = vld [vmem:[#allocation11 + $0xc30] sm:$0xff]
    %v3687 = vld [vmem:[#allocation11 + $0xc38] sm:$0xff]
    %v3688 = vld [vmem:[#allocation11 + $0xc40] sm:$0xff]
    %v3689 = vld [vmem:[#allocation11 + $0xc48] sm:$0xff]
    %v3690 = vld [vmem:[#allocation11 + $0xc50] sm:$0xff]
    %v3691 = vld [vmem:[#allocation11 + $0xc58] sm:$0xff]
    %v3692 = vld [vmem:[#allocation11 + $0xc60] sm:$0xff]
    %v3693 = vld [vmem:[#allocation11 + $0xc68] sm:$0xff]
    %v3694 = vld [vmem:[#allocation11 + $0xc70] sm:$0xff]
    %v3695 = vld [vmem:[#allocation11 + $0xc78] sm:$0xff]
    %v3696 = vld [vmem:[#allocation11 + $0xc80] sm:$0xff]
    %v3697 = vld [vmem:[#allocation11 + $0xc88] sm:$0xff]
    %v3698 = vld [vmem:[#allocation11 + $0xc90] sm:$0xff]
    %v3699 = vld [vmem:[#allocation11 + $0xc98] sm:$0xff]
    %v3700 = vld [vmem:[#allocation11 + $0xca0] sm:$0xff]
    %v3701 = vld [vmem:[#allocation11 + $0xca8] sm:$0xff]
    %v3702 = vld [vmem:[#allocation11 + $0xcb0] sm:$0xff]
    %v3703 = vld [vmem:[#allocation11 + $0xcb8] sm:$0xff]
    %v3704 = vld [vmem:[#allocation11 + $0xcc0] sm:$0xff]
    %v3705 = vld [vmem:[#allocation11 + $0xcc8] sm:$0xff]
    %v3706 = vld [vmem:[#allocation11 + $0xcd0] sm:$0xff]
    %v3707 = vld [vmem:[#allocation11 + $0xcd8] sm:$0xff]
    %v3708 = vld [vmem:[#allocation11 + $0xce0] sm:$0xff]
    %v3709 = vld [vmem:[#allocation11 + $0xce8] sm:$0xff]
    %v3710 = vld [vmem:[#allocation11 + $0xcf0] sm:$0xff]
    %v3711 = vld [vmem:[#allocation11 + $0xcf8] sm:$0xff]
    %v3712 = vld [vmem:[#allocation11 + $0xd00] sm:$0xff]
    %v3713 = vld [vmem:[#allocation11 + $0xd08] sm:$0xff]
    %v3714 = vld [vmem:[#allocation11 + $0xd10] sm:$0xff]
    %v3715 = vld [vmem:[#allocation11 + $0xd18] sm:$0xff]
    %v3716 = vld [vmem:[#allocation11 + $0xd20] sm:$0xff]
    %v3717 = vld [vmem:[#allocation11 + $0xd28] sm:$0xff]
    %v3718 = vld [vmem:[#allocation11 + $0xd30] sm:$0xff]
    %v3719 = vld [vmem:[#allocation11 + $0xd38] sm:$0xff]
    %v3720 = vld [vmem:[#allocation11 + $0xd40] sm:$0xff]
    %v3721 = vld [vmem:[#allocation11 + $0xd48] sm:$0xff]
    %v3722 = vld [vmem:[#allocation11 + $0xd50] sm:$0xff]
    %v3723 = vld [vmem:[#allocation11 + $0xd58] sm:$0xff]
    %v3724 = vld [vmem:[#allocation11 + $0xd60] sm:$0xff]
    %v3725 = vld [vmem:[#allocation11 + $0xd68] sm:$0xff]
    %v3726 = vld [vmem:[#allocation11 + $0xd70] sm:$0xff]
    %v3727 = vld [vmem:[#allocation11 + $0xd78] sm:$0xff]
    %v3728 = vld [vmem:[#allocation11 + $0xd80] sm:$0xff]
    %v3729 = vld [vmem:[#allocation11 + $0xd88] sm:$0xff]
    %v3730 = vld [vmem:[#allocation11 + $0xd90] sm:$0xff]
    %v3731 = vld [vmem:[#allocation11 + $0xd98] sm:$0xff]
    %v3732 = vld [vmem:[#allocation11 + $0xda0] sm:$0xff]
    %v3733 = vld [vmem:[#allocation11 + $0xda8] sm:$0xff]
    %v3734 = vld [vmem:[#allocation11 + $0xdb0] sm:$0xff]
    %v3735 = vld [vmem:[#allocation11 + $0xdb8] sm:$0xff]
    %v3736 = vld [vmem:[#allocation11 + $0xdc0] sm:$0xff]
    %v3737 = vld [vmem:[#allocation11 + $0xdc8] sm:$0xff]
    %v3738 = vld [vmem:[#allocation11 + $0xdd0] sm:$0xff]
    %v3739 = vld [vmem:[#allocation11 + $0xdd8] sm:$0xff]
    %v3740 = vld [vmem:[#allocation11 + $0xde0] sm:$0xff]
    %v3741 = vld [vmem:[#allocation11 + $0xde8] sm:$0xff]
    %v3742 = vld [vmem:[#allocation11 + $0xdf0] sm:$0xff]
    %v3743 = vld [vmem:[#allocation11 + $0xdf8] sm:$0xff]
    %v3744 = vld [vmem:[#allocation11 + $0xe00] sm:$0xff]
    %v3745 = vld [vmem:[#allocation11 + $0xe08] sm:$0xff]
    %v3746 = vld [vmem:[#allocation11 + $0xe10] sm:$0xff]
    %v3747 = vld [vmem:[#allocation11 + $0xe18] sm:$0xff]
    %v3748 = vld [vmem:[#allocation11 + $0xe20] sm:$0xff]
    %v3749 = vld [vmem:[#allocation11 + $0xe28] sm:$0xff]
    %v3750 = vld [vmem:[#allocation11 + $0xe30] sm:$0xff]
    %v3751 = vld [vmem:[#allocation11 + $0xe38] sm:$0xff]
    %v3752 = vld [vmem:[#allocation11 + $0xe40] sm:$0xff]
    %v3753 = vld [vmem:[#allocation11 + $0xe48] sm:$0xff]
    %v3754 = vld [vmem:[#allocation11 + $0xe50] sm:$0xff]
    %v3755 = vld [vmem:[#allocation11 + $0xe58] sm:$0xff]
    %v3756 = vld [vmem:[#allocation11 + $0xe60] sm:$0xff]
    %v3757 = vld [vmem:[#allocation11 + $0xe68] sm:$0xff]
    %v3758 = vld [vmem:[#allocation11 + $0xe70] sm:$0xff]
    %v3759 = vld [vmem:[#allocation11 + $0xe78] sm:$0xff]
    %v3760 = vld [vmem:[#allocation11 + $0xe80] sm:$0xff]
    %v3761 = vld [vmem:[#allocation11 + $0xe88] sm:$0xff]
    %v3762 = vld [vmem:[#allocation11 + $0xe90] sm:$0xff]
    %v3763 = vld [vmem:[#allocation11 + $0xe98] sm:$0xff]
    %v3764 = vld [vmem:[#allocation11 + $0xea0] sm:$0xff]
    %v3765 = vld [vmem:[#allocation11 + $0xea8] sm:$0xff]
    %v3766 = vld [vmem:[#allocation11 + $0xeb0] sm:$0xff]
    %v3767 = vld [vmem:[#allocation11 + $0xeb8] sm:$0xff]
    %v3768 = vld [vmem:[#allocation11 + $0xec0] sm:$0xff]
    %v3769 = vld [vmem:[#allocation11 + $0xec8] sm:$0xff]
    %v3770 = vld [vmem:[#allocation11 + $0xed0] sm:$0xff]
    %v3771 = vld [vmem:[#allocation11 + $0xed8] sm:$0xff]
    %v3772 = vld [vmem:[#allocation11 + $0xee0] sm:$0xff]
    %v3773 = vld [vmem:[#allocation11 + $0xee8] sm:$0xff]
    %v3774 = vld [vmem:[#allocation11 + $0xef0] sm:$0xff]
    %v3775 = vld [vmem:[#allocation11 + $0xef8] sm:$0xff]
    %v3776 = vld [vmem:[#allocation11 + $0xf00] sm:$0xff]
    %v3777 = vld [vmem:[#allocation11 + $0xf08] sm:$0xff]
    %v3778 = vld [vmem:[#allocation11 + $0xf10] sm:$0xff]
    %v3779 = vld [vmem:[#allocation11 + $0xf18] sm:$0xff]
    %v3780 = vld [vmem:[#allocation11 + $0xf20] sm:$0xff]
    %v3781 = vld [vmem:[#allocation11 + $0xf28] sm:$0xff]
    %v3782 = vld [vmem:[#allocation11 + $0xf30] sm:$0xff]
    %v3783 = vld [vmem:[#allocation11 + $0xf38] sm:$0xff]
    %v3784 = vld [vmem:[#allocation11 + $0xf40] sm:$0xff]
    %v3785 = vld [vmem:[#allocation11 + $0xf48] sm:$0xff]
    %v3786 = vld [vmem:[#allocation11 + $0xf50] sm:$0xff]
    %v3787 = vld [vmem:[#allocation11 + $0xf58] sm:$0xff]
    %v3788 = vld [vmem:[#allocation11 + $0xf60] sm:$0xff]
    %v3789 = vld [vmem:[#allocation11 + $0xf68] sm:$0xff]
    %v3790 = vld [vmem:[#allocation11 + $0xf70] sm:$0xff]
    %v3791 = vld [vmem:[#allocation11 + $0xf78] sm:$0xff]
    %v3792 = vld [vmem:[#allocation11 + $0xf80] sm:$0xff]
    %v3793 = vld [vmem:[#allocation11 + $0xf88] sm:$0xff]
    %v3794 = vld [vmem:[#allocation11 + $0xf90] sm:$0xff]
    %v3795 = vld [vmem:[#allocation11 + $0xf98] sm:$0xff]
    %v3796 = vld [vmem:[#allocation11 + $0xfa0] sm:$0xff]
    %v3797 = vld [vmem:[#allocation11 + $0xfa8] sm:$0xff]
    %v3798 = vld [vmem:[#allocation11 + $0xfb0] sm:$0xff]
    %v3799 = vld [vmem:[#allocation11 + $0xfb8] sm:$0xff]
    %v3800 = vld [vmem:[#allocation11 + $0xfc0] sm:$0xff]
    %v3801 = vld [vmem:[#allocation11 + $0xfc8] sm:$0xff]
    %v3802 = vld [vmem:[#allocation11 + $0xfd0] sm:$0xff]
    %v3803 = vld [vmem:[#allocation11 + $0xfd8] sm:$0xff]
    %v3804 = vld [vmem:[#allocation11 + $0xfe0] sm:$0xff]
    %v3805 = vld [vmem:[#allocation11 + $0xfe8] sm:$0xff]
    %v3806 = vld [vmem:[#allocation11 + $0xff0] sm:$0xff]
    %v3807 = vld [vmem:[#allocation11 + $0xff8] sm:$0xff]
    %v3808 = vld [vmem:[#allocation11 + $0x1000] sm:$0xff]
    %v3809 = vld [vmem:[#allocation11 + $0x1008] sm:$0xff]
    %v3810 = vld [vmem:[#allocation11 + $0x1010] sm:$0xff]
    %v3811 = vld [vmem:[#allocation11 + $0x1018] sm:$0xff]
    %v3812 = vld [vmem:[#allocation11 + $0x1020] sm:$0xff]
    %v3813 = vld [vmem:[#allocation11 + $0x1028] sm:$0xff]
    %v3814 = vld [vmem:[#allocation11 + $0x1030] sm:$0xff]
    %v3815 = vld [vmem:[#allocation11 + $0x1038] sm:$0xff]
    %v3816 = vld [vmem:[#allocation11 + $0x1040] sm:$0xff]
    %v3817 = vld [vmem:[#allocation11 + $0x1048] sm:$0xff]
    %v3818 = vld [vmem:[#allocation11 + $0x1050] sm:$0xff]
    %v3819 = vld [vmem:[#allocation11 + $0x1058] sm:$0xff]
    %v3820 = vld [vmem:[#allocation11 + $0x1060] sm:$0xff]
    %v3821 = vld [vmem:[#allocation11 + $0x1068] sm:$0xff]
    %v3822 = vld [vmem:[#allocation11 + $0x1070] sm:$0xff]
    %v3823 = vld [vmem:[#allocation11 + $0x1078] sm:$0xff]
    %v3824 = vld [vmem:[#allocation11 + $0x1080] sm:$0xff]
    %v3825 = vld [vmem:[#allocation11 + $0x1088] sm:$0xff]
    %v3826 = vld [vmem:[#allocation11 + $0x1090] sm:$0xff]
    %v3827 = vld [vmem:[#allocation11 + $0x1098] sm:$0xff]
    %v3828 = vld [vmem:[#allocation11 + $0x10a0] sm:$0xff]
    %v3829 = vld [vmem:[#allocation11 + $0x10a8] sm:$0xff]
    %v3830 = vld [vmem:[#allocation11 + $0x10b0] sm:$0xff]
    %v3831 = vld [vmem:[#allocation11 + $0x10b8] sm:$0xff]
    %v3832 = vld [vmem:[#allocation11 + $0x10c0] sm:$0xff]
    %v3833 = vld [vmem:[#allocation11 + $0x10c8] sm:$0xff]
    %v3834 = vld [vmem:[#allocation11 + $0x10d0] sm:$0xff]
    %v3835 = vld [vmem:[#allocation11 + $0x10d8] sm:$0xff]
    %v3836 = vld [vmem:[#allocation11 + $0x10e0] sm:$0xff]
    %v3837 = vld [vmem:[#allocation11 + $0x10e8] sm:$0xff]
    %v3838 = vld [vmem:[#allocation11 + $0x10f0] sm:$0xff]
    %v3839 = vld [vmem:[#allocation11 + $0x10f8] sm:$0xff]
    %v3840 = vld [vmem:[#allocation11 + $0x1100] sm:$0xff]
    %v3841 = vld [vmem:[#allocation11 + $0x1108] sm:$0xff]
    %v3842 = vld [vmem:[#allocation11 + $0x1110] sm:$0xff]
    %v3843 = vld [vmem:[#allocation11 + $0x1118] sm:$0xff]
    %v3844 = vld [vmem:[#allocation11 + $0x1120] sm:$0xff]
    %v3845 = vld [vmem:[#allocation11 + $0x1128] sm:$0xff]
    %v3846 = vld [vmem:[#allocation11 + $0x1130] sm:$0xff]
    %v3847 = vld [vmem:[#allocation11 + $0x1138] sm:$0xff]
    %v3848 = vld [vmem:[#allocation11 + $0x1140] sm:$0xff]
    %v3849 = vld [vmem:[#allocation11 + $0x1148] sm:$0xff]
    %v3850 = vld [vmem:[#allocation11 + $0x1150] sm:$0xff]
    %v3851 = vld [vmem:[#allocation11 + $0x1158] sm:$0xff]
    %v3852 = vld [vmem:[#allocation11 + $0x1160] sm:$0xff]
    %v3853 = vld [vmem:[#allocation11 + $0x1168] sm:$0xff]
    %v3854 = vld [vmem:[#allocation11 + $0x1170] sm:$0xff]
    %v3855 = vld [vmem:[#allocation11 + $0x1178] sm:$0xff]
    %v3856 = vld [vmem:[#allocation11 + $0x1180] sm:$0xff]
    %v3857 = vld [vmem:[#allocation11 + $0x1188] sm:$0xff]
    %v3858 = vld [vmem:[#allocation11 + $0x1190] sm:$0xff]
    %v3859 = vld [vmem:[#allocation11 + $0x1198] sm:$0xff]
    %v3860 = vld [vmem:[#allocation11 + $0x11a0] sm:$0xff]
    %v3861 = vld [vmem:[#allocation11 + $0x11a8] sm:$0xff]
    %v3862 = vld [vmem:[#allocation11 + $0x11b0] sm:$0xff]
    %v3863 = vld [vmem:[#allocation11 + $0x11b8] sm:$0xff]
    %v3864 = vld [vmem:[#allocation11 + $0x11c0] sm:$0xff]
    %v3865 = vld [vmem:[#allocation11 + $0x11c8] sm:$0xff]
    %v3866 = vld [vmem:[#allocation11 + $0x11d0] sm:$0xff]
    %v3867 = vld [vmem:[#allocation11 + $0x11d8] sm:$0xff]
    %v3868 = vld [vmem:[#allocation11 + $0x11e0] sm:$0xff]
    %v3869 = vld [vmem:[#allocation11 + $0x11e8] sm:$0xff]
    %v3870 = vld [vmem:[#allocation11 + $0x11f0] sm:$0xff]
    %v3871 = vld [vmem:[#allocation11 + $0x11f8] sm:$0xff]
    %v3872 = vld [vmem:[#allocation11 + $0x1200] sm:$0xff]
    %v3873 = vld [vmem:[#allocation11 + $0x1208] sm:$0xff]
    %v3874 = vld [vmem:[#allocation11 + $0x1210] sm:$0xff]
    %v3875 = vld [vmem:[#allocation11 + $0x1218] sm:$0xff]
    %v3876 = vld [vmem:[#allocation11 + $0x1220] sm:$0xff]
    %v3877 = vld [vmem:[#allocation11 + $0x1228] sm:$0xff]
    %v3878 = vld [vmem:[#allocation11 + $0x1230] sm:$0xff]
    %v3879 = vld [vmem:[#allocation11 + $0x1238] sm:$0xff]
    %v3880 = vld [vmem:[#allocation11 + $0x1240] sm:$0xff]
    %v3881 = vld [vmem:[#allocation11 + $0x1248] sm:$0xff]
    %v3882 = vld [vmem:[#allocation11 + $0x1250] sm:$0xff]
    %v3883 = vld [vmem:[#allocation11 + $0x1258] sm:$0xff]
    %v3884 = vld [vmem:[#allocation11 + $0x1260] sm:$0xff]
    %v3885 = vld [vmem:[#allocation11 + $0x1268] sm:$0xff]
    %v3886 = vld [vmem:[#allocation11 + $0x1270] sm:$0xff]
    %v3887 = vld [vmem:[#allocation11 + $0x1278] sm:$0xff]
    %v3888 = vld [vmem:[#allocation11 + $0x1280] sm:$0xff]
    %v3889 = vld [vmem:[#allocation11 + $0x1288] sm:$0xff]
    %v3890 = vld [vmem:[#allocation11 + $0x1290] sm:$0xff]
    %v3891 = vld [vmem:[#allocation11 + $0x1298] sm:$0xff]
    %v3892 = vld [vmem:[#allocation11 + $0x12a0] sm:$0xff]
    %v3893 = vld [vmem:[#allocation11 + $0x12a8] sm:$0xff]
    %v3894 = vld [vmem:[#allocation11 + $0x12b0] sm:$0xff]
    %v3895 = vld [vmem:[#allocation11 + $0x12b8] sm:$0xff]
    %v3896 = vld [vmem:[#allocation11 + $0x12c0] sm:$0xff]
    %v3897 = vld [vmem:[#allocation11 + $0x12c8] sm:$0xff]
    %v3898 = vld [vmem:[#allocation11 + $0x12d0] sm:$0xff]
    %v3899 = vld [vmem:[#allocation11 + $0x12d8] sm:$0xff]
    %v3900 = vld [vmem:[#allocation11 + $0x12e0] sm:$0xff]
    %v3901 = vld [vmem:[#allocation11 + $0x12e8] sm:$0xff]
    %v3902 = vld [vmem:[#allocation11 + $0x12f0] sm:$0xff]
    %v3903 = vld [vmem:[#allocation11 + $0x12f8] sm:$0xff]
    %v3904 = vld [vmem:[#allocation11 + $0x1300] sm:$0xff]
    %v3905 = vld [vmem:[#allocation11 + $0x1308] sm:$0xff]
    %v3906 = vld [vmem:[#allocation11 + $0x1310] sm:$0xff]
    %v3907 = vld [vmem:[#allocation11 + $0x1318] sm:$0xff]
    %v3908 = vld [vmem:[#allocation11 + $0x1320] sm:$0xff]
    %v3909 = vld [vmem:[#allocation11 + $0x1328] sm:$0xff]
    %v3910 = vld [vmem:[#allocation11 + $0x1330] sm:$0xff]
    %v3911 = vld [vmem:[#allocation11 + $0x1338] sm:$0xff]
    %v3912 = vld [vmem:[#allocation11 + $0x1340] sm:$0xff]
    %v3913 = vld [vmem:[#allocation11 + $0x1348] sm:$0xff]
    %v3914 = vld [vmem:[#allocation11 + $0x1350] sm:$0xff]
    %v3915 = vld [vmem:[#allocation11 + $0x1358] sm:$0xff]
    %v3916 = vld [vmem:[#allocation11 + $0x1360] sm:$0xff]
    %v3917 = vld [vmem:[#allocation11 + $0x1368] sm:$0xff]
    %v3918 = vld [vmem:[#allocation11 + $0x1370] sm:$0xff]
    %v3919 = vld [vmem:[#allocation11 + $0x1378] sm:$0xff]
    %v3920 = vld [vmem:[#allocation11 + $0x1380] sm:$0xff]
    %v3921 = vld [vmem:[#allocation11 + $0x1388] sm:$0xff]
    %v3922 = vld [vmem:[#allocation11 + $0x1390] sm:$0xff]
    %v3923 = vld [vmem:[#allocation11 + $0x1398] sm:$0xff]
    %v3924 = vld [vmem:[#allocation11 + $0x13a0] sm:$0xff]
    %v3925 = vld [vmem:[#allocation11 + $0x13a8] sm:$0xff]
    %v3926 = vld [vmem:[#allocation11 + $0x13b0] sm:$0xff]
    %v3927 = vld [vmem:[#allocation11 + $0x13b8] sm:$0xff]
    %v3928 = vld [vmem:[#allocation11 + $0x13c0] sm:$0xff]
    %v3929 = vld [vmem:[#allocation11 + $0x13c8] sm:$0xff]
    %v3930 = vld [vmem:[#allocation11 + $0x13d0] sm:$0xff]
    %v3931 = vld [vmem:[#allocation11 + $0x13d8] sm:$0xff]
    %v3932 = vld [vmem:[#allocation11 + $0x13e0] sm:$0xff]
    %v3933 = vld [vmem:[#allocation11 + $0x13e8] sm:$0xff]
    %v3934 = vld [vmem:[#allocation11 + $0x13f0] sm:$0xff]
    %v3935 = vld [vmem:[#allocation11 + $0x13f8] sm:$0xff]
    %v3936 = vld [vmem:[#allocation11 + $0x1400] sm:$0xff]
    %v3937 = vld [vmem:[#allocation11 + $0x1408] sm:$0xff]
    %v3938 = vld [vmem:[#allocation11 + $0x1410] sm:$0xff]
    %v3939 = vld [vmem:[#allocation11 + $0x1418] sm:$0xff]
    %v3940 = vld [vmem:[#allocation11 + $0x1420] sm:$0xff]
    %v3941 = vld [vmem:[#allocation11 + $0x1428] sm:$0xff]
    %v3942 = vld [vmem:[#allocation11 + $0x1430] sm:$0xff]
    %v3943 = vld [vmem:[#allocation11 + $0x1438] sm:$0xff]
    %v3944 = vld [vmem:[#allocation11 + $0x1440] sm:$0xff]
    %v3945 = vld [vmem:[#allocation11 + $0x1448] sm:$0xff]
    %v3946 = vld [vmem:[#allocation11 + $0x1450] sm:$0xff]
    %v3947 = vld [vmem:[#allocation11 + $0x1458] sm:$0xff]
    %v3948 = vld [vmem:[#allocation11 + $0x1460] sm:$0xff]
    %v3949 = vld [vmem:[#allocation11 + $0x1468] sm:$0xff]
    %v3950 = vld [vmem:[#allocation11 + $0x1470] sm:$0xff]
    %v3951 = vld [vmem:[#allocation11 + $0x1478] sm:$0xff]
    %v3952 = vld [vmem:[#allocation11 + $0x1480] sm:$0xff]
    %v3953 = vld [vmem:[#allocation11 + $0x1488] sm:$0xff]
    %v3954 = vld [vmem:[#allocation11 + $0x1490] sm:$0xff]
    %v3955 = vld [vmem:[#allocation11 + $0x1498] sm:$0xff]
    %v3956 = vld [vmem:[#allocation11 + $0x14a0] sm:$0xff]
    %v3957 = vld [vmem:[#allocation11 + $0x14a8] sm:$0xff]
    %v3958 = vld [vmem:[#allocation11 + $0x14b0] sm:$0xff]
    %v3959 = vld [vmem:[#allocation11 + $0x14b8] sm:$0xff]
    %v3960 = vld [vmem:[#allocation11 + $0x14c0] sm:$0xff]
    %v3961 = vld [vmem:[#allocation11 + $0x14c8] sm:$0xff]
    %v3962 = vld [vmem:[#allocation11 + $0x14d0] sm:$0xff]
    %v3963 = vld [vmem:[#allocation11 + $0x14d8] sm:$0xff]
    %v3964 = vld [vmem:[#allocation11 + $0x14e0] sm:$0xff]
    %v3965 = vld [vmem:[#allocation11 + $0x14e8] sm:$0xff]
    %v3966 = vld [vmem:[#allocation11 + $0x14f0] sm:$0xff]
    %v3967 = vld [vmem:[#allocation11 + $0x14f8] sm:$0xff]
    %v3968 = vld [vmem:[#allocation11 + $0x1500] sm:$0xff]
    %v3969 = vld [vmem:[#allocation11 + $0x1508] sm:$0xff]
    %v3970 = vld [vmem:[#allocation11 + $0x1510] sm:$0xff]
    %v3971 = vld [vmem:[#allocation11 + $0x1518] sm:$0xff]
    %v3972 = vld [vmem:[#allocation11 + $0x1520] sm:$0xff]
    %v3973 = vld [vmem:[#allocation11 + $0x1528] sm:$0xff]
    %v3974 = vld [vmem:[#allocation11 + $0x1530] sm:$0xff]
    %v3975 = vld [vmem:[#allocation11 + $0x1538] sm:$0xff]
    %v3976 = vld [vmem:[#allocation11 + $0x1540] sm:$0xff]
    %v3977 = vld [vmem:[#allocation11 + $0x1548] sm:$0xff]
    %v3978 = vld [vmem:[#allocation11 + $0x1550] sm:$0xff]
    %v3979 = vld [vmem:[#allocation11 + $0x1558] sm:$0xff]
    %v3980 = vld [vmem:[#allocation11 + $0x1560] sm:$0xff]
    %v3981 = vld [vmem:[#allocation11 + $0x1568] sm:$0xff]
    %v3982 = vld [vmem:[#allocation11 + $0x1570] sm:$0xff]
    %v3983 = vld [vmem:[#allocation11 + $0x1578] sm:$0xff]
    %v3984 = vld [vmem:[#allocation11 + $0x1580] sm:$0xff]
    %v3985 = vld [vmem:[#allocation11 + $0x1588] sm:$0xff]
    %v3986 = vld [vmem:[#allocation11 + $0x1590] sm:$0xff]
    %v3987 = vld [vmem:[#allocation11 + $0x1598] sm:$0xff]
    %v3988 = vld [vmem:[#allocation11 + $0x15a0] sm:$0xff]
    %v3989 = vld [vmem:[#allocation11 + $0x15a8] sm:$0xff]
    %v3990 = vld [vmem:[#allocation11 + $0x15b0] sm:$0xff]
    %v3991 = vld [vmem:[#allocation11 + $0x15b8] sm:$0xff]
    %v3992 = vld [vmem:[#allocation11 + $0x15c0] sm:$0xff]
    %v3993 = vld [vmem:[#allocation11 + $0x15c8] sm:$0xff]
    %v3994 = vld [vmem:[#allocation11 + $0x15d0] sm:$0xff]
    %v3995 = vld [vmem:[#allocation11 + $0x15d8] sm:$0xff]
    %v3996 = vld [vmem:[#allocation11 + $0x15e0] sm:$0xff]
    %v3997 = vld [vmem:[#allocation11 + $0x15e8] sm:$0xff]
    %v3998 = vld [vmem:[#allocation11 + $0x15f0] sm:$0xff]
    %v3999 = vld [vmem:[#allocation11 + $0x15f8] sm:$0xff]
    %v4000 = vld [vmem:[#allocation11 + $0x1600] sm:$0xff]
    %v4001 = vld [vmem:[#allocation11 + $0x1608] sm:$0xff]
    %v4002 = vld [vmem:[#allocation11 + $0x1610] sm:$0xff]
    %v4003 = vld [vmem:[#allocation11 + $0x1618] sm:$0xff]
    %v4004 = vld [vmem:[#allocation11 + $0x1620] sm:$0xff]
    %v4005 = vld [vmem:[#allocation11 + $0x1628] sm:$0xff]
    %v4006 = vld [vmem:[#allocation11 + $0x1630] sm:$0xff]
    %v4007 = vld [vmem:[#allocation11 + $0x1638] sm:$0xff]
    %v4008 = vld [vmem:[#allocation11 + $0x1640] sm:$0xff]
    %v4009 = vld [vmem:[#allocation11 + $0x1648] sm:$0xff]
    %v4010 = vld [vmem:[#allocation11 + $0x1650] sm:$0xff]
    %v4011 = vld [vmem:[#allocation11 + $0x1658] sm:$0xff]
    %v4012 = vld [vmem:[#allocation11 + $0x1660] sm:$0xff]
    %v4013 = vld [vmem:[#allocation11 + $0x1668] sm:$0xff]
    %v4014 = vld [vmem:[#allocation11 + $0x1670] sm:$0xff]
    %v4015 = vld [vmem:[#allocation11 + $0x1678] sm:$0xff]
    %v4016 = vld [vmem:[#allocation11 + $0x1680] sm:$0xff]
    %v4017 = vld [vmem:[#allocation11 + $0x1688] sm:$0xff]
    %v4018 = vld [vmem:[#allocation11 + $0x1690] sm:$0xff]
    %v4019 = vld [vmem:[#allocation11 + $0x1698] sm:$0xff]
    %v4020 = vld [vmem:[#allocation11 + $0x16a0] sm:$0xff]
    %v4021 = vld [vmem:[#allocation11 + $0x16a8] sm:$0xff]
    %v4022 = vld [vmem:[#allocation11 + $0x16b0] sm:$0xff]
    %v4023 = vld [vmem:[#allocation11 + $0x16b8] sm:$0xff]
    %v4024 = vld [vmem:[#allocation11 + $0x16c0] sm:$0xff]
    %v4025 = vld [vmem:[#allocation11 + $0x16c8] sm:$0xff]
    %v4026 = vld [vmem:[#allocation11 + $0x16d0] sm:$0xff]
    %v4027 = vld [vmem:[#allocation11 + $0x16d8] sm:$0xff]
    %v4028 = vld [vmem:[#allocation11 + $0x16e0] sm:$0xff]
    %v4029 = vld [vmem:[#allocation11 + $0x16e8] sm:$0xff]
    %v4030 = vld [vmem:[#allocation11 + $0x16f0] sm:$0xff]
    %v4031 = vld [vmem:[#allocation11 + $0x16f8] sm:$0xff]
    %v4032 = vld [vmem:[#allocation11 + $0x1700] sm:$0xff]
    %v4033 = vld [vmem:[#allocation11 + $0x1708] sm:$0xff]
    %v4034 = vld [vmem:[#allocation11 + $0x1710] sm:$0xff]
    %v4035 = vld [vmem:[#allocation11 + $0x1718] sm:$0xff]
    %v4036 = vld [vmem:[#allocation11 + $0x1720] sm:$0xff]
    %v4037 = vld [vmem:[#allocation11 + $0x1728] sm:$0xff]
    %v4038 = vld [vmem:[#allocation11 + $0x1730] sm:$0xff]
    %v4039 = vld [vmem:[#allocation11 + $0x1738] sm:$0xff]
    %v4040 = vld [vmem:[#allocation11 + $0x1740] sm:$0xff]
    %v4041 = vld [vmem:[#allocation11 + $0x1748] sm:$0xff]
    %v4042 = vld [vmem:[#allocation11 + $0x1750] sm:$0xff]
    %v4043 = vld [vmem:[#allocation11 + $0x1758] sm:$0xff]
    %v4044 = vld [vmem:[#allocation11 + $0x1760] sm:$0xff]
    %v4045 = vld [vmem:[#allocation11 + $0x1768] sm:$0xff]
    %v4046 = vld [vmem:[#allocation11 + $0x1770] sm:$0xff]
    %v4047 = vld [vmem:[#allocation11 + $0x1778] sm:$0xff]
    %v4048 = vld [vmem:[#allocation11 + $0x1780] sm:$0xff]
    %v4049 = vld [vmem:[#allocation11 + $0x1788] sm:$0xff]
    %v4050 = vld [vmem:[#allocation11 + $0x1790] sm:$0xff]
    %v4051 = vld [vmem:[#allocation11 + $0x1798] sm:$0xff]
    %v4052 = vld [vmem:[#allocation11 + $0x17a0] sm:$0xff]
    %v4053 = vld [vmem:[#allocation11 + $0x17a8] sm:$0xff]
    %v4054 = vld [vmem:[#allocation11 + $0x17b0] sm:$0xff]
    %v4055 = vld [vmem:[#allocation11 + $0x17b8] sm:$0xff]
    %v4056 = vld [vmem:[#allocation11 + $0x17c0] sm:$0xff]
    %v4057 = vld [vmem:[#allocation11 + $0x17c8] sm:$0xff]
    %v4058 = vld [vmem:[#allocation11 + $0x17d0] sm:$0xff]
    %v4059 = vld [vmem:[#allocation11 + $0x17d8] sm:$0xff]
    %v4060 = vld [vmem:[#allocation11 + $0x17e0] sm:$0xff]
    %v4061 = vld [vmem:[#allocation11 + $0x17e8] sm:$0xff]
    %v4062 = vld [vmem:[#allocation11 + $0x17f0] sm:$0xff]
    %v4063 = vld [vmem:[#allocation11 + $0x17f8] sm:$0xff]
    %v4064 = vld [vmem:[#allocation13] sm:$0xff]
    %v4065 = vld [vmem:[#allocation13 + $0x8] sm:$0xf]
    %v4068 = vlaneseq
    %v4069 = vshrl.u32 %v4068, 7
    %v4070 = vsub.s32 0, %v4069
    %v4071 = vrot.slane %v4064, %v4070
    %v4072 = vlaneseq
    %v4073 = vshrl.u32 %v4072, 7
    %v4074 = vsub.s32 1, %v4073
    %v4075 = vrot.slane %v4064, %v4074
    %v4076 = vlaneseq
    %v4077 = vshrl.u32 %v4076, 7
    %v4078 = vsub.s32 2, %v4077
    %v4079 = vrot.slane %v4064, %v4078
    %v4080 = vlaneseq
    %v4081 = vshrl.u32 %v4080, 7
    %v4082 = vsub.s32 3, %v4081
    %v4083 = vrot.slane %v4064, %v4082
    %v4084 = vlaneseq
    %v4085 = vshrl.u32 %v4084, 7
    %v4086 = vsub.s32 4, %v4085
    %v4087 = vrot.slane %v4064, %v4086
    %v4088 = vlaneseq
    %v4089 = vshrl.u32 %v4088, 7
    %v4090 = vsub.s32 5, %v4089
    %v4091 = vrot.slane %v4064, %v4090
    %v4092 = vlaneseq
    %v4093 = vshrl.u32 %v4092, 7
    %v4094 = vsub.s32 6, %v4093
    %v4095 = vrot.slane %v4064, %v4094
    %v4096 = vlaneseq
    %v4097 = vshrl.u32 %v4096, 7
    %v4098 = vsub.s32 7, %v4097
    %v4099 = vrot.slane %v4064, %v4098
    %v4100 = vlaneseq
    %v4101 = vshrl.u32 %v4100, 7
    %v4102 = vsub.s32 0, %v4101
    %v4103 = vrot.slane %v4065, %v4102
    %v4104 = vlaneseq
    %v4105 = vshrl.u32 %v4104, 7
    %v4106 = vsub.s32 1, %v4105
    %v4107 = vrot.slane %v4065, %v4106
    %v4108 = vlaneseq
    %v4109 = vshrl.u32 %v4108, 7
    %v4110 = vsub.s32 2, %v4109
    %v4111 = vrot.slane %v4065, %v4110
    %v4112 = vlaneseq
    %v4113 = vshrl.u32 %v4112, 7
    %v4114 = vsub.s32 3, %v4113
    %v4115 = vrot.slane %v4065, %v4114
    %v4896 = vunpack.c.l.b16 %v3296
    %v4897 = vunpack.c.h.b16 %v3296
    %v4898 = vunpack.c.l.b16 %v3297
    %v4899 = vunpack.c.h.b16 %v3297
    %v4900 = vunpack.c.l.b16 %v3298
    %v4901 = vunpack.c.h.b16 %v3298
    %v4902 = vunpack.c.l.b16 %v3299
    %v4903 = vunpack.c.h.b16 %v3299
    %v4904 = vunpack.c.l.b16 %v3300
    %v4905 = vunpack.c.h.b16 %v3300
    %v4906 = vunpack.c.l.b16 %v3301
    %v4907 = vunpack.c.h.b16 %v3301
    %v4908 = vunpack.c.l.b16 %v3302
    %v4909 = vunpack.c.h.b16 %v3302
    %v4910 = vunpack.c.l.b16 %v3303
    %v4911 = vunpack.c.h.b16 %v3303
    %v4912 = vunpack.c.l.b16 %v3304
    %v4913 = vunpack.c.h.b16 %v3304
    %v4914 = vunpack.c.l.b16 %v3305
    %v4915 = vunpack.c.h.b16 %v3305
    %v4916 = vunpack.c.l.b16 %v3306
    %v4917 = vunpack.c.h.b16 %v3306
    %v4918 = vunpack.c.l.b16 %v3307
    %v4919 = vunpack.c.h.b16 %v3307
    %v4920 = vunpack.c.l.b16 %v3308
    %v4921 = vunpack.c.h.b16 %v3308
    %v4922 = vunpack.c.l.b16 %v3309
    %v4923 = vunpack.c.h.b16 %v3309
    %v4924 = vunpack.c.l.b16 %v3310
    %v4925 = vunpack.c.h.b16 %v3310
    %v4926 = vunpack.c.l.b16 %v3311
    %v4927 = vunpack.c.h.b16 %v3311
    %v4928 = vunpack.c.l.b16 %v3312
    %v4929 = vunpack.c.h.b16 %v3312
    %v4930 = vunpack.c.l.b16 %v3313
    %v4931 = vunpack.c.h.b16 %v3313
    %v4932 = vunpack.c.l.b16 %v3314
    %v4933 = vunpack.c.h.b16 %v3314
    %v4934 = vunpack.c.l.b16 %v3315
    %v4935 = vunpack.c.h.b16 %v3315
    %v4936 = vunpack.c.l.b16 %v3316
    %v4937 = vunpack.c.h.b16 %v3316
    %v4938 = vunpack.c.l.b16 %v3317
    %v4939 = vunpack.c.h.b16 %v3317
    %v4940 = vunpack.c.l.b16 %v3318
    %v4941 = vunpack.c.h.b16 %v3318
    %v4942 = vunpack.c.l.b16 %v3319
    %v4943 = vunpack.c.h.b16 %v3319
    %v4944 = vunpack.c.l.b16 %v3320
    %v4945 = vunpack.c.h.b16 %v3320
    %v4946 = vunpack.c.l.b16 %v3321
    %v4947 = vunpack.c.h.b16 %v3321
    %v4948 = vunpack.c.l.b16 %v3322
    %v4949 = vunpack.c.h.b16 %v3322
    %v4950 = vunpack.c.l.b16 %v3323
    %v4951 = vunpack.c.h.b16 %v3323
    %v4952 = vunpack.c.l.b16 %v3324
    %v4953 = vunpack.c.h.b16 %v3324
    %v4954 = vunpack.c.l.b16 %v3325
    %v4955 = vunpack.c.h.b16 %v3325
    %v4956 = vunpack.c.l.b16 %v3326
    %v4957 = vunpack.c.h.b16 %v3326
    %v4958 = vunpack.c.l.b16 %v3327
    %v4959 = vunpack.c.h.b16 %v3327
    %v4960 = vunpack.c.l.b16 %v3328
    %v4961 = vunpack.c.h.b16 %v3328
    %v4962 = vunpack.c.l.b16 %v3329
    %v4963 = vunpack.c.h.b16 %v3329
    %v4964 = vunpack.c.l.b16 %v3330
    %v4965 = vunpack.c.h.b16 %v3330
    %v4966 = vunpack.c.l.b16 %v3331
    %v4967 = vunpack.c.h.b16 %v3331
    %v4968 = vunpack.c.l.b16 %v3332
    %v4969 = vunpack.c.h.b16 %v3332
    %v4970 = vunpack.c.l.b16 %v3333
    %v4971 = vunpack.c.h.b16 %v3333
    %v4972 = vunpack.c.l.b16 %v3334
    %v4973 = vunpack.c.h.b16 %v3334
    %v4974 = vunpack.c.l.b16 %v3335
    %v4975 = vunpack.c.h.b16 %v3335
    %v4976 = vunpack.c.l.b16 %v3336
    %v4977 = vunpack.c.h.b16 %v3336
    %v4978 = vunpack.c.l.b16 %v3337
    %v4979 = vunpack.c.h.b16 %v3337
    %v4980 = vunpack.c.l.b16 %v3338
    %v4981 = vunpack.c.h.b16 %v3338
    %v4982 = vunpack.c.l.b16 %v3339
    %v4983 = vunpack.c.h.b16 %v3339
    %v4984 = vunpack.c.l.b16 %v3340
    %v4985 = vunpack.c.h.b16 %v3340
    %v4986 = vunpack.c.l.b16 %v3341
    %v4987 = vunpack.c.h.b16 %v3341
    %v4988 = vunpack.c.l.b16 %v3342
    %v4989 = vunpack.c.h.b16 %v3342
    %v4990 = vunpack.c.l.b16 %v3343
    %v4991 = vunpack.c.h.b16 %v3343
    %v4992 = vunpack.c.l.b16 %v3344
    %v4993 = vunpack.c.h.b16 %v3344
    %v4994 = vunpack.c.l.b16 %v3345
    %v4995 = vunpack.c.h.b16 %v3345
    %v4996 = vunpack.c.l.b16 %v3346
    %v4997 = vunpack.c.h.b16 %v3346
    %v4998 = vunpack.c.l.b16 %v3347
    %v4999 = vunpack.c.h.b16 %v3347
    %v5000 = vunpack.c.l.b16 %v3348
    %v5001 = vunpack.c.h.b16 %v3348
    %v5002 = vunpack.c.l.b16 %v3349
    %v5003 = vunpack.c.h.b16 %v3349
    %v5004 = vunpack.c.l.b16 %v3350
    %v5005 = vunpack.c.h.b16 %v3350
    %v5006 = vunpack.c.l.b16 %v3351
    %v5007 = vunpack.c.h.b16 %v3351
    %v5008 = vunpack.c.l.b16 %v3352
    %v5009 = vunpack.c.h.b16 %v3352
    %v5010 = vunpack.c.l.b16 %v3353
    %v5011 = vunpack.c.h.b16 %v3353
    %v5012 = vunpack.c.l.b16 %v3354
    %v5013 = vunpack.c.h.b16 %v3354
    %v5014 = vunpack.c.l.b16 %v3355
    %v5015 = vunpack.c.h.b16 %v3355
    %v5016 = vunpack.c.l.b16 %v3356
    %v5017 = vunpack.c.h.b16 %v3356
    %v5018 = vunpack.c.l.b16 %v3357
    %v5019 = vunpack.c.h.b16 %v3357
    %v5020 = vunpack.c.l.b16 %v3358
    %v5021 = vunpack.c.h.b16 %v3358
    %v5022 = vunpack.c.l.b16 %v3359
    %v5023 = vunpack.c.h.b16 %v3359
    %v5024 = vunpack.c.l.b16 %v3360
    %v5025 = vunpack.c.h.b16 %v3360
    %v5026 = vunpack.c.l.b16 %v3361
    %v5027 = vunpack.c.h.b16 %v3361
    %v5028 = vunpack.c.l.b16 %v3362
    %v5029 = vunpack.c.h.b16 %v3362
    %v5030 = vunpack.c.l.b16 %v3363
    %v5031 = vunpack.c.h.b16 %v3363
    %v5032 = vunpack.c.l.b16 %v3364
    %v5033 = vunpack.c.h.b16 %v3364
    %v5034 = vunpack.c.l.b16 %v3365
    %v5035 = vunpack.c.h.b16 %v3365
    %v5036 = vunpack.c.l.b16 %v3366
    %v5037 = vunpack.c.h.b16 %v3366
    %v5038 = vunpack.c.l.b16 %v3367
    %v5039 = vunpack.c.h.b16 %v3367
    %v5040 = vunpack.c.l.b16 %v3368
    %v5041 = vunpack.c.h.b16 %v3368
    %v5042 = vunpack.c.l.b16 %v3369
    %v5043 = vunpack.c.h.b16 %v3369
    %v5044 = vunpack.c.l.b16 %v3370
    %v5045 = vunpack.c.h.b16 %v3370
    %v5046 = vunpack.c.l.b16 %v3371
    %v5047 = vunpack.c.h.b16 %v3371
    %v5048 = vunpack.c.l.b16 %v3372
    %v5049 = vunpack.c.h.b16 %v3372
    %v5050 = vunpack.c.l.b16 %v3373
    %v5051 = vunpack.c.h.b16 %v3373
    %v5052 = vunpack.c.l.b16 %v3374
    %v5053 = vunpack.c.h.b16 %v3374
    %v5054 = vunpack.c.l.b16 %v3375
    %v5055 = vunpack.c.h.b16 %v3375
    %v5056 = vunpack.c.l.b16 %v3376
    %v5057 = vunpack.c.h.b16 %v3376
    %v5058 = vunpack.c.l.b16 %v3377
    %v5059 = vunpack.c.h.b16 %v3377
    %v5060 = vunpack.c.l.b16 %v3378
    %v5061 = vunpack.c.h.b16 %v3378
    %v5062 = vunpack.c.l.b16 %v3379
    %v5063 = vunpack.c.h.b16 %v3379
    %v5064 = vunpack.c.l.b16 %v3380
    %v5065 = vunpack.c.h.b16 %v3380
    %v5066 = vunpack.c.l.b16 %v3381
    %v5067 = vunpack.c.h.b16 %v3381
    %v5068 = vunpack.c.l.b16 %v3382
    %v5069 = vunpack.c.h.b16 %v3382
    %v5070 = vunpack.c.l.b16 %v3383
    %v5071 = vunpack.c.h.b16 %v3383
    %v5072 = vunpack.c.l.b16 %v3384
    %v5073 = vunpack.c.h.b16 %v3384
    %v5074 = vunpack.c.l.b16 %v3385
    %v5075 = vunpack.c.h.b16 %v3385
    %v5076 = vunpack.c.l.b16 %v3386
    %v5077 = vunpack.c.h.b16 %v3386
    %v5078 = vunpack.c.l.b16 %v3387
    %v5079 = vunpack.c.h.b16 %v3387
    %v5080 = vunpack.c.l.b16 %v3388
    %v5081 = vunpack.c.h.b16 %v3388
    %v5082 = vunpack.c.l.b16 %v3389
    %v5083 = vunpack.c.h.b16 %v3389
    %v5084 = vunpack.c.l.b16 %v3390
    %v5085 = vunpack.c.h.b16 %v3390
    %v5086 = vunpack.c.l.b16 %v3391
    %v5087 = vunpack.c.h.b16 %v3391
    %v5088 = vunpack.c.l.b16 %v3392
    %v5089 = vunpack.c.h.b16 %v3392
    %v5090 = vunpack.c.l.b16 %v3393
    %v5091 = vunpack.c.h.b16 %v3393
    %v5092 = vunpack.c.l.b16 %v3394
    %v5093 = vunpack.c.h.b16 %v3394
    %v5094 = vunpack.c.l.b16 %v3395
    %v5095 = vunpack.c.h.b16 %v3395
    %v5096 = vunpack.c.l.b16 %v3396
    %v5097 = vunpack.c.h.b16 %v3396
    %v5098 = vunpack.c.l.b16 %v3397
    %v5099 = vunpack.c.h.b16 %v3397
    %v5100 = vunpack.c.l.b16 %v3398
    %v5101 = vunpack.c.h.b16 %v3398
    %v5102 = vunpack.c.l.b16 %v3399
    %v5103 = vunpack.c.h.b16 %v3399
    %v5104 = vunpack.c.l.b16 %v3400
    %v5105 = vunpack.c.h.b16 %v3400
    %v5106 = vunpack.c.l.b16 %v3401
    %v5107 = vunpack.c.h.b16 %v3401
    %v5108 = vunpack.c.l.b16 %v3402
    %v5109 = vunpack.c.h.b16 %v3402
    %v5110 = vunpack.c.l.b16 %v3403
    %v5111 = vunpack.c.h.b16 %v3403
    %v5112 = vunpack.c.l.b16 %v3404
    %v5113 = vunpack.c.h.b16 %v3404
    %v5114 = vunpack.c.l.b16 %v3405
    %v5115 = vunpack.c.h.b16 %v3405
    %v5116 = vunpack.c.l.b16 %v3406
    %v5117 = vunpack.c.h.b16 %v3406
    %v5118 = vunpack.c.l.b16 %v3407
    %v5119 = vunpack.c.h.b16 %v3407
    %v5120 = vunpack.c.l.b16 %v3408
    %v5121 = vunpack.c.h.b16 %v3408
    %v5122 = vunpack.c.l.b16 %v3409
    %v5123 = vunpack.c.h.b16 %v3409
    %v5124 = vunpack.c.l.b16 %v3410
    %v5125 = vunpack.c.h.b16 %v3410
    %v5126 = vunpack.c.l.b16 %v3411
    %v5127 = vunpack.c.h.b16 %v3411
    %v5128 = vunpack.c.l.b16 %v3412
    %v5129 = vunpack.c.h.b16 %v3412
    %v5130 = vunpack.c.l.b16 %v3413
    %v5131 = vunpack.c.h.b16 %v3413
    %v5132 = vunpack.c.l.b16 %v3414
    %v5133 = vunpack.c.h.b16 %v3414
    %v5134 = vunpack.c.l.b16 %v3415
    %v5135 = vunpack.c.h.b16 %v3415
    %v5136 = vunpack.c.l.b16 %v3416
    %v5137 = vunpack.c.h.b16 %v3416
    %v5138 = vunpack.c.l.b16 %v3417
    %v5139 = vunpack.c.h.b16 %v3417
    %v5140 = vunpack.c.l.b16 %v3418
    %v5141 = vunpack.c.h.b16 %v3418
    %v5142 = vunpack.c.l.b16 %v3419
    %v5143 = vunpack.c.h.b16 %v3419
    %v5144 = vunpack.c.l.b16 %v3420
    %v5145 = vunpack.c.h.b16 %v3420
    %v5146 = vunpack.c.l.b16 %v3421
    %v5147 = vunpack.c.h.b16 %v3421
    %v5148 = vunpack.c.l.b16 %v3422
    %v5149 = vunpack.c.h.b16 %v3422
    %v5150 = vunpack.c.l.b16 %v3423
    %v5151 = vunpack.c.h.b16 %v3423
    %v5152 = vunpack.c.l.b16 %v3424
    %v5153 = vunpack.c.h.b16 %v3424
    %v5154 = vunpack.c.l.b16 %v3425
    %v5155 = vunpack.c.h.b16 %v3425
    %v5156 = vunpack.c.l.b16 %v3426
    %v5157 = vunpack.c.h.b16 %v3426
    %v5158 = vunpack.c.l.b16 %v3427
    %v5159 = vunpack.c.h.b16 %v3427
    %v5160 = vunpack.c.l.b16 %v3428
    %v5161 = vunpack.c.h.b16 %v3428
    %v5162 = vunpack.c.l.b16 %v3429
    %v5163 = vunpack.c.h.b16 %v3429
    %v5164 = vunpack.c.l.b16 %v3430
    %v5165 = vunpack.c.h.b16 %v3430
    %v5166 = vunpack.c.l.b16 %v3431
    %v5167 = vunpack.c.h.b16 %v3431
    %v5168 = vunpack.c.l.b16 %v3432
    %v5169 = vunpack.c.h.b16 %v3432
    %v5170 = vunpack.c.l.b16 %v3433
    %v5171 = vunpack.c.h.b16 %v3433
    %v5172 = vunpack.c.l.b16 %v3434
    %v5173 = vunpack.c.h.b16 %v3434
    %v5174 = vunpack.c.l.b16 %v3435
    %v5175 = vunpack.c.h.b16 %v3435
    %v5176 = vunpack.c.l.b16 %v3436
    %v5177 = vunpack.c.h.b16 %v3436
    %v5178 = vunpack.c.l.b16 %v3437
    %v5179 = vunpack.c.h.b16 %v3437
    %v5180 = vunpack.c.l.b16 %v3438
    %v5181 = vunpack.c.h.b16 %v3438
    %v5182 = vunpack.c.l.b16 %v3439
    %v5183 = vunpack.c.h.b16 %v3439
    %v5184 = vunpack.c.l.b16 %v3440
    %v5185 = vunpack.c.h.b16 %v3440
    %v5186 = vunpack.c.l.b16 %v3441
    %v5187 = vunpack.c.h.b16 %v3441
    %v5188 = vunpack.c.l.b16 %v3442
    %v5189 = vunpack.c.h.b16 %v3442
    %v5190 = vunpack.c.l.b16 %v3443
    %v5191 = vunpack.c.h.b16 %v3443
    %v5192 = vunpack.c.l.b16 %v3444
    %v5193 = vunpack.c.h.b16 %v3444
    %v5194 = vunpack.c.l.b16 %v3445
    %v5195 = vunpack.c.h.b16 %v3445
    %v5196 = vunpack.c.l.b16 %v3446
    %v5197 = vunpack.c.h.b16 %v3446
    %v5198 = vunpack.c.l.b16 %v3447
    %v5199 = vunpack.c.h.b16 %v3447
    %v5200 = vunpack.c.l.b16 %v3448
    %v5201 = vunpack.c.h.b16 %v3448
    %v5202 = vunpack.c.l.b16 %v3449
    %v5203 = vunpack.c.h.b16 %v3449
    %v5204 = vunpack.c.l.b16 %v3450
    %v5205 = vunpack.c.h.b16 %v3450
    %v5206 = vunpack.c.l.b16 %v3451
    %v5207 = vunpack.c.h.b16 %v3451
    %v5208 = vunpack.c.l.b16 %v3452
    %v5209 = vunpack.c.h.b16 %v3452
    %v5210 = vunpack.c.l.b16 %v3453
    %v5211 = vunpack.c.h.b16 %v3453
    %v5212 = vunpack.c.l.b16 %v3454
    %v5213 = vunpack.c.h.b16 %v3454
    %v5214 = vunpack.c.l.b16 %v3455
    %v5215 = vunpack.c.h.b16 %v3455
    %v5216 = vunpack.c.l.b16 %v3456
    %v5217 = vunpack.c.h.b16 %v3456
    %v5218 = vunpack.c.l.b16 %v3457
    %v5219 = vunpack.c.h.b16 %v3457
    %v5220 = vunpack.c.l.b16 %v3458
    %v5221 = vunpack.c.h.b16 %v3458
    %v5222 = vunpack.c.l.b16 %v3459
    %v5223 = vunpack.c.h.b16 %v3459
    %v5224 = vunpack.c.l.b16 %v3460
    %v5225 = vunpack.c.h.b16 %v3460
    %v5226 = vunpack.c.l.b16 %v3461
    %v5227 = vunpack.c.h.b16 %v3461
    %v5228 = vunpack.c.l.b16 %v3462
    %v5229 = vunpack.c.h.b16 %v3462
    %v5230 = vunpack.c.l.b16 %v3463
    %v5231 = vunpack.c.h.b16 %v3463
    %v5232 = vunpack.c.l.b16 %v3464
    %v5233 = vunpack.c.h.b16 %v3464
    %v5234 = vunpack.c.l.b16 %v3465
    %v5235 = vunpack.c.h.b16 %v3465
    %v5236 = vunpack.c.l.b16 %v3466
    %v5237 = vunpack.c.h.b16 %v3466
    %v5238 = vunpack.c.l.b16 %v3467
    %v5239 = vunpack.c.h.b16 %v3467
    %v5240 = vunpack.c.l.b16 %v3468
    %v5241 = vunpack.c.h.b16 %v3468
    %v5242 = vunpack.c.l.b16 %v3469
    %v5243 = vunpack.c.h.b16 %v3469
    %v5244 = vunpack.c.l.b16 %v3470
    %v5245 = vunpack.c.h.b16 %v3470
    %v5246 = vunpack.c.l.b16 %v3471
    %v5247 = vunpack.c.h.b16 %v3471
    %v5248 = vunpack.c.l.b16 %v3472
    %v5249 = vunpack.c.h.b16 %v3472
    %v5250 = vunpack.c.l.b16 %v3473
    %v5251 = vunpack.c.h.b16 %v3473
    %v5252 = vunpack.c.l.b16 %v3474
    %v5253 = vunpack.c.h.b16 %v3474
    %v5254 = vunpack.c.l.b16 %v3475
    %v5255 = vunpack.c.h.b16 %v3475
    %v5256 = vunpack.c.l.b16 %v3476
    %v5257 = vunpack.c.h.b16 %v3476
    %v5258 = vunpack.c.l.b16 %v3477
    %v5259 = vunpack.c.h.b16 %v3477
    %v5260 = vunpack.c.l.b16 %v3478
    %v5261 = vunpack.c.h.b16 %v3478
    %v5262 = vunpack.c.l.b16 %v3479
    %v5263 = vunpack.c.h.b16 %v3479
    %v5264 = vunpack.c.l.b16 %v3480
    %v5265 = vunpack.c.h.b16 %v3480
    %v5266 = vunpack.c.l.b16 %v3481
    %v5267 = vunpack.c.h.b16 %v3481
    %v5268 = vunpack.c.l.b16 %v3482
    %v5269 = vunpack.c.h.b16 %v3482
    %v5270 = vunpack.c.l.b16 %v3483
    %v5271 = vunpack.c.h.b16 %v3483
    %v5272 = vunpack.c.l.b16 %v3484
    %v5273 = vunpack.c.h.b16 %v3484
    %v5274 = vunpack.c.l.b16 %v3485
    %v5275 = vunpack.c.h.b16 %v3485
    %v5276 = vunpack.c.l.b16 %v3486
    %v5277 = vunpack.c.h.b16 %v3486
    %v5278 = vunpack.c.l.b16 %v3487
    %v5279 = vunpack.c.h.b16 %v3487
    %v5280 = vunpack.c.l.b16 %v3488
    %v5281 = vunpack.c.h.b16 %v3488
    %v5282 = vunpack.c.l.b16 %v3489
    %v5283 = vunpack.c.h.b16 %v3489
    %v5284 = vunpack.c.l.b16 %v3490
    %v5285 = vunpack.c.h.b16 %v3490
    %v5286 = vunpack.c.l.b16 %v3491
    %v5287 = vunpack.c.h.b16 %v3491
    %v5288 = vunpack.c.l.b16 %v3492
    %v5289 = vunpack.c.h.b16 %v3492
    %v5290 = vunpack.c.l.b16 %v3493
    %v5291 = vunpack.c.h.b16 %v3493
    %v5292 = vunpack.c.l.b16 %v3494
    %v5293 = vunpack.c.h.b16 %v3494
    %v5294 = vunpack.c.l.b16 %v3495
    %v5295 = vunpack.c.h.b16 %v3495
    %v5296 = vunpack.c.l.b16 %v3496
    %v5297 = vunpack.c.h.b16 %v3496
    %v5298 = vunpack.c.l.b16 %v3497
    %v5299 = vunpack.c.h.b16 %v3497
    %v5300 = vunpack.c.l.b16 %v3498
    %v5301 = vunpack.c.h.b16 %v3498
    %v5302 = vunpack.c.l.b16 %v3499
    %v5303 = vunpack.c.h.b16 %v3499
    %v5304 = vunpack.c.l.b16 %v3500
    %v5305 = vunpack.c.h.b16 %v3500
    %v5306 = vunpack.c.l.b16 %v3501
    %v5307 = vunpack.c.h.b16 %v3501
    %v5308 = vunpack.c.l.b16 %v3502
    %v5309 = vunpack.c.h.b16 %v3502
    %v5310 = vunpack.c.l.b16 %v3503
    %v5311 = vunpack.c.h.b16 %v3503
    %v5312 = vunpack.c.l.b16 %v3504
    %v5313 = vunpack.c.h.b16 %v3504
    %v5314 = vunpack.c.l.b16 %v3505
    %v5315 = vunpack.c.h.b16 %v3505
    %v5316 = vunpack.c.l.b16 %v3506
    %v5317 = vunpack.c.h.b16 %v3506
    %v5318 = vunpack.c.l.b16 %v3507
    %v5319 = vunpack.c.h.b16 %v3507
    %v5320 = vunpack.c.l.b16 %v3508
    %v5321 = vunpack.c.h.b16 %v3508
    %v5322 = vunpack.c.l.b16 %v3509
    %v5323 = vunpack.c.h.b16 %v3509
    %v5324 = vunpack.c.l.b16 %v3510
    %v5325 = vunpack.c.h.b16 %v3510
    %v5326 = vunpack.c.l.b16 %v3511
    %v5327 = vunpack.c.h.b16 %v3511
    %v5328 = vunpack.c.l.b16 %v3512
    %v5329 = vunpack.c.h.b16 %v3512
    %v5330 = vunpack.c.l.b16 %v3513
    %v5331 = vunpack.c.h.b16 %v3513
    %v5332 = vunpack.c.l.b16 %v3514
    %v5333 = vunpack.c.h.b16 %v3514
    %v5334 = vunpack.c.l.b16 %v3515
    %v5335 = vunpack.c.h.b16 %v3515
    %v5336 = vunpack.c.l.b16 %v3516
    %v5337 = vunpack.c.h.b16 %v3516
    %v5338 = vunpack.c.l.b16 %v3517
    %v5339 = vunpack.c.h.b16 %v3517
    %v5340 = vunpack.c.l.b16 %v3518
    %v5341 = vunpack.c.h.b16 %v3518
    %v5342 = vunpack.c.l.b16 %v3519
    %v5343 = vunpack.c.h.b16 %v3519
    %v5344 = vunpack.c.l.b16 %v3520
    %v5345 = vunpack.c.h.b16 %v3520
    %v5346 = vunpack.c.l.b16 %v3521
    %v5347 = vunpack.c.h.b16 %v3521
    %v5348 = vunpack.c.l.b16 %v3522
    %v5349 = vunpack.c.h.b16 %v3522
    %v5350 = vunpack.c.l.b16 %v3523
    %v5351 = vunpack.c.h.b16 %v3523
    %v5352 = vunpack.c.l.b16 %v3524
    %v5353 = vunpack.c.h.b16 %v3524
    %v5354 = vunpack.c.l.b16 %v3525
    %v5355 = vunpack.c.h.b16 %v3525
    %v5356 = vunpack.c.l.b16 %v3526
    %v5357 = vunpack.c.h.b16 %v3526
    %v5358 = vunpack.c.l.b16 %v3527
    %v5359 = vunpack.c.h.b16 %v3527
    %v5360 = vunpack.c.l.b16 %v3528
    %v5361 = vunpack.c.h.b16 %v3528
    %v5362 = vunpack.c.l.b16 %v3529
    %v5363 = vunpack.c.h.b16 %v3529
    %v5364 = vunpack.c.l.b16 %v3530
    %v5365 = vunpack.c.h.b16 %v3530
    %v5366 = vunpack.c.l.b16 %v3531
    %v5367 = vunpack.c.h.b16 %v3531
    %v5368 = vunpack.c.l.b16 %v3532
    %v5369 = vunpack.c.h.b16 %v3532
    %v5370 = vunpack.c.l.b16 %v3533
    %v5371 = vunpack.c.h.b16 %v3533
    %v5372 = vunpack.c.l.b16 %v3534
    %v5373 = vunpack.c.h.b16 %v3534
    %v5374 = vunpack.c.l.b16 %v3535
    %v5375 = vunpack.c.h.b16 %v3535
    %v5376 = vunpack.c.l.b16 %v3536
    %v5377 = vunpack.c.h.b16 %v3536
    %v5378 = vunpack.c.l.b16 %v3537
    %v5379 = vunpack.c.h.b16 %v3537
    %v5380 = vunpack.c.l.b16 %v3538
    %v5381 = vunpack.c.h.b16 %v3538
    %v5382 = vunpack.c.l.b16 %v3539
    %v5383 = vunpack.c.h.b16 %v3539
    %v5384 = vunpack.c.l.b16 %v3540
    %v5385 = vunpack.c.h.b16 %v3540
    %v5386 = vunpack.c.l.b16 %v3541
    %v5387 = vunpack.c.h.b16 %v3541
    %v5388 = vunpack.c.l.b16 %v3542
    %v5389 = vunpack.c.h.b16 %v3542
    %v5390 = vunpack.c.l.b16 %v3543
    %v5391 = vunpack.c.h.b16 %v3543
    %v5392 = vunpack.c.l.b16 %v3544
    %v5393 = vunpack.c.h.b16 %v3544
    %v5394 = vunpack.c.l.b16 %v3545
    %v5395 = vunpack.c.h.b16 %v3545
    %v5396 = vunpack.c.l.b16 %v3546
    %v5397 = vunpack.c.h.b16 %v3546
    %v5398 = vunpack.c.l.b16 %v3547
    %v5399 = vunpack.c.h.b16 %v3547
    %v5400 = vunpack.c.l.b16 %v3548
    %v5401 = vunpack.c.h.b16 %v3548
    %v5402 = vunpack.c.l.b16 %v3549
    %v5403 = vunpack.c.h.b16 %v3549
    %v5404 = vunpack.c.l.b16 %v3550
    %v5405 = vunpack.c.h.b16 %v3550
    %v5406 = vunpack.c.l.b16 %v3551
    %v5407 = vunpack.c.h.b16 %v3551
    %v5408 = vunpack.c.l.b16 %v3552
    %v5409 = vunpack.c.h.b16 %v3552
    %v5410 = vunpack.c.l.b16 %v3553
    %v5411 = vunpack.c.h.b16 %v3553
    %v5412 = vunpack.c.l.b16 %v3554
    %v5413 = vunpack.c.h.b16 %v3554
    %v5414 = vunpack.c.l.b16 %v3555
    %v5415 = vunpack.c.h.b16 %v3555
    %v5416 = vunpack.c.l.b16 %v3556
    %v5417 = vunpack.c.h.b16 %v3556
    %v5418 = vunpack.c.l.b16 %v3557
    %v5419 = vunpack.c.h.b16 %v3557
    %v5420 = vunpack.c.l.b16 %v3558
    %v5421 = vunpack.c.h.b16 %v3558
    %v5422 = vunpack.c.l.b16 %v3559
    %v5423 = vunpack.c.h.b16 %v3559
    %v5424 = vunpack.c.l.b16 %v3560
    %v5425 = vunpack.c.h.b16 %v3560
    %v5426 = vunpack.c.l.b16 %v3561
    %v5427 = vunpack.c.h.b16 %v3561
    %v5428 = vunpack.c.l.b16 %v3562
    %v5429 = vunpack.c.h.b16 %v3562
    %v5430 = vunpack.c.l.b16 %v3563
    %v5431 = vunpack.c.h.b16 %v3563
    %v5432 = vunpack.c.l.b16 %v3564
    %v5433 = vunpack.c.h.b16 %v3564
    %v5434 = vunpack.c.l.b16 %v3565
    %v5435 = vunpack.c.h.b16 %v3565
    %v5436 = vunpack.c.l.b16 %v3566
    %v5437 = vunpack.c.h.b16 %v3566
    %v5438 = vunpack.c.l.b16 %v3567
    %v5439 = vunpack.c.h.b16 %v3567
    %v5440 = vunpack.c.l.b16 %v3568
    %v5441 = vunpack.c.h.b16 %v3568
    %v5442 = vunpack.c.l.b16 %v3569
    %v5443 = vunpack.c.h.b16 %v3569
    %v5444 = vunpack.c.l.b16 %v3570
    %v5445 = vunpack.c.h.b16 %v3570
    %v5446 = vunpack.c.l.b16 %v3571
    %v5447 = vunpack.c.h.b16 %v3571
    %v5448 = vunpack.c.l.b16 %v3572
    %v5449 = vunpack.c.h.b16 %v3572
    %v5450 = vunpack.c.l.b16 %v3573
    %v5451 = vunpack.c.h.b16 %v3573
    %v5452 = vunpack.c.l.b16 %v3574
    %v5453 = vunpack.c.h.b16 %v3574
    %v5454 = vunpack.c.l.b16 %v3575
    %v5455 = vunpack.c.h.b16 %v3575
    %v5456 = vunpack.c.l.b16 %v3576
    %v5457 = vunpack.c.h.b16 %v3576
    %v5458 = vunpack.c.l.b16 %v3577
    %v5459 = vunpack.c.h.b16 %v3577
    %v5460 = vunpack.c.l.b16 %v3578
    %v5461 = vunpack.c.h.b16 %v3578
    %v5462 = vunpack.c.l.b16 %v3579
    %v5463 = vunpack.c.h.b16 %v3579
    %v5464 = vunpack.c.l.b16 %v3580
    %v5465 = vunpack.c.h.b16 %v3580
    %v5466 = vunpack.c.l.b16 %v3581
    %v5467 = vunpack.c.h.b16 %v3581
    %v5468 = vunpack.c.l.b16 %v3582
    %v5469 = vunpack.c.h.b16 %v3582
    %v5470 = vunpack.c.l.b16 %v3583
    %v5471 = vunpack.c.h.b16 %v3583
    %v5472 = vunpack.c.l.b16 %v3584
    %v5473 = vunpack.c.h.b16 %v3584
    %v5474 = vunpack.c.l.b16 %v3585
    %v5475 = vunpack.c.h.b16 %v3585
    %v5476 = vunpack.c.l.b16 %v3586
    %v5477 = vunpack.c.h.b16 %v3586
    %v5478 = vunpack.c.l.b16 %v3587
    %v5479 = vunpack.c.h.b16 %v3587
    %v5480 = vunpack.c.l.b16 %v3588
    %v5481 = vunpack.c.h.b16 %v3588
    %v5482 = vunpack.c.l.b16 %v3589
    %v5483 = vunpack.c.h.b16 %v3589
    %v5484 = vunpack.c.l.b16 %v3590
    %v5485 = vunpack.c.h.b16 %v3590
    %v5486 = vunpack.c.l.b16 %v3591
    %v5487 = vunpack.c.h.b16 %v3591
    %v5488 = vunpack.c.l.b16 %v3592
    %v5489 = vunpack.c.h.b16 %v3592
    %v5490 = vunpack.c.l.b16 %v3593
    %v5491 = vunpack.c.h.b16 %v3593
    %v5492 = vunpack.c.l.b16 %v3594
    %v5493 = vunpack.c.h.b16 %v3594
    %v5494 = vunpack.c.l.b16 %v3595
    %v5495 = vunpack.c.h.b16 %v3595
    %v5496 = vunpack.c.l.b16 %v3596
    %v5497 = vunpack.c.h.b16 %v3596
    %v5498 = vunpack.c.l.b16 %v3597
    %v5499 = vunpack.c.h.b16 %v3597
    %v5500 = vunpack.c.l.b16 %v3598
    %v5501 = vunpack.c.h.b16 %v3598
    %v5502 = vunpack.c.l.b16 %v3599
    %v5503 = vunpack.c.h.b16 %v3599
    %v5504 = vunpack.c.l.b16 %v3600
    %v5505 = vunpack.c.h.b16 %v3600
    %v5506 = vunpack.c.l.b16 %v3601
    %v5507 = vunpack.c.h.b16 %v3601
    %v5508 = vunpack.c.l.b16 %v3602
    %v5509 = vunpack.c.h.b16 %v3602
    %v5510 = vunpack.c.l.b16 %v3603
    %v5511 = vunpack.c.h.b16 %v3603
    %v5512 = vunpack.c.l.b16 %v3604
    %v5513 = vunpack.c.h.b16 %v3604
    %v5514 = vunpack.c.l.b16 %v3605
    %v5515 = vunpack.c.h.b16 %v3605
    %v5516 = vunpack.c.l.b16 %v3606
    %v5517 = vunpack.c.h.b16 %v3606
    %v5518 = vunpack.c.l.b16 %v3607
    %v5519 = vunpack.c.h.b16 %v3607
    %v5520 = vunpack.c.l.b16 %v3608
    %v5521 = vunpack.c.h.b16 %v3608
    %v5522 = vunpack.c.l.b16 %v3609
    %v5523 = vunpack.c.h.b16 %v3609
    %v5524 = vunpack.c.l.b16 %v3610
    %v5525 = vunpack.c.h.b16 %v3610
    %v5526 = vunpack.c.l.b16 %v3611
    %v5527 = vunpack.c.h.b16 %v3611
    %v5528 = vunpack.c.l.b16 %v3612
    %v5529 = vunpack.c.h.b16 %v3612
    %v5530 = vunpack.c.l.b16 %v3613
    %v5531 = vunpack.c.h.b16 %v3613
    %v5532 = vunpack.c.l.b16 %v3614
    %v5533 = vunpack.c.h.b16 %v3614
    %v5534 = vunpack.c.l.b16 %v3615
    %v5535 = vunpack.c.h.b16 %v3615
    %v5536 = vunpack.c.l.b16 %v3616
    %v5537 = vunpack.c.h.b16 %v3616
    %v5538 = vunpack.c.l.b16 %v3617
    %v5539 = vunpack.c.h.b16 %v3617
    %v5540 = vunpack.c.l.b16 %v3618
    %v5541 = vunpack.c.h.b16 %v3618
    %v5542 = vunpack.c.l.b16 %v3619
    %v5543 = vunpack.c.h.b16 %v3619
    %v5544 = vunpack.c.l.b16 %v3620
    %v5545 = vunpack.c.h.b16 %v3620
    %v5546 = vunpack.c.l.b16 %v3621
    %v5547 = vunpack.c.h.b16 %v3621
    %v5548 = vunpack.c.l.b16 %v3622
    %v5549 = vunpack.c.h.b16 %v3622
    %v5550 = vunpack.c.l.b16 %v3623
    %v5551 = vunpack.c.h.b16 %v3623
    %v5552 = vunpack.c.l.b16 %v3624
    %v5553 = vunpack.c.h.b16 %v3624
    %v5554 = vunpack.c.l.b16 %v3625
    %v5555 = vunpack.c.h.b16 %v3625
    %v5556 = vunpack.c.l.b16 %v3626
    %v5557 = vunpack.c.h.b16 %v3626
    %v5558 = vunpack.c.l.b16 %v3627
    %v5559 = vunpack.c.h.b16 %v3627
    %v5560 = vunpack.c.l.b16 %v3628
    %v5561 = vunpack.c.h.b16 %v3628
    %v5562 = vunpack.c.l.b16 %v3629
    %v5563 = vunpack.c.h.b16 %v3629
    %v5564 = vunpack.c.l.b16 %v3630
    %v5565 = vunpack.c.h.b16 %v3630
    %v5566 = vunpack.c.l.b16 %v3631
    %v5567 = vunpack.c.h.b16 %v3631
    %v5568 = vunpack.c.l.b16 %v3632
    %v5569 = vunpack.c.h.b16 %v3632
    %v5570 = vunpack.c.l.b16 %v3633
    %v5571 = vunpack.c.h.b16 %v3633
    %v5572 = vunpack.c.l.b16 %v3634
    %v5573 = vunpack.c.h.b16 %v3634
    %v5574 = vunpack.c.l.b16 %v3635
    %v5575 = vunpack.c.h.b16 %v3635
    %v5576 = vunpack.c.l.b16 %v3636
    %v5577 = vunpack.c.h.b16 %v3636
    %v5578 = vunpack.c.l.b16 %v3637
    %v5579 = vunpack.c.h.b16 %v3637
    %v5580 = vunpack.c.l.b16 %v3638
    %v5581 = vunpack.c.h.b16 %v3638
    %v5582 = vunpack.c.l.b16 %v3639
    %v5583 = vunpack.c.h.b16 %v3639
    %v5584 = vunpack.c.l.b16 %v3640
    %v5585 = vunpack.c.h.b16 %v3640
    %v5586 = vunpack.c.l.b16 %v3641
    %v5587 = vunpack.c.h.b16 %v3641
    %v5588 = vunpack.c.l.b16 %v3642
    %v5589 = vunpack.c.h.b16 %v3642
    %v5590 = vunpack.c.l.b16 %v3643
    %v5591 = vunpack.c.h.b16 %v3643
    %v5592 = vunpack.c.l.b16 %v3644
    %v5593 = vunpack.c.h.b16 %v3644
    %v5594 = vunpack.c.l.b16 %v3645
    %v5595 = vunpack.c.h.b16 %v3645
    %v5596 = vunpack.c.l.b16 %v3646
    %v5597 = vunpack.c.h.b16 %v3646
    %v5598 = vunpack.c.l.b16 %v3647
    %v5599 = vunpack.c.h.b16 %v3647
    %v5600 = vunpack.c.l.b16 %v3648
    %v5601 = vunpack.c.h.b16 %v3648
    %v5602 = vunpack.c.l.b16 %v3649
    %v5603 = vunpack.c.h.b16 %v3649
    %v5604 = vunpack.c.l.b16 %v3650
    %v5605 = vunpack.c.h.b16 %v3650
    %v5606 = vunpack.c.l.b16 %v3651
    %v5607 = vunpack.c.h.b16 %v3651
    %v5608 = vunpack.c.l.b16 %v3652
    %v5609 = vunpack.c.h.b16 %v3652
    %v5610 = vunpack.c.l.b16 %v3653
    %v5611 = vunpack.c.h.b16 %v3653
    %v5612 = vunpack.c.l.b16 %v3654
    %v5613 = vunpack.c.h.b16 %v3654
    %v5614 = vunpack.c.l.b16 %v3655
    %v5615 = vunpack.c.h.b16 %v3655
    %v5616 = vunpack.c.l.b16 %v3656
    %v5617 = vunpack.c.h.b16 %v3656
    %v5618 = vunpack.c.l.b16 %v3657
    %v5619 = vunpack.c.h.b16 %v3657
    %v5620 = vunpack.c.l.b16 %v3658
    %v5621 = vunpack.c.h.b16 %v3658
    %v5622 = vunpack.c.l.b16 %v3659
    %v5623 = vunpack.c.h.b16 %v3659
    %v5624 = vunpack.c.l.b16 %v3660
    %v5625 = vunpack.c.h.b16 %v3660
    %v5626 = vunpack.c.l.b16 %v3661
    %v5627 = vunpack.c.h.b16 %v3661
    %v5628 = vunpack.c.l.b16 %v3662
    %v5629 = vunpack.c.h.b16 %v3662
    %v5630 = vunpack.c.l.b16 %v3663
    %v5631 = vunpack.c.h.b16 %v3663
    %v5632 = vunpack.c.l.b16 %v3664
    %v5633 = vunpack.c.h.b16 %v3664
    %v5634 = vunpack.c.l.b16 %v3665
    %v5635 = vunpack.c.h.b16 %v3665
    %v5636 = vunpack.c.l.b16 %v3666
    %v5637 = vunpack.c.h.b16 %v3666
    %v5638 = vunpack.c.l.b16 %v3667
    %v5639 = vunpack.c.h.b16 %v3667
    %v5640 = vunpack.c.l.b16 %v3668
    %v5641 = vunpack.c.h.b16 %v3668
    %v5642 = vunpack.c.l.b16 %v3669
    %v5643 = vunpack.c.h.b16 %v3669
    %v5644 = vunpack.c.l.b16 %v3670
    %v5645 = vunpack.c.h.b16 %v3670
    %v5646 = vunpack.c.l.b16 %v3671
    %v5647 = vunpack.c.h.b16 %v3671
    %v5648 = vunpack.c.l.b16 %v3672
    %v5649 = vunpack.c.h.b16 %v3672
    %v5650 = vunpack.c.l.b16 %v3673
    %v5651 = vunpack.c.h.b16 %v3673
    %v5652 = vunpack.c.l.b16 %v3674
    %v5653 = vunpack.c.h.b16 %v3674
    %v5654 = vunpack.c.l.b16 %v3675
    %v5655 = vunpack.c.h.b16 %v3675
    %v5656 = vunpack.c.l.b16 %v3676
    %v5657 = vunpack.c.h.b16 %v3676
    %v5658 = vunpack.c.l.b16 %v3677
    %v5659 = vunpack.c.h.b16 %v3677
    %v5660 = vunpack.c.l.b16 %v3678
    %v5661 = vunpack.c.h.b16 %v3678
    %v5662 = vunpack.c.l.b16 %v3679
    %v5663 = vunpack.c.h.b16 %v3679
    %v5664 = vunpack.c.l.b16 %v3680
    %v5665 = vunpack.c.h.b16 %v3680
    %v5666 = vunpack.c.l.b16 %v3681
    %v5667 = vunpack.c.h.b16 %v3681
    %v5668 = vunpack.c.l.b16 %v3682
    %v5669 = vunpack.c.h.b16 %v3682
    %v5670 = vunpack.c.l.b16 %v3683
    %v5671 = vunpack.c.h.b16 %v3683
    %v5672 = vunpack.c.l.b16 %v3684
    %v5673 = vunpack.c.h.b16 %v3684
    %v5674 = vunpack.c.l.b16 %v3685
    %v5675 = vunpack.c.h.b16 %v3685
    %v5676 = vunpack.c.l.b16 %v3686
    %v5677 = vunpack.c.h.b16 %v3686
    %v5678 = vunpack.c.l.b16 %v3687
    %v5679 = vunpack.c.h.b16 %v3687
    %v5680 = vunpack.c.l.b16 %v3688
    %v5681 = vunpack.c.h.b16 %v3688
    %v5682 = vunpack.c.l.b16 %v3689
    %v5683 = vunpack.c.h.b16 %v3689
    %v5684 = vunpack.c.l.b16 %v3690
    %v5685 = vunpack.c.h.b16 %v3690
    %v5686 = vunpack.c.l.b16 %v3691
    %v5687 = vunpack.c.h.b16 %v3691
    %v5688 = vunpack.c.l.b16 %v3692
    %v5689 = vunpack.c.h.b16 %v3692
    %v5690 = vunpack.c.l.b16 %v3693
    %v5691 = vunpack.c.h.b16 %v3693
    %v5692 = vunpack.c.l.b16 %v3694
    %v5693 = vunpack.c.h.b16 %v3694
    %v5694 = vunpack.c.l.b16 %v3695
    %v5695 = vunpack.c.h.b16 %v3695
    %v5696 = vunpack.c.l.b16 %v3696
    %v5697 = vunpack.c.h.b16 %v3696
    %v5698 = vunpack.c.l.b16 %v3697
    %v5699 = vunpack.c.h.b16 %v3697
    %v5700 = vunpack.c.l.b16 %v3698
    %v5701 = vunpack.c.h.b16 %v3698
    %v5702 = vunpack.c.l.b16 %v3699
    %v5703 = vunpack.c.h.b16 %v3699
    %v5704 = vunpack.c.l.b16 %v3700
    %v5705 = vunpack.c.h.b16 %v3700
    %v5706 = vunpack.c.l.b16 %v3701
    %v5707 = vunpack.c.h.b16 %v3701
    %v5708 = vunpack.c.l.b16 %v3702
    %v5709 = vunpack.c.h.b16 %v3702
    %v5710 = vunpack.c.l.b16 %v3703
    %v5711 = vunpack.c.h.b16 %v3703
    %v5712 = vunpack.c.l.b16 %v3704
    %v5713 = vunpack.c.h.b16 %v3704
    %v5714 = vunpack.c.l.b16 %v3705
    %v5715 = vunpack.c.h.b16 %v3705
    %v5716 = vunpack.c.l.b16 %v3706
    %v5717 = vunpack.c.h.b16 %v3706
    %v5718 = vunpack.c.l.b16 %v3707
    %v5719 = vunpack.c.h.b16 %v3707
    %v5720 = vunpack.c.l.b16 %v3708
    %v5721 = vunpack.c.h.b16 %v3708
    %v5722 = vunpack.c.l.b16 %v3709
    %v5723 = vunpack.c.h.b16 %v3709
    %v5724 = vunpack.c.l.b16 %v3710
    %v5725 = vunpack.c.h.b16 %v3710
    %v5726 = vunpack.c.l.b16 %v3711
    %v5727 = vunpack.c.h.b16 %v3711
    %v5728 = vunpack.c.l.b16 %v3712
    %v5729 = vunpack.c.h.b16 %v3712
    %v5730 = vunpack.c.l.b16 %v3713
    %v5731 = vunpack.c.h.b16 %v3713
    %v5732 = vunpack.c.l.b16 %v3714
    %v5733 = vunpack.c.h.b16 %v3714
    %v5734 = vunpack.c.l.b16 %v3715
    %v5735 = vunpack.c.h.b16 %v3715
    %v5736 = vunpack.c.l.b16 %v3716
    %v5737 = vunpack.c.h.b16 %v3716
    %v5738 = vunpack.c.l.b16 %v3717
    %v5739 = vunpack.c.h.b16 %v3717
    %v5740 = vunpack.c.l.b16 %v3718
    %v5741 = vunpack.c.h.b16 %v3718
    %v5742 = vunpack.c.l.b16 %v3719
    %v5743 = vunpack.c.h.b16 %v3719
    %v5744 = vunpack.c.l.b16 %v3720
    %v5745 = vunpack.c.h.b16 %v3720
    %v5746 = vunpack.c.l.b16 %v3721
    %v5747 = vunpack.c.h.b16 %v3721
    %v5748 = vunpack.c.l.b16 %v3722
    %v5749 = vunpack.c.h.b16 %v3722
    %v5750 = vunpack.c.l.b16 %v3723
    %v5751 = vunpack.c.h.b16 %v3723
    %v5752 = vunpack.c.l.b16 %v3724
    %v5753 = vunpack.c.h.b16 %v3724
    %v5754 = vunpack.c.l.b16 %v3725
    %v5755 = vunpack.c.h.b16 %v3725
    %v5756 = vunpack.c.l.b16 %v3726
    %v5757 = vunpack.c.h.b16 %v3726
    %v5758 = vunpack.c.l.b16 %v3727
    %v5759 = vunpack.c.h.b16 %v3727
    %v5760 = vunpack.c.l.b16 %v3728
    %v5761 = vunpack.c.h.b16 %v3728
    %v5762 = vunpack.c.l.b16 %v3729
    %v5763 = vunpack.c.h.b16 %v3729
    %v5764 = vunpack.c.l.b16 %v3730
    %v5765 = vunpack.c.h.b16 %v3730
    %v5766 = vunpack.c.l.b16 %v3731
    %v5767 = vunpack.c.h.b16 %v3731
    %v5768 = vunpack.c.l.b16 %v3732
    %v5769 = vunpack.c.h.b16 %v3732
    %v5770 = vunpack.c.l.b16 %v3733
    %v5771 = vunpack.c.h.b16 %v3733
    %v5772 = vunpack.c.l.b16 %v3734
    %v5773 = vunpack.c.h.b16 %v3734
    %v5774 = vunpack.c.l.b16 %v3735
    %v5775 = vunpack.c.h.b16 %v3735
    %v5776 = vunpack.c.l.b16 %v3736
    %v5777 = vunpack.c.h.b16 %v3736
    %v5778 = vunpack.c.l.b16 %v3737
    %v5779 = vunpack.c.h.b16 %v3737
    %v5780 = vunpack.c.l.b16 %v3738
    %v5781 = vunpack.c.h.b16 %v3738
    %v5782 = vunpack.c.l.b16 %v3739
    %v5783 = vunpack.c.h.b16 %v3739
    %v5784 = vunpack.c.l.b16 %v3740
    %v5785 = vunpack.c.h.b16 %v3740
    %v5786 = vunpack.c.l.b16 %v3741
    %v5787 = vunpack.c.h.b16 %v3741
    %v5788 = vunpack.c.l.b16 %v3742
    %v5789 = vunpack.c.h.b16 %v3742
    %v5790 = vunpack.c.l.b16 %v3743
    %v5791 = vunpack.c.h.b16 %v3743
    %v5792 = vunpack.c.l.b16 %v3744
    %v5793 = vunpack.c.h.b16 %v3744
    %v5794 = vunpack.c.l.b16 %v3745
    %v5795 = vunpack.c.h.b16 %v3745
    %v5796 = vunpack.c.l.b16 %v3746
    %v5797 = vunpack.c.h.b16 %v3746
    %v5798 = vunpack.c.l.b16 %v3747
    %v5799 = vunpack.c.h.b16 %v3747
    %v5800 = vunpack.c.l.b16 %v3748
    %v5801 = vunpack.c.h.b16 %v3748
    %v5802 = vunpack.c.l.b16 %v3749
    %v5803 = vunpack.c.h.b16 %v3749
    %v5804 = vunpack.c.l.b16 %v3750
    %v5805 = vunpack.c.h.b16 %v3750
    %v5806 = vunpack.c.l.b16 %v3751
    %v5807 = vunpack.c.h.b16 %v3751
    %v5808 = vunpack.c.l.b16 %v3752
    %v5809 = vunpack.c.h.b16 %v3752
    %v5810 = vunpack.c.l.b16 %v3753
    %v5811 = vunpack.c.h.b16 %v3753
    %v5812 = vunpack.c.l.b16 %v3754
    %v5813 = vunpack.c.h.b16 %v3754
    %v5814 = vunpack.c.l.b16 %v3755
    %v5815 = vunpack.c.h.b16 %v3755
    %v5816 = vunpack.c.l.b16 %v3756
    %v5817 = vunpack.c.h.b16 %v3756
    %v5818 = vunpack.c.l.b16 %v3757
    %v5819 = vunpack.c.h.b16 %v3757
    %v5820 = vunpack.c.l.b16 %v3758
    %v5821 = vunpack.c.h.b16 %v3758
    %v5822 = vunpack.c.l.b16 %v3759
    %v5823 = vunpack.c.h.b16 %v3759
    %v5824 = vunpack.c.l.b16 %v3760
    %v5825 = vunpack.c.h.b16 %v3760
    %v5826 = vunpack.c.l.b16 %v3761
    %v5827 = vunpack.c.h.b16 %v3761
    %v5828 = vunpack.c.l.b16 %v3762
    %v5829 = vunpack.c.h.b16 %v3762
    %v5830 = vunpack.c.l.b16 %v3763
    %v5831 = vunpack.c.h.b16 %v3763
    %v5832 = vunpack.c.l.b16 %v3764
    %v5833 = vunpack.c.h.b16 %v3764
    %v5834 = vunpack.c.l.b16 %v3765
    %v5835 = vunpack.c.h.b16 %v3765
    %v5836 = vunpack.c.l.b16 %v3766
    %v5837 = vunpack.c.h.b16 %v3766
    %v5838 = vunpack.c.l.b16 %v3767
    %v5839 = vunpack.c.h.b16 %v3767
    %v5840 = vunpack.c.l.b16 %v3768
    %v5841 = vunpack.c.h.b16 %v3768
    %v5842 = vunpack.c.l.b16 %v3769
    %v5843 = vunpack.c.h.b16 %v3769
    %v5844 = vunpack.c.l.b16 %v3770
    %v5845 = vunpack.c.h.b16 %v3770
    %v5846 = vunpack.c.l.b16 %v3771
    %v5847 = vunpack.c.h.b16 %v3771
    %v5848 = vunpack.c.l.b16 %v3772
    %v5849 = vunpack.c.h.b16 %v3772
    %v5850 = vunpack.c.l.b16 %v3773
    %v5851 = vunpack.c.h.b16 %v3773
    %v5852 = vunpack.c.l.b16 %v3774
    %v5853 = vunpack.c.h.b16 %v3774
    %v5854 = vunpack.c.l.b16 %v3775
    %v5855 = vunpack.c.h.b16 %v3775
    %v5856 = vunpack.c.l.b16 %v3776
    %v5857 = vunpack.c.h.b16 %v3776
    %v5858 = vunpack.c.l.b16 %v3777
    %v5859 = vunpack.c.h.b16 %v3777
    %v5860 = vunpack.c.l.b16 %v3778
    %v5861 = vunpack.c.h.b16 %v3778
    %v5862 = vunpack.c.l.b16 %v3779
    %v5863 = vunpack.c.h.b16 %v3779
    %v5864 = vunpack.c.l.b16 %v3780
    %v5865 = vunpack.c.h.b16 %v3780
    %v5866 = vunpack.c.l.b16 %v3781
    %v5867 = vunpack.c.h.b16 %v3781
    %v5868 = vunpack.c.l.b16 %v3782
    %v5869 = vunpack.c.h.b16 %v3782
    %v5870 = vunpack.c.l.b16 %v3783
    %v5871 = vunpack.c.h.b16 %v3783
    %v5872 = vunpack.c.l.b16 %v3784
    %v5873 = vunpack.c.h.b16 %v3784
    %v5874 = vunpack.c.l.b16 %v3785
    %v5875 = vunpack.c.h.b16 %v3785
    %v5876 = vunpack.c.l.b16 %v3786
    %v5877 = vunpack.c.h.b16 %v3786
    %v5878 = vunpack.c.l.b16 %v3787
    %v5879 = vunpack.c.h.b16 %v3787
    %v5880 = vunpack.c.l.b16 %v3788
    %v5881 = vunpack.c.h.b16 %v3788
    %v5882 = vunpack.c.l.b16 %v3789
    %v5883 = vunpack.c.h.b16 %v3789
    %v5884 = vunpack.c.l.b16 %v3790
    %v5885 = vunpack.c.h.b16 %v3790
    %v5886 = vunpack.c.l.b16 %v3791
    %v5887 = vunpack.c.h.b16 %v3791
    %v5888 = vunpack.c.l.b16 %v3792
    %v5889 = vunpack.c.h.b16 %v3792
    %v5890 = vunpack.c.l.b16 %v3793
    %v5891 = vunpack.c.h.b16 %v3793
    %v5892 = vunpack.c.l.b16 %v3794
    %v5893 = vunpack.c.h.b16 %v3794
    %v5894 = vunpack.c.l.b16 %v3795
    %v5895 = vunpack.c.h.b16 %v3795
    %v5896 = vunpack.c.l.b16 %v3796
    %v5897 = vunpack.c.h.b16 %v3796
    %v5898 = vunpack.c.l.b16 %v3797
    %v5899 = vunpack.c.h.b16 %v3797
    %v5900 = vunpack.c.l.b16 %v3798
    %v5901 = vunpack.c.h.b16 %v3798
    %v5902 = vunpack.c.l.b16 %v3799
    %v5903 = vunpack.c.h.b16 %v3799
    %v5904 = vunpack.c.l.b16 %v3800
    %v5905 = vunpack.c.h.b16 %v3800
    %v5906 = vunpack.c.l.b16 %v3801
    %v5907 = vunpack.c.h.b16 %v3801
    %v5908 = vunpack.c.l.b16 %v3802
    %v5909 = vunpack.c.h.b16 %v3802
    %v5910 = vunpack.c.l.b16 %v3803
    %v5911 = vunpack.c.h.b16 %v3803
    %v5912 = vunpack.c.l.b16 %v3804
    %v5913 = vunpack.c.h.b16 %v3804
    %v5914 = vunpack.c.l.b16 %v3805
    %v5915 = vunpack.c.h.b16 %v3805
    %v5916 = vunpack.c.l.b16 %v3806
    %v5917 = vunpack.c.h.b16 %v3806
    %v5918 = vunpack.c.l.b16 %v3807
    %v5919 = vunpack.c.h.b16 %v3807
    %v5920 = vunpack.c.l.b16 %v3808
    %v5921 = vunpack.c.h.b16 %v3808
    %v5922 = vunpack.c.l.b16 %v3809
    %v5923 = vunpack.c.h.b16 %v3809
    %v5924 = vunpack.c.l.b16 %v3810
    %v5925 = vunpack.c.h.b16 %v3810
    %v5926 = vunpack.c.l.b16 %v3811
    %v5927 = vunpack.c.h.b16 %v3811
    %v5928 = vunpack.c.l.b16 %v3812
    %v5929 = vunpack.c.h.b16 %v3812
    %v5930 = vunpack.c.l.b16 %v3813
    %v5931 = vunpack.c.h.b16 %v3813
    %v5932 = vunpack.c.l.b16 %v3814
    %v5933 = vunpack.c.h.b16 %v3814
    %v5934 = vunpack.c.l.b16 %v3815
    %v5935 = vunpack.c.h.b16 %v3815
    %v5936 = vunpack.c.l.b16 %v3816
    %v5937 = vunpack.c.h.b16 %v3816
    %v5938 = vunpack.c.l.b16 %v3817
    %v5939 = vunpack.c.h.b16 %v3817
    %v5940 = vunpack.c.l.b16 %v3818
    %v5941 = vunpack.c.h.b16 %v3818
    %v5942 = vunpack.c.l.b16 %v3819
    %v5943 = vunpack.c.h.b16 %v3819
    %v5944 = vunpack.c.l.b16 %v3820
    %v5945 = vunpack.c.h.b16 %v3820
    %v5946 = vunpack.c.l.b16 %v3821
    %v5947 = vunpack.c.h.b16 %v3821
    %v5948 = vunpack.c.l.b16 %v3822
    %v5949 = vunpack.c.h.b16 %v3822
    %v5950 = vunpack.c.l.b16 %v3823
    %v5951 = vunpack.c.h.b16 %v3823
    %v5952 = vunpack.c.l.b16 %v3824
    %v5953 = vunpack.c.h.b16 %v3824
    %v5954 = vunpack.c.l.b16 %v3825
    %v5955 = vunpack.c.h.b16 %v3825
    %v5956 = vunpack.c.l.b16 %v3826
    %v5957 = vunpack.c.h.b16 %v3826
    %v5958 = vunpack.c.l.b16 %v3827
    %v5959 = vunpack.c.h.b16 %v3827
    %v5960 = vunpack.c.l.b16 %v3828
    %v5961 = vunpack.c.h.b16 %v3828
    %v5962 = vunpack.c.l.b16 %v3829
    %v5963 = vunpack.c.h.b16 %v3829
    %v5964 = vunpack.c.l.b16 %v3830
    %v5965 = vunpack.c.h.b16 %v3830
    %v5966 = vunpack.c.l.b16 %v3831
    %v5967 = vunpack.c.h.b16 %v3831
    %v5968 = vunpack.c.l.b16 %v3832
    %v5969 = vunpack.c.h.b16 %v3832
    %v5970 = vunpack.c.l.b16 %v3833
    %v5971 = vunpack.c.h.b16 %v3833
    %v5972 = vunpack.c.l.b16 %v3834
    %v5973 = vunpack.c.h.b16 %v3834
    %v5974 = vunpack.c.l.b16 %v3835
    %v5975 = vunpack.c.h.b16 %v3835
    %v5976 = vunpack.c.l.b16 %v3836
    %v5977 = vunpack.c.h.b16 %v3836
    %v5978 = vunpack.c.l.b16 %v3837
    %v5979 = vunpack.c.h.b16 %v3837
    %v5980 = vunpack.c.l.b16 %v3838
    %v5981 = vunpack.c.h.b16 %v3838
    %v5982 = vunpack.c.l.b16 %v3839
    %v5983 = vunpack.c.h.b16 %v3839
    %v5984 = vunpack.c.l.b16 %v3840
    %v5985 = vunpack.c.h.b16 %v3840
    %v5986 = vunpack.c.l.b16 %v3841
    %v5987 = vunpack.c.h.b16 %v3841
    %v5988 = vunpack.c.l.b16 %v3842
    %v5989 = vunpack.c.h.b16 %v3842
    %v5990 = vunpack.c.l.b16 %v3843
    %v5991 = vunpack.c.h.b16 %v3843
    %v5992 = vunpack.c.l.b16 %v3844
    %v5993 = vunpack.c.h.b16 %v3844
    %v5994 = vunpack.c.l.b16 %v3845
    %v5995 = vunpack.c.h.b16 %v3845
    %v5996 = vunpack.c.l.b16 %v3846
    %v5997 = vunpack.c.h.b16 %v3846
    %v5998 = vunpack.c.l.b16 %v3847
    %v5999 = vunpack.c.h.b16 %v3847
    %v6000 = vunpack.c.l.b16 %v3848
    %v6001 = vunpack.c.h.b16 %v3848
    %v6002 = vunpack.c.l.b16 %v3849
    %v6003 = vunpack.c.h.b16 %v3849
    %v6004 = vunpack.c.l.b16 %v3850
    %v6005 = vunpack.c.h.b16 %v3850
    %v6006 = vunpack.c.l.b16 %v3851
    %v6007 = vunpack.c.h.b16 %v3851
    %v6008 = vunpack.c.l.b16 %v3852
    %v6009 = vunpack.c.h.b16 %v3852
    %v6010 = vunpack.c.l.b16 %v3853
    %v6011 = vunpack.c.h.b16 %v3853
    %v6012 = vunpack.c.l.b16 %v3854
    %v6013 = vunpack.c.h.b16 %v3854
    %v6014 = vunpack.c.l.b16 %v3855
    %v6015 = vunpack.c.h.b16 %v3855
    %v6016 = vunpack.c.l.b16 %v3856
    %v6017 = vunpack.c.h.b16 %v3856
    %v6018 = vunpack.c.l.b16 %v3857
    %v6019 = vunpack.c.h.b16 %v3857
    %v6020 = vunpack.c.l.b16 %v3858
    %v6021 = vunpack.c.h.b16 %v3858
    %v6022 = vunpack.c.l.b16 %v3859
    %v6023 = vunpack.c.h.b16 %v3859
    %v6024 = vunpack.c.l.b16 %v3860
    %v6025 = vunpack.c.h.b16 %v3860
    %v6026 = vunpack.c.l.b16 %v3861
    %v6027 = vunpack.c.h.b16 %v3861
    %v6028 = vunpack.c.l.b16 %v3862
    %v6029 = vunpack.c.h.b16 %v3862
    %v6030 = vunpack.c.l.b16 %v3863
    %v6031 = vunpack.c.h.b16 %v3863
    %v6032 = vunpack.c.l.b16 %v3864
    %v6033 = vunpack.c.h.b16 %v3864
    %v6034 = vunpack.c.l.b16 %v3865
    %v6035 = vunpack.c.h.b16 %v3865
    %v6036 = vunpack.c.l.b16 %v3866
    %v6037 = vunpack.c.h.b16 %v3866
    %v6038 = vunpack.c.l.b16 %v3867
    %v6039 = vunpack.c.h.b16 %v3867
    %v6040 = vunpack.c.l.b16 %v3868
    %v6041 = vunpack.c.h.b16 %v3868
    %v6042 = vunpack.c.l.b16 %v3869
    %v6043 = vunpack.c.h.b16 %v3869
    %v6044 = vunpack.c.l.b16 %v3870
    %v6045 = vunpack.c.h.b16 %v3870
    %v6046 = vunpack.c.l.b16 %v3871
    %v6047 = vunpack.c.h.b16 %v3871
    %v6048 = vunpack.c.l.b16 %v3872
    %v6049 = vunpack.c.h.b16 %v3872
    %v6050 = vunpack.c.l.b16 %v3873
    %v6051 = vunpack.c.h.b16 %v3873
    %v6052 = vunpack.c.l.b16 %v3874
    %v6053 = vunpack.c.h.b16 %v3874
    %v6054 = vunpack.c.l.b16 %v3875
    %v6055 = vunpack.c.h.b16 %v3875
    %v6056 = vunpack.c.l.b16 %v3876
    %v6057 = vunpack.c.h.b16 %v3876
    %v6058 = vunpack.c.l.b16 %v3877
    %v6059 = vunpack.c.h.b16 %v3877
    %v6060 = vunpack.c.l.b16 %v3878
    %v6061 = vunpack.c.h.b16 %v3878
    %v6062 = vunpack.c.l.b16 %v3879
    %v6063 = vunpack.c.h.b16 %v3879
    %v6064 = vunpack.c.l.b16 %v3880
    %v6065 = vunpack.c.h.b16 %v3880
    %v6066 = vunpack.c.l.b16 %v3881
    %v6067 = vunpack.c.h.b16 %v3881
    %v6068 = vunpack.c.l.b16 %v3882
    %v6069 = vunpack.c.h.b16 %v3882
    %v6070 = vunpack.c.l.b16 %v3883
    %v6071 = vunpack.c.h.b16 %v3883
    %v6072 = vunpack.c.l.b16 %v3884
    %v6073 = vunpack.c.h.b16 %v3884
    %v6074 = vunpack.c.l.b16 %v3885
    %v6075 = vunpack.c.h.b16 %v3885
    %v6076 = vunpack.c.l.b16 %v3886
    %v6077 = vunpack.c.h.b16 %v3886
    %v6078 = vunpack.c.l.b16 %v3887
    %v6079 = vunpack.c.h.b16 %v3887
    %v6080 = vunpack.c.l.b16 %v3888
    %v6081 = vunpack.c.h.b16 %v3888
    %v6082 = vunpack.c.l.b16 %v3889
    %v6083 = vunpack.c.h.b16 %v3889
    %v6084 = vunpack.c.l.b16 %v3890
    %v6085 = vunpack.c.h.b16 %v3890
    %v6086 = vunpack.c.l.b16 %v3891
    %v6087 = vunpack.c.h.b16 %v3891
    %v6088 = vunpack.c.l.b16 %v3892
    %v6089 = vunpack.c.h.b16 %v3892
    %v6090 = vunpack.c.l.b16 %v3893
    %v6091 = vunpack.c.h.b16 %v3893
    %v6092 = vunpack.c.l.b16 %v3894
    %v6093 = vunpack.c.h.b16 %v3894
    %v6094 = vunpack.c.l.b16 %v3895
    %v6095 = vunpack.c.h.b16 %v3895
    %v6096 = vunpack.c.l.b16 %v3896
    %v6097 = vunpack.c.h.b16 %v3896
    %v6098 = vunpack.c.l.b16 %v3897
    %v6099 = vunpack.c.h.b16 %v3897
    %v6100 = vunpack.c.l.b16 %v3898
    %v6101 = vunpack.c.h.b16 %v3898
    %v6102 = vunpack.c.l.b16 %v3899
    %v6103 = vunpack.c.h.b16 %v3899
    %v6104 = vunpack.c.l.b16 %v3900
    %v6105 = vunpack.c.h.b16 %v3900
    %v6106 = vunpack.c.l.b16 %v3901
    %v6107 = vunpack.c.h.b16 %v3901
    %v6108 = vunpack.c.l.b16 %v3902
    %v6109 = vunpack.c.h.b16 %v3902
    %v6110 = vunpack.c.l.b16 %v3903
    %v6111 = vunpack.c.h.b16 %v3903
    %v6112 = vunpack.c.l.b16 %v3904
    %v6113 = vunpack.c.h.b16 %v3904
    %v6114 = vunpack.c.l.b16 %v3905
    %v6115 = vunpack.c.h.b16 %v3905
    %v6116 = vunpack.c.l.b16 %v3906
    %v6117 = vunpack.c.h.b16 %v3906
    %v6118 = vunpack.c.l.b16 %v3907
    %v6119 = vunpack.c.h.b16 %v3907
    %v6120 = vunpack.c.l.b16 %v3908
    %v6121 = vunpack.c.h.b16 %v3908
    %v6122 = vunpack.c.l.b16 %v3909
    %v6123 = vunpack.c.h.b16 %v3909
    %v6124 = vunpack.c.l.b16 %v3910
    %v6125 = vunpack.c.h.b16 %v3910
    %v6126 = vunpack.c.l.b16 %v3911
    %v6127 = vunpack.c.h.b16 %v3911
    %v6128 = vunpack.c.l.b16 %v3912
    %v6129 = vunpack.c.h.b16 %v3912
    %v6130 = vunpack.c.l.b16 %v3913
    %v6131 = vunpack.c.h.b16 %v3913
    %v6132 = vunpack.c.l.b16 %v3914
    %v6133 = vunpack.c.h.b16 %v3914
    %v6134 = vunpack.c.l.b16 %v3915
    %v6135 = vunpack.c.h.b16 %v3915
    %v6136 = vunpack.c.l.b16 %v3916
    %v6137 = vunpack.c.h.b16 %v3916
    %v6138 = vunpack.c.l.b16 %v3917
    %v6139 = vunpack.c.h.b16 %v3917
    %v6140 = vunpack.c.l.b16 %v3918
    %v6141 = vunpack.c.h.b16 %v3918
    %v6142 = vunpack.c.l.b16 %v3919
    %v6143 = vunpack.c.h.b16 %v3919
    %v6144 = vunpack.c.l.b16 %v3920
    %v6145 = vunpack.c.h.b16 %v3920
    %v6146 = vunpack.c.l.b16 %v3921
    %v6147 = vunpack.c.h.b16 %v3921
    %v6148 = vunpack.c.l.b16 %v3922
    %v6149 = vunpack.c.h.b16 %v3922
    %v6150 = vunpack.c.l.b16 %v3923
    %v6151 = vunpack.c.h.b16 %v3923
    %v6152 = vunpack.c.l.b16 %v3924
    %v6153 = vunpack.c.h.b16 %v3924
    %v6154 = vunpack.c.l.b16 %v3925
    %v6155 = vunpack.c.h.b16 %v3925
    %v6156 = vunpack.c.l.b16 %v3926
    %v6157 = vunpack.c.h.b16 %v3926
    %v6158 = vunpack.c.l.b16 %v3927
    %v6159 = vunpack.c.h.b16 %v3927
    %v6160 = vunpack.c.l.b16 %v3928
    %v6161 = vunpack.c.h.b16 %v3928
    %v6162 = vunpack.c.l.b16 %v3929
    %v6163 = vunpack.c.h.b16 %v3929
    %v6164 = vunpack.c.l.b16 %v3930
    %v6165 = vunpack.c.h.b16 %v3930
    %v6166 = vunpack.c.l.b16 %v3931
    %v6167 = vunpack.c.h.b16 %v3931
    %v6168 = vunpack.c.l.b16 %v3932
    %v6169 = vunpack.c.h.b16 %v3932
    %v6170 = vunpack.c.l.b16 %v3933
    %v6171 = vunpack.c.h.b16 %v3933
    %v6172 = vunpack.c.l.b16 %v3934
    %v6173 = vunpack.c.h.b16 %v3934
    %v6174 = vunpack.c.l.b16 %v3935
    %v6175 = vunpack.c.h.b16 %v3935
    %v6176 = vunpack.c.l.b16 %v3936
    %v6177 = vunpack.c.h.b16 %v3936
    %v6178 = vunpack.c.l.b16 %v3937
    %v6179 = vunpack.c.h.b16 %v3937
    %v6180 = vunpack.c.l.b16 %v3938
    %v6181 = vunpack.c.h.b16 %v3938
    %v6182 = vunpack.c.l.b16 %v3939
    %v6183 = vunpack.c.h.b16 %v3939
    %v6184 = vunpack.c.l.b16 %v3940
    %v6185 = vunpack.c.h.b16 %v3940
    %v6186 = vunpack.c.l.b16 %v3941
    %v6187 = vunpack.c.h.b16 %v3941
    %v6188 = vunpack.c.l.b16 %v3942
    %v6189 = vunpack.c.h.b16 %v3942
    %v6190 = vunpack.c.l.b16 %v3943
    %v6191 = vunpack.c.h.b16 %v3943
    %v6192 = vunpack.c.l.b16 %v3944
    %v6193 = vunpack.c.h.b16 %v3944
    %v6194 = vunpack.c.l.b16 %v3945
    %v6195 = vunpack.c.h.b16 %v3945
    %v6196 = vunpack.c.l.b16 %v3946
    %v6197 = vunpack.c.h.b16 %v3946
    %v6198 = vunpack.c.l.b16 %v3947
    %v6199 = vunpack.c.h.b16 %v3947
    %v6200 = vunpack.c.l.b16 %v3948
    %v6201 = vunpack.c.h.b16 %v3948
    %v6202 = vunpack.c.l.b16 %v3949
    %v6203 = vunpack.c.h.b16 %v3949
    %v6204 = vunpack.c.l.b16 %v3950
    %v6205 = vunpack.c.h.b16 %v3950
    %v6206 = vunpack.c.l.b16 %v3951
    %v6207 = vunpack.c.h.b16 %v3951
    %v6208 = vunpack.c.l.b16 %v3952
    %v6209 = vunpack.c.h.b16 %v3952
    %v6210 = vunpack.c.l.b16 %v3953
    %v6211 = vunpack.c.h.b16 %v3953
    %v6212 = vunpack.c.l.b16 %v3954
    %v6213 = vunpack.c.h.b16 %v3954
    %v6214 = vunpack.c.l.b16 %v3955
    %v6215 = vunpack.c.h.b16 %v3955
    %v6216 = vunpack.c.l.b16 %v3956
    %v6217 = vunpack.c.h.b16 %v3956
    %v6218 = vunpack.c.l.b16 %v3957
    %v6219 = vunpack.c.h.b16 %v3957
    %v6220 = vunpack.c.l.b16 %v3958
    %v6221 = vunpack.c.h.b16 %v3958
    %v6222 = vunpack.c.l.b16 %v3959
    %v6223 = vunpack.c.h.b16 %v3959
    %v6224 = vunpack.c.l.b16 %v3960
    %v6225 = vunpack.c.h.b16 %v3960
    %v6226 = vunpack.c.l.b16 %v3961
    %v6227 = vunpack.c.h.b16 %v3961
    %v6228 = vunpack.c.l.b16 %v3962
    %v6229 = vunpack.c.h.b16 %v3962
    %v6230 = vunpack.c.l.b16 %v3963
    %v6231 = vunpack.c.h.b16 %v3963
    %v6232 = vunpack.c.l.b16 %v3964
    %v6233 = vunpack.c.h.b16 %v3964
    %v6234 = vunpack.c.l.b16 %v3965
    %v6235 = vunpack.c.h.b16 %v3965
    %v6236 = vunpack.c.l.b16 %v3966
    %v6237 = vunpack.c.h.b16 %v3966
    %v6238 = vunpack.c.l.b16 %v3967
    %v6239 = vunpack.c.h.b16 %v3967
    %v6240 = vunpack.c.l.b16 %v3968
    %v6241 = vunpack.c.h.b16 %v3968
    %v6242 = vunpack.c.l.b16 %v3969
    %v6243 = vunpack.c.h.b16 %v3969
    %v6244 = vunpack.c.l.b16 %v3970
    %v6245 = vunpack.c.h.b16 %v3970
    %v6246 = vunpack.c.l.b16 %v3971
    %v6247 = vunpack.c.h.b16 %v3971
    %v6248 = vunpack.c.l.b16 %v3972
    %v6249 = vunpack.c.h.b16 %v3972
    %v6250 = vunpack.c.l.b16 %v3973
    %v6251 = vunpack.c.h.b16 %v3973
    %v6252 = vunpack.c.l.b16 %v3974
    %v6253 = vunpack.c.h.b16 %v3974
    %v6254 = vunpack.c.l.b16 %v3975
    %v6255 = vunpack.c.h.b16 %v3975
    %v6256 = vunpack.c.l.b16 %v3976
    %v6257 = vunpack.c.h.b16 %v3976
    %v6258 = vunpack.c.l.b16 %v3977
    %v6259 = vunpack.c.h.b16 %v3977
    %v6260 = vunpack.c.l.b16 %v3978
    %v6261 = vunpack.c.h.b16 %v3978
    %v6262 = vunpack.c.l.b16 %v3979
    %v6263 = vunpack.c.h.b16 %v3979
    %v6264 = vunpack.c.l.b16 %v3980
    %v6265 = vunpack.c.h.b16 %v3980
    %v6266 = vunpack.c.l.b16 %v3981
    %v6267 = vunpack.c.h.b16 %v3981
    %v6268 = vunpack.c.l.b16 %v3982
    %v6269 = vunpack.c.h.b16 %v3982
    %v6270 = vunpack.c.l.b16 %v3983
    %v6271 = vunpack.c.h.b16 %v3983
    %v6272 = vunpack.c.l.b16 %v3984
    %v6273 = vunpack.c.h.b16 %v3984
    %v6274 = vunpack.c.l.b16 %v3985
    %v6275 = vunpack.c.h.b16 %v3985
    %v6276 = vunpack.c.l.b16 %v3986
    %v6277 = vunpack.c.h.b16 %v3986
    %v6278 = vunpack.c.l.b16 %v3987
    %v6279 = vunpack.c.h.b16 %v3987
    %v6280 = vunpack.c.l.b16 %v3988
    %v6281 = vunpack.c.h.b16 %v3988
    %v6282 = vunpack.c.l.b16 %v3989
    %v6283 = vunpack.c.h.b16 %v3989
    %v6284 = vunpack.c.l.b16 %v3990
    %v6285 = vunpack.c.h.b16 %v3990
    %v6286 = vunpack.c.l.b16 %v3991
    %v6287 = vunpack.c.h.b16 %v3991
    %v6288 = vunpack.c.l.b16 %v3992
    %v6289 = vunpack.c.h.b16 %v3992
    %v6290 = vunpack.c.l.b16 %v3993
    %v6291 = vunpack.c.h.b16 %v3993
    %v6292 = vunpack.c.l.b16 %v3994
    %v6293 = vunpack.c.h.b16 %v3994
    %v6294 = vunpack.c.l.b16 %v3995
    %v6295 = vunpack.c.h.b16 %v3995
    %v6296 = vunpack.c.l.b16 %v3996
    %v6297 = vunpack.c.h.b16 %v3996
    %v6298 = vunpack.c.l.b16 %v3997
    %v6299 = vunpack.c.h.b16 %v3997
    %v6300 = vunpack.c.l.b16 %v3998
    %v6301 = vunpack.c.h.b16 %v3998
    %v6302 = vunpack.c.l.b16 %v3999
    %v6303 = vunpack.c.h.b16 %v3999
    %v6304 = vunpack.c.l.b16 %v4000
    %v6305 = vunpack.c.h.b16 %v4000
    %v6306 = vunpack.c.l.b16 %v4001
    %v6307 = vunpack.c.h.b16 %v4001
    %v6308 = vunpack.c.l.b16 %v4002
    %v6309 = vunpack.c.h.b16 %v4002
    %v6310 = vunpack.c.l.b16 %v4003
    %v6311 = vunpack.c.h.b16 %v4003
    %v6312 = vunpack.c.l.b16 %v4004
    %v6313 = vunpack.c.h.b16 %v4004
    %v6314 = vunpack.c.l.b16 %v4005
    %v6315 = vunpack.c.h.b16 %v4005
    %v6316 = vunpack.c.l.b16 %v4006
    %v6317 = vunpack.c.h.b16 %v4006
    %v6318 = vunpack.c.l.b16 %v4007
    %v6319 = vunpack.c.h.b16 %v4007
    %v6320 = vunpack.c.l.b16 %v4008
    %v6321 = vunpack.c.h.b16 %v4008
    %v6322 = vunpack.c.l.b16 %v4009
    %v6323 = vunpack.c.h.b16 %v4009
    %v6324 = vunpack.c.l.b16 %v4010
    %v6325 = vunpack.c.h.b16 %v4010
    %v6326 = vunpack.c.l.b16 %v4011
    %v6327 = vunpack.c.h.b16 %v4011
    %v6328 = vunpack.c.l.b16 %v4012
    %v6329 = vunpack.c.h.b16 %v4012
    %v6330 = vunpack.c.l.b16 %v4013
    %v6331 = vunpack.c.h.b16 %v4013
    %v6332 = vunpack.c.l.b16 %v4014
    %v6333 = vunpack.c.h.b16 %v4014
    %v6334 = vunpack.c.l.b16 %v4015
    %v6335 = vunpack.c.h.b16 %v4015
    %v6336 = vunpack.c.l.b16 %v4016
    %v6337 = vunpack.c.h.b16 %v4016
    %v6338 = vunpack.c.l.b16 %v4017
    %v6339 = vunpack.c.h.b16 %v4017
    %v6340 = vunpack.c.l.b16 %v4018
    %v6341 = vunpack.c.h.b16 %v4018
    %v6342 = vunpack.c.l.b16 %v4019
    %v6343 = vunpack.c.h.b16 %v4019
    %v6344 = vunpack.c.l.b16 %v4020
    %v6345 = vunpack.c.h.b16 %v4020
    %v6346 = vunpack.c.l.b16 %v4021
    %v6347 = vunpack.c.h.b16 %v4021
    %v6348 = vunpack.c.l.b16 %v4022
    %v6349 = vunpack.c.h.b16 %v4022
    %v6350 = vunpack.c.l.b16 %v4023
    %v6351 = vunpack.c.h.b16 %v4023
    %v6352 = vunpack.c.l.b16 %v4024
    %v6353 = vunpack.c.h.b16 %v4024
    %v6354 = vunpack.c.l.b16 %v4025
    %v6355 = vunpack.c.h.b16 %v4025
    %v6356 = vunpack.c.l.b16 %v4026
    %v6357 = vunpack.c.h.b16 %v4026
    %v6358 = vunpack.c.l.b16 %v4027
    %v6359 = vunpack.c.h.b16 %v4027
    %v6360 = vunpack.c.l.b16 %v4028
    %v6361 = vunpack.c.h.b16 %v4028
    %v6362 = vunpack.c.l.b16 %v4029
    %v6363 = vunpack.c.h.b16 %v4029
    %v6364 = vunpack.c.l.b16 %v4030
    %v6365 = vunpack.c.h.b16 %v4030
    %v6366 = vunpack.c.l.b16 %v4031
    %v6367 = vunpack.c.h.b16 %v4031
    %v6368 = vunpack.c.l.b16 %v4032
    %v6369 = vunpack.c.h.b16 %v4032
    %v6370 = vunpack.c.l.b16 %v4033
    %v6371 = vunpack.c.h.b16 %v4033
    %v6372 = vunpack.c.l.b16 %v4034
    %v6373 = vunpack.c.h.b16 %v4034
    %v6374 = vunpack.c.l.b16 %v4035
    %v6375 = vunpack.c.h.b16 %v4035
    %v6376 = vunpack.c.l.b16 %v4036
    %v6377 = vunpack.c.h.b16 %v4036
    %v6378 = vunpack.c.l.b16 %v4037
    %v6379 = vunpack.c.h.b16 %v4037
    %v6380 = vunpack.c.l.b16 %v4038
    %v6381 = vunpack.c.h.b16 %v4038
    %v6382 = vunpack.c.l.b16 %v4039
    %v6383 = vunpack.c.h.b16 %v4039
    %v6384 = vunpack.c.l.b16 %v4040
    %v6385 = vunpack.c.h.b16 %v4040
    %v6386 = vunpack.c.l.b16 %v4041
    %v6387 = vunpack.c.h.b16 %v4041
    %v6388 = vunpack.c.l.b16 %v4042
    %v6389 = vunpack.c.h.b16 %v4042
    %v6390 = vunpack.c.l.b16 %v4043
    %v6391 = vunpack.c.h.b16 %v4043
    %v6392 = vunpack.c.l.b16 %v4044
    %v6393 = vunpack.c.h.b16 %v4044
    %v6394 = vunpack.c.l.b16 %v4045
    %v6395 = vunpack.c.h.b16 %v4045
    %v6396 = vunpack.c.l.b16 %v4046
    %v6397 = vunpack.c.h.b16 %v4046
    %v6398 = vunpack.c.l.b16 %v4047
    %v6399 = vunpack.c.h.b16 %v4047
    %v6400 = vunpack.c.l.b16 %v4048
    %v6401 = vunpack.c.h.b16 %v4048
    %v6402 = vunpack.c.l.b16 %v4049
    %v6403 = vunpack.c.h.b16 %v4049
    %v6404 = vunpack.c.l.b16 %v4050
    %v6405 = vunpack.c.h.b16 %v4050
    %v6406 = vunpack.c.l.b16 %v4051
    %v6407 = vunpack.c.h.b16 %v4051
    %v6408 = vunpack.c.l.b16 %v4052
    %v6409 = vunpack.c.h.b16 %v4052
    %v6410 = vunpack.c.l.b16 %v4053
    %v6411 = vunpack.c.h.b16 %v4053
    %v6412 = vunpack.c.l.b16 %v4054
    %v6413 = vunpack.c.h.b16 %v4054
    %v6414 = vunpack.c.l.b16 %v4055
    %v6415 = vunpack.c.h.b16 %v4055
    %v6416 = vunpack.c.l.b16 %v4056
    %v6417 = vunpack.c.h.b16 %v4056
    %v6418 = vunpack.c.l.b16 %v4057
    %v6419 = vunpack.c.h.b16 %v4057
    %v6420 = vunpack.c.l.b16 %v4058
    %v6421 = vunpack.c.h.b16 %v4058
    %v6422 = vunpack.c.l.b16 %v4059
    %v6423 = vunpack.c.h.b16 %v4059
    %v6424 = vunpack.c.l.b16 %v4060
    %v6425 = vunpack.c.h.b16 %v4060
    %v6426 = vunpack.c.l.b16 %v4061
    %v6427 = vunpack.c.h.b16 %v4061
    %v6428 = vunpack.c.l.b16 %v4062
    %v6429 = vunpack.c.h.b16 %v4062
    %v6430 = vunpack.c.l.b16 %v4063
    %v6431 = vunpack.c.h.b16 %v4063
    %v6432 = vpack.c.b16 %v4908, %v4896
    %v6433 = vpack.c.b16 %v4909, %v4897
    %v6434 = vpack.c.b16 %v4910, %v4898
    %v6435 = vpack.c.b16 %v4911, %v4899
    %v6436 = vpack.c.b16 %v4912, %v4900
    %v6437 = vpack.c.b16 %v4913, %v4901
    %v6438 = vpack.c.b16 %v4914, %v4902
    %v6439 = vpack.c.b16 %v4915, %v4903
    %v6440 = vpack.c.b16 %v4916, %v4904
    %v6441 = vpack.c.b16 %v4917, %v4905
    %v6442 = vpack.c.b16 %v4918, %v4906
    %v6443 = vpack.c.b16 %v4919, %v4907
    %v6444 = vpack.c.b16 %v4932, %v4920
    %v6445 = vpack.c.b16 %v4933, %v4921
    %v6446 = vpack.c.b16 %v4934, %v4922
    %v6447 = vpack.c.b16 %v4935, %v4923
    %v6448 = vpack.c.b16 %v4936, %v4924
    %v6449 = vpack.c.b16 %v4937, %v4925
    %v6450 = vpack.c.b16 %v4938, %v4926
    %v6451 = vpack.c.b16 %v4939, %v4927
    %v6452 = vpack.c.b16 %v4940, %v4928
    %v6453 = vpack.c.b16 %v4941, %v4929
    %v6454 = vpack.c.b16 %v4942, %v4930
    %v6455 = vpack.c.b16 %v4943, %v4931
    %v6456 = vpack.c.b16 %v4956, %v4944
    %v6457 = vpack.c.b16 %v4957, %v4945
    %v6458 = vpack.c.b16 %v4958, %v4946
    %v6459 = vpack.c.b16 %v4959, %v4947
    %v6460 = vpack.c.b16 %v4960, %v4948
    %v6461 = vpack.c.b16 %v4961, %v4949
    %v6462 = vpack.c.b16 %v4962, %v4950
    %v6463 = vpack.c.b16 %v4963, %v4951
    %v6464 = vpack.c.b16 %v4964, %v4952
    %v6465 = vpack.c.b16 %v4965, %v4953
    %v6466 = vpack.c.b16 %v4966, %v4954
    %v6467 = vpack.c.b16 %v4967, %v4955
    %v6468 = vpack.c.b16 %v4980, %v4968
    %v6469 = vpack.c.b16 %v4981, %v4969
    %v6470 = vpack.c.b16 %v4982, %v4970
    %v6471 = vpack.c.b16 %v4983, %v4971
    %v6472 = vpack.c.b16 %v4984, %v4972
    %v6473 = vpack.c.b16 %v4985, %v4973
    %v6474 = vpack.c.b16 %v4986, %v4974
    %v6475 = vpack.c.b16 %v4987, %v4975
    %v6476 = vpack.c.b16 %v4988, %v4976
    %v6477 = vpack.c.b16 %v4989, %v4977
    %v6478 = vpack.c.b16 %v4990, %v4978
    %v6479 = vpack.c.b16 %v4991, %v4979
    %v6480 = vpack.c.b16 %v5004, %v4992
    %v6481 = vpack.c.b16 %v5005, %v4993
    %v6482 = vpack.c.b16 %v5006, %v4994
    %v6483 = vpack.c.b16 %v5007, %v4995
    %v6484 = vpack.c.b16 %v5008, %v4996
    %v6485 = vpack.c.b16 %v5009, %v4997
    %v6486 = vpack.c.b16 %v5010, %v4998
    %v6487 = vpack.c.b16 %v5011, %v4999
    %v6488 = vpack.c.b16 %v5012, %v5000
    %v6489 = vpack.c.b16 %v5013, %v5001
    %v6490 = vpack.c.b16 %v5014, %v5002
    %v6491 = vpack.c.b16 %v5015, %v5003
    %v6492 = vpack.c.b16 %v5028, %v5016
    %v6493 = vpack.c.b16 %v5029, %v5017
    %v6494 = vpack.c.b16 %v5030, %v5018
    %v6495 = vpack.c.b16 %v5031, %v5019
    %v6496 = vpack.c.b16 %v5032, %v5020
    %v6497 = vpack.c.b16 %v5033, %v5021
    %v6498 = vpack.c.b16 %v5034, %v5022
    %v6499 = vpack.c.b16 %v5035, %v5023
    %v6500 = vpack.c.b16 %v5036, %v5024
    %v6501 = vpack.c.b16 %v5037, %v5025
    %v6502 = vpack.c.b16 %v5038, %v5026
    %v6503 = vpack.c.b16 %v5039, %v5027
    %v6504 = vpack.c.b16 %v5052, %v5040
    %v6505 = vpack.c.b16 %v5053, %v5041
    %v6506 = vpack.c.b16 %v5054, %v5042
    %v6507 = vpack.c.b16 %v5055, %v5043
    %v6508 = vpack.c.b16 %v5056, %v5044
    %v6509 = vpack.c.b16 %v5057, %v5045
    %v6510 = vpack.c.b16 %v5058, %v5046
    %v6511 = vpack.c.b16 %v5059, %v5047
    %v6512 = vpack.c.b16 %v5060, %v5048
    %v6513 = vpack.c.b16 %v5061, %v5049
    %v6514 = vpack.c.b16 %v5062, %v5050
    %v6515 = vpack.c.b16 %v5063, %v5051
    %v6516 = vpack.c.b16 %v5076, %v5064
    %v6517 = vpack.c.b16 %v5077, %v5065
    %v6518 = vpack.c.b16 %v5078, %v5066
    %v6519 = vpack.c.b16 %v5079, %v5067
    %v6520 = vpack.c.b16 %v5080, %v5068
    %v6521 = vpack.c.b16 %v5081, %v5069
    %v6522 = vpack.c.b16 %v5082, %v5070
    %v6523 = vpack.c.b16 %v5083, %v5071
    %v6524 = vpack.c.b16 %v5084, %v5072
    %v6525 = vpack.c.b16 %v5085, %v5073
    %v6526 = vpack.c.b16 %v5086, %v5074
    %v6527 = vpack.c.b16 %v5087, %v5075
    %v6528 = vpack.c.b16 %v5100, %v5088
    %v6529 = vpack.c.b16 %v5101, %v5089
    %v6530 = vpack.c.b16 %v5102, %v5090
    %v6531 = vpack.c.b16 %v5103, %v5091
    %v6532 = vpack.c.b16 %v5104, %v5092
    %v6533 = vpack.c.b16 %v5105, %v5093
    %v6534 = vpack.c.b16 %v5106, %v5094
    %v6535 = vpack.c.b16 %v5107, %v5095
    %v6536 = vpack.c.b16 %v5108, %v5096
    %v6537 = vpack.c.b16 %v5109, %v5097
    %v6538 = vpack.c.b16 %v5110, %v5098
    %v6539 = vpack.c.b16 %v5111, %v5099
    %v6540 = vpack.c.b16 %v5124, %v5112
    %v6541 = vpack.c.b16 %v5125, %v5113
    %v6542 = vpack.c.b16 %v5126, %v5114
    %v6543 = vpack.c.b16 %v5127, %v5115
    %v6544 = vpack.c.b16 %v5128, %v5116
    %v6545 = vpack.c.b16 %v5129, %v5117
    %v6546 = vpack.c.b16 %v5130, %v5118
    %v6547 = vpack.c.b16 %v5131, %v5119
    %v6548 = vpack.c.b16 %v5132, %v5120
    %v6549 = vpack.c.b16 %v5133, %v5121
    %v6550 = vpack.c.b16 %v5134, %v5122
    %v6551 = vpack.c.b16 %v5135, %v5123
    %v6552 = vpack.c.b16 %v5148, %v5136
    %v6553 = vpack.c.b16 %v5149, %v5137
    %v6554 = vpack.c.b16 %v5150, %v5138
    %v6555 = vpack.c.b16 %v5151, %v5139
    %v6556 = vpack.c.b16 %v5152, %v5140
    %v6557 = vpack.c.b16 %v5153, %v5141
    %v6558 = vpack.c.b16 %v5154, %v5142
    %v6559 = vpack.c.b16 %v5155, %v5143
    %v6560 = vpack.c.b16 %v5156, %v5144
    %v6561 = vpack.c.b16 %v5157, %v5145
    %v6562 = vpack.c.b16 %v5158, %v5146
    %v6563 = vpack.c.b16 %v5159, %v5147
    %v6564 = vpack.c.b16 %v5172, %v5160
    %v6565 = vpack.c.b16 %v5173, %v5161
    %v6566 = vpack.c.b16 %v5174, %v5162
    %v6567 = vpack.c.b16 %v5175, %v5163
    %v6568 = vpack.c.b16 %v5176, %v5164
    %v6569 = vpack.c.b16 %v5177, %v5165
    %v6570 = vpack.c.b16 %v5178, %v5166
    %v6571 = vpack.c.b16 %v5179, %v5167
    %v6572 = vpack.c.b16 %v5180, %v5168
    %v6573 = vpack.c.b16 %v5181, %v5169
    %v6574 = vpack.c.b16 %v5182, %v5170
    %v6575 = vpack.c.b16 %v5183, %v5171
    %v6576 = vpack.c.b16 %v5196, %v5184
    %v6577 = vpack.c.b16 %v5197, %v5185
    %v6578 = vpack.c.b16 %v5198, %v5186
    %v6579 = vpack.c.b16 %v5199, %v5187
    %v6580 = vpack.c.b16 %v5200, %v5188
    %v6581 = vpack.c.b16 %v5201, %v5189
    %v6582 = vpack.c.b16 %v5202, %v5190
    %v6583 = vpack.c.b16 %v5203, %v5191
    %v6584 = vpack.c.b16 %v5204, %v5192
    %v6585 = vpack.c.b16 %v5205, %v5193
    %v6586 = vpack.c.b16 %v5206, %v5194
    %v6587 = vpack.c.b16 %v5207, %v5195
    %v6588 = vpack.c.b16 %v5220, %v5208
    %v6589 = vpack.c.b16 %v5221, %v5209
    %v6590 = vpack.c.b16 %v5222, %v5210
    %v6591 = vpack.c.b16 %v5223, %v5211
    %v6592 = vpack.c.b16 %v5224, %v5212
    %v6593 = vpack.c.b16 %v5225, %v5213
    %v6594 = vpack.c.b16 %v5226, %v5214
    %v6595 = vpack.c.b16 %v5227, %v5215
    %v6596 = vpack.c.b16 %v5228, %v5216
    %v6597 = vpack.c.b16 %v5229, %v5217
    %v6598 = vpack.c.b16 %v5230, %v5218
    %v6599 = vpack.c.b16 %v5231, %v5219
    %v6600 = vpack.c.b16 %v5244, %v5232
    %v6601 = vpack.c.b16 %v5245, %v5233
    %v6602 = vpack.c.b16 %v5246, %v5234
    %v6603 = vpack.c.b16 %v5247, %v5235
    %v6604 = vpack.c.b16 %v5248, %v5236
    %v6605 = vpack.c.b16 %v5249, %v5237
    %v6606 = vpack.c.b16 %v5250, %v5238
    %v6607 = vpack.c.b16 %v5251, %v5239
    %v6608 = vpack.c.b16 %v5252, %v5240
    %v6609 = vpack.c.b16 %v5253, %v5241
    %v6610 = vpack.c.b16 %v5254, %v5242
    %v6611 = vpack.c.b16 %v5255, %v5243
    %v6612 = vpack.c.b16 %v5268, %v5256
    %v6613 = vpack.c.b16 %v5269, %v5257
    %v6614 = vpack.c.b16 %v5270, %v5258
    %v6615 = vpack.c.b16 %v5271, %v5259
    %v6616 = vpack.c.b16 %v5272, %v5260
    %v6617 = vpack.c.b16 %v5273, %v5261
    %v6618 = vpack.c.b16 %v5274, %v5262
    %v6619 = vpack.c.b16 %v5275, %v5263
    %v6620 = vpack.c.b16 %v5276, %v5264
    %v6621 = vpack.c.b16 %v5277, %v5265
    %v6622 = vpack.c.b16 %v5278, %v5266
    %v6623 = vpack.c.b16 %v5279, %v5267
    %v6624 = vpack.c.b16 %v5292, %v5280
    %v6625 = vpack.c.b16 %v5293, %v5281
    %v6626 = vpack.c.b16 %v5294, %v5282
    %v6627 = vpack.c.b16 %v5295, %v5283
    %v6628 = vpack.c.b16 %v5296, %v5284
    %v6629 = vpack.c.b16 %v5297, %v5285
    %v6630 = vpack.c.b16 %v5298, %v5286
    %v6631 = vpack.c.b16 %v5299, %v5287
    %v6632 = vpack.c.b16 %v5300, %v5288
    %v6633 = vpack.c.b16 %v5301, %v5289
    %v6634 = vpack.c.b16 %v5302, %v5290
    %v6635 = vpack.c.b16 %v5303, %v5291
    %v6636 = vpack.c.b16 %v5316, %v5304
    %v6637 = vpack.c.b16 %v5317, %v5305
    %v6638 = vpack.c.b16 %v5318, %v5306
    %v6639 = vpack.c.b16 %v5319, %v5307
    %v6640 = vpack.c.b16 %v5320, %v5308
    %v6641 = vpack.c.b16 %v5321, %v5309
    %v6642 = vpack.c.b16 %v5322, %v5310
    %v6643 = vpack.c.b16 %v5323, %v5311
    %v6644 = vpack.c.b16 %v5324, %v5312
    %v6645 = vpack.c.b16 %v5325, %v5313
    %v6646 = vpack.c.b16 %v5326, %v5314
    %v6647 = vpack.c.b16 %v5327, %v5315
    %v6648 = vpack.c.b16 %v5340, %v5328
    %v6649 = vpack.c.b16 %v5341, %v5329
    %v6650 = vpack.c.b16 %v5342, %v5330
    %v6651 = vpack.c.b16 %v5343, %v5331
    %v6652 = vpack.c.b16 %v5344, %v5332
    %v6653 = vpack.c.b16 %v5345, %v5333
    %v6654 = vpack.c.b16 %v5346, %v5334
    %v6655 = vpack.c.b16 %v5347, %v5335
    %v6656 = vpack.c.b16 %v5348, %v5336
    %v6657 = vpack.c.b16 %v5349, %v5337
    %v6658 = vpack.c.b16 %v5350, %v5338
    %v6659 = vpack.c.b16 %v5351, %v5339
    %v6660 = vpack.c.b16 %v5364, %v5352
    %v6661 = vpack.c.b16 %v5365, %v5353
    %v6662 = vpack.c.b16 %v5366, %v5354
    %v6663 = vpack.c.b16 %v5367, %v5355
    %v6664 = vpack.c.b16 %v5368, %v5356
    %v6665 = vpack.c.b16 %v5369, %v5357
    %v6666 = vpack.c.b16 %v5370, %v5358
    %v6667 = vpack.c.b16 %v5371, %v5359
    %v6668 = vpack.c.b16 %v5372, %v5360
    %v6669 = vpack.c.b16 %v5373, %v5361
    %v6670 = vpack.c.b16 %v5374, %v5362
    %v6671 = vpack.c.b16 %v5375, %v5363
    %v6672 = vpack.c.b16 %v5388, %v5376
    %v6673 = vpack.c.b16 %v5389, %v5377
    %v6674 = vpack.c.b16 %v5390, %v5378
    %v6675 = vpack.c.b16 %v5391, %v5379
    %v6676 = vpack.c.b16 %v5392, %v5380
    %v6677 = vpack.c.b16 %v5393, %v5381
    %v6678 = vpack.c.b16 %v5394, %v5382
    %v6679 = vpack.c.b16 %v5395, %v5383
    %v6680 = vpack.c.b16 %v5396, %v5384
    %v6681 = vpack.c.b16 %v5397, %v5385
    %v6682 = vpack.c.b16 %v5398, %v5386
    %v6683 = vpack.c.b16 %v5399, %v5387
    %v6684 = vpack.c.b16 %v5412, %v5400
    %v6685 = vpack.c.b16 %v5413, %v5401
    %v6686 = vpack.c.b16 %v5414, %v5402
    %v6687 = vpack.c.b16 %v5415, %v5403
    %v6688 = vpack.c.b16 %v5416, %v5404
    %v6689 = vpack.c.b16 %v5417, %v5405
    %v6690 = vpack.c.b16 %v5418, %v5406
    %v6691 = vpack.c.b16 %v5419, %v5407
    %v6692 = vpack.c.b16 %v5420, %v5408
    %v6693 = vpack.c.b16 %v5421, %v5409
    %v6694 = vpack.c.b16 %v5422, %v5410
    %v6695 = vpack.c.b16 %v5423, %v5411
    %v6696 = vpack.c.b16 %v5436, %v5424
    %v6697 = vpack.c.b16 %v5437, %v5425
    %v6698 = vpack.c.b16 %v5438, %v5426
    %v6699 = vpack.c.b16 %v5439, %v5427
    %v6700 = vpack.c.b16 %v5440, %v5428
    %v6701 = vpack.c.b16 %v5441, %v5429
    %v6702 = vpack.c.b16 %v5442, %v5430
    %v6703 = vpack.c.b16 %v5443, %v5431
    %v6704 = vpack.c.b16 %v5444, %v5432
    %v6705 = vpack.c.b16 %v5445, %v5433
    %v6706 = vpack.c.b16 %v5446, %v5434
    %v6707 = vpack.c.b16 %v5447, %v5435
    %v6708 = vpack.c.b16 %v5460, %v5448
    %v6709 = vpack.c.b16 %v5461, %v5449
    %v6710 = vpack.c.b16 %v5462, %v5450
    %v6711 = vpack.c.b16 %v5463, %v5451
    %v6712 = vpack.c.b16 %v5464, %v5452
    %v6713 = vpack.c.b16 %v5465, %v5453
    %v6714 = vpack.c.b16 %v5466, %v5454
    %v6715 = vpack.c.b16 %v5467, %v5455
    %v6716 = vpack.c.b16 %v5468, %v5456
    %v6717 = vpack.c.b16 %v5469, %v5457
    %v6718 = vpack.c.b16 %v5470, %v5458
    %v6719 = vpack.c.b16 %v5471, %v5459
    %v6720 = vpack.c.b16 %v5484, %v5472
    %v6721 = vpack.c.b16 %v5485, %v5473
    %v6722 = vpack.c.b16 %v5486, %v5474
    %v6723 = vpack.c.b16 %v5487, %v5475
    %v6724 = vpack.c.b16 %v5488, %v5476
    %v6725 = vpack.c.b16 %v5489, %v5477
    %v6726 = vpack.c.b16 %v5490, %v5478
    %v6727 = vpack.c.b16 %v5491, %v5479
    %v6728 = vpack.c.b16 %v5492, %v5480
    %v6729 = vpack.c.b16 %v5493, %v5481
    %v6730 = vpack.c.b16 %v5494, %v5482
    %v6731 = vpack.c.b16 %v5495, %v5483
    %v6732 = vpack.c.b16 %v5508, %v5496
    %v6733 = vpack.c.b16 %v5509, %v5497
    %v6734 = vpack.c.b16 %v5510, %v5498
    %v6735 = vpack.c.b16 %v5511, %v5499
    %v6736 = vpack.c.b16 %v5512, %v5500
    %v6737 = vpack.c.b16 %v5513, %v5501
    %v6738 = vpack.c.b16 %v5514, %v5502
    %v6739 = vpack.c.b16 %v5515, %v5503
    %v6740 = vpack.c.b16 %v5516, %v5504
    %v6741 = vpack.c.b16 %v5517, %v5505
    %v6742 = vpack.c.b16 %v5518, %v5506
    %v6743 = vpack.c.b16 %v5519, %v5507
    %v6744 = vpack.c.b16 %v5532, %v5520
    %v6745 = vpack.c.b16 %v5533, %v5521
    %v6746 = vpack.c.b16 %v5534, %v5522
    %v6747 = vpack.c.b16 %v5535, %v5523
    %v6748 = vpack.c.b16 %v5536, %v5524
    %v6749 = vpack.c.b16 %v5537, %v5525
    %v6750 = vpack.c.b16 %v5538, %v5526
    %v6751 = vpack.c.b16 %v5539, %v5527
    %v6752 = vpack.c.b16 %v5540, %v5528
    %v6753 = vpack.c.b16 %v5541, %v5529
    %v6754 = vpack.c.b16 %v5542, %v5530
    %v6755 = vpack.c.b16 %v5543, %v5531
    %v6756 = vpack.c.b16 %v5556, %v5544
    %v6757 = vpack.c.b16 %v5557, %v5545
    %v6758 = vpack.c.b16 %v5558, %v5546
    %v6759 = vpack.c.b16 %v5559, %v5547
    %v6760 = vpack.c.b16 %v5560, %v5548
    %v6761 = vpack.c.b16 %v5561, %v5549
    %v6762 = vpack.c.b16 %v5562, %v5550
    %v6763 = vpack.c.b16 %v5563, %v5551
    %v6764 = vpack.c.b16 %v5564, %v5552
    %v6765 = vpack.c.b16 %v5565, %v5553
    %v6766 = vpack.c.b16 %v5566, %v5554
    %v6767 = vpack.c.b16 %v5567, %v5555
    %v6768 = vpack.c.b16 %v5580, %v5568
    %v6769 = vpack.c.b16 %v5581, %v5569
    %v6770 = vpack.c.b16 %v5582, %v5570
    %v6771 = vpack.c.b16 %v5583, %v5571
    %v6772 = vpack.c.b16 %v5584, %v5572
    %v6773 = vpack.c.b16 %v5585, %v5573
    %v6774 = vpack.c.b16 %v5586, %v5574
    %v6775 = vpack.c.b16 %v5587, %v5575
    %v6776 = vpack.c.b16 %v5588, %v5576
    %v6777 = vpack.c.b16 %v5589, %v5577
    %v6778 = vpack.c.b16 %v5590, %v5578
    %v6779 = vpack.c.b16 %v5591, %v5579
    %v6780 = vpack.c.b16 %v5604, %v5592
    %v6781 = vpack.c.b16 %v5605, %v5593
    %v6782 = vpack.c.b16 %v5606, %v5594
    %v6783 = vpack.c.b16 %v5607, %v5595
    %v6784 = vpack.c.b16 %v5608, %v5596
    %v6785 = vpack.c.b16 %v5609, %v5597
    %v6786 = vpack.c.b16 %v5610, %v5598
    %v6787 = vpack.c.b16 %v5611, %v5599
    %v6788 = vpack.c.b16 %v5612, %v5600
    %v6789 = vpack.c.b16 %v5613, %v5601
    %v6790 = vpack.c.b16 %v5614, %v5602
    %v6791 = vpack.c.b16 %v5615, %v5603
    %v6792 = vpack.c.b16 %v5628, %v5616
    %v6793 = vpack.c.b16 %v5629, %v5617
    %v6794 = vpack.c.b16 %v5630, %v5618
    %v6795 = vpack.c.b16 %v5631, %v5619
    %v6796 = vpack.c.b16 %v5632, %v5620
    %v6797 = vpack.c.b16 %v5633, %v5621
    %v6798 = vpack.c.b16 %v5634, %v5622
    %v6799 = vpack.c.b16 %v5635, %v5623
    %v6800 = vpack.c.b16 %v5636, %v5624
    %v6801 = vpack.c.b16 %v5637, %v5625
    %v6802 = vpack.c.b16 %v5638, %v5626
    %v6803 = vpack.c.b16 %v5639, %v5627
    %v6804 = vpack.c.b16 %v5652, %v5640
    %v6805 = vpack.c.b16 %v5653, %v5641
    %v6806 = vpack.c.b16 %v5654, %v5642
    %v6807 = vpack.c.b16 %v5655, %v5643
    %v6808 = vpack.c.b16 %v5656, %v5644
    %v6809 = vpack.c.b16 %v5657, %v5645
    %v6810 = vpack.c.b16 %v5658, %v5646
    %v6811 = vpack.c.b16 %v5659, %v5647
    %v6812 = vpack.c.b16 %v5660, %v5648
    %v6813 = vpack.c.b16 %v5661, %v5649
    %v6814 = vpack.c.b16 %v5662, %v5650
    %v6815 = vpack.c.b16 %v5663, %v5651
    %v6816 = vpack.c.b16 %v5676, %v5664
    %v6817 = vpack.c.b16 %v5677, %v5665
    %v6818 = vpack.c.b16 %v5678, %v5666
    %v6819 = vpack.c.b16 %v5679, %v5667
    %v6820 = vpack.c.b16 %v5680, %v5668
    %v6821 = vpack.c.b16 %v5681, %v5669
    %v6822 = vpack.c.b16 %v5682, %v5670
    %v6823 = vpack.c.b16 %v5683, %v5671
    %v6824 = vpack.c.b16 %v5684, %v5672
    %v6825 = vpack.c.b16 %v5685, %v5673
    %v6826 = vpack.c.b16 %v5686, %v5674
    %v6827 = vpack.c.b16 %v5687, %v5675
    %v6828 = vpack.c.b16 %v5700, %v5688
    %v6829 = vpack.c.b16 %v5701, %v5689
    %v6830 = vpack.c.b16 %v5702, %v5690
    %v6831 = vpack.c.b16 %v5703, %v5691
    %v6832 = vpack.c.b16 %v5704, %v5692
    %v6833 = vpack.c.b16 %v5705, %v5693
    %v6834 = vpack.c.b16 %v5706, %v5694
    %v6835 = vpack.c.b16 %v5707, %v5695
    %v6836 = vpack.c.b16 %v5708, %v5696
    %v6837 = vpack.c.b16 %v5709, %v5697
    %v6838 = vpack.c.b16 %v5710, %v5698
    %v6839 = vpack.c.b16 %v5711, %v5699
    %v6840 = vpack.c.b16 %v5724, %v5712
    %v6841 = vpack.c.b16 %v5725, %v5713
    %v6842 = vpack.c.b16 %v5726, %v5714
    %v6843 = vpack.c.b16 %v5727, %v5715
    %v6844 = vpack.c.b16 %v5728, %v5716
    %v6845 = vpack.c.b16 %v5729, %v5717
    %v6846 = vpack.c.b16 %v5730, %v5718
    %v6847 = vpack.c.b16 %v5731, %v5719
    %v6848 = vpack.c.b16 %v5732, %v5720
    %v6849 = vpack.c.b16 %v5733, %v5721
    %v6850 = vpack.c.b16 %v5734, %v5722
    %v6851 = vpack.c.b16 %v5735, %v5723
    %v6852 = vpack.c.b16 %v5748, %v5736
    %v6853 = vpack.c.b16 %v5749, %v5737
    %v6854 = vpack.c.b16 %v5750, %v5738
    %v6855 = vpack.c.b16 %v5751, %v5739
    %v6856 = vpack.c.b16 %v5752, %v5740
    %v6857 = vpack.c.b16 %v5753, %v5741
    %v6858 = vpack.c.b16 %v5754, %v5742
    %v6859 = vpack.c.b16 %v5755, %v5743
    %v6860 = vpack.c.b16 %v5756, %v5744
    %v6861 = vpack.c.b16 %v5757, %v5745
    %v6862 = vpack.c.b16 %v5758, %v5746
    %v6863 = vpack.c.b16 %v5759, %v5747
    %v6864 = vpack.c.b16 %v5772, %v5760
    %v6865 = vpack.c.b16 %v5773, %v5761
    %v6866 = vpack.c.b16 %v5774, %v5762
    %v6867 = vpack.c.b16 %v5775, %v5763
    %v6868 = vpack.c.b16 %v5776, %v5764
    %v6869 = vpack.c.b16 %v5777, %v5765
    %v6870 = vpack.c.b16 %v5778, %v5766
    %v6871 = vpack.c.b16 %v5779, %v5767
    %v6872 = vpack.c.b16 %v5780, %v5768
    %v6873 = vpack.c.b16 %v5781, %v5769
    %v6874 = vpack.c.b16 %v5782, %v5770
    %v6875 = vpack.c.b16 %v5783, %v5771
    %v6876 = vpack.c.b16 %v5796, %v5784
    %v6877 = vpack.c.b16 %v5797, %v5785
    %v6878 = vpack.c.b16 %v5798, %v5786
    %v6879 = vpack.c.b16 %v5799, %v5787
    %v6880 = vpack.c.b16 %v5800, %v5788
    %v6881 = vpack.c.b16 %v5801, %v5789
    %v6882 = vpack.c.b16 %v5802, %v5790
    %v6883 = vpack.c.b16 %v5803, %v5791
    %v6884 = vpack.c.b16 %v5804, %v5792
    %v6885 = vpack.c.b16 %v5805, %v5793
    %v6886 = vpack.c.b16 %v5806, %v5794
    %v6887 = vpack.c.b16 %v5807, %v5795
    %v6888 = vpack.c.b16 %v5820, %v5808
    %v6889 = vpack.c.b16 %v5821, %v5809
    %v6890 = vpack.c.b16 %v5822, %v5810
    %v6891 = vpack.c.b16 %v5823, %v5811
    %v6892 = vpack.c.b16 %v5824, %v5812
    %v6893 = vpack.c.b16 %v5825, %v5813
    %v6894 = vpack.c.b16 %v5826, %v5814
    %v6895 = vpack.c.b16 %v5827, %v5815
    %v6896 = vpack.c.b16 %v5828, %v5816
    %v6897 = vpack.c.b16 %v5829, %v5817
    %v6898 = vpack.c.b16 %v5830, %v5818
    %v6899 = vpack.c.b16 %v5831, %v5819
    %v6900 = vpack.c.b16 %v5844, %v5832
    %v6901 = vpack.c.b16 %v5845, %v5833
    %v6902 = vpack.c.b16 %v5846, %v5834
    %v6903 = vpack.c.b16 %v5847, %v5835
    %v6904 = vpack.c.b16 %v5848, %v5836
    %v6905 = vpack.c.b16 %v5849, %v5837
    %v6906 = vpack.c.b16 %v5850, %v5838
    %v6907 = vpack.c.b16 %v5851, %v5839
    %v6908 = vpack.c.b16 %v5852, %v5840
    %v6909 = vpack.c.b16 %v5853, %v5841
    %v6910 = vpack.c.b16 %v5854, %v5842
    %v6911 = vpack.c.b16 %v5855, %v5843
    %v6912 = vpack.c.b16 %v5868, %v5856
    %v6913 = vpack.c.b16 %v5869, %v5857
    %v6914 = vpack.c.b16 %v5870, %v5858
    %v6915 = vpack.c.b16 %v5871, %v5859
    %v6916 = vpack.c.b16 %v5872, %v5860
    %v6917 = vpack.c.b16 %v5873, %v5861
    %v6918 = vpack.c.b16 %v5874, %v5862
    %v6919 = vpack.c.b16 %v5875, %v5863
    %v6920 = vpack.c.b16 %v5876, %v5864
    %v6921 = vpack.c.b16 %v5877, %v5865
    %v6922 = vpack.c.b16 %v5878, %v5866
    %v6923 = vpack.c.b16 %v5879, %v5867
    %v6924 = vpack.c.b16 %v5892, %v5880
    %v6925 = vpack.c.b16 %v5893, %v5881
    %v6926 = vpack.c.b16 %v5894, %v5882
    %v6927 = vpack.c.b16 %v5895, %v5883
    %v6928 = vpack.c.b16 %v5896, %v5884
    %v6929 = vpack.c.b16 %v5897, %v5885
    %v6930 = vpack.c.b16 %v5898, %v5886
    %v6931 = vpack.c.b16 %v5899, %v5887
    %v6932 = vpack.c.b16 %v5900, %v5888
    %v6933 = vpack.c.b16 %v5901, %v5889
    %v6934 = vpack.c.b16 %v5902, %v5890
    %v6935 = vpack.c.b16 %v5903, %v5891
    %v6936 = vpack.c.b16 %v5916, %v5904
    %v6937 = vpack.c.b16 %v5917, %v5905
    %v6938 = vpack.c.b16 %v5918, %v5906
    %v6939 = vpack.c.b16 %v5919, %v5907
    %v6940 = vpack.c.b16 %v5920, %v5908
    %v6941 = vpack.c.b16 %v5921, %v5909
    %v6942 = vpack.c.b16 %v5922, %v5910
    %v6943 = vpack.c.b16 %v5923, %v5911
    %v6944 = vpack.c.b16 %v5924, %v5912
    %v6945 = vpack.c.b16 %v5925, %v5913
    %v6946 = vpack.c.b16 %v5926, %v5914
    %v6947 = vpack.c.b16 %v5927, %v5915
    %v6948 = vpack.c.b16 %v5940, %v5928
    %v6949 = vpack.c.b16 %v5941, %v5929
    %v6950 = vpack.c.b16 %v5942, %v5930
    %v6951 = vpack.c.b16 %v5943, %v5931
    %v6952 = vpack.c.b16 %v5944, %v5932
    %v6953 = vpack.c.b16 %v5945, %v5933
    %v6954 = vpack.c.b16 %v5946, %v5934
    %v6955 = vpack.c.b16 %v5947, %v5935
    %v6956 = vpack.c.b16 %v5948, %v5936
    %v6957 = vpack.c.b16 %v5949, %v5937
    %v6958 = vpack.c.b16 %v5950, %v5938
    %v6959 = vpack.c.b16 %v5951, %v5939
    %v6960 = vpack.c.b16 %v5964, %v5952
    %v6961 = vpack.c.b16 %v5965, %v5953
    %v6962 = vpack.c.b16 %v5966, %v5954
    %v6963 = vpack.c.b16 %v5967, %v5955
    %v6964 = vpack.c.b16 %v5968, %v5956
    %v6965 = vpack.c.b16 %v5969, %v5957
    %v6966 = vpack.c.b16 %v5970, %v5958
    %v6967 = vpack.c.b16 %v5971, %v5959
    %v6968 = vpack.c.b16 %v5972, %v5960
    %v6969 = vpack.c.b16 %v5973, %v5961
    %v6970 = vpack.c.b16 %v5974, %v5962
    %v6971 = vpack.c.b16 %v5975, %v5963
    %v6972 = vpack.c.b16 %v5988, %v5976
    %v6973 = vpack.c.b16 %v5989, %v5977
    %v6974 = vpack.c.b16 %v5990, %v5978
    %v6975 = vpack.c.b16 %v5991, %v5979
    %v6976 = vpack.c.b16 %v5992, %v5980
    %v6977 = vpack.c.b16 %v5993, %v5981
    %v6978 = vpack.c.b16 %v5994, %v5982
    %v6979 = vpack.c.b16 %v5995, %v5983
    %v6980 = vpack.c.b16 %v5996, %v5984
    %v6981 = vpack.c.b16 %v5997, %v5985
    %v6982 = vpack.c.b16 %v5998, %v5986
    %v6983 = vpack.c.b16 %v5999, %v5987
    %v6984 = vpack.c.b16 %v6012, %v6000
    %v6985 = vpack.c.b16 %v6013, %v6001
    %v6986 = vpack.c.b16 %v6014, %v6002
    %v6987 = vpack.c.b16 %v6015, %v6003
    %v6988 = vpack.c.b16 %v6016, %v6004
    %v6989 = vpack.c.b16 %v6017, %v6005
    %v6990 = vpack.c.b16 %v6018, %v6006
    %v6991 = vpack.c.b16 %v6019, %v6007
    %v6992 = vpack.c.b16 %v6020, %v6008
    %v6993 = vpack.c.b16 %v6021, %v6009
    %v6994 = vpack.c.b16 %v6022, %v6010
    %v6995 = vpack.c.b16 %v6023, %v6011
    %v6996 = vpack.c.b16 %v6036, %v6024
    %v6997 = vpack.c.b16 %v6037, %v6025
    %v6998 = vpack.c.b16 %v6038, %v6026
    %v6999 = vpack.c.b16 %v6039, %v6027
    %v7000 = vpack.c.b16 %v6040, %v6028
    %v7001 = vpack.c.b16 %v6041, %v6029
    %v7002 = vpack.c.b16 %v6042, %v6030
    %v7003 = vpack.c.b16 %v6043, %v6031
    %v7004 = vpack.c.b16 %v6044, %v6032
    %v7005 = vpack.c.b16 %v6045, %v6033
    %v7006 = vpack.c.b16 %v6046, %v6034
    %v7007 = vpack.c.b16 %v6047, %v6035
    %v7008 = vpack.c.b16 %v6060, %v6048
    %v7009 = vpack.c.b16 %v6061, %v6049
    %v7010 = vpack.c.b16 %v6062, %v6050
    %v7011 = vpack.c.b16 %v6063, %v6051
    %v7012 = vpack.c.b16 %v6064, %v6052
    %v7013 = vpack.c.b16 %v6065, %v6053
    %v7014 = vpack.c.b16 %v6066, %v6054
    %v7015 = vpack.c.b16 %v6067, %v6055
    %v7016 = vpack.c.b16 %v6068, %v6056
    %v7017 = vpack.c.b16 %v6069, %v6057
    %v7018 = vpack.c.b16 %v6070, %v6058
    %v7019 = vpack.c.b16 %v6071, %v6059
    %v7020 = vpack.c.b16 %v6084, %v6072
    %v7021 = vpack.c.b16 %v6085, %v6073
    %v7022 = vpack.c.b16 %v6086, %v6074
    %v7023 = vpack.c.b16 %v6087, %v6075
    %v7024 = vpack.c.b16 %v6088, %v6076
    %v7025 = vpack.c.b16 %v6089, %v6077
    %v7026 = vpack.c.b16 %v6090, %v6078
    %v7027 = vpack.c.b16 %v6091, %v6079
    %v7028 = vpack.c.b16 %v6092, %v6080
    %v7029 = vpack.c.b16 %v6093, %v6081
    %v7030 = vpack.c.b16 %v6094, %v6082
    %v7031 = vpack.c.b16 %v6095, %v6083
    %v7032 = vpack.c.b16 %v6108, %v6096
    %v7033 = vpack.c.b16 %v6109, %v6097
    %v7034 = vpack.c.b16 %v6110, %v6098
    %v7035 = vpack.c.b16 %v6111, %v6099
    %v7036 = vpack.c.b16 %v6112, %v6100
    %v7037 = vpack.c.b16 %v6113, %v6101
    %v7038 = vpack.c.b16 %v6114, %v6102
    %v7039 = vpack.c.b16 %v6115, %v6103
    %v7040 = vpack.c.b16 %v6116, %v6104
    %v7041 = vpack.c.b16 %v6117, %v6105
    %v7042 = vpack.c.b16 %v6118, %v6106
    %v7043 = vpack.c.b16 %v6119, %v6107
    %v7044 = vpack.c.b16 %v6132, %v6120
    %v7045 = vpack.c.b16 %v6133, %v6121
    %v7046 = vpack.c.b16 %v6134, %v6122
    %v7047 = vpack.c.b16 %v6135, %v6123
    %v7048 = vpack.c.b16 %v6136, %v6124
    %v7049 = vpack.c.b16 %v6137, %v6125
    %v7050 = vpack.c.b16 %v6138, %v6126
    %v7051 = vpack.c.b16 %v6139, %v6127
    %v7052 = vpack.c.b16 %v6140, %v6128
    %v7053 = vpack.c.b16 %v6141, %v6129
    %v7054 = vpack.c.b16 %v6142, %v6130
    %v7055 = vpack.c.b16 %v6143, %v6131
    %v7056 = vpack.c.b16 %v6156, %v6144
    %v7057 = vpack.c.b16 %v6157, %v6145
    %v7058 = vpack.c.b16 %v6158, %v6146
    %v7059 = vpack.c.b16 %v6159, %v6147
    %v7060 = vpack.c.b16 %v6160, %v6148
    %v7061 = vpack.c.b16 %v6161, %v6149
    %v7062 = vpack.c.b16 %v6162, %v6150
    %v7063 = vpack.c.b16 %v6163, %v6151
    %v7064 = vpack.c.b16 %v6164, %v6152
    %v7065 = vpack.c.b16 %v6165, %v6153
    %v7066 = vpack.c.b16 %v6166, %v6154
    %v7067 = vpack.c.b16 %v6167, %v6155
    %v7068 = vpack.c.b16 %v6180, %v6168
    %v7069 = vpack.c.b16 %v6181, %v6169
    %v7070 = vpack.c.b16 %v6182, %v6170
    %v7071 = vpack.c.b16 %v6183, %v6171
    %v7072 = vpack.c.b16 %v6184, %v6172
    %v7073 = vpack.c.b16 %v6185, %v6173
    %v7074 = vpack.c.b16 %v6186, %v6174
    %v7075 = vpack.c.b16 %v6187, %v6175
    %v7076 = vpack.c.b16 %v6188, %v6176
    %v7077 = vpack.c.b16 %v6189, %v6177
    %v7078 = vpack.c.b16 %v6190, %v6178
    %v7079 = vpack.c.b16 %v6191, %v6179
    %v7080 = vpack.c.b16 %v6204, %v6192
    %v7081 = vpack.c.b16 %v6205, %v6193
    %v7082 = vpack.c.b16 %v6206, %v6194
    %v7083 = vpack.c.b16 %v6207, %v6195
    %v7084 = vpack.c.b16 %v6208, %v6196
    %v7085 = vpack.c.b16 %v6209, %v6197
    %v7086 = vpack.c.b16 %v6210, %v6198
    %v7087 = vpack.c.b16 %v6211, %v6199
    %v7088 = vpack.c.b16 %v6212, %v6200
    %v7089 = vpack.c.b16 %v6213, %v6201
    %v7090 = vpack.c.b16 %v6214, %v6202
    %v7091 = vpack.c.b16 %v6215, %v6203
    %v7092 = vpack.c.b16 %v6228, %v6216
    %v7093 = vpack.c.b16 %v6229, %v6217
    %v7094 = vpack.c.b16 %v6230, %v6218
    %v7095 = vpack.c.b16 %v6231, %v6219
    %v7096 = vpack.c.b16 %v6232, %v6220
    %v7097 = vpack.c.b16 %v6233, %v6221
    %v7098 = vpack.c.b16 %v6234, %v6222
    %v7099 = vpack.c.b16 %v6235, %v6223
    %v7100 = vpack.c.b16 %v6236, %v6224
    %v7101 = vpack.c.b16 %v6237, %v6225
    %v7102 = vpack.c.b16 %v6238, %v6226
    %v7103 = vpack.c.b16 %v6239, %v6227
    %v7104 = vpack.c.b16 %v6252, %v6240
    %v7105 = vpack.c.b16 %v6253, %v6241
    %v7106 = vpack.c.b16 %v6254, %v6242
    %v7107 = vpack.c.b16 %v6255, %v6243
    %v7108 = vpack.c.b16 %v6256, %v6244
    %v7109 = vpack.c.b16 %v6257, %v6245
    %v7110 = vpack.c.b16 %v6258, %v6246
    %v7111 = vpack.c.b16 %v6259, %v6247
    %v7112 = vpack.c.b16 %v6260, %v6248
    %v7113 = vpack.c.b16 %v6261, %v6249
    %v7114 = vpack.c.b16 %v6262, %v6250
    %v7115 = vpack.c.b16 %v6263, %v6251
    %v7116 = vpack.c.b16 %v6276, %v6264
    %v7117 = vpack.c.b16 %v6277, %v6265
    %v7118 = vpack.c.b16 %v6278, %v6266
    %v7119 = vpack.c.b16 %v6279, %v6267
    %v7120 = vpack.c.b16 %v6280, %v6268
    %v7121 = vpack.c.b16 %v6281, %v6269
    %v7122 = vpack.c.b16 %v6282, %v6270
    %v7123 = vpack.c.b16 %v6283, %v6271
    %v7124 = vpack.c.b16 %v6284, %v6272
    %v7125 = vpack.c.b16 %v6285, %v6273
    %v7126 = vpack.c.b16 %v6286, %v6274
    %v7127 = vpack.c.b16 %v6287, %v6275
    %v7128 = vpack.c.b16 %v6300, %v6288
    %v7129 = vpack.c.b16 %v6301, %v6289
    %v7130 = vpack.c.b16 %v6302, %v6290
    %v7131 = vpack.c.b16 %v6303, %v6291
    %v7132 = vpack.c.b16 %v6304, %v6292
    %v7133 = vpack.c.b16 %v6305, %v6293
    %v7134 = vpack.c.b16 %v6306, %v6294
    %v7135 = vpack.c.b16 %v6307, %v6295
    %v7136 = vpack.c.b16 %v6308, %v6296
    %v7137 = vpack.c.b16 %v6309, %v6297
    %v7138 = vpack.c.b16 %v6310, %v6298
    %v7139 = vpack.c.b16 %v6311, %v6299
    %v7140 = vpack.c.b16 %v6324, %v6312
    %v7141 = vpack.c.b16 %v6325, %v6313
    %v7142 = vpack.c.b16 %v6326, %v6314
    %v7143 = vpack.c.b16 %v6327, %v6315
    %v7144 = vpack.c.b16 %v6328, %v6316
    %v7145 = vpack.c.b16 %v6329, %v6317
    %v7146 = vpack.c.b16 %v6330, %v6318
    %v7147 = vpack.c.b16 %v6331, %v6319
    %v7148 = vpack.c.b16 %v6332, %v6320
    %v7149 = vpack.c.b16 %v6333, %v6321
    %v7150 = vpack.c.b16 %v6334, %v6322
    %v7151 = vpack.c.b16 %v6335, %v6323
    %v7152 = vpack.c.b16 %v6348, %v6336
    %v7153 = vpack.c.b16 %v6349, %v6337
    %v7154 = vpack.c.b16 %v6350, %v6338
    %v7155 = vpack.c.b16 %v6351, %v6339
    %v7156 = vpack.c.b16 %v6352, %v6340
    %v7157 = vpack.c.b16 %v6353, %v6341
    %v7158 = vpack.c.b16 %v6354, %v6342
    %v7159 = vpack.c.b16 %v6355, %v6343
    %v7160 = vpack.c.b16 %v6356, %v6344
    %v7161 = vpack.c.b16 %v6357, %v6345
    %v7162 = vpack.c.b16 %v6358, %v6346
    %v7163 = vpack.c.b16 %v6359, %v6347
    %v7164 = vpack.c.b16 %v6372, %v6360
    %v7165 = vpack.c.b16 %v6373, %v6361
    %v7166 = vpack.c.b16 %v6374, %v6362
    %v7167 = vpack.c.b16 %v6375, %v6363
    %v7168 = vpack.c.b16 %v6376, %v6364
    %v7169 = vpack.c.b16 %v6377, %v6365
    %v7170 = vpack.c.b16 %v6378, %v6366
    %v7171 = vpack.c.b16 %v6379, %v6367
    %v7172 = vpack.c.b16 %v6380, %v6368
    %v7173 = vpack.c.b16 %v6381, %v6369
    %v7174 = vpack.c.b16 %v6382, %v6370
    %v7175 = vpack.c.b16 %v6383, %v6371
    %v7176 = vpack.c.b16 %v6396, %v6384
    %v7177 = vpack.c.b16 %v6397, %v6385
    %v7178 = vpack.c.b16 %v6398, %v6386
    %v7179 = vpack.c.b16 %v6399, %v6387
    %v7180 = vpack.c.b16 %v6400, %v6388
    %v7181 = vpack.c.b16 %v6401, %v6389
    %v7182 = vpack.c.b16 %v6402, %v6390
    %v7183 = vpack.c.b16 %v6403, %v6391
    %v7184 = vpack.c.b16 %v6404, %v6392
    %v7185 = vpack.c.b16 %v6405, %v6393
    %v7186 = vpack.c.b16 %v6406, %v6394
    %v7187 = vpack.c.b16 %v6407, %v6395
    %v7188 = vpack.c.b16 %v6420, %v6408
    %v7189 = vpack.c.b16 %v6421, %v6409
    %v7190 = vpack.c.b16 %v6422, %v6410
    %v7191 = vpack.c.b16 %v6423, %v6411
    %v7192 = vpack.c.b16 %v6424, %v6412
    %v7193 = vpack.c.b16 %v6425, %v6413
    %v7194 = vpack.c.b16 %v6426, %v6414
    %v7195 = vpack.c.b16 %v6427, %v6415
    %v7196 = vpack.c.b16 %v6428, %v6416
    %v7197 = vpack.c.b16 %v6429, %v6417
    %v7198 = vpack.c.b16 %v6430, %v6418
    %v7199 = vpack.c.b16 %v6431, %v6419
    %7968 = vmatprep.subr.bf16.mxu0 %v6433
    %7969 = vmatpush1.bf16.msra.mxu0 %v6432
    %7970 = vmatprep.subr.bf16.mxu0 %v6445
    %7971 = vmatpush1.bf16.msra.mxu0 %v6444
    %7972 = vmatprep.subr.bf16.mxu0 %v6457
    %7973 = vmatpush1.bf16.msra.mxu0 %v6456
    %7974 = vmatprep.subr.bf16.mxu0 %v6469
    %7975 = vmatpush1.bf16.msra.mxu0 %v6468
    %7976 = vmatprep.subr.bf16.mxu0 %v6481
    %7977 = vmatpush1.bf16.msra.mxu0 %v6480
    %7978 = vmatprep.subr.bf16.mxu0 %v6493
    %7979 = vmatpush1.bf16.msra.mxu0 %v6492
    %7980 = vmatprep.subr.bf16.mxu0 %v6505
    %7981 = vmatpush1.bf16.msra.mxu0 %v6504
    %7982 = vmatprep.subr.bf16.mxu0 %v6517
    %7983 = vmatpush1.bf16.msra.mxu0 %v6516
    %7984 = vmatprep.subr.bf16.mxu0 %v6529
    %7985 = vmatpush1.bf16.msra.mxu0 %v6528
    %7986 = vmatprep.subr.bf16.mxu0 %v6541
    %7987 = vmatpush1.bf16.msra.mxu0 %v6540
    %7988 = vmatprep.subr.bf16.mxu0 %v6553
    %7989 = vmatpush1.bf16.msra.mxu0 %v6552
    %7990 = vmatprep.subr.bf16.mxu0 %v6565
    %7991 = vmatpush1.bf16.msra.mxu0 %v6564
    %7992 = vmatprep.subr.bf16.mxu0 %v6577
    %7993 = vmatpush1.bf16.msra.mxu0 %v6576
    %7994 = vmatprep.subr.bf16.mxu0 %v6589
    %7995 = vmatpush1.bf16.msra.mxu0 %v6588
    %7996 = vmatprep.subr.bf16.mxu0 %v6601
    %7997 = vmatpush1.bf16.msra.mxu0 %v6600
    %7998 = vmatprep.subr.bf16.mxu0 %v6613
    %7999 = vmatpush1.bf16.msra.mxu0 %v6612
    %8000 = vmatprep.mubr.bf16.mxu0 %v3289
    %8001 = vmatmul.mubr.bf16.gmra.mrb[0].mxu0 %v3288
    %v8002 = vpop.f32.mrb[0].mxu0
    %v8003 = vadd.f32 %v4071, %v8002
    %v8004 = vpop.f32.mrb[0].mxu0
    %v8005 = vadd.f32 %v4075, %v8004
    %v8006 = vpop.f32.mrb[0].mxu0
    %v8007 = vadd.f32 %v4071, %v8006
    %v8008 = vpop.f32.mrb[0].mxu0
    %v8009 = vadd.f32 %v4075, %v8008
    %8010 = vdwg.mxu0
    %8011 = vmatprep.subr.bf16.mxu0 %v6625
    %8012 = vmatpush1.bf16.msra.mxu0 %v6624
    %8013 = vmatprep.subr.bf16.mxu0 %v6637
    %8014 = vmatpush1.bf16.msra.mxu0 %v6636
    %8015 = vmatprep.subr.bf16.mxu0 %v6649
    %8016 = vmatpush1.bf16.msra.mxu0 %v6648
    %8017 = vmatprep.subr.bf16.mxu0 %v6661
    %8018 = vmatpush1.bf16.msra.mxu0 %v6660
    %8019 = vmatprep.subr.bf16.mxu0 %v6673
    %8020 = vmatpush1.bf16.msra.mxu0 %v6672
    %8021 = vmatprep.subr.bf16.mxu0 %v6685
    %8022 = vmatpush1.bf16.msra.mxu0 %v6684
    %8023 = vmatprep.subr.bf16.mxu0 %v6697
    %8024 = vmatpush1.bf16.msra.mxu0 %v6696
    %8025 = vmatprep.subr.bf16.mxu0 %v6709
    %8026 = vmatpush1.bf16.msra.mxu0 %v6708
    %8027 = vmatprep.subr.bf16.mxu0 %v6721
    %8028 = vmatpush1.bf16.msra.mxu0 %v6720
    %8029 = vmatprep.subr.bf16.mxu0 %v6733
    %8030 = vmatpush1.bf16.msra.mxu0 %v6732
    %8031 = vmatprep.subr.bf16.mxu0 %v6745
    %8032 = vmatpush1.bf16.msra.mxu0 %v6744
    %8033 = vmatprep.subr.bf16.mxu0 %v6757
    %8034 = vmatpush1.bf16.msra.mxu0 %v6756
    %8035 = vmatprep.subr.bf16.mxu0 %v6769
    %8036 = vmatpush1.bf16.msra.mxu0 %v6768
    %8037 = vmatprep.subr.bf16.mxu0 %v6781
    %8038 = vmatpush1.bf16.msra.mxu0 %v6780
    %8039 = vmatprep.subr.bf16.mxu0 %v6793
    %8040 = vmatpush1.bf16.msra.mxu0 %v6792
    %8041 = vmatprep.subr.bf16.mxu0 %v6805
    %8042 = vmatpush1.bf16.msra.mxu0 %v6804
    %8043 = vmatprep.mubr.bf16.mxu0 %v3291
    %8044 = vmatmul.mubr.bf16.gmra.mrb[0].mxu0 %v3290
    %v8045 = vpop.f32.mrb[0].mxu0
    %v8046 = vadd.f32 %v8003, %v8045
    %v8047 = vpop.f32.mrb[0].mxu0
    %v8048 = vadd.f32 %v8005, %v8047
    %v8049 = vpop.f32.mrb[0].mxu0
    %v8050 = vadd.f32 %v8007, %v8049
    %v8051 = vpop.f32.mrb[0].mxu0
    %v8052 = vadd.f32 %v8009, %v8051
    %8053 = vdwg.mxu0
    %8054 = vmatprep.subr.bf16.mxu0 %v6817
    %8055 = vmatpush1.bf16.msra.mxu0 %v6816
    %8056 = vmatprep.subr.bf16.mxu0 %v6829
    %8057 = vmatpush1.bf16.msra.mxu0 %v6828
    %8058 = vmatprep.subr.bf16.mxu0 %v6841
    %8059 = vmatpush1.bf16.msra.mxu0 %v6840
    %8060 = vmatprep.subr.bf16.mxu0 %v6853
    %8061 = vmatpush1.bf16.msra.mxu0 %v6852
    %8062 = vmatprep.subr.bf16.mxu0 %v6865
    %8063 = vmatpush1.bf16.msra.mxu0 %v6864
    %8064 = vmatprep.subr.bf16.mxu0 %v6877
    %8065 = vmatpush1.bf16.msra.mxu0 %v6876
    %8066 = vmatprep.subr.bf16.mxu0 %v6889
    %8067 = vmatpush1.bf16.msra.mxu0 %v6888
    %8068 = vmatprep.subr.bf16.mxu0 %v6901
    %8069 = vmatpush1.bf16.msra.mxu0 %v6900
    %8070 = vmatprep.subr.bf16.mxu0 %v6913
    %8071 = vmatpush1.bf16.msra.mxu0 %v6912
    %8072 = vmatprep.subr.bf16.mxu0 %v6925
    %8073 = vmatpush1.bf16.msra.mxu0 %v6924
    %8074 = vmatprep.subr.bf16.mxu0 %v6937
    %8075 = vmatpush1.bf16.msra.mxu0 %v6936
    %8076 = vmatprep.subr.bf16.mxu0 %v6949
    %8077 = vmatpush1.bf16.msra.mxu0 %v6948
    %8078 = vmatprep.subr.bf16.mxu0 %v6961
    %8079 = vmatpush1.bf16.msra.mxu0 %v6960
    %8080 = vmatprep.subr.bf16.mxu0 %v6973
    %8081 = vmatpush1.bf16.msra.mxu0 %v6972
    %8082 = vmatprep.subr.bf16.mxu0 %v6985
    %8083 = vmatpush1.bf16.msra.mxu0 %v6984
    %8084 = vmatprep.subr.bf16.mxu0 %v6997
    %8085 = vmatpush1.bf16.msra.mxu0 %v6996
    %8086 = vmatprep.mubr.bf16.mxu0 %v3293
    %8087 = vmatmul.mubr.bf16.gmra.mrb[0].mxu0 %v3292
    %v8088 = vpop.f32.mrb[0].mxu0
    %v8089 = vadd.f32 %v8046, %v8088
    %v8090 = vpop.f32.mrb[0].mxu0
    %v8091 = vadd.f32 %v8048, %v8090
    %v8092 = vpop.f32.mrb[0].mxu0
    %v8093 = vadd.f32 %v8050, %v8092
    %v8094 = vpop.f32.mrb[0].mxu0
    %v8095 = vadd.f32 %v8052, %v8094
    %8096 = vdwg.mxu0
    %8097 = vmatprep.subr.bf16.mxu0 %v7009
    %8098 = vmatpush1.bf16.msra.mxu0 %v7008
    %8099 = vmatprep.subr.bf16.mxu0 %v7021
    %8100 = vmatpush1.bf16.msra.mxu0 %v7020
    %8101 = vmatprep.subr.bf16.mxu0 %v7033
    %8102 = vmatpush1.bf16.msra.mxu0 %v7032
    %8103 = vmatprep.subr.bf16.mxu0 %v7045
    %8104 = vmatpush1.bf16.msra.mxu0 %v7044
    %8105 = vmatprep.subr.bf16.mxu0 %v7057
    %8106 = vmatpush1.bf16.msra.mxu0 %v7056
    %8107 = vmatprep.subr.bf16.mxu0 %v7069
    %8108 = vmatpush1.bf16.msra.mxu0 %v7068
    %8109 = vmatprep.subr.bf16.mxu0 %v7081
    %8110 = vmatpush1.bf16.msra.mxu0 %v7080
    %8111 = vmatprep.subr.bf16.mxu0 %v7093
    %8112 = vmatpush1.bf16.msra.mxu0 %v7092
    %8113 = vmatprep.subr.bf16.mxu0 %v7105
    %8114 = vmatpush1.bf16.msra.mxu0 %v7104
    %8115 = vmatprep.subr.bf16.mxu0 %v7117
    %8116 = vmatpush1.bf16.msra.mxu0 %v7116
    %8117 = vmatprep.subr.bf16.mxu0 %v7129
    %8118 = vmatpush1.bf16.msra.mxu0 %v7128
    %8119 = vmatprep.subr.bf16.mxu0 %v7141
    %8120 = vmatpush1.bf16.msra.mxu0 %v7140
    %8121 = vmatprep.subr.bf16.mxu0 %v7153
    %8122 = vmatpush1.bf16.msra.mxu0 %v7152
    %8123 = vmatprep.subr.bf16.mxu0 %v7165
    %8124 = vmatpush1.bf16.msra.mxu0 %v7164
    %8125 = vmatprep.subr.bf16.mxu0 %v7177
    %8126 = vmatpush1.bf16.msra.mxu0 %v7176
    %8127 = vmatprep.subr.bf16.mxu0 %v7189
    %8128 = vmatpush1.bf16.msra.mxu0 %v7188
    %8129 = vmatprep.mubr.bf16.mxu0 %v3295
    %8130 = vmatmul.mubr.bf16.gmra.mrb[0].mxu0 %v3294
    %v8131 = vpop.f32.mrb[0].mxu0
    %v8132 = vadd.f32 %v8089, %v8131
    %v8133 = vpop.f32.mrb[0].mxu0
    %v8134 = vadd.f32 %v8091, %v8133
    %v8135 = vpop.f32.mrb[0].mxu0
    %v8136 = vadd.f32 %v8093, %v8135
    %v8137 = vpop.f32.mrb[0].mxu0
    %v8138 = vadd.f32 %v8095, %v8137
    %8139 = vdwg.mxu0
    %8140 = vmatprep.subr.bf16.mxu0 %v6435
    %8141 = vmatpush1.bf16.msra.mxu0 %v6434
    %8142 = vmatprep.subr.bf16.mxu0 %v6447
    %8143 = vmatpush1.bf16.msra.mxu0 %v6446
    %8144 = vmatprep.subr.bf16.mxu0 %v6459
    %8145 = vmatpush1.bf16.msra.mxu0 %v6458
    %8146 = vmatprep.subr.bf16.mxu0 %v6471
    %8147 = vmatpush1.bf16.msra.mxu0 %v6470
    %8148 = vmatprep.subr.bf16.mxu0 %v6483
    %8149 = vmatpush1.bf16.msra.mxu0 %v6482
    %8150 = vmatprep.subr.bf16.mxu0 %v6495
    %8151 = vmatpush1.bf16.msra.mxu0 %v6494
    %8152 = vmatprep.subr.bf16.mxu0 %v6507
    %8153 = vmatpush1.bf16.msra.mxu0 %v6506
    %8154 = vmatprep.subr.bf16.mxu0 %v6519
    %8155 = vmatpush1.bf16.msra.mxu0 %v6518
    %8156 = vmatprep.subr.bf16.mxu0 %v6531
    %8157 = vmatpush1.bf16.msra.mxu0 %v6530
    %8158 = vmatprep.subr.bf16.mxu0 %v6543
    %8159 = vmatpush1.bf16.msra.mxu0 %v6542
    %8160 = vmatprep.subr.bf16.mxu0 %v6555
    %8161 = vmatpush1.bf16.msra.mxu0 %v6554
    %8162 = vmatprep.subr.bf16.mxu0 %v6567
    %8163 = vmatpush1.bf16.msra.mxu0 %v6566
    %8164 = vmatprep.subr.bf16.mxu0 %v6579
    %8165 = vmatpush1.bf16.msra.mxu0 %v6578
    %8166 = vmatprep.subr.bf16.mxu0 %v6591
    %8167 = vmatpush1.bf16.msra.mxu0 %v6590
    %8168 = vmatprep.subr.bf16.mxu0 %v6603
    %8169 = vmatpush1.bf16.msra.mxu0 %v6602
    %8170 = vmatprep.subr.bf16.mxu0 %v6615
    %8171 = vmatpush1.bf16.msra.mxu0 %v6614
    %8172 = vmatprep.mubr.bf16.mxu0 %v3289
    %8173 = vmatmul.mubr.bf16.gmra.mrb[0].mxu0 %v3288
    %v8174 = vpop.f32.mrb[0].mxu0
    %v8175 = vadd.f32 %v4079, %v8174
    %v8176 = vpop.f32.mrb[0].mxu0
    %v8177 = vadd.f32 %v4083, %v8176
    %v8178 = vpop.f32.mrb[0].mxu0
    %v8179 = vadd.f32 %v4079, %v8178
    %v8180 = vpop.f32.mrb[0].mxu0
    %v8181 = vadd.f32 %v4083, %v8180
    %8182 = vdwg.mxu0
    %8183 = vmatprep.subr.bf16.mxu0 %v6627
    %8184 = vmatpush1.bf16.msra.mxu0 %v6626
    %8185 = vmatprep.subr.bf16.mxu0 %v6639
    %8186 = vmatpush1.bf16.msra.mxu0 %v6638
    %8187 = vmatprep.subr.bf16.mxu0 %v6651
    %8188 = vmatpush1.bf16.msra.mxu0 %v6650
    %8189 = vmatprep.subr.bf16.mxu0 %v6663
    %8190 = vmatpush1.bf16.msra.mxu0 %v6662
    %8191 = vmatprep.subr.bf16.mxu0 %v6675
    %8192 = vmatpush1.bf16.msra.mxu0 %v6674
    %8193 = vmatprep.subr.bf16.mxu0 %v6687
    %8194 = vmatpush1.bf16.msra.mxu0 %v6686
    %8195 = vmatprep.subr.bf16.mxu0 %v6699
    %8196 = vmatpush1.bf16.msra.mxu0 %v6698
    %8197 = vmatprep.subr.bf16.mxu0 %v6711
    %8198 = vmatpush1.bf16.msra.mxu0 %v6710
    %8199 = vmatprep.subr.bf16.mxu0 %v6723
    %8200 = vmatpush1.bf16.msra.mxu0 %v6722
    %8201 = vmatprep.subr.bf16.mxu0 %v6735
    %8202 = vmatpush1.bf16.msra.mxu0 %v6734
    %8203 = vmatprep.subr.bf16.mxu0 %v6747
    %8204 = vmatpush1.bf16.msra.mxu0 %v6746
    %8205 = vmatprep.subr.bf16.mxu0 %v6759
    %8206 = vmatpush1.bf16.msra.mxu0 %v6758
    %8207 = vmatprep.subr.bf16.mxu0 %v6771
    %8208 = vmatpush1.bf16.msra.mxu0 %v6770
    %8209 = vmatprep.subr.bf16.mxu0 %v6783
    %8210 = vmatpush1.bf16.msra.mxu0 %v6782
    %8211 = vmatprep.subr.bf16.mxu0 %v6795
    %8212 = vmatpush1.bf16.msra.mxu0 %v6794
    %8213 = vmatprep.subr.bf16.mxu0 %v6807
    %8214 = vmatpush1.bf16.msra.mxu0 %v6806
    %8215 = vmatprep.mubr.bf16.mxu0 %v3291
    %8216 = vmatmul.mubr.bf16.gmra.mrb[0].mxu0 %v3290
    %v8217 = vpop.f32.mrb[0].mxu0
    %v8218 = vadd.f32 %v8175, %v8217
    %v8219 = vpop.f32.mrb[0].mxu0
    %v8220 = vadd.f32 %v8177, %v8219
    %v8221 = vpop.f32.mrb[0].mxu0
    %v8222 = vadd.f32 %v8179, %v8221
    %v8223 = vpop.f32.mrb[0].mxu0
    %v8224 = vadd.f32 %v8181, %v8223
    %8225 = vdwg.mxu0
    %8226 = vmatprep.subr.bf16.mxu0 %v6819
    %8227 = vmatpush1.bf16.msra.mxu0 %v6818
    %8228 = vmatprep.subr.bf16.mxu0 %v6831
    %8229 = vmatpush1.bf16.msra.mxu0 %v6830
    %8230 = vmatprep.subr.bf16.mxu0 %v6843
    %8231 = vmatpush1.bf16.msra.mxu0 %v6842
    %8232 = vmatprep.subr.bf16.mxu0 %v6855
    %8233 = vmatpush1.bf16.msra.mxu0 %v6854
    %8234 = vmatprep.subr.bf16.mxu0 %v6867
    %8235 = vmatpush1.bf16.msra.mxu0 %v6866
    %8236 = vmatprep.subr.bf16.mxu0 %v6879
    %8237 = vmatpush1.bf16.msra.mxu0 %v6878
    %8238 = vmatprep.subr.bf16.mxu0 %v6891
    %8239 = vmatpush1.bf16.msra.mxu0 %v6890
    %8240 = vmatprep.subr.bf16.mxu0 %v6903
    %8241 = vmatpush1.bf16.msra.mxu0 %v6902
    %8242 = vmatprep.subr.bf16.mxu0 %v6915
    %8243 = vmatpush1.bf16.msra.mxu0 %v6914
    %8244 = vmatprep.subr.bf16.mxu0 %v6927
    %8245 = vmatpush1.bf16.msra.mxu0 %v6926
    %8246 = vmatprep.subr.bf16.mxu0 %v6939
    %8247 = vmatpush1.bf16.msra.mxu0 %v6938
    %8248 = vmatprep.subr.bf16.mxu0 %v6951
    %8249 = vmatpush1.bf16.msra.mxu0 %v6950
    %8250 = vmatprep.subr.bf16.mxu0 %v6963
    %8251 = vmatpush1.bf16.msra.mxu0 %v6962
    %8252 = vmatprep.subr.bf16.mxu0 %v6975
    %8253 = vmatpush1.bf16.msra.mxu0 %v6974
    %8254 = vmatprep.subr.bf16.mxu0 %v6987
    %8255 = vmatpush1.bf16.msra.mxu0 %v6986
    %8256 = vmatprep.subr.bf16.mxu0 %v6999
    %8257 = vmatpush1.bf16.msra.mxu0 %v6998
    %8258 = vmatprep.mubr.bf16.mxu0 %v3293
    %8259 = vmatmul.mubr.bf16.gmra.mrb[0].mxu0 %v3292
    %v8260 = vpop.f32.mrb[0].mxu0
    %v8261 = vadd.f32 %v8218, %v8260
    %v8262 = vpop.f32.mrb[0].mxu0
    %v8263 = vadd.f32 %v8220, %v8262
    %v8264 = vpop.f32.mrb[0].mxu0
    %v8265 = vadd.f32 %v8222, %v8264
    %v8266 = vpop.f32.mrb[0].mxu0
    %v8267 = vadd.f32 %v8224, %v8266
    %8268 = vdwg.mxu0
    %8269 = vmatprep.subr.bf16.mxu0 %v7011
    %8270 = vmatpush1.bf16.msra.mxu0 %v7010
    %8271 = vmatprep.subr.bf16.mxu0 %v7023
    %8272 = vmatpush1.bf16.msra.mxu0 %v7022
    %8273 = vmatprep.subr.bf16.mxu0 %v7035
    %8274 = vmatpush1.bf16.msra.mxu0 %v7034
    %8275 = vmatprep.subr.bf16.mxu0 %v7047
    %8276 = vmatpush1.bf16.msra.mxu0 %v7046
    %8277 = vmatprep.subr.bf16.mxu0 %v7059
    %8278 = vmatpush1.bf16.msra.mxu0 %v7058
    %8279 = vmatprep.subr.bf16.mxu0 %v7071
    %8280 = vmatpush1.bf16.msra.mxu0 %v7070
    %8281 = vmatprep.subr.bf16.mxu0 %v7083
    %8282 = vmatpush1.bf16.msra.mxu0 %v7082
    %8283 = vmatprep.subr.bf16.mxu0 %v7095
    %8284 = vmatpush1.bf16.msra.mxu0 %v7094
    %8285 = vmatprep.subr.bf16.mxu0 %v7107
    %8286 = vmatpush1.bf16.msra.mxu0 %v7106
    %8287 = vmatprep.subr.bf16.mxu0 %v7119
    %8288 = vmatpush1.bf16.msra.mxu0 %v7118
    %8289 = vmatprep.subr.bf16.mxu0 %v7131
    %8290 = vmatpush1.bf16.msra.mxu0 %v7130
    %8291 = vmatprep.subr.bf16.mxu0 %v7143
    %8292 = vmatpush1.bf16.msra.mxu0 %v7142
    %8293 = vmatprep.subr.bf16.mxu0 %v7155
    %8294 = vmatpush1.bf16.msra.mxu0 %v7154
    %8295 = vmatprep.subr.bf16.mxu0 %v7167
    %8296 = vmatpush1.bf16.msra.mxu0 %v7166
    %8297 = vmatprep.subr.bf16.mxu0 %v7179
    %8298 = vmatpush1.bf16.msra.mxu0 %v7178
    %8299 = vmatprep.subr.bf16.mxu0 %v7191
    %8300 = vmatpush1.bf16.msra.mxu0 %v7190
    %8301 = vmatprep.mubr.bf16.mxu0 %v3295
    %8302 = vmatmul.mubr.bf16.gmra.mrb[0].mxu0 %v3294
    %v8303 = vpop.f32.mrb[0].mxu0
    %v8304 = vadd.f32 %v8261, %v8303
    %v8305 = vpop.f32.mrb[0].mxu0
    %v8306 = vadd.f32 %v8263, %v8305
    %v8307 = vpop.f32.mrb[0].mxu0
    %v8308 = vadd.f32 %v8265, %v8307
    %v8309 = vpop.f32.mrb[0].mxu0
    %v8310 = vadd.f32 %v8267, %v8309
    %8311 = vdwg.mxu0
    %8312 = vmatprep.subr.bf16.mxu0 %v6437
    %8313 = vmatpush1.bf16.msra.mxu0 %v6436
    %8314 = vmatprep.subr.bf16.mxu0 %v6449
    %8315 = vmatpush1.bf16.msra.mxu0 %v6448
    %8316 = vmatprep.subr.bf16.mxu0 %v6461
    %8317 = vmatpush1.bf16.msra.mxu0 %v6460
    %8318 = vmatprep.subr.bf16.mxu0 %v6473
    %8319 = vmatpush1.bf16.msra.mxu0 %v6472
    %8320 = vmatprep.subr.bf16.mxu0 %v6485
    %8321 = vmatpush1.bf16.msra.mxu0 %v6484
    %8322 = vmatprep.subr.bf16.mxu0 %v6497
    %8323 = vmatpush1.bf16.msra.mxu0 %v6496
    %8324 = vmatprep.subr.bf16.mxu0 %v6509
    %8325 = vmatpush1.bf16.msra.mxu0 %v6508
    %8326 = vmatprep.subr.bf16.mxu0 %v6521
    %8327 = vmatpush1.bf16.msra.mxu0 %v6520
    %8328 = vmatprep.subr.bf16.mxu0 %v6533
    %8329 = vmatpush1.bf16.msra.mxu0 %v6532
    %8330 = vmatprep.subr.bf16.mxu0 %v6545
    %8331 = vmatpush1.bf16.msra.mxu0 %v6544
    %8332 = vmatprep.subr.bf16.mxu0 %v6557
    %8333 = vmatpush1.bf16.msra.mxu0 %v6556
    %8334 = vmatprep.subr.bf16.mxu0 %v6569
    %8335 = vmatpush1.bf16.msra.mxu0 %v6568
    %8336 = vmatprep.subr.bf16.mxu0 %v6581
    %8337 = vmatpush1.bf16.msra.mxu0 %v6580
    %8338 = vmatprep.subr.bf16.mxu0 %v6593
    %8339 = vmatpush1.bf16.msra.mxu0 %v6592
    %8340 = vmatprep.subr.bf16.mxu0 %v6605
    %8341 = vmatpush1.bf16.msra.mxu0 %v6604
    %8342 = vmatprep.subr.bf16.mxu0 %v6617
    %8343 = vmatpush1.bf16.msra.mxu0 %v6616
    %8344 = vmatprep.mubr.bf16.mxu0 %v3289
    %8345 = vmatmul.mubr.bf16.gmra.mrb[0].mxu0 %v3288
    %v8346 = vpop.f32.mrb[0].mxu0
    %v8347 = vadd.f32 %v4087, %v8346
    %v8348 = vpop.f32.mrb[0].mxu0
    %v8349 = vadd.f32 %v4091, %v8348
    %v8350 = vpop.f32.mrb[0].mxu0
    %v8351 = vadd.f32 %v4087, %v8350
    %v8352 = vpop.f32.mrb[0].mxu0
    %v8353 = vadd.f32 %v4091, %v8352
    %8354 = vdwg.mxu0
    %8355 = vmatprep.subr.bf16.mxu0 %v6629
    %8356 = vmatpush1.bf16.msra.mxu0 %v6628
    %8357 = vmatprep.subr.bf16.mxu0 %v6641
    %8358 = vmatpush1.bf16.msra.mxu0 %v6640
    %8359 = vmatprep.subr.bf16.mxu0 %v6653
    %8360 = vmatpush1.bf16.msra.mxu0 %v6652
    %8361 = vmatprep.subr.bf16.mxu0 %v6665
    %8362 = vmatpush1.bf16.msra.mxu0 %v6664
    %8363 = vmatprep.subr.bf16.mxu0 %v6677
    %8364 = vmatpush1.bf16.msra.mxu0 %v6676
    %8365 = vmatprep.subr.bf16.mxu0 %v6689
    %8366 = vmatpush1.bf16.msra.mxu0 %v6688
    %8367 = vmatprep.subr.bf16.mxu0 %v6701
    %8368 = vmatpush1.bf16.msra.mxu0 %v6700
    %8369 = vmatprep.subr.bf16.mxu0 %v6713
    %8370 = vmatpush1.bf16.msra.mxu0 %v6712
    %8371 = vmatprep.subr.bf16.mxu0 %v6725
    %8372 = vmatpush1.bf16.msra.mxu0 %v6724
    %8373 = vmatprep.subr.bf16.mxu0 %v6737
    %8374 = vmatpush1.bf16.msra.mxu0 %v6736
    %8375 = vmatprep.subr.bf16.mxu0 %v6749
    %8376 = vmatpush1.bf16.msra.mxu0 %v6748
    %8377 = vmatprep.subr.bf16.mxu0 %v6761
    %8378 = vmatpush1.bf16.msra.mxu0 %v6760
    %8379 = vmatprep.subr.bf16.mxu0 %v6773
    %8380 = vmatpush1.bf16.msra.mxu0 %v6772
    %8381 = vmatprep.subr.bf16.mxu0 %v6785
    %8382 = vmatpush1.bf16.msra.mxu0 %v6784
    %8383 = vmatprep.subr.bf16.mxu0 %v6797
    %8384 = vmatpush1.bf16.msra.mxu0 %v6796
    %8385 = vmatprep.subr.bf16.mxu0 %v6809
    %8386 = vmatpush1.bf16.msra.mxu0 %v6808
    %8387 = vmatprep.mubr.bf16.mxu0 %v3291
    %8388 = vmatmul.mubr.bf16.gmra.mrb[0].mxu0 %v3290
    %v8389 = vpop.f32.mrb[0].mxu0
    %v8390 = vadd.f32 %v8347, %v8389
    %v8391 = vpop.f32.mrb[0].mxu0
    %v8392 = vadd.f32 %v8349, %v8391
    %v8393 = vpop.f32.mrb[0].mxu0
    %v8394 = vadd.f32 %v8351, %v8393
    %v8395 = vpop.f32.mrb[0].mxu0
    %v8396 = vadd.f32 %v8353, %v8395
    %8397 = vdwg.mxu0
    %8398 = vmatprep.subr.bf16.mxu0 %v6821
    %8399 = vmatpush1.bf16.msra.mxu0 %v6820
    %8400 = vmatprep.subr.bf16.mxu0 %v6833
    %8401 = vmatpush1.bf16.msra.mxu0 %v6832
    %8402 = vmatprep.subr.bf16.mxu0 %v6845
    %8403 = vmatpush1.bf16.msra.mxu0 %v6844
    %8404 = vmatprep.subr.bf16.mxu0 %v6857
    %8405 = vmatpush1.bf16.msra.mxu0 %v6856
    %8406 = vmatprep.subr.bf16.mxu0 %v6869
    %8407 = vmatpush1.bf16.msra.mxu0 %v6868
    %8408 = vmatprep.subr.bf16.mxu0 %v6881
    %8409 = vmatpush1.bf16.msra.mxu0 %v6880
    %8410 = vmatprep.subr.bf16.mxu0 %v6893
    %8411 = vmatpush1.bf16.msra.mxu0 %v6892
    %8412 = vmatprep.subr.bf16.mxu0 %v6905
    %8413 = vmatpush1.bf16.msra.mxu0 %v6904
    %8414 = vmatprep.subr.bf16.mxu0 %v6917
    %8415 = vmatpush1.bf16.msra.mxu0 %v6916
    %8416 = vmatprep.subr.bf16.mxu0 %v6929
    %8417 = vmatpush1.bf16.msra.mxu0 %v6928
    %8418 = vmatprep.subr.bf16.mxu0 %v6941
    %8419 = vmatpush1.bf16.msra.mxu0 %v6940
    %8420 = vmatprep.subr.bf16.mxu0 %v6953
    %8421 = vmatpush1.bf16.msra.mxu0 %v6952
    %8422 = vmatprep.subr.bf16.mxu0 %v6965
    %8423 = vmatpush1.bf16.msra.mxu0 %v6964
    %8424 = vmatprep.subr.bf16.mxu0 %v6977
    %8425 = vmatpush1.bf16.msra.mxu0 %v6976
    %8426 = vmatprep.subr.bf16.mxu0 %v6989
    %8427 = vmatpush1.bf16.msra.mxu0 %v6988
    %8428 = vmatprep.subr.bf16.mxu0 %v7001
    %8429 = vmatpush1.bf16.msra.mxu0 %v7000
    %8430 = vmatprep.mubr.bf16.mxu0 %v3293
    %8431 = vmatmul.mubr.bf16.gmra.mrb[0].mxu0 %v3292
    %v8432 = vpop.f32.mrb[0].mxu0
    %v8433 = vadd.f32 %v8390, %v8432
    %v8434 = vpop.f32.mrb[0].mxu0
    %v8435 = vadd.f32 %v8392, %v8434
    %v8436 = vpop.f32.mrb[0].mxu0
    %v8437 = vadd.f32 %v8394, %v8436
    %v8438 = vpop.f32.mrb[0].mxu0
    %v8439 = vadd.f32 %v8396, %v8438
    %8440 = vdwg.mxu0
    %8441 = vmatprep.subr.bf16.mxu0 %v7013
    %8442 = vmatpush1.bf16.msra.mxu0 %v7012
    %8443 = vmatprep.subr.bf16.mxu0 %v7025
    %8444 = vmatpush1.bf16.msra.mxu0 %v7024
    %8445 = vmatprep.subr.bf16.mxu0 %v7037
    %8446 = vmatpush1.bf16.msra.mxu0 %v7036
    %8447 = vmatprep.subr.bf16.mxu0 %v7049
    %8448 = vmatpush1.bf16.msra.mxu0 %v7048
    %8449 = vmatprep.subr.bf16.mxu0 %v7061
    %8450 = vmatpush1.bf16.msra.mxu0 %v7060
    %8451 = vmatprep.subr.bf16.mxu0 %v7073
    %8452 = vmatpush1.bf16.msra.mxu0 %v7072
    %8453 = vmatprep.subr.bf16.mxu0 %v7085
    %8454 = vmatpush1.bf16.msra.mxu0 %v7084
    %8455 = vmatprep.subr.bf16.mxu0 %v7097
    %8456 = vmatpush1.bf16.msra.mxu0 %v7096
    %8457 = vmatprep.subr.bf16.mxu0 %v7109
    %8458 = vmatpush1.bf16.msra.mxu0 %v7108
    %8459 = vmatprep.subr.bf16.mxu0 %v7121
    %8460 = vmatpush1.bf16.msra.mxu0 %v7120
    %8461 = vmatprep.subr.bf16.mxu0 %v7133
    %8462 = vmatpush1.bf16.msra.mxu0 %v7132
    %8463 = vmatprep.subr.bf16.mxu0 %v7145
    %8464 = vmatpush1.bf16.msra.mxu0 %v7144
    %8465 = vmatprep.subr.bf16.mxu0 %v7157
    %8466 = vmatpush1.bf16.msra.mxu0 %v7156
    %8467 = vmatprep.subr.bf16.mxu0 %v7169
    %8468 = vmatpush1.bf16.msra.mxu0 %v7168
    %8469 = vmatprep.subr.bf16.mxu0 %v7181
    %8470 = vmatpush1.bf16.msra.mxu0 %v7180
    %8471 = vmatprep.subr.bf16.mxu0 %v7193
    %8472 = vmatpush1.bf16.msra.mxu0 %v7192
    %8473 = vmatprep.mubr.bf16.mxu0 %v3295
    %8474 = vmatmul.mubr.bf16.gmra.mrb[0].mxu0 %v3294
    %v8475 = vpop.f32.mrb[0].mxu0
    %v8476 = vadd.f32 %v8433, %v8475
    %v8477 = vpop.f32.mrb[0].mxu0
    %v8478 = vadd.f32 %v8435, %v8477
    %v8479 = vpop.f32.mrb[0].mxu0
    %v8480 = vadd.f32 %v8437, %v8479
    %v8481 = vpop.f32.mrb[0].mxu0
    %v8482 = vadd.f32 %v8439, %v8481
    %8483 = vdwg.mxu0
    %8484 = vmatprep.subr.bf16.mxu0 %v6439
    %8485 = vmatpush1.bf16.msra.mxu0 %v6438
    %8486 = vmatprep.subr.bf16.mxu0 %v6451
    %8487 = vmatpush1.bf16.msra.mxu0 %v6450
    %8488 = vmatprep.subr.bf16.mxu0 %v6463
    %8489 = vmatpush1.bf16.msra.mxu0 %v6462
    %8490 = vmatprep.subr.bf16.mxu0 %v6475
    %8491 = vmatpush1.bf16.msra.mxu0 %v6474
    %8492 = vmatprep.subr.bf16.mxu0 %v6487
    %8493 = vmatpush1.bf16.msra.mxu0 %v6486
    %8494 = vmatprep.subr.bf16.mxu0 %v6499
    %8495 = vmatpush1.bf16.msra.mxu0 %v6498
    %8496 = vmatprep.subr.bf16.mxu0 %v6511
    %8497 = vmatpush1.bf16.msra.mxu0 %v6510
    %8498 = vmatprep.subr.bf16.mxu0 %v6523
    %8499 = vmatpush1.bf16.msra.mxu0 %v6522
    %8500 = vmatprep.subr.bf16.mxu0 %v6535
    %8501 = vmatpush1.bf16.msra.mxu0 %v6534
    %8502 = vmatprep.subr.bf16.mxu0 %v6547
    %8503 = vmatpush1.bf16.msra.mxu0 %v6546
    %8504 = vmatprep.subr.bf16.mxu0 %v6559
    %8505 = vmatpush1.bf16.msra.mxu0 %v6558
    %8506 = vmatprep.subr.bf16.mxu0 %v6571
    %8507 = vmatpush1.bf16.msra.mxu0 %v6570
    %8508 = vmatprep.subr.bf16.mxu0 %v6583
    %8509 = vmatpush1.bf16.msra.mxu0 %v6582
    %8510 = vmatprep.subr.bf16.mxu0 %v6595
    %8511 = vmatpush1.bf16.msra.mxu0 %v6594
    %8512 = vmatprep.subr.bf16.mxu0 %v6607
    %8513 = vmatpush1.bf16.msra.mxu0 %v6606
    %8514 = vmatprep.subr.bf16.mxu0 %v6619
    %8515 = vmatpush1.bf16.msra.mxu0 %v6618
    %8516 = vmatprep.mubr.bf16.mxu0 %v3289
    %8517 = vmatmul.mubr.bf16.gmra.mrb[0].mxu0 %v3288
    %v8518 = vpop.f32.mrb[0].mxu0
    %v8519 = vadd.f32 %v4095, %v8518
    %v8520 = vpop.f32.mrb[0].mxu0
    %v8521 = vadd.f32 %v4099, %v8520
    %v8522 = vpop.f32.mrb[0].mxu0
    %v8523 = vadd.f32 %v4095, %v8522
    %v8524 = vpop.f32.mrb[0].mxu0
    %v8525 = vadd.f32 %v4099, %v8524
    %8526 = vdwg.mxu0
    %8527 = vmatprep.subr.bf16.mxu0 %v6631
    %8528 = vmatpush1.bf16.msra.mxu0 %v6630
    %8529 = vmatprep.subr.bf16.mxu0 %v6643
    %8530 = vmatpush1.bf16.msra.mxu0 %v6642
    %8531 = vmatprep.subr.bf16.mxu0 %v6655
    %8532 = vmatpush1.bf16.msra.mxu0 %v6654
    %8533 = vmatprep.subr.bf16.mxu0 %v6667
    %8534 = vmatpush1.bf16.msra.mxu0 %v6666
    %8535 = vmatprep.subr.bf16.mxu0 %v6679
    %8536 = vmatpush1.bf16.msra.mxu0 %v6678
    %8537 = vmatprep.subr.bf16.mxu0 %v6691
    %8538 = vmatpush1.bf16.msra.mxu0 %v6690
    %8539 = vmatprep.subr.bf16.mxu0 %v6703
    %8540 = vmatpush1.bf16.msra.mxu0 %v6702
    %8541 = vmatprep.subr.bf16.mxu0 %v6715
    %8542 = vmatpush1.bf16.msra.mxu0 %v6714
    %8543 = vmatprep.subr.bf16.mxu0 %v6727
    %8544 = vmatpush1.bf16.msra.mxu0 %v6726
    %8545 = vmatprep.subr.bf16.mxu0 %v6739
    %8546 = vmatpush1.bf16.msra.mxu0 %v6738
    %8547 = vmatprep.subr.bf16.mxu0 %v6751
    %8548 = vmatpush1.bf16.msra.mxu0 %v6750
    %8549 = vmatprep.subr.bf16.mxu0 %v6763
    %8550 = vmatpush1.bf16.msra.mxu0 %v6762
    %8551 = vmatprep.subr.bf16.mxu0 %v6775
    %8552 = vmatpush1.bf16.msra.mxu0 %v6774
    %8553 = vmatprep.subr.bf16.mxu0 %v6787
    %8554 = vmatpush1.bf16.msra.mxu0 %v6786
    %8555 = vmatprep.subr.bf16.mxu0 %v6799
    %8556 = vmatpush1.bf16.msra.mxu0 %v6798
    %8557 = vmatprep.subr.bf16.mxu0 %v6811
    %8558 = vmatpush1.bf16.msra.mxu0 %v6810
    %8559 = vmatprep.mubr.bf16.mxu0 %v3291
    %8560 = vmatmul.mubr.bf16.gmra.mrb[0].mxu0 %v3290
    %v8561 = vpop.f32.mrb[0].mxu0
    %v8562 = vadd.f32 %v8519, %v8561
    %v8563 = vpop.f32.mrb[0].mxu0
    %v8564 = vadd.f32 %v8521, %v8563
    %v8565 = vpop.f32.mrb[0].mxu0
    %v8566 = vadd.f32 %v8523, %v8565
    %v8567 = vpop.f32.mrb[0].mxu0
    %v8568 = vadd.f32 %v8525, %v8567
    %8569 = vdwg.mxu0
    %8570 = vmatprep.subr.bf16.mxu0 %v6823
    %8571 = vmatpush1.bf16.msra.mxu0 %v6822
    %8572 = vmatprep.subr.bf16.mxu0 %v6835
    %8573 = vmatpush1.bf16.msra.mxu0 %v6834
    %8574 = vmatprep.subr.bf16.mxu0 %v6847
    %8575 = vmatpush1.bf16.msra.mxu0 %v6846
    %8576 = vmatprep.subr.bf16.mxu0 %v6859
    %8577 = vmatpush1.bf16.msra.mxu0 %v6858
    %8578 = vmatprep.subr.bf16.mxu0 %v6871
    %8579 = vmatpush1.bf16.msra.mxu0 %v6870
    %8580 = vmatprep.subr.bf16.mxu0 %v6883
    %8581 = vmatpush1.bf16.msra.mxu0 %v6882
    %8582 = vmatprep.subr.bf16.mxu0 %v6895
    %8583 = vmatpush1.bf16.msra.mxu0 %v6894
    %8584 = vmatprep.subr.bf16.mxu0 %v6907
    %8585 = vmatpush1.bf16.msra.mxu0 %v6906
    %8586 = vmatprep.subr.bf16.mxu0 %v6919
    %8587 = vmatpush1.bf16.msra.mxu0 %v6918
    %8588 = vmatprep.subr.bf16.mxu0 %v6931
    %8589 = vmatpush1.bf16.msra.mxu0 %v6930
    %8590 = vmatprep.subr.bf16.mxu0 %v6943
    %8591 = vmatpush1.bf16.msra.mxu0 %v6942
    %8592 = vmatprep.subr.bf16.mxu0 %v6955
    %8593 = vmatpush1.bf16.msra.mxu0 %v6954
    %8594 = vmatprep.subr.bf16.mxu0 %v6967
    %8595 = vmatpush1.bf16.msra.mxu0 %v6966
    %8596 = vmatprep.subr.bf16.mxu0 %v6979
    %8597 = vmatpush1.bf16.msra.mxu0 %v6978
    %8598 = vmatprep.subr.bf16.mxu0 %v6991
    %8599 = vmatpush1.bf16.msra.mxu0 %v6990
    %8600 = vmatprep.subr.bf16.mxu0 %v7003
    %8601 = vmatpush1.bf16.msra.mxu0 %v7002
    %8602 = vmatprep.mubr.bf16.mxu0 %v3293
    %8603 = vmatmul.mubr.bf16.gmra.mrb[0].mxu0 %v3292
    %v8604 = vpop.f32.mrb[0].mxu0
    %v8605 = vadd.f32 %v8562, %v8604
    %v8606 = vpop.f32.mrb[0].mxu0
    %v8607 = vadd.f32 %v8564, %v8606
    %v8608 = vpop.f32.mrb[0].mxu0
    %v8609 = vadd.f32 %v8566, %v8608
    %v8610 = vpop.f32.mrb[0].mxu0
    %v8611 = vadd.f32 %v8568, %v8610
    %8612 = vdwg.mxu0
    %8613 = vmatprep.subr.bf16.mxu0 %v7015
    %8614 = vmatpush1.bf16.msra.mxu0 %v7014
    %8615 = vmatprep.subr.bf16.mxu0 %v7027
    %8616 = vmatpush1.bf16.msra.mxu0 %v7026
    %8617 = vmatprep.subr.bf16.mxu0 %v7039
    %8618 = vmatpush1.bf16.msra.mxu0 %v7038
    %8619 = vmatprep.subr.bf16.mxu0 %v7051
    %8620 = vmatpush1.bf16.msra.mxu0 %v7050
    %8621 = vmatprep.subr.bf16.mxu0 %v7063
    %8622 = vmatpush1.bf16.msra.mxu0 %v7062
    %8623 = vmatprep.subr.bf16.mxu0 %v7075
    %8624 = vmatpush1.bf16.msra.mxu0 %v7074
    %8625 = vmatprep.subr.bf16.mxu0 %v7087
    %8626 = vmatpush1.bf16.msra.mxu0 %v7086
    %8627 = vmatprep.subr.bf16.mxu0 %v7099
    %8628 = vmatpush1.bf16.msra.mxu0 %v7098
    %8629 = vmatprep.subr.bf16.mxu0 %v7111
    %8630 = vmatpush1.bf16.msra.mxu0 %v7110
    %8631 = vmatprep.subr.bf16.mxu0 %v7123
    %8632 = vmatpush1.bf16.msra.mxu0 %v7122
    %8633 = vmatprep.subr.bf16.mxu0 %v7135
    %8634 = vmatpush1.bf16.msra.mxu0 %v7134
    %8635 = vmatprep.subr.bf16.mxu0 %v7147
    %8636 = vmatpush1.bf16.msra.mxu0 %v7146
    %8637 = vmatprep.subr.bf16.mxu0 %v7159
    %8638 = vmatpush1.bf16.msra.mxu0 %v7158
    %8639 = vmatprep.subr.bf16.mxu0 %v7171
    %8640 = vmatpush1.bf16.msra.mxu0 %v7170
    %8641 = vmatprep.subr.bf16.mxu0 %v7183
    %8642 = vmatpush1.bf16.msra.mxu0 %v7182
    %8643 = vmatprep.subr.bf16.mxu0 %v7195
    %8644 = vmatpush1.bf16.msra.mxu0 %v7194
    %8645 = vmatprep.mubr.bf16.mxu0 %v3295
    %8646 = vmatmul.mubr.bf16.gmra.mrb[0].mxu0 %v3294
    %v8647 = vpop.f32.mrb[0].mxu0
    %v8648 = vadd.f32 %v8605, %v8647
    %v8649 = vpop.f32.mrb[0].mxu0
    %v8650 = vadd.f32 %v8607, %v8649
    %v8651 = vpop.f32.mrb[0].mxu0
    %v8652 = vadd.f32 %v8609, %v8651
    %v8653 = vpop.f32.mrb[0].mxu0
    %v8654 = vadd.f32 %v8611, %v8653
    %8655 = vdwg.mxu0
    %8656 = vmatprep.subr.bf16.mxu0 %v6441
    %8657 = vmatpush1.bf16.msra.mxu0 %v6440
    %8658 = vmatprep.subr.bf16.mxu0 %v6453
    %8659 = vmatpush1.bf16.msra.mxu0 %v6452
    %8660 = vmatprep.subr.bf16.mxu0 %v6465
    %8661 = vmatpush1.bf16.msra.mxu0 %v6464
    %8662 = vmatprep.subr.bf16.mxu0 %v6477
    %8663 = vmatpush1.bf16.msra.mxu0 %v6476
    %8664 = vmatprep.subr.bf16.mxu0 %v6489
    %8665 = vmatpush1.bf16.msra.mxu0 %v6488
    %8666 = vmatprep.subr.bf16.mxu0 %v6501
    %8667 = vmatpush1.bf16.msra.mxu0 %v6500
    %8668 = vmatprep.subr.bf16.mxu0 %v6513
    %8669 = vmatpush1.bf16.msra.mxu0 %v6512
    %8670 = vmatprep.subr.bf16.mxu0 %v6525
    %8671 = vmatpush1.bf16.msra.mxu0 %v6524
    %8672 = vmatprep.subr.bf16.mxu0 %v6537
    %8673 = vmatpush1.bf16.msra.mxu0 %v6536
    %8674 = vmatprep.subr.bf16.mxu0 %v6549
    %8675 = vmatpush1.bf16.msra.mxu0 %v6548
    %8676 = vmatprep.subr.bf16.mxu0 %v6561
    %8677 = vmatpush1.bf16.msra.mxu0 %v6560
    %8678 = vmatprep.subr.bf16.mxu0 %v6573
    %8679 = vmatpush1.bf16.msra.mxu0 %v6572
    %8680 = vmatprep.subr.bf16.mxu0 %v6585
    %8681 = vmatpush1.bf16.msra.mxu0 %v6584
    %8682 = vmatprep.subr.bf16.mxu0 %v6597
    %8683 = vmatpush1.bf16.msra.mxu0 %v6596
    %8684 = vmatprep.subr.bf16.mxu0 %v6609
    %8685 = vmatpush1.bf16.msra.mxu0 %v6608
    %8686 = vmatprep.subr.bf16.mxu0 %v6621
    %8687 = vmatpush1.bf16.msra.mxu0 %v6620
    %8688 = vmatprep.mubr.bf16.mxu0 %v3289
    %8689 = vmatmul.mubr.bf16.gmra.mrb[0].mxu0 %v3288
    %v8690 = vpop.f32.mrb[0].mxu0
    %v8691 = vadd.f32 %v4103, %v8690
    %v8692 = vpop.f32.mrb[0].mxu0
    %v8693 = vadd.f32 %v4107, %v8692
    %v8694 = vpop.f32.mrb[0].mxu0
    %v8695 = vadd.f32 %v4103, %v8694
    %v8696 = vpop.f32.mrb[0].mxu0
    %v8697 = vadd.f32 %v4107, %v8696
    %8698 = vdwg.mxu0
    %8699 = vmatprep.subr.bf16.mxu0 %v6633
    %8700 = vmatpush1.bf16.msra.mxu0 %v6632
    %8701 = vmatprep.subr.bf16.mxu0 %v6645
    %8702 = vmatpush1.bf16.msra.mxu0 %v6644
    %8703 = vmatprep.subr.bf16.mxu0 %v6657
    %8704 = vmatpush1.bf16.msra.mxu0 %v6656
    %8705 = vmatprep.subr.bf16.mxu0 %v6669
    %8706 = vmatpush1.bf16.msra.mxu0 %v6668
    %8707 = vmatprep.subr.bf16.mxu0 %v6681
    %8708 = vmatpush1.bf16.msra.mxu0 %v6680
    %8709 = vmatprep.subr.bf16.mxu0 %v6693
    %8710 = vmatpush1.bf16.msra.mxu0 %v6692
    %8711 = vmatprep.subr.bf16.mxu0 %v6705
    %8712 = vmatpush1.bf16.msra.mxu0 %v6704
    %8713 = vmatprep.subr.bf16.mxu0 %v6717
    %8714 = vmatpush1.bf16.msra.mxu0 %v6716
    %8715 = vmatprep.subr.bf16.mxu0 %v6729
    %8716 = vmatpush1.bf16.msra.mxu0 %v6728
    %8717 = vmatprep.subr.bf16.mxu0 %v6741
    %8718 = vmatpush1.bf16.msra.mxu0 %v6740
    %8719 = vmatprep.subr.bf16.mxu0 %v6753
    %8720 = vmatpush1.bf16.msra.mxu0 %v6752
    %8721 = vmatprep.subr.bf16.mxu0 %v6765
    %8722 = vmatpush1.bf16.msra.mxu0 %v6764
    %8723 = vmatprep.subr.bf16.mxu0 %v6777
    %8724 = vmatpush1.bf16.msra.mxu0 %v6776
    %8725 = vmatprep.subr.bf16.mxu0 %v6789
    %8726 = vmatpush1.bf16.msra.mxu0 %v6788
    %8727 = vmatprep.subr.bf16.mxu0 %v6801
    %8728 = vmatpush1.bf16.msra.mxu0 %v6800
    %8729 = vmatprep.subr.bf16.mxu0 %v6813
    %8730 = vmatpush1.bf16.msra.mxu0 %v6812
    %8731 = vmatprep.mubr.bf16.mxu0 %v3291
    %8732 = vmatmul.mubr.bf16.gmra.mrb[0].mxu0 %v3290
    %v8733 = vpop.f32.mrb[0].mxu0
    %v8734 = vadd.f32 %v8691, %v8733
    %v8735 = vpop.f32.mrb[0].mxu0
    %v8736 = vadd.f32 %v8693, %v8735
    %v8737 = vpop.f32.mrb[0].mxu0
    %v8738 = vadd.f32 %v8695, %v8737
    %v8739 = vpop.f32.mrb[0].mxu0
    %v8740 = vadd.f32 %v8697, %v8739
    %8741 = vdwg.mxu0
    %8742 = vmatprep.subr.bf16.mxu0 %v6825
    %8743 = vmatpush1.bf16.msra.mxu0 %v6824
    %8744 = vmatprep.subr.bf16.mxu0 %v6837
    %8745 = vmatpush1.bf16.msra.mxu0 %v6836
    %8746 = vmatprep.subr.bf16.mxu0 %v6849
    %8747 = vmatpush1.bf16.msra.mxu0 %v6848
    %8748 = vmatprep.subr.bf16.mxu0 %v6861
    %8749 = vmatpush1.bf16.msra.mxu0 %v6860
    %8750 = vmatprep.subr.bf16.mxu0 %v6873
    %8751 = vmatpush1.bf16.msra.mxu0 %v6872
    %8752 = vmatprep.subr.bf16.mxu0 %v6885
    %8753 = vmatpush1.bf16.msra.mxu0 %v6884
    %8754 = vmatprep.subr.bf16.mxu0 %v6897
    %8755 = vmatpush1.bf16.msra.mxu0 %v6896
    %8756 = vmatprep.subr.bf16.mxu0 %v6909
    %8757 = vmatpush1.bf16.msra.mxu0 %v6908
    %8758 = vmatprep.subr.bf16.mxu0 %v6921
    %8759 = vmatpush1.bf16.msra.mxu0 %v6920
    %8760 = vmatprep.subr.bf16.mxu0 %v6933
    %8761 = vmatpush1.bf16.msra.mxu0 %v6932
    %8762 = vmatprep.subr.bf16.mxu0 %v6945
    %8763 = vmatpush1.bf16.msra.mxu0 %v6944
    %8764 = vmatprep.subr.bf16.mxu0 %v6957
    %8765 = vmatpush1.bf16.msra.mxu0 %v6956
    %8766 = vmatprep.subr.bf16.mxu0 %v6969
    %8767 = vmatpush1.bf16.msra.mxu0 %v6968
    %8768 = vmatprep.subr.bf16.mxu0 %v6981
    %8769 = vmatpush1.bf16.msra.mxu0 %v6980
    %8770 = vmatprep.subr.bf16.mxu0 %v6993
    %8771 = vmatpush1.bf16.msra.mxu0 %v6992
    %8772 = vmatprep.subr.bf16.mxu0 %v7005
    %8773 = vmatpush1.bf16.msra.mxu0 %v7004
    %8774 = vmatprep.mubr.bf16.mxu0 %v3293
    %8775 = vmatmul.mubr.bf16.gmra.mrb[0].mxu0 %v3292
    %v8776 = vpop.f32.mrb[0].mxu0
    %v8777 = vadd.f32 %v8734, %v8776
    %v8778 = vpop.f32.mrb[0].mxu0
    %v8779 = vadd.f32 %v8736, %v8778
    %v8780 = vpop.f32.mrb[0].mxu0
    %v8781 = vadd.f32 %v8738, %v8780
    %v8782 = vpop.f32.mrb[0].mxu0
    %v8783 = vadd.f32 %v8740, %v8782
    %8784 = vdwg.mxu0
    %8785 = vmatprep.subr.bf16.mxu0 %v7017
    %8786 = vmatpush1.bf16.msra.mxu0 %v7016
    %8787 = vmatprep.subr.bf16.mxu0 %v7029
    %8788 = vmatpush1.bf16.msra.mxu0 %v7028
    %8789 = vmatprep.subr.bf16.mxu0 %v7041
    %8790 = vmatpush1.bf16.msra.mxu0 %v7040
    %8791 = vmatprep.subr.bf16.mxu0 %v7053
    %8792 = vmatpush1.bf16.msra.mxu0 %v7052
    %8793 = vmatprep.subr.bf16.mxu0 %v7065
    %8794 = vmatpush1.bf16.msra.mxu0 %v7064
    %8795 = vmatprep.subr.bf16.mxu0 %v7077
    %8796 = vmatpush1.bf16.msra.mxu0 %v7076
    %8797 = vmatprep.subr.bf16.mxu0 %v7089
    %8798 = vmatpush1.bf16.msra.mxu0 %v7088
    %8799 = vmatprep.subr.bf16.mxu0 %v7101
    %8800 = vmatpush1.bf16.msra.mxu0 %v7100
    %8801 = vmatprep.subr.bf16.mxu0 %v7113
    %8802 = vmatpush1.bf16.msra.mxu0 %v7112
    %8803 = vmatprep.subr.bf16.mxu0 %v7125
    %8804 = vmatpush1.bf16.msra.mxu0 %v7124
    %8805 = vmatprep.subr.bf16.mxu0 %v7137
    %8806 = vmatpush1.bf16.msra.mxu0 %v7136
    %8807 = vmatprep.subr.bf16.mxu0 %v7149
    %8808 = vmatpush1.bf16.msra.mxu0 %v7148
    %8809 = vmatprep.subr.bf16.mxu0 %v7161
    %8810 = vmatpush1.bf16.msra.mxu0 %v7160
    %8811 = vmatprep.subr.bf16.mxu0 %v7173
    %8812 = vmatpush1.bf16.msra.mxu0 %v7172
    %8813 = vmatprep.subr.bf16.mxu0 %v7185
    %8814 = vmatpush1.bf16.msra.mxu0 %v7184
    %8815 = vmatprep.subr.bf16.mxu0 %v7197
    %8816 = vmatpush1.bf16.msra.mxu0 %v7196
    %8817 = vmatprep.mubr.bf16.mxu0 %v3295
    %8818 = vmatmul.mubr.bf16.gmra.mrb[0].mxu0 %v3294
    %v8819 = vpop.f32.mrb[0].mxu0
    %v8820 = vadd.f32 %v8777, %v8819
    %v8821 = vpop.f32.mrb[0].mxu0
    %v8822 = vadd.f32 %v8779, %v8821
    %v8823 = vpop.f32.mrb[0].mxu0
    %v8824 = vadd.f32 %v8781, %v8823
    %v8825 = vpop.f32.mrb[0].mxu0
    %v8826 = vadd.f32 %v8783, %v8825
    %8827 = vdwg.mxu0
    %8828 = vmatprep.subr.bf16.mxu0 %v6443
    %8829 = vmatpush1.bf16.msra.mxu0 %v6442
    %8830 = vmatprep.subr.bf16.mxu0 %v6455
    %8831 = vmatpush1.bf16.msra.mxu0 %v6454
    %8832 = vmatprep.subr.bf16.mxu0 %v6467
    %8833 = vmatpush1.bf16.msra.mxu0 %v6466
    %8834 = vmatprep.subr.bf16.mxu0 %v6479
    %8835 = vmatpush1.bf16.msra.mxu0 %v6478
    %8836 = vmatprep.subr.bf16.mxu0 %v6491
    %8837 = vmatpush1.bf16.msra.mxu0 %v6490
    %8838 = vmatprep.subr.bf16.mxu0 %v6503
    %8839 = vmatpush1.bf16.msra.mxu0 %v6502
    %8840 = vmatprep.subr.bf16.mxu0 %v6515
    %8841 = vmatpush1.bf16.msra.mxu0 %v6514
    %8842 = vmatprep.subr.bf16.mxu0 %v6527
    %8843 = vmatpush1.bf16.msra.mxu0 %v6526
    %8844 = vmatprep.subr.bf16.mxu0 %v6539
    %8845 = vmatpush1.bf16.msra.mxu0 %v6538
    %8846 = vmatprep.subr.bf16.mxu0 %v6551
    %8847 = vmatpush1.bf16.msra.mxu0 %v6550
    %8848 = vmatprep.subr.bf16.mxu0 %v6563
    %8849 = vmatpush1.bf16.msra.mxu0 %v6562
    %8850 = vmatprep.subr.bf16.mxu0 %v6575
    %8851 = vmatpush1.bf16.msra.mxu0 %v6574
    %8852 = vmatprep.subr.bf16.mxu0 %v6587
    %8853 = vmatpush1.bf16.msra.mxu0 %v6586
    %8854 = vmatprep.subr.bf16.mxu0 %v6599
    %8855 = vmatpush1.bf16.msra.mxu0 %v6598
    %8856 = vmatprep.subr.bf16.mxu0 %v6611
    %8857 = vmatpush1.bf16.msra.mxu0 %v6610
    %8858 = vmatprep.subr.bf16.mxu0 %v6623
    %8859 = vmatpush1.bf16.msra.mxu0 %v6622
    %8860 = vmatprep.mubr.bf16.mxu0 %v3289
    %8861 = vmatmul.mubr.bf16.gmra.mrb[0].mxu0 %v3288
    %v8862 = vpop.f32.mrb[0].mxu0
    %v8863 = vadd.f32 %v4111, %v8862
    %v8864 = vpop.f32.mrb[0].mxu0
    %v8865 = vadd.f32 %v4115, %v8864
    %v8866 = vpop.f32.mrb[0].mxu0
    %v8867 = vadd.f32 %v4111, %v8866
    %v8868 = vpop.f32.mrb[0].mxu0
    %v8869 = vadd.f32 %v4115, %v8868
    %8870 = vdwg.mxu0
    %8871 = vmatprep.subr.bf16.mxu0 %v6635
    %8872 = vmatpush1.bf16.msra.mxu0 %v6634
    %8873 = vmatprep.subr.bf16.mxu0 %v6647
    %8874 = vmatpush1.bf16.msra.mxu0 %v6646
    %8875 = vmatprep.subr.bf16.mxu0 %v6659
    %8876 = vmatpush1.bf16.msra.mxu0 %v6658
    %8877 = vmatprep.subr.bf16.mxu0 %v6671
    %8878 = vmatpush1.bf16.msra.mxu0 %v6670
    %8879 = vmatprep.subr.bf16.mxu0 %v6683
    %8880 = vmatpush1.bf16.msra.mxu0 %v6682
    %8881 = vmatprep.subr.bf16.mxu0 %v6695
    %8882 = vmatpush1.bf16.msra.mxu0 %v6694
    %8883 = vmatprep.subr.bf16.mxu0 %v6707
    %8884 = vmatpush1.bf16.msra.mxu0 %v6706
    %8885 = vmatprep.subr.bf16.mxu0 %v6719
    %8886 = vmatpush1.bf16.msra.mxu0 %v6718
    %8887 = vmatprep.subr.bf16.mxu0 %v6731
    %8888 = vmatpush1.bf16.msra.mxu0 %v6730
    %8889 = vmatprep.subr.bf16.mxu0 %v6743
    %8890 = vmatpush1.bf16.msra.mxu0 %v6742
    %8891 = vmatprep.subr.bf16.mxu0 %v6755
    %8892 = vmatpush1.bf16.msra.mxu0 %v6754
    %8893 = vmatprep.subr.bf16.mxu0 %v6767
    %8894 = vmatpush1.bf16.msra.mxu0 %v6766
    %8895 = vmatprep.subr.bf16.mxu0 %v6779
    %8896 = vmatpush1.bf16.msra.mxu0 %v6778
    %8897 = vmatprep.subr.bf16.mxu0 %v6791
    %8898 = vmatpush1.bf16.msra.mxu0 %v6790
    %8899 = vmatprep.subr.bf16.mxu0 %v6803
    %8900 = vmatpush1.bf16.msra.mxu0 %v6802
    %8901 = vmatprep.subr.bf16.mxu0 %v6815
    %8902 = vmatpush1.bf16.msra.mxu0 %v6814
    %8903 = vmatprep.mubr.bf16.mxu0 %v3291
    %8904 = vmatmul.mubr.bf16.gmra.mrb[0].mxu0 %v3290
    %v8905 = vpop.f32.mrb[0].mxu0
    %v8906 = vadd.f32 %v8863, %v8905
    %v8907 = vpop.f32.mrb[0].mxu0
    %v8908 = vadd.f32 %v8865, %v8907
    %v8909 = vpop.f32.mrb[0].mxu0
    %v8910 = vadd.f32 %v8867, %v8909
    %v8911 = vpop.f32.mrb[0].mxu0
    %v8912 = vadd.f32 %v8869, %v8911
    %8913 = vdwg.mxu0
    %8914 = vmatprep.subr.bf16.mxu0 %v6827
    %8915 = vmatpush1.bf16.msra.mxu0 %v6826
    %8916 = vmatprep.subr.bf16.mxu0 %v6839
    %8917 = vmatpush1.bf16.msra.mxu0 %v6838
    %8918 = vmatprep.subr.bf16.mxu0 %v6851
    %8919 = vmatpush1.bf16.msra.mxu0 %v6850
    %8920 = vmatprep.subr.bf16.mxu0 %v6863
    %8921 = vmatpush1.bf16.msra.mxu0 %v6862
    %8922 = vmatprep.subr.bf16.mxu0 %v6875
    %8923 = vmatpush1.bf16.msra.mxu0 %v6874
    %8924 = vmatprep.subr.bf16.mxu0 %v6887
    %8925 = vmatpush1.bf16.msra.mxu0 %v6886
    %8926 = vmatprep.subr.bf16.mxu0 %v6899
    %8927 = vmatpush1.bf16.msra.mxu0 %v6898
    %8928 = vmatprep.subr.bf16.mxu0 %v6911
    %8929 = vmatpush1.bf16.msra.mxu0 %v6910
    %8930 = vmatprep.subr.bf16.mxu0 %v6923
    %8931 = vmatpush1.bf16.msra.mxu0 %v6922
    %8932 = vmatprep.subr.bf16.mxu0 %v6935
    %8933 = vmatpush1.bf16.msra.mxu0 %v6934
    %8934 = vmatprep.subr.bf16.mxu0 %v6947
    %8935 = vmatpush1.bf16.msra.mxu0 %v6946
    %8936 = vmatprep.subr.bf16.mxu0 %v6959
    %8937 = vmatpush1.bf16.msra.mxu0 %v6958
    %8938 = vmatprep.subr.bf16.mxu0 %v6971
    %8939 = vmatpush1.bf16.msra.mxu0 %v6970
    %8940 = vmatprep.subr.bf16.mxu0 %v6983
    %8941 = vmatpush1.bf16.msra.mxu0 %v6982
    %8942 = vmatprep.subr.bf16.mxu0 %v6995
    %8943 = vmatpush1.bf16.msra.mxu0 %v6994
    %8944 = vmatprep.subr.bf16.mxu0 %v7007
    %8945 = vmatpush1.bf16.msra.mxu0 %v7006
    %8946 = vmatprep.mubr.bf16.mxu0 %v3293
    %8947 = vmatmul.mubr.bf16.gmra.mrb[0].mxu0 %v3292
    %v8948 = vpop.f32.mrb[0].mxu0
    %v8949 = vadd.f32 %v8906, %v8948
    %v8950 = vpop.f32.mrb[0].mxu0
    %v8951 = vadd.f32 %v8908, %v8950
    %v8952 = vpop.f32.mrb[0].mxu0
    %v8953 = vadd.f32 %v8910, %v8952
    %v8954 = vpop.f32.mrb[0].mxu0
    %v8955 = vadd.f32 %v8912, %v8954
    %8956 = vdwg.mxu0
    %8957 = vmatprep.subr.bf16.mxu0 %v7019
    %8958 = vmatpush1.bf16.msra.mxu0 %v7018
    %8959 = vmatprep.subr.bf16.mxu0 %v7031
    %8960 = vmatpush1.bf16.msra.mxu0 %v7030
    %8961 = vmatprep.subr.bf16.mxu0 %v7043
    %8962 = vmatpush1.bf16.msra.mxu0 %v7042
    %8963 = vmatprep.subr.bf16.mxu0 %v7055
    %8964 = vmatpush1.bf16.msra.mxu0 %v7054
    %8965 = vmatprep.subr.bf16.mxu0 %v7067
    %8966 = vmatpush1.bf16.msra.mxu0 %v7066
    %8967 = vmatprep.subr.bf16.mxu0 %v7079
    %8968 = vmatpush1.bf16.msra.mxu0 %v7078
    %8969 = vmatprep.subr.bf16.mxu0 %v7091
    %8970 = vmatpush1.bf16.msra.mxu0 %v7090
    %8971 = vmatprep.subr.bf16.mxu0 %v7103
    %8972 = vmatpush1.bf16.msra.mxu0 %v7102
    %8973 = vmatprep.subr.bf16.mxu0 %v7115
    %8974 = vmatpush1.bf16.msra.mxu0 %v7114
    %8975 = vmatprep.subr.bf16.mxu0 %v7127
    %8976 = vmatpush1.bf16.msra.mxu0 %v7126
    %8977 = vmatprep.subr.bf16.mxu0 %v7139
    %8978 = vmatpush1.bf16.msra.mxu0 %v7138
    %8979 = vmatprep.subr.bf16.mxu0 %v7151
    %8980 = vmatpush1.bf16.msra.mxu0 %v7150
    %8981 = vmatprep.subr.bf16.mxu0 %v7163
    %8982 = vmatpush1.bf16.msra.mxu0 %v7162
    %8983 = vmatprep.subr.bf16.mxu0 %v7175
    %8984 = vmatpush1.bf16.msra.mxu0 %v7174
    %8985 = vmatprep.subr.bf16.mxu0 %v7187
    %8986 = vmatpush1.bf16.msra.mxu0 %v7186
    %8987 = vmatprep.subr.bf16.mxu0 %v7199
    %8988 = vmatpush1.bf16.msra.mxu0 %v7198
    %8989 = vmatprep.mubr.bf16.mxu0 %v3295
    %8990 = vmatmul.mubr.bf16.gmra.mrb[0].mxu0 %v3294
    %v8991 = vpop.f32.mrb[0].mxu0
    %v8992 = vadd.f32 %v8949, %v8991
    %v8993 = vpop.f32.mrb[0].mxu0
    %v8994 = vadd.f32 %v8951, %v8993
    %v8995 = vpop.f32.mrb[0].mxu0
    %v8996 = vadd.f32 %v8953, %v8995
    %v8997 = vpop.f32.mrb[0].mxu0
    %v8998 = vadd.f32 %v8955, %v8997
    %8999 = vdwg.mxu0
    %v9000 = vmax.f32 %v8132, 0.0
    %v9001 = vmax.f32 %v8134, 0.0
    %v9002 = vmax.f32 %v8304, 0.0
    %v9003 = vmax.f32 %v8306, 0.0
    %v9004 = vmax.f32 %v8476, 0.0
    %v9005 = vmax.f32 %v8478, 0.0
    %v9006 = vmax.f32 %v8648, 0.0
    %v9007 = vmax.f32 %v8650, 0.0
    %v9008 = vmax.f32 %v8820, 0.0
    %v9009 = vmax.f32 %v8822, 0.0
    %v9010 = vmax.f32 %v8992, 0.0
    %v9011 = vmax.f32 %v8994, 0.0
    %v9012 = vmax.f32 %v8136, 0.0
    %v9013 = vmax.f32 %v8138, 0.0
    %v9014 = vmax.f32 %v8308, 0.0
    %v9015 = vmax.f32 %v8310, 0.0
    %v9016 = vmax.f32 %v8480, 0.0
    %v9017 = vmax.f32 %v8482, 0.0
    %v9018 = vmax.f32 %v8652, 0.0
    %v9019 = vmax.f32 %v8654, 0.0
    %v9020 = vmax.f32 %v8824, 0.0
    %v9021 = vmax.f32 %v8826, 0.0
    %v9022 = vmax.f32 %v8996, 0.0
    %v9023 = vmax.f32 %v8998, 0.0
    %v9024 = vpack.c.bf16 %v9012, %v9000
    %v9025 = vpack.c.bf16 %v9013, %v9001
    %v9026 = vpack.c.bf16 %v9014, %v9002
    %v9027 = vpack.c.bf16 %v9015, %v9003
    %v9028 = vpack.c.bf16 %v9016, %v9004
    %v9029 = vpack.c.bf16 %v9017, %v9005
    %v9030 = vpack.c.bf16 %v9018, %v9006
    %v9031 = vpack.c.bf16 %v9019, %v9007
    %v9032 = vpack.c.bf16 %v9020, %v9008
    %v9033 = vpack.c.bf16 %v9021, %v9009
    %v9034 = vpack.c.bf16 %v9022, %v9010
    %v9035 = vpack.c.bf16 %v9023, %v9011
    %v9036 = vld [vmem:[#allocation14] sm:$0xf]
    %v9037 = vld [vmem:[#allocation14 + $0x4] sm:$0xf]
    %v9038 = vld [vmem:[#allocation14 + $0x8] sm:$0xf]
    %v9039 = vld [vmem:[#allocation14 + $0xc] sm:$0xf]
    %v9040 = vld [vmem:[#allocation14 + $0x10] sm:$0xf]
    %v9041 = vld [vmem:[#allocation14 + $0x14] sm:$0xf]
    %v9042 = vld [vmem:[#allocation14 + $0x18] sm:$0xf]
    %v9043 = vld [vmem:[#allocation14 + $0x1c] sm:$0xf]
    %v9044 = vld [vmem:[#allocation14 + $0x20] sm:$0xf]
    %v9045 = vld [vmem:[#allocation14 + $0x24] sm:$0xf]
    %v9046 = vld [vmem:[#allocation14 + $0x28] sm:$0xf]
    %v9047 = vld [vmem:[#allocation14 + $0x2c] sm:$0xf]
    %v9048 = vld [vmem:[#allocation14 + $0x30] sm:$0xf]
    %v9049 = vld [vmem:[#allocation14 + $0x34] sm:$0xf]
    %v9050 = vld [vmem:[#allocation14 + $0x38] sm:$0xf]
    %v9051 = vld [vmem:[#allocation14 + $0x3c] sm:$0xf]
    %v9052 = vld [vmem:[#allocation14 + $0x40] sm:$0xf]
    %v9053 = vld [vmem:[#allocation14 + $0x44] sm:$0xf]
    %v9054 = vld [vmem:[#allocation14 + $0x48] sm:$0xf]
    %v9055 = vld [vmem:[#allocation14 + $0x4c] sm:$0xf]
    %v9056 = vld [vmem:[#allocation14 + $0x50] sm:$0xf]
    %v9057 = vld [vmem:[#allocation14 + $0x54] sm:$0xf]
    %v9058 = vld [vmem:[#allocation14 + $0x58] sm:$0xf]
    %v9059 = vld [vmem:[#allocation14 + $0x5c] sm:$0xf]
    %v9060 = vld [vmem:[#allocation14 + $0x60] sm:$0xf]
    %v9061 = vld [vmem:[#allocation14 + $0x64] sm:$0xf]
    %v9062 = vld [vmem:[#allocation14 + $0x68] sm:$0xf]
    %v9063 = vld [vmem:[#allocation14 + $0x6c] sm:$0xf]
    %v9064 = vld [vmem:[#allocation14 + $0x70] sm:$0xf]
    %v9065 = vld [vmem:[#allocation14 + $0x74] sm:$0xf]
    %v9066 = vld [vmem:[#allocation14 + $0x78] sm:$0xf]
    %v9067 = vld [vmem:[#allocation14 + $0x7c] sm:$0xf]
    %v9068 = vld [vmem:[#allocation14 + $0x80] sm:$0xf]
    %v9069 = vld [vmem:[#allocation14 + $0x84] sm:$0xf]
    %v9070 = vld [vmem:[#allocation14 + $0x88] sm:$0xf]
    %v9071 = vld [vmem:[#allocation14 + $0x8c] sm:$0xf]
    %v9072 = vld [vmem:[#allocation14 + $0x90] sm:$0xf]
    %v9073 = vld [vmem:[#allocation14 + $0x94] sm:$0xf]
    %v9074 = vld [vmem:[#allocation14 + $0x98] sm:$0xf]
    %v9075 = vld [vmem:[#allocation14 + $0x9c] sm:$0xf]
    %v9076 = vld [vmem:[#allocation14 + $0xa0] sm:$0xf]
    %v9077 = vld [vmem:[#allocation14 + $0xa4] sm:$0xf]
    %v9078 = vld [vmem:[#allocation14 + $0xa8] sm:$0xf]
    %v9079 = vld [vmem:[#allocation14 + $0xac] sm:$0xf]
    %v9080 = vld [vmem:[#allocation14 + $0xb0] sm:$0xf]
    %v9081 = vld [vmem:[#allocation14 + $0xb4] sm:$0xf]
    %v9082 = vld [vmem:[#allocation14 + $0xb8] sm:$0xf]
    %v9083 = vld [vmem:[#allocation14 + $0xbc] sm:$0xf]
    %v9084 = vld [vmem:[#allocation14 + $0xc0] sm:$0xf]
    %v9085 = vld [vmem:[#allocation14 + $0xc4] sm:$0xf]
    %v9086 = vld [vmem:[#allocation14 + $0xc8] sm:$0xf]
    %v9087 = vld [vmem:[#allocation14 + $0xcc] sm:$0xf]
    %v9088 = vld [vmem:[#allocation14 + $0xd0] sm:$0xf]
    %v9089 = vld [vmem:[#allocation14 + $0xd4] sm:$0xf]
    %v9090 = vld [vmem:[#allocation14 + $0xd8] sm:$0xf]
    %v9091 = vld [vmem:[#allocation14 + $0xdc] sm:$0xf]
    %v9092 = vld [vmem:[#allocation14 + $0xe0] sm:$0xf]
    %v9093 = vld [vmem:[#allocation14 + $0xe4] sm:$0xf]
    %v9094 = vld [vmem:[#allocation14 + $0xe8] sm:$0xf]
    %v9095 = vld [vmem:[#allocation14 + $0xec] sm:$0xf]
    %v9096 = vld [vmem:[#allocation14 + $0xf0] sm:$0xf]
    %v9097 = vld [vmem:[#allocation14 + $0xf4] sm:$0xf]
    %v9098 = vld [vmem:[#allocation14 + $0xf8] sm:$0xf]
    %v9099 = vld [vmem:[#allocation14 + $0xfc] sm:$0xf]
    %v9100 = vld [vmem:[#allocation14 + $0x100] sm:$0xf]
    %v9101 = vld [vmem:[#allocation14 + $0x104] sm:$0xf]
    %v9102 = vld [vmem:[#allocation14 + $0x108] sm:$0xf]
    %v9103 = vld [vmem:[#allocation14 + $0x10c] sm:$0xf]
    %v9104 = vld [vmem:[#allocation14 + $0x110] sm:$0xf]
    %v9105 = vld [vmem:[#allocation14 + $0x114] sm:$0xf]
    %v9106 = vld [vmem:[#allocation14 + $0x118] sm:$0xf]
    %v9107 = vld [vmem:[#allocation14 + $0x11c] sm:$0xf]
    %v9108 = vld [vmem:[#allocation14 + $0x120] sm:$0xf]
    %v9109 = vld [vmem:[#allocation14 + $0x124] sm:$0xf]
    %v9110 = vld [vmem:[#allocation14 + $0x128] sm:$0xf]
    %v9111 = vld [vmem:[#allocation14 + $0x12c] sm:$0xf]
    %v9112 = vld [vmem:[#allocation14 + $0x130] sm:$0xf]
    %v9113 = vld [vmem:[#allocation14 + $0x134] sm:$0xf]
    %v9114 = vld [vmem:[#allocation14 + $0x138] sm:$0xf]
    %v9115 = vld [vmem:[#allocation14 + $0x13c] sm:$0xf]
    %v9116 = vld [vmem:[#allocation14 + $0x140] sm:$0xf]
    %v9117 = vld [vmem:[#allocation14 + $0x144] sm:$0xf]
    %v9118 = vld [vmem:[#allocation14 + $0x148] sm:$0xf]
    %v9119 = vld [vmem:[#allocation14 + $0x14c] sm:$0xf]
    %v9120 = vld [vmem:[#allocation14 + $0x150] sm:$0xf]
    %v9121 = vld [vmem:[#allocation14 + $0x154] sm:$0xf]
    %v9122 = vld [vmem:[#allocation14 + $0x158] sm:$0xf]
    %v9123 = vld [vmem:[#allocation14 + $0x15c] sm:$0xf]
    %v9124 = vld [vmem:[#allocation14 + $0x160] sm:$0xf]
    %v9125 = vld [vmem:[#allocation14 + $0x164] sm:$0xf]
    %v9126 = vld [vmem:[#allocation14 + $0x168] sm:$0xf]
    %v9127 = vld [vmem:[#allocation14 + $0x16c] sm:$0xf]
    %v9128 = vld [vmem:[#allocation14 + $0x170] sm:$0xf]
    %v9129 = vld [vmem:[#allocation14 + $0x174] sm:$0xf]
    %v9130 = vld [vmem:[#allocation14 + $0x178] sm:$0xf]
    %v9131 = vld [vmem:[#allocation14 + $0x17c] sm:$0xf]
    %v9132 = vld [vmem:[#allocation14 + $0x180] sm:$0xf]
    %v9133 = vld [vmem:[#allocation14 + $0x184] sm:$0xf]
    %v9134 = vld [vmem:[#allocation14 + $0x188] sm:$0xf]
    %v9135 = vld [vmem:[#allocation14 + $0x18c] sm:$0xf]
    %v9136 = vld [vmem:[#allocation14 + $0x190] sm:$0xf]
    %v9137 = vld [vmem:[#allocation14 + $0x194] sm:$0xf]
    %v9138 = vld [vmem:[#allocation14 + $0x198] sm:$0xf]
    %v9139 = vld [vmem:[#allocation14 + $0x19c] sm:$0xf]
    %v9140 = vld [vmem:[#allocation14 + $0x1a0] sm:$0xf]
    %v9141 = vld [vmem:[#allocation14 + $0x1a4] sm:$0xf]
    %v9142 = vld [vmem:[#allocation14 + $0x1a8] sm:$0xf]
    %v9143 = vld [vmem:[#allocation14 + $0x1ac] sm:$0xf]
    %v9144 = vld [vmem:[#allocation14 + $0x1b0] sm:$0xf]
    %v9145 = vld [vmem:[#allocation14 + $0x1b4] sm:$0xf]
    %v9146 = vld [vmem:[#allocation14 + $0x1b8] sm:$0xf]
    %v9147 = vld [vmem:[#allocation14 + $0x1bc] sm:$0xf]
    %v9148 = vld [vmem:[#allocation14 + $0x1c0] sm:$0xf]
    %v9149 = vld [vmem:[#allocation14 + $0x1c4] sm:$0xf]
    %v9150 = vld [vmem:[#allocation14 + $0x1c8] sm:$0xf]
    %v9151 = vld [vmem:[#allocation14 + $0x1cc] sm:$0xf]
    %v9152 = vld [vmem:[#allocation14 + $0x1d0] sm:$0xf]
    %v9153 = vld [vmem:[#allocation14 + $0x1d4] sm:$0xf]
    %v9154 = vld [vmem:[#allocation14 + $0x1d8] sm:$0xf]
    %v9155 = vld [vmem:[#allocation14 + $0x1dc] sm:$0xf]
    %v9156 = vld [vmem:[#allocation14 + $0x1e0] sm:$0xf]
    %v9157 = vld [vmem:[#allocation14 + $0x1e4] sm:$0xf]
    %v9158 = vld [vmem:[#allocation14 + $0x1e8] sm:$0xf]
    %v9159 = vld [vmem:[#allocation14 + $0x1ec] sm:$0xf]
    %v9160 = vld [vmem:[#allocation14 + $0x1f0] sm:$0xf]
    %v9161 = vld [vmem:[#allocation14 + $0x1f4] sm:$0xf]
    %v9162 = vld [vmem:[#allocation14 + $0x1f8] sm:$0xf]
    %v9163 = vld [vmem:[#allocation14 + $0x1fc] sm:$0xf]
    %v9164 = vld [vmem:[#allocation14 + $0x200] sm:$0xf]
    %v9165 = vld [vmem:[#allocation14 + $0x204] sm:$0xf]
    %v9166 = vld [vmem:[#allocation14 + $0x208] sm:$0xf]
    %v9167 = vld [vmem:[#allocation14 + $0x20c] sm:$0xf]
    %v9168 = vld [vmem:[#allocation14 + $0x210] sm:$0xf]
    %v9169 = vld [vmem:[#allocation14 + $0x214] sm:$0xf]
    %v9170 = vld [vmem:[#allocation14 + $0x218] sm:$0xf]
    %v9171 = vld [vmem:[#allocation14 + $0x21c] sm:$0xf]
    %v9172 = vld [vmem:[#allocation14 + $0x220] sm:$0xf]
    %v9173 = vld [vmem:[#allocation14 + $0x224] sm:$0xf]
    %v9174 = vld [vmem:[#allocation14 + $0x228] sm:$0xf]
    %v9175 = vld [vmem:[#allocation14 + $0x22c] sm:$0xf]
    %v9176 = vld [vmem:[#allocation14 + $0x230] sm:$0xf]
    %v9177 = vld [vmem:[#allocation14 + $0x234] sm:$0xf]
    %v9178 = vld [vmem:[#allocation14 + $0x238] sm:$0xf]
    %v9179 = vld [vmem:[#allocation14 + $0x23c] sm:$0xf]
    %v9180 = vld [vmem:[#allocation14 + $0x240] sm:$0xf]
    %v9181 = vld [vmem:[#allocation14 + $0x244] sm:$0xf]
    %v9182 = vld [vmem:[#allocation14 + $0x248] sm:$0xf]
    %v9183 = vld [vmem:[#allocation14 + $0x24c] sm:$0xf]
    %v9184 = vld [vmem:[#allocation14 + $0x250] sm:$0xf]
    %v9185 = vld [vmem:[#allocation14 + $0x254] sm:$0xf]
    %v9186 = vld [vmem:[#allocation14 + $0x258] sm:$0xf]
    %v9187 = vld [vmem:[#allocation14 + $0x25c] sm:$0xf]
    %v9188 = vld [vmem:[#allocation14 + $0x260] sm:$0xf]
    %v9189 = vld [vmem:[#allocation14 + $0x264] sm:$0xf]
    %v9190 = vld [vmem:[#allocation14 + $0x268] sm:$0xf]
    %v9191 = vld [vmem:[#allocation14 + $0x26c] sm:$0xf]
    %v9192 = vld [vmem:[#allocation14 + $0x270] sm:$0xf]
    %v9193 = vld [vmem:[#allocation14 + $0x274] sm:$0xf]
    %v9194 = vld [vmem:[#allocation14 + $0x278] sm:$0xf]
    %v9195 = vld [vmem:[#allocation14 + $0x27c] sm:$0xf]
    %v9196 = vld [vmem:[#allocation14 + $0x280] sm:$0xf]
    %v9197 = vld [vmem:[#allocation14 + $0x284] sm:$0xf]
    %v9198 = vld [vmem:[#allocation14 + $0x288] sm:$0xf]
    %v9199 = vld [vmem:[#allocation14 + $0x28c] sm:$0xf]
    %v9200 = vld [vmem:[#allocation14 + $0x290] sm:$0xf]
    %v9201 = vld [vmem:[#allocation14 + $0x294] sm:$0xf]
    %v9202 = vld [vmem:[#allocation14 + $0x298] sm:$0xf]
    %v9203 = vld [vmem:[#allocation14 + $0x29c] sm:$0xf]
    %v9204 = vld [vmem:[#allocation14 + $0x2a0] sm:$0xf]
    %v9205 = vld [vmem:[#allocation14 + $0x2a4] sm:$0xf]
    %v9206 = vld [vmem:[#allocation14 + $0x2a8] sm:$0xf]
    %v9207 = vld [vmem:[#allocation14 + $0x2ac] sm:$0xf]
    %v9208 = vld [vmem:[#allocation14 + $0x2b0] sm:$0xf]
    %v9209 = vld [vmem:[#allocation14 + $0x2b4] sm:$0xf]
    %v9210 = vld [vmem:[#allocation14 + $0x2b8] sm:$0xf]
    %v9211 = vld [vmem:[#allocation14 + $0x2bc] sm:$0xf]
    %v9212 = vld [vmem:[#allocation14 + $0x2c0] sm:$0xf]
    %v9213 = vld [vmem:[#allocation14 + $0x2c4] sm:$0xf]
    %v9214 = vld [vmem:[#allocation14 + $0x2c8] sm:$0xf]
    %v9215 = vld [vmem:[#allocation14 + $0x2cc] sm:$0xf]
    %v9216 = vld [vmem:[#allocation14 + $0x2d0] sm:$0xf]
    %v9217 = vld [vmem:[#allocation14 + $0x2d4] sm:$0xf]
    %v9218 = vld [vmem:[#allocation14 + $0x2d8] sm:$0xf]
    %v9219 = vld [vmem:[#allocation14 + $0x2dc] sm:$0xf]
    %v9220 = vld [vmem:[#allocation14 + $0x2e0] sm:$0xf]
    %v9221 = vld [vmem:[#allocation14 + $0x2e4] sm:$0xf]
    %v9222 = vld [vmem:[#allocation14 + $0x2e8] sm:$0xf]
    %v9223 = vld [vmem:[#allocation14 + $0x2ec] sm:$0xf]
    %v9224 = vld [vmem:[#allocation14 + $0x2f0] sm:$0xf]
    %v9225 = vld [vmem:[#allocation14 + $0x2f4] sm:$0xf]
    %v9226 = vld [vmem:[#allocation14 + $0x2f8] sm:$0xf]
    %v9227 = vld [vmem:[#allocation14 + $0x2fc] sm:$0xf]
    %v9228 = vld [vmem:[#allocation16] sm:$0x1]
    %v9230 = vlaneseq
    %v9231 = vshrl.u32 %v9230, 7
    %v9232 = vsub.s32 0, %v9231
    %v9233 = vrot.slane %v9228, %v9232
    %v9427 = vunpack.c.l.b16 %v9036
    %v9428 = vunpack.c.l.b16 %v9037
    %v9429 = vunpack.c.l.b16 %v9038
    %v9430 = vunpack.c.l.b16 %v9039
    %v9431 = vunpack.c.l.b16 %v9040
    %v9432 = vunpack.c.l.b16 %v9041
    %v9433 = vunpack.c.l.b16 %v9042
    %v9434 = vunpack.c.l.b16 %v9043
    %v9435 = vunpack.c.l.b16 %v9044
    %v9436 = vunpack.c.l.b16 %v9045
    %v9437 = vunpack.c.l.b16 %v9046
    %v9438 = vunpack.c.l.b16 %v9047
    %v9439 = vunpack.c.l.b16 %v9048
    %v9440 = vunpack.c.l.b16 %v9049
    %v9441 = vunpack.c.l.b16 %v9050
    %v9442 = vunpack.c.l.b16 %v9051
    %v9443 = vunpack.c.l.b16 %v9052
    %v9444 = vunpack.c.l.b16 %v9053
    %v9445 = vunpack.c.l.b16 %v9054
    %v9446 = vunpack.c.l.b16 %v9055
    %v9447 = vunpack.c.l.b16 %v9056
    %v9448 = vunpack.c.l.b16 %v9057
    %v9449 = vunpack.c.l.b16 %v9058
    %v9450 = vunpack.c.l.b16 %v9059
    %v9451 = vunpack.c.l.b16 %v9060
    %v9452 = vunpack.c.l.b16 %v9061
    %v9453 = vunpack.c.l.b16 %v9062
    %v9454 = vunpack.c.l.b16 %v9063
    %v9455 = vunpack.c.l.b16 %v9064
    %v9456 = vunpack.c.l.b16 %v9065
    %v9457 = vunpack.c.l.b16 %v9066
    %v9458 = vunpack.c.l.b16 %v9067
    %v9459 = vunpack.c.l.b16 %v9068
    %v9460 = vunpack.c.l.b16 %v9069
    %v9461 = vunpack.c.l.b16 %v9070
    %v9462 = vunpack.c.l.b16 %v9071
    %v9463 = vunpack.c.l.b16 %v9072
    %v9464 = vunpack.c.l.b16 %v9073
    %v9465 = vunpack.c.l.b16 %v9074
    %v9466 = vunpack.c.l.b16 %v9075
    %v9467 = vunpack.c.l.b16 %v9076
    %v9468 = vunpack.c.l.b16 %v9077
    %v9469 = vunpack.c.l.b16 %v9078
    %v9470 = vunpack.c.l.b16 %v9079
    %v9471 = vunpack.c.l.b16 %v9080
    %v9472 = vunpack.c.l.b16 %v9081
    %v9473 = vunpack.c.l.b16 %v9082
    %v9474 = vunpack.c.l.b16 %v9083
    %v9475 = vunpack.c.l.b16 %v9084
    %v9476 = vunpack.c.l.b16 %v9085
    %v9477 = vunpack.c.l.b16 %v9086
    %v9478 = vunpack.c.l.b16 %v9087
    %v9479 = vunpack.c.l.b16 %v9088
    %v9480 = vunpack.c.l.b16 %v9089
    %v9481 = vunpack.c.l.b16 %v9090
    %v9482 = vunpack.c.l.b16 %v9091
    %v9483 = vunpack.c.l.b16 %v9092
    %v9484 = vunpack.c.l.b16 %v9093
    %v9485 = vunpack.c.l.b16 %v9094
    %v9486 = vunpack.c.l.b16 %v9095
    %v9487 = vunpack.c.l.b16 %v9096
    %v9488 = vunpack.c.l.b16 %v9097
    %v9489 = vunpack.c.l.b16 %v9098
    %v9490 = vunpack.c.l.b16 %v9099
    %v9491 = vunpack.c.l.b16 %v9100
    %v9492 = vunpack.c.l.b16 %v9101
    %v9493 = vunpack.c.l.b16 %v9102
    %v9494 = vunpack.c.l.b16 %v9103
    %v9495 = vunpack.c.l.b16 %v9104
    %v9496 = vunpack.c.l.b16 %v9105
    %v9497 = vunpack.c.l.b16 %v9106
    %v9498 = vunpack.c.l.b16 %v9107
    %v9499 = vunpack.c.l.b16 %v9108
    %v9500 = vunpack.c.l.b16 %v9109
    %v9501 = vunpack.c.l.b16 %v9110
    %v9502 = vunpack.c.l.b16 %v9111
    %v9503 = vunpack.c.l.b16 %v9112
    %v9504 = vunpack.c.l.b16 %v9113
    %v9505 = vunpack.c.l.b16 %v9114
    %v9506 = vunpack.c.l.b16 %v9115
    %v9507 = vunpack.c.l.b16 %v9116
    %v9508 = vunpack.c.l.b16 %v9117
    %v9509 = vunpack.c.l.b16 %v9118
    %v9510 = vunpack.c.l.b16 %v9119
    %v9511 = vunpack.c.l.b16 %v9120
    %v9512 = vunpack.c.l.b16 %v9121
    %v9513 = vunpack.c.l.b16 %v9122
    %v9514 = vunpack.c.l.b16 %v9123
    %v9515 = vunpack.c.l.b16 %v9124
    %v9516 = vunpack.c.l.b16 %v9125
    %v9517 = vunpack.c.l.b16 %v9126
    %v9518 = vunpack.c.l.b16 %v9127
    %v9519 = vunpack.c.l.b16 %v9128
    %v9520 = vunpack.c.l.b16 %v9129
    %v9521 = vunpack.c.l.b16 %v9130
    %v9522 = vunpack.c.l.b16 %v9131
    %v9523 = vunpack.c.l.b16 %v9132
    %v9524 = vunpack.c.l.b16 %v9133
    %v9525 = vunpack.c.l.b16 %v9134
    %v9526 = vunpack.c.l.b16 %v9135
    %v9527 = vunpack.c.l.b16 %v9136
    %v9528 = vunpack.c.l.b16 %v9137
    %v9529 = vunpack.c.l.b16 %v9138
    %v9530 = vunpack.c.l.b16 %v9139
    %v9531 = vunpack.c.l.b16 %v9140
    %v9532 = vunpack.c.l.b16 %v9141
    %v9533 = vunpack.c.l.b16 %v9142
    %v9534 = vunpack.c.l.b16 %v9143
    %v9535 = vunpack.c.l.b16 %v9144
    %v9536 = vunpack.c.l.b16 %v9145
    %v9537 = vunpack.c.l.b16 %v9146
    %v9538 = vunpack.c.l.b16 %v9147
    %v9539 = vunpack.c.l.b16 %v9148
    %v9540 = vunpack.c.l.b16 %v9149
    %v9541 = vunpack.c.l.b16 %v9150
    %v9542 = vunpack.c.l.b16 %v9151
    %v9543 = vunpack.c.l.b16 %v9152
    %v9544 = vunpack.c.l.b16 %v9153
    %v9545 = vunpack.c.l.b16 %v9154
    %v9546 = vunpack.c.l.b16 %v9155
    %v9547 = vunpack.c.l.b16 %v9156
    %v9548 = vunpack.c.l.b16 %v9157
    %v9549 = vunpack.c.l.b16 %v9158
    %v9550 = vunpack.c.l.b16 %v9159
    %v9551 = vunpack.c.l.b16 %v9160
    %v9552 = vunpack.c.l.b16 %v9161
    %v9553 = vunpack.c.l.b16 %v9162
    %v9554 = vunpack.c.l.b16 %v9163
    %v9555 = vunpack.c.l.b16 %v9164
    %v9556 = vunpack.c.l.b16 %v9165
    %v9557 = vunpack.c.l.b16 %v9166
    %v9558 = vunpack.c.l.b16 %v9167
    %v9559 = vunpack.c.l.b16 %v9168
    %v9560 = vunpack.c.l.b16 %v9169
    %v9561 = vunpack.c.l.b16 %v9170
    %v9562 = vunpack.c.l.b16 %v9171
    %v9563 = vunpack.c.l.b16 %v9172
    %v9564 = vunpack.c.l.b16 %v9173
    %v9565 = vunpack.c.l.b16 %v9174
    %v9566 = vunpack.c.l.b16 %v9175
    %v9567 = vunpack.c.l.b16 %v9176
    %v9568 = vunpack.c.l.b16 %v9177
    %v9569 = vunpack.c.l.b16 %v9178
    %v9570 = vunpack.c.l.b16 %v9179
    %v9571 = vunpack.c.l.b16 %v9180
    %v9572 = vunpack.c.l.b16 %v9181
    %v9573 = vunpack.c.l.b16 %v9182
    %v9574 = vunpack.c.l.b16 %v9183
    %v9575 = vunpack.c.l.b16 %v9184
    %v9576 = vunpack.c.l.b16 %v9185
    %v9577 = vunpack.c.l.b16 %v9186
    %v9578 = vunpack.c.l.b16 %v9187
    %v9579 = vunpack.c.l.b16 %v9188
    %v9580 = vunpack.c.l.b16 %v9189
    %v9581 = vunpack.c.l.b16 %v9190
    %v9582 = vunpack.c.l.b16 %v9191
    %v9583 = vunpack.c.l.b16 %v9192
    %v9584 = vunpack.c.l.b16 %v9193
    %v9585 = vunpack.c.l.b16 %v9194
    %v9586 = vunpack.c.l.b16 %v9195
    %v9587 = vunpack.c.l.b16 %v9196
    %v9588 = vunpack.c.l.b16 %v9197
    %v9589 = vunpack.c.l.b16 %v9198
    %v9590 = vunpack.c.l.b16 %v9199
    %v9591 = vunpack.c.l.b16 %v9200
    %v9592 = vunpack.c.l.b16 %v9201
    %v9593 = vunpack.c.l.b16 %v9202
    %v9594 = vunpack.c.l.b16 %v9203
    %v9595 = vunpack.c.l.b16 %v9204
    %v9596 = vunpack.c.l.b16 %v9205
    %v9597 = vunpack.c.l.b16 %v9206
    %v9598 = vunpack.c.l.b16 %v9207
    %v9599 = vunpack.c.l.b16 %v9208
    %v9600 = vunpack.c.l.b16 %v9209
    %v9601 = vunpack.c.l.b16 %v9210
    %v9602 = vunpack.c.l.b16 %v9211
    %v9603 = vunpack.c.l.b16 %v9212
    %v9604 = vunpack.c.l.b16 %v9213
    %v9605 = vunpack.c.l.b16 %v9214
    %v9606 = vunpack.c.l.b16 %v9215
    %v9607 = vunpack.c.l.b16 %v9216
    %v9608 = vunpack.c.l.b16 %v9217
    %v9609 = vunpack.c.l.b16 %v9218
    %v9610 = vunpack.c.l.b16 %v9219
    %v9611 = vunpack.c.l.b16 %v9220
    %v9612 = vunpack.c.l.b16 %v9221
    %v9613 = vunpack.c.l.b16 %v9222
    %v9614 = vunpack.c.l.b16 %v9223
    %v9615 = vunpack.c.l.b16 %v9224
    %v9616 = vunpack.c.l.b16 %v9225
    %v9617 = vunpack.c.l.b16 %v9226
    %v9618 = vunpack.c.l.b16 %v9227
    %v9619 = vpack.c.b16 %v9428, %v9427
    %v9620 = vpack.c.b16 %v9430, %v9429
    %v9621 = vpack.c.b16 %v9432, %v9431
    %v9622 = vpack.c.b16 %v9434, %v9433
    %v9623 = vpack.c.b16 %v9436, %v9435
    %v9624 = vpack.c.b16 %v9438, %v9437
    %v9625 = vpack.c.b16 %v9440, %v9439
    %v9626 = vpack.c.b16 %v9442, %v9441
    %v9627 = vpack.c.b16 %v9444, %v9443
    %v9628 = vpack.c.b16 %v9446, %v9445
    %v9629 = vpack.c.b16 %v9448, %v9447
    %v9630 = vpack.c.b16 %v9450, %v9449
    %v9631 = vpack.c.b16 %v9452, %v9451
    %v9632 = vpack.c.b16 %v9454, %v9453
    %v9633 = vpack.c.b16 %v9456, %v9455
    %v9634 = vpack.c.b16 %v9458, %v9457
    %v9635 = vpack.c.b16 %v9460, %v9459
    %v9636 = vpack.c.b16 %v9462, %v9461
    %v9637 = vpack.c.b16 %v9464, %v9463
    %v9638 = vpack.c.b16 %v9466, %v9465
    %v9639 = vpack.c.b16 %v9468, %v9467
    %v9640 = vpack.c.b16 %v9470, %v9469
    %v9641 = vpack.c.b16 %v9472, %v9471
    %v9642 = vpack.c.b16 %v9474, %v9473
    %v9643 = vpack.c.b16 %v9476, %v9475
    %v9644 = vpack.c.b16 %v9478, %v9477
    %v9645 = vpack.c.b16 %v9480, %v9479
    %v9646 = vpack.c.b16 %v9482, %v9481
    %v9647 = vpack.c.b16 %v9484, %v9483
    %v9648 = vpack.c.b16 %v9486, %v9485
    %v9649 = vpack.c.b16 %v9488, %v9487
    %v9650 = vpack.c.b16 %v9490, %v9489
    %v9651 = vpack.c.b16 %v9492, %v9491
    %v9652 = vpack.c.b16 %v9494, %v9493
    %v9653 = vpack.c.b16 %v9496, %v9495
    %v9654 = vpack.c.b16 %v9498, %v9497
    %v9655 = vpack.c.b16 %v9500, %v9499
    %v9656 = vpack.c.b16 %v9502, %v9501
    %v9657 = vpack.c.b16 %v9504, %v9503
    %v9658 = vpack.c.b16 %v9506, %v9505
    %v9659 = vpack.c.b16 %v9508, %v9507
    %v9660 = vpack.c.b16 %v9510, %v9509
    %v9661 = vpack.c.b16 %v9512, %v9511
    %v9662 = vpack.c.b16 %v9514, %v9513
    %v9663 = vpack.c.b16 %v9516, %v9515
    %v9664 = vpack.c.b16 %v9518, %v9517
    %v9665 = vpack.c.b16 %v9520, %v9519
    %v9666 = vpack.c.b16 %v9522, %v9521
    %v9667 = vpack.c.b16 %v9524, %v9523
    %v9668 = vpack.c.b16 %v9526, %v9525
    %v9669 = vpack.c.b16 %v9528, %v9527
    %v9670 = vpack.c.b16 %v9530, %v9529
    %v9671 = vpack.c.b16 %v9532, %v9531
    %v9672 = vpack.c.b16 %v9534, %v9533
    %v9673 = vpack.c.b16 %v9536, %v9535
    %v9674 = vpack.c.b16 %v9538, %v9537
    %v9675 = vpack.c.b16 %v9540, %v9539
    %v9676 = vpack.c.b16 %v9542, %v9541
    %v9677 = vpack.c.b16 %v9544, %v9543
    %v9678 = vpack.c.b16 %v9546, %v9545
    %v9679 = vpack.c.b16 %v9548, %v9547
    %v9680 = vpack.c.b16 %v9550, %v9549
    %v9681 = vpack.c.b16 %v9552, %v9551
    %v9682 = vpack.c.b16 %v9554, %v9553
    %v9683 = vpack.c.b16 %v9556, %v9555
    %v9684 = vpack.c.b16 %v9558, %v9557
    %v9685 = vpack.c.b16 %v9560, %v9559
    %v9686 = vpack.c.b16 %v9562, %v9561
    %v9687 = vpack.c.b16 %v9564, %v9563
    %v9688 = vpack.c.b16 %v9566, %v9565
    %v9689 = vpack.c.b16 %v9568, %v9567
    %v9690 = vpack.c.b16 %v9570, %v9569
    %v9691 = vpack.c.b16 %v9572, %v9571
    %v9692 = vpack.c.b16 %v9574, %v9573
    %v9693 = vpack.c.b16 %v9576, %v9575
    %v9694 = vpack.c.b16 %v9578, %v9577
    %v9695 = vpack.c.b16 %v9580, %v9579
    %v9696 = vpack.c.b16 %v9582, %v9581
    %v9697 = vpack.c.b16 %v9584, %v9583
    %v9698 = vpack.c.b16 %v9586, %v9585
    %v9699 = vpack.c.b16 %v9588, %v9587
    %v9700 = vpack.c.b16 %v9590, %v9589
    %v9701 = vpack.c.b16 %v9592, %v9591
    %v9702 = vpack.c.b16 %v9594, %v9593
    %v9703 = vpack.c.b16 %v9596, %v9595
    %v9704 = vpack.c.b16 %v9598, %v9597
    %v9705 = vpack.c.b16 %v9600, %v9599
    %v9706 = vpack.c.b16 %v9602, %v9601
    %v9707 = vpack.c.b16 %v9604, %v9603
    %v9708 = vpack.c.b16 %v9606, %v9605
    %v9709 = vpack.c.b16 %v9608, %v9607
    %v9710 = vpack.c.b16 %v9610, %v9609
    %v9711 = vpack.c.b16 %v9612, %v9611
    %v9712 = vpack.c.b16 %v9614, %v9613
    %v9713 = vpack.c.b16 %v9616, %v9615
    %v9714 = vpack.c.b16 %v9618, %v9617
    %9811 = vmatprep.subr.bf16.mxu0 0
    %9812 = vmatpush1.bf16.msra.mxu0 %v9619
    %9813 = vmatprep.subr.bf16.mxu0 0
    %9814 = vmatpush1.bf16.msra.mxu0 %v9620
    %9815 = vmatprep.subr.bf16.mxu0 0
    %9816 = vmatpush1.bf16.msra.mxu0 %v9621
    %9817 = vmatprep.subr.bf16.mxu0 0
    %9818 = vmatpush1.bf16.msra.mxu0 %v9622
    %9819 = vmatprep.subr.bf16.mxu0 0
    %9820 = vmatpush1.bf16.msra.mxu0 %v9623
    %9821 = vmatprep.subr.bf16.mxu0 0
    %9822 = vmatpush1.bf16.msra.mxu0 %v9624
    %9823 = vmatprep.subr.bf16.mxu0 0
    %9824 = vmatpush1.bf16.msra.mxu0 %v9625
    %9825 = vmatprep.subr.bf16.mxu0 0
    %9826 = vmatpush1.bf16.msra.mxu0 %v9626
    %9827 = vmatprep.subr.bf16.mxu0 0
    %9828 = vmatpush1.bf16.msra.mxu0 %v9627
    %9829 = vmatprep.subr.bf16.mxu0 0
    %9830 = vmatpush1.bf16.msra.mxu0 %v9628
    %9831 = vmatprep.subr.bf16.mxu0 0
    %9832 = vmatpush1.bf16.msra.mxu0 %v9629
    %9833 = vmatprep.subr.bf16.mxu0 0
    %9834 = vmatpush1.bf16.msra.mxu0 %v9630
    %9835 = vmatprep.subr.bf16.mxu0 0
    %9836 = vmatpush1.bf16.msra.mxu0 %v9631
    %9837 = vmatprep.subr.bf16.mxu0 0
    %9838 = vmatpush1.bf16.msra.mxu0 %v9632
    %9839 = vmatprep.subr.bf16.mxu0 0
    %9840 = vmatpush1.bf16.msra.mxu0 %v9633
    %9841 = vmatprep.subr.bf16.mxu0 0
    %9842 = vmatpush1.bf16.msra.mxu0 %v9634
    %9843 = vmatprep.mubr.bf16.mxu0 %v9025
    %9844 = vmatmul.mubr.bf16.gmra.mrb[0].mxu0 %v9024
    %v9845 = vpop.f32.mrb[0].mxu0
    %v9846 = vadd.f32 %v9233, %v9845
    %v9847 = vpop.f32.mrb[0].mxu0
    %v9848 = vpop.f32.mrb[0].mxu0
    %v9849 = vadd.f32 %v9233, %v9848
    %v9850 = vpop.f32.mrb[0].mxu0
    %9851 = vdwg.mxu0
    %9852 = vmatprep.subr.bf16.mxu0 0
    %9853 = vmatpush1.bf16.msra.mxu0 %v9635
    %9854 = vmatprep.subr.bf16.mxu0 0
    %9855 = vmatpush1.bf16.msra.mxu0 %v9636
    %9856 = vmatprep.subr.bf16.mxu0 0
    %9857 = vmatpush1.bf16.msra.mxu0 %v9637
    %9858 = vmatprep.subr.bf16.mxu0 0
    %9859 = vmatpush1.bf16.msra.mxu0 %v9638
    %9860 = vmatprep.subr.bf16.mxu0 0
    %9861 = vmatpush1.bf16.msra.mxu0 %v9639
    %9862 = vmatprep.subr.bf16.mxu0 0
    %9863 = vmatpush1.bf16.msra.mxu0 %v9640
    %9864 = vmatprep.subr.bf16.mxu0 0
    %9865 = vmatpush1.bf16.msra.mxu0 %v9641
    %9866 = vmatprep.subr.bf16.mxu0 0
    %9867 = vmatpush1.bf16.msra.mxu0 %v9642
    %9868 = vmatprep.subr.bf16.mxu0 0
    %9869 = vmatpush1.bf16.msra.mxu0 %v9643
    %9870 = vmatprep.subr.bf16.mxu0 0
    %9871 = vmatpush1.bf16.msra.mxu0 %v9644
    %9872 = vmatprep.subr.bf16.mxu0 0
    %9873 = vmatpush1.bf16.msra.mxu0 %v9645
    %9874 = vmatprep.subr.bf16.mxu0 0
    %9875 = vmatpush1.bf16.msra.mxu0 %v9646
    %9876 = vmatprep.subr.bf16.mxu0 0
    %9877 = vmatpush1.bf16.msra.mxu0 %v9647
    %9878 = vmatprep.subr.bf16.mxu0 0
    %9879 = vmatpush1.bf16.msra.mxu0 %v9648
    %9880 = vmatprep.subr.bf16.mxu0 0
    %9881 = vmatpush1.bf16.msra.mxu0 %v9649
    %9882 = vmatprep.subr.bf16.mxu0 0
    %9883 = vmatpush1.bf16.msra.mxu0 %v9650
    %9884 = vmatprep.mubr.bf16.mxu0 %v9027
    %9885 = vmatmul.mubr.bf16.gmra.mrb[0].mxu0 %v9026
    %v9886 = vpop.f32.mrb[0].mxu0
    %v9887 = vadd.f32 %v9846, %v9886
    %v9888 = vpop.f32.mrb[0].mxu0
    %v9889 = vpop.f32.mrb[0].mxu0
    %v9890 = vadd.f32 %v9849, %v9889
    %v9891 = vpop.f32.mrb[0].mxu0
    %9892 = vdwg.mxu0
    %9893 = vmatprep.subr.bf16.mxu0 0
    %9894 = vmatpush1.bf16.msra.mxu0 %v9651
    %9895 = vmatprep.subr.bf16.mxu0 0
    %9896 = vmatpush1.bf16.msra.mxu0 %v9652
    %9897 = vmatprep.subr.bf16.mxu0 0
    %9898 = vmatpush1.bf16.msra.mxu0 %v9653
    %9899 = vmatprep.subr.bf16.mxu0 0
    %9900 = vmatpush1.bf16.msra.mxu0 %v9654
    %9901 = vmatprep.subr.bf16.mxu0 0
    %9902 = vmatpush1.bf16.msra.mxu0 %v9655
    %9903 = vmatprep.subr.bf16.mxu0 0
    %9904 = vmatpush1.bf16.msra.mxu0 %v9656
    %9905 = vmatprep.subr.bf16.mxu0 0
    %9906 = vmatpush1.bf16.msra.mxu0 %v9657
    %9907 = vmatprep.subr.bf16.mxu0 0
    %9908 = vmatpush1.bf16.msra.mxu0 %v9658
    %9909 = vmatprep.subr.bf16.mxu0 0
    %9910 = vmatpush1.bf16.msra.mxu0 %v9659
    %9911 = vmatprep.subr.bf16.mxu0 0
    %9912 = vmatpush1.bf16.msra.mxu0 %v9660
    %9913 = vmatprep.subr.bf16.mxu0 0
    %9914 = vmatpush1.bf16.msra.mxu0 %v9661
    %9915 = vmatprep.subr.bf16.mxu0 0
    %9916 = vmatpush1.bf16.msra.mxu0 %v9662
    %9917 = vmatprep.subr.bf16.mxu0 0
    %9918 = vmatpush1.bf16.msra.mxu0 %v9663
    %9919 = vmatprep.subr.bf16.mxu0 0
    %9920 = vmatpush1.bf16.msra.mxu0 %v9664
    %9921 = vmatprep.subr.bf16.mxu0 0
    %9922 = vmatpush1.bf16.msra.mxu0 %v9665
    %9923 = vmatprep.subr.bf16.mxu0 0
    %9924 = vmatpush1.bf16.msra.mxu0 %v9666
    %9925 = vmatprep.mubr.bf16.mxu0 %v9029
    %9926 = vmatmul.mubr.bf16.gmra.mrb[0].mxu0 %v9028
    %v9927 = vpop.f32.mrb[0].mxu0
    %v9928 = vadd.f32 %v9887, %v9927
    %v9929 = vpop.f32.mrb[0].mxu0
    %v9930 = vpop.f32.mrb[0].mxu0
    %v9931 = vadd.f32 %v9890, %v9930
    %v9932 = vpop.f32.mrb[0].mxu0
    %9933 = vdwg.mxu0
    %9934 = vmatprep.subr.bf16.mxu0 0
    %9935 = vmatpush1.bf16.msra.mxu0 %v9667
    %9936 = vmatprep.subr.bf16.mxu0 0
    %9937 = vmatpush1.bf16.msra.mxu0 %v9668
    %9938 = vmatprep.subr.bf16.mxu0 0
    %9939 = vmatpush1.bf16.msra.mxu0 %v9669
    %9940 = vmatprep.subr.bf16.mxu0 0
    %9941 = vmatpush1.bf16.msra.mxu0 %v9670
    %9942 = vmatprep.subr.bf16.mxu0 0
    %9943 = vmatpush1.bf16.msra.mxu0 %v9671
    %9944 = vmatprep.subr.bf16.mxu0 0
    %9945 = vmatpush1.bf16.msra.mxu0 %v9672
    %9946 = vmatprep.subr.bf16.mxu0 0
    %9947 = vmatpush1.bf16.msra.mxu0 %v9673
    %9948 = vmatprep.subr.bf16.mxu0 0
    %9949 = vmatpush1.bf16.msra.mxu0 %v9674
    %9950 = vmatprep.subr.bf16.mxu0 0
    %9951 = vmatpush1.bf16.msra.mxu0 %v9675
    %9952 = vmatprep.subr.bf16.mxu0 0
    %9953 = vmatpush1.bf16.msra.mxu0 %v9676
    %9954 = vmatprep.subr.bf16.mxu0 0
    %9955 = vmatpush1.bf16.msra.mxu0 %v9677
    %9956 = vmatprep.subr.bf16.mxu0 0
    %9957 = vmatpush1.bf16.msra.mxu0 %v9678
    %9958 = vmatprep.subr.bf16.mxu0 0
    %9959 = vmatpush1.bf16.msra.mxu0 %v9679
    %9960 = vmatprep.subr.bf16.mxu0 0
    %9961 = vmatpush1.bf16.msra.mxu0 %v9680
    %9962 = vmatprep.subr.bf16.mxu0 0
    %9963 = vmatpush1.bf16.msra.mxu0 %v9681
    %9964 = vmatprep.subr.bf16.mxu0 0
    %9965 = vmatpush1.bf16.msra.mxu0 %v9682
    %9966 = vmatprep.mubr.bf16.mxu0 %v9031
    %9967 = vmatmul.mubr.bf16.gmra.mrb[0].mxu0 %v9030
    %v9968 = vpop.f32.mrb[0].mxu0
    %v9969 = vadd.f32 %v9928, %v9968
    %v9970 = vpop.f32.mrb[0].mxu0
    %v9971 = vpop.f32.mrb[0].mxu0
    %v9972 = vadd.f32 %v9931, %v9971
    %v9973 = vpop.f32.mrb[0].mxu0
    %9974 = vdwg.mxu0
    %9975 = vmatprep.subr.bf16.mxu0 0
    %9976 = vmatpush1.bf16.msra.mxu0 %v9683
    %9977 = vmatprep.subr.bf16.mxu0 0
    %9978 = vmatpush1.bf16.msra.mxu0 %v9684
    %9979 = vmatprep.subr.bf16.mxu0 0
    %9980 = vmatpush1.bf16.msra.mxu0 %v9685
    %9981 = vmatprep.subr.bf16.mxu0 0
    %9982 = vmatpush1.bf16.msra.mxu0 %v9686
    %9983 = vmatprep.subr.bf16.mxu0 0
    %9984 = vmatpush1.bf16.msra.mxu0 %v9687
    %9985 = vmatprep.subr.bf16.mxu0 0
    %9986 = vmatpush1.bf16.msra.mxu0 %v9688
    %9987 = vmatprep.subr.bf16.mxu0 0
    %9988 = vmatpush1.bf16.msra.mxu0 %v9689
    %9989 = vmatprep.subr.bf16.mxu0 0
    %9990 = vmatpush1.bf16.msra.mxu0 %v9690
    %9991 = vmatprep.subr.bf16.mxu0 0
    %9992 = vmatpush1.bf16.msra.mxu0 %v9691
    %9993 = vmatprep.subr.bf16.mxu0 0
    %9994 = vmatpush1.bf16.msra.mxu0 %v9692
    %9995 = vmatprep.subr.bf16.mxu0 0
    %9996 = vmatpush1.bf16.msra.mxu0 %v9693
    %9997 = vmatprep.subr.bf16.mxu0 0
    %9998 = vmatpush1.bf16.msra.mxu0 %v9694
    %9999 = vmatprep.subr.bf16.mxu0 0
    %10000 = vmatpush1.bf16.msra.mxu0 %v9695
    %10001 = vmatprep.subr.bf16.mxu0 0
    %10002 = vmatpush1.bf16.msra.mxu0 %v9696
    %10003 = vmatprep.subr.bf16.mxu0 0
    %10004 = vmatpush1.bf16.msra.mxu0 %v9697
    %10005 = vmatprep.subr.bf16.mxu0 0
    %10006 = vmatpush1.bf16.msra.mxu0 %v9698
    %10007 = vmatprep.mubr.bf16.mxu0 %v9033
    %10008 = vmatmul.mubr.bf16.gmra.mrb[0].mxu0 %v9032
    %v10009 = vpop.f32.mrb[0].mxu0
    %v10010 = vadd.f32 %v9969, %v10009
    %v10011 = vpop.f32.mrb[0].mxu0
    %v10012 = vpop.f32.mrb[0].mxu0
    %v10013 = vadd.f32 %v9972, %v10012
    %v10014 = vpop.f32.mrb[0].mxu0
    %10015 = vdwg.mxu0
    %10016 = vmatprep.subr.bf16.mxu0 0
    %10017 = vmatpush1.bf16.msra.mxu0 %v9699
    %10018 = vmatprep.subr.bf16.mxu0 0
    %10019 = vmatpush1.bf16.msra.mxu0 %v9700
    %10020 = vmatprep.subr.bf16.mxu0 0
    %10021 = vmatpush1.bf16.msra.mxu0 %v9701
    %10022 = vmatprep.subr.bf16.mxu0 0
    %10023 = vmatpush1.bf16.msra.mxu0 %v9702
    %10024 = vmatprep.subr.bf16.mxu0 0
    %10025 = vmatpush1.bf16.msra.mxu0 %v9703
    %10026 = vmatprep.subr.bf16.mxu0 0
    %10027 = vmatpush1.bf16.msra.mxu0 %v9704
    %10028 = vmatprep.subr.bf16.mxu0 0
    %10029 = vmatpush1.bf16.msra.mxu0 %v9705
    %10030 = vmatprep.subr.bf16.mxu0 0
    %10031 = vmatpush1.bf16.msra.mxu0 %v9706
    %10032 = vmatprep.subr.bf16.mxu0 0
    %10033 = vmatpush1.bf16.msra.mxu0 %v9707
    %10034 = vmatprep.subr.bf16.mxu0 0
    %10035 = vmatpush1.bf16.msra.mxu0 %v9708
    %10036 = vmatprep.subr.bf16.mxu0 0
    %10037 = vmatpush1.bf16.msra.mxu0 %v9709
    %10038 = vmatprep.subr.bf16.mxu0 0
    %10039 = vmatpush1.bf16.msra.mxu0 %v9710
    %10040 = vmatprep.subr.bf16.mxu0 0
    %10041 = vmatpush1.bf16.msra.mxu0 %v9711
    %10042 = vmatprep.subr.bf16.mxu0 0
    %10043 = vmatpush1.bf16.msra.mxu0 %v9712
    %10044 = vmatprep.subr.bf16.mxu0 0
    %10045 = vmatpush1.bf16.msra.mxu0 %v9713
    %10046 = vmatprep.subr.bf16.mxu0 0
    %10047 = vmatpush1.bf16.msra.mxu0 %v9714
    %10048 = vmatprep.mubr.bf16.mxu0 %v9035
    %10049 = vmatmul.mubr.bf16.gmra.mrb[0].mxu0 %v9034
    %v10050 = vpop.f32.mrb[0].mxu0
    %v10051 = vadd.f32 %v10010, %v10050
    %v10052 = vpop.f32.mrb[0].mxu0
    %v10053 = vpop.f32.mrb[0].mxu0
    %v10054 = vadd.f32 %v10013, %v10053
    %v10055 = vpop.f32.mrb[0].mxu0
    %10056 = vdwg.mxu0
    %10057 = vst [vmem:[#allocation17] sm:$0xff] %v10051
    %10058 = vst [vmem:[#allocation17 + $0x8] sm:$0xff] %v10054
    // Predicated region
    $region74: #{tpu_custom_call.1} parent=1 // pred_check
      _
    $region75: #{tpu_custom_call.1} parent=1 // pred_check_branch
      %10060 = sbr.rel (0) target = $region77
    $region76: #{tpu_custom_call.1} parent=1 // pred_region
      %s10062 = ssub.s32 256, 256
      %10063 = vsyncadd [#allocation4], %s10062
      %s10064 = sshll.u32 [#allocation17], 4
      %s10065 = int_to_ptr.vmem [resolvable:$true] %s10064
      %10070 = dma.vmem_to_hbm [thread:$0]  %s10065, 256, %s9, [#allocation4], 128, 128, 8
    $region77: #{tpu_custom_call.1} parent=1 // pred_fallthru
      _
    // Predicated region
    $region78: #{tpu_custom_call.1} parent=1 // pred_check
      _
    $region79: #{tpu_custom_call.1} parent=1 // pred_check_branch
      %10072 = sbr.rel (0) target = $region81
    $region80: #{tpu_custom_call.1} parent=1 // pred_region
      %10073 = dma.done [#allocation4], 256
    $region81: #{tpu_custom_call.1} parent=1 // pred_fallthru
      _
    %10074 = vsyncpa [#allocation3], 1
    %10075 = vsyncpa [#allocation6], 1
    %10076 = vsyncpa [#allocation9], 1
    %10077 = vsyncpa [#allocation12], 1
    %10078 = vsyncpa [#allocation15], 1
    %10079 = vsyncpa [#allocation4], 1

</llo_original>
